<compile_context>
chip_gen: v5e
topology: v5e:2x2
jax: 0.10.0
libtpu: 0.0.40
codegen_flags: <defaults>
</compile_context>

<pallas_src>
import jax
import jax.numpy as jnp
from jax import lax
from jax.experimental import pallas as pl
from jax.experimental.pallas import tpu as pltpu

H = 768        # BERT-base hidden size (hardcoded in the module)
K = 10         # Conv1d kernel_size
PAD = 10       # Conv1d padding
POOLED = 105   # Linear in_features (=> seq len 200)
KP = 16        # conv taps padded to 16 lanes (zero-filled; do NOT pad further)
CP = 128       # class dim padded to 128 sublanes of the [CP, BP] output
BP = 128       # output columns padded to one full lane tile (lane-dense stores,
               # tile-aligned N for the classifier matmul; waste is negligible)


@jax.jit
def glibert_classifier_cnn(hidden_state, conv_w, conv_b, lin_w, lin_b):
    """hidden_state [B,S,768] f32, conv_w [1,768,10], conv_b [1],
    lin_w [C,105], lin_b [C]  ->  log-probs [B, C]."""
    B, S, h = hidden_state.shape
    assert h == H
    assert B <= BP
    C = lin_w.shape[0]
    assert C <= CP
    SP = S + 2 * PAD               # padded conv input length (220)
    T = SP - K + 1                 # conv output length (211)
    assert T // 2 == POOLED == lin_w.shape[1]
    # Roll-safety invariants: the tap shifts (k < K) and the maxpool pair shift
    # (+1) never cross a batch boundary for any conv position the pool-folded
    # classifier actually consumes (largest consumed position is 2*(POOLED-1)+1).
    assert SP - T == K - 1
    assert 2 * (POOLED - 1) + 1 < T <= SP
    J = B * SP                     # flat (batch, position) row count (440)

    # ---- wrapper-side prep: layout only, no compute hoisted -----------------
    # bf16 cast FIRST (halves every byte moved afterwards), then the conv zero
    # padding (fuses with the cast); NO transpose -- the kernel keeps H on lanes.
    xb = hidden_state.astype(jnp.bfloat16)
    x_flat = jnp.pad(xb, ((0, 0), (PAD, PAD), (0, 0))).reshape(J, H)      # [J, H]

    # conv weight [1, H, K] -> [H, KP] (taps on lanes), bf16.
    wcT = jnp.zeros((H, KP), jnp.bfloat16).at[:, :K].set(
        conv_w[0].astype(jnp.bfloat16))
    bconv = conv_b.reshape(1, 1).astype(jnp.float32)

    # Linear(105 -> C) with MaxPool1d(2,2) folded in: weights scattered onto the
    # even conv positions of every per-batch block; classes padded to CP; bf16
    # operands (accumulation stays f32 in-kernel).
    w_one = jnp.zeros((CP, SP), jnp.bfloat16).at[:C, 0:2 * POOLED:2].set(
        lin_w.astype(jnp.bfloat16))
    wl_exp = jnp.tile(w_one, (1, B))                                      # [CP, J]
    bl_col = jnp.zeros((CP, 1), jnp.float32).at[:C, 0].set(lin_b)

    def kernel(x_ref, wcT_ref, bconv_ref, wl_ref, bl_ref, o_ref):
        # (1) Conv1d(768->1, k=10): H-contraction as one MXU matmul, native layout.
        u = jnp.dot(x_ref[...], wcT_ref[...],
                    preferred_element_type=jnp.float32)            # [J, KP] f32
        # (2) 10-tap banded accumulation: z[j] = sum_k u[j+k, k].  Tap alignment
        #     goes through the XLU (pltpu.roll) instead of unaligned strip loads;
        #     roll wraparound only lands on positions the classifier never reads
        #     (asserted above), so the result is unchanged.
        lane = lax.broadcasted_iota(jnp.int32, (J, KP), 1)
        v = jnp.where(lane == 0, u, 0.0)
        for k in range(1, K):
            v = v + jnp.where(lane == k,
                              pltpu.roll(u, shift=J - k, axis=0), 0.0)
        z = jnp.sum(v, axis=1, keepdims=True)                       # [J, 1]
        # (3) conv bias (SMEM scalar) + Tanh  (f32 VPU/EUP math on every chip).
        y = jnp.tanh(z + bconv_ref[0, 0])                           # [J, 1]
        # (4) MaxPool1d(2,2): adjacent-pair max; only even positions carry
        #     classifier weight, so odd/tail positions are harmless.
        m = jnp.maximum(y, pltpu.roll(y, shift=J - 1, axis=0))      # [J, 1]
        # (5) Block-diagonal batch expansion: column b holds batch b's rows only.
        rows = lax.broadcasted_iota(jnp.int32, (J, BP), 0)
        cols = lax.broadcasted_iota(jnp.int32, (J, BP), 1)
        in_b = (cols < B) & (rows >= cols * SP) & (rows < cols * SP + SP)
        mb = jnp.where(in_b, m, 0.0).astype(jnp.bfloat16)           # [J, BP]
        # (6) pool-folded classifier: [CP, J] x [J, BP] bf16 -> f32.
        logits = jnp.dot(wl_ref[...], mb,
                         preferred_element_type=jnp.float32) + bl_ref[...]  # [CP, BP]
        # (7) masked, numerically stable log-softmax over the padded class dim.
        crow = lax.broadcasted_iota(jnp.int32, (CP, BP), 0)
        ml = jnp.where(crow < C, logits, jnp.float32(-1e30))
        mx = jnp.max(ml, axis=0, keepdims=True)
        s = ml - mx
        lse = jnp.log(jnp.sum(jnp.exp(s), axis=0, keepdims=True))
        o_ref[...] = (s - lse).astype(o_ref.dtype)                  # [CP, BP]

    cost = pl.CostEstimate(
        flops=2 * J * H * KP + 2 * CP * J * BP,
        transcendentals=J + CP * BP,
        bytes_accessed=(x_flat.size * 2 + wcT.size * 2 + wl_exp.size * 2
                        + bl_col.size * 4 + bconv.size * 4 + CP * BP * 4),
    )
    # TODO(synk): at real serving batch sizes, add a grid over the batch dim with
    #             a "parallel" dimension_semantics entry (shards across the two
    #             v7x TensorCores, bounds the resident VMEM slab, and lets
    #             BlockSpec double-buffering hide the activation DMA); at B=2 a
    #             grid would only add per-step overhead.
    out = pl.pallas_call(
        kernel,
        out_shape=jax.ShapeDtypeStruct((CP, BP), jnp.float32),
        in_specs=[
            pl.BlockSpec(memory_space=pltpu.MemorySpace.VMEM),   # activations [J, H] bf16
            pl.BlockSpec(memory_space=pltpu.MemorySpace.VMEM),   # conv weight [H, KP] bf16
            pl.BlockSpec(memory_space=pltpu.MemorySpace.SMEM),   # conv bias scalar
            pl.BlockSpec(memory_space=pltpu.MemorySpace.VMEM),   # pool-folded linear W
            pl.BlockSpec(memory_space=pltpu.MemorySpace.VMEM),   # linear bias column
        ],
        out_specs=pl.BlockSpec(memory_space=pltpu.MemorySpace.VMEM),
        cost_estimate=cost,
    )(x_flat, wcT, bconv, wl_exp, bl_col)
    return out[:C, :B].T           # [B, C] log-probs


def reference_forward(hidden_state, conv_w, conv_b, lin_w, lin_b):
    """Plain-JAX mirror of GliBertClassifierCNN's head (combine_SRLs=False)."""
    B, S, _ = hidden_state.shape
    k = conv_w.shape[-1]
    xp = jnp.pad(hidden_state, ((0, 0), (PAD, PAD), (0, 0)))
    T = S + 2 * PAD - k + 1
    taps = jnp.stack([xp[:, i:i + T, :] for i in range(k)], axis=-1)   # [B,T,H,K]
    y = jnp.einsum('bthk,hk->bt', taps, conv_w[0],
                   precision=jax.lax.Precision.HIGHEST) + conv_b[0]
    y = jnp.tanh(y)
    p = jnp.max(y[:, :2 * (T // 2)].reshape(B, T // 2, 2), axis=-1)    # MaxPool1d(2,2)
    logits = jnp.dot(p, lin_w.T, precision=jax.lax.Precision.HIGHEST) + lin_b
    return jax.nn.log_softmax(logits, axis=-1)


if __name__ == "__main__":
    B, S, C = 2, 200, 3   # S=200 is implied by Linear(105, C) after the conv+pool
    key = jax.random.PRNGKey(0)
    kx, kcw, kcb, klw, klb = jax.random.split(key, 5)

    # synthetic BERT last_hidden_state (backbone out of scope); values rounded
    # to bf16 so the kernel (bf16 MXU operands) and the f32 reference see
    # identical operand values.
    hidden_state = jax.random.normal(kx, (B, S, H), jnp.float32)
    hidden_state = hidden_state.astype(jnp.bfloat16).astype(jnp.float32)

    # Conv1d(768, 1, kernel_size=10, stride=1, padding=10) params (PyTorch layout)
    cbound = 1.0 / (H * K) ** 0.5
    conv_w = jax.random.uniform(kcw, (1, H, K), jnp.float32, -cbound, cbound)
    conv_w = conv_w.astype(jnp.bfloat16).astype(jnp.float32)
    conv_b = jax.random.uniform(kcb, (1,), jnp.float32, -cbound, cbound)

    # Linear(105, num_classes) params (weights bf16-rounded: classifier is bf16 MXU)
    lbound = 1.0 / POOLED ** 0.5
    lin_w = jax.random.uniform(klw, (C, POOLED), jnp.float32, -lbound, lbound)
    lin_w = lin_w.astype(jnp.bfloat16).astype(jnp.float32)
    lin_b = jax.random.uniform(klb, (C,), jnp.float32, -lbound, lbound)

    out = jax.block_until_ready(
        glibert_classifier_cnn(hidden_state, conv_w, conv_b, lin_w, lin_b))
    ref = reference_forward(hidden_state, conv_w, conv_b, lin_w, lin_b)

    assert out.shape == (B, C)
    err = float(jnp.max(jnp.abs(out - ref)))
    assert err < 5e-3, f"mismatch vs reference, max abs err = {err}"
    print("KERNEL_OK")
</pallas_src>

<mosaic_0001>
module attributes {stable_mosaic.version = 11 : i64} {
  func.func @kernel(%arg0: memref<440x768xbf16, #tpu.memory_space<vmem>>, %arg1: memref<768x16xbf16, #tpu.memory_space<vmem>>, %arg2: memref<1x1xf32, #tpu.memory_space<smem>>, %arg3: memref<128x440xbf16, #tpu.memory_space<vmem>>, %arg4: memref<128x1xf32, #tpu.memory_space<vmem>>, %arg5: memref<128x128xf32, #tpu.memory_space<vmem>>) attributes {dimension_semantics = [], scalar_prefetch = 0 : i64, scratch_operands = 0 : i64, tpu.core_type = #tpu.core_type<tc>} {
    %c0 = arith.constant 0 : index
    %c0_0 = arith.constant 0 : index
    %0 = vector.load %arg0[%c0, %c0_0] : memref<440x768xbf16, #tpu.memory_space<vmem>>, vector<440x768xbf16>
    %c0_1 = arith.constant 0 : index
    %c0_2 = arith.constant 0 : index
    %1 = vector.load %arg1[%c0_1, %c0_2] : memref<768x16xbf16, #tpu.memory_space<vmem>>, vector<768x16xbf16>
    %cst = arith.constant dense<0.000000e+00> : vector<440x16xf32>
    %2 = tpu.matmul %0, %1, %cst {dimension_numbers = #tpu.dot_dimension_numbers<[1], [0], [0], [1], [0, 0, 1, 1], [], []>} : vector<440x768xbf16>, vector<768x16xbf16>, vector<440x16xf32> -> vector<440x16xf32>
    %3 = tpu.iota {dimensions = array<i32: 1>} : vector<440x16xi32>
    %c0_i32 = arith.constant 0 : i32
    %4 = vector.broadcast %c0_i32 : i32 to vector<440x16xi32>
    %5 = arith.cmpi eq, %3, %4 : vector<440x16xi32>
    %cst_3 = arith.constant 0.000000e+00 : f32
    %6 = vector.broadcast %cst_3 : f32 to vector<440x16xf32>
    %7 = arith.select %5, %2, %6 : vector<440x16xi1>, vector<440x16xf32>
    %c1_i32 = arith.constant 1 : i32
    %8 = vector.broadcast %c1_i32 : i32 to vector<440x16xi32>
    %9 = arith.cmpi eq, %3, %8 : vector<440x16xi32>
    %c439_i32 = arith.constant 439 : i32
    %10 = tpu.dynamic_rotate %2 by %c439_i32 dim 0 : vector<440x16xf32>, i32 -> vector<440x16xf32>
    %cst_4 = arith.constant 0.000000e+00 : f32
    %11 = vector.broadcast %cst_4 : f32 to vector<440x16xf32>
    %12 = arith.select %9, %10, %11 : vector<440x16xi1>, vector<440x16xf32>
    %13 = arith.addf %7, %12 : vector<440x16xf32>
    %c2_i32 = arith.constant 2 : i32
    %14 = vector.broadcast %c2_i32 : i32 to vector<440x16xi32>
    %15 = arith.cmpi eq, %3, %14 : vector<440x16xi32>
    %c438_i32 = arith.constant 438 : i32
    %16 = tpu.dynamic_rotate %2 by %c438_i32 dim 0 : vector<440x16xf32>, i32 -> vector<440x16xf32>
    %cst_5 = arith.constant 0.000000e+00 : f32
    %17 = vector.broadcast %cst_5 : f32 to vector<440x16xf32>
    %18 = arith.select %15, %16, %17 : vector<440x16xi1>, vector<440x16xf32>
    %19 = arith.addf %13, %18 : vector<440x16xf32>
    %c3_i32 = arith.constant 3 : i32
    %20 = vector.broadcast %c3_i32 : i32 to vector<440x16xi32>
    %21 = arith.cmpi eq, %3, %20 : vector<440x16xi32>
    %c437_i32 = arith.constant 437 : i32
    %22 = tpu.dynamic_rotate %2 by %c437_i32 dim 0 : vector<440x16xf32>, i32 -> vector<440x16xf32>
    %cst_6 = arith.constant 0.000000e+00 : f32
    %23 = vector.broadcast %cst_6 : f32 to vector<440x16xf32>
    %24 = arith.select %21, %22, %23 : vector<440x16xi1>, vector<440x16xf32>
    %25 = arith.addf %19, %24 : vector<440x16xf32>
    %c4_i32 = arith.constant 4 : i32
    %26 = vector.broadcast %c4_i32 : i32 to vector<440x16xi32>
    %27 = arith.cmpi eq, %3, %26 : vector<440x16xi32>
    %c436_i32 = arith.constant 436 : i32
    %28 = tpu.dynamic_rotate %2 by %c436_i32 dim 0 : vector<440x16xf32>, i32 -> vector<440x16xf32>
    %cst_7 = arith.constant 0.000000e+00 : f32
    %29 = vector.broadcast %cst_7 : f32 to vector<440x16xf32>
    %30 = arith.select %27, %28, %29 : vector<440x16xi1>, vector<440x16xf32>
    %31 = arith.addf %25, %30 : vector<440x16xf32>
    %c5_i32 = arith.constant 5 : i32
    %32 = vector.broadcast %c5_i32 : i32 to vector<440x16xi32>
    %33 = arith.cmpi eq, %3, %32 : vector<440x16xi32>
    %c435_i32 = arith.constant 435 : i32
    %34 = tpu.dynamic_rotate %2 by %c435_i32 dim 0 : vector<440x16xf32>, i32 -> vector<440x16xf32>
    %cst_8 = arith.constant 0.000000e+00 : f32
    %35 = vector.broadcast %cst_8 : f32 to vector<440x16xf32>
    %36 = arith.select %33, %34, %35 : vector<440x16xi1>, vector<440x16xf32>
    %37 = arith.addf %31, %36 : vector<440x16xf32>
    %c6_i32 = arith.constant 6 : i32
    %38 = vector.broadcast %c6_i32 : i32 to vector<440x16xi32>
    %39 = arith.cmpi eq, %3, %38 : vector<440x16xi32>
    %c434_i32 = arith.constant 434 : i32
    %40 = tpu.dynamic_rotate %2 by %c434_i32 dim 0 : vector<440x16xf32>, i32 -> vector<440x16xf32>
    %cst_9 = arith.constant 0.000000e+00 : f32
    %41 = vector.broadcast %cst_9 : f32 to vector<440x16xf32>
    %42 = arith.select %39, %40, %41 : vector<440x16xi1>, vector<440x16xf32>
    %43 = arith.addf %37, %42 : vector<440x16xf32>
    %c7_i32 = arith.constant 7 : i32
    %44 = vector.broadcast %c7_i32 : i32 to vector<440x16xi32>
    %45 = arith.cmpi eq, %3, %44 : vector<440x16xi32>
    %c433_i32 = arith.constant 433 : i32
    %46 = tpu.dynamic_rotate %2 by %c433_i32 dim 0 : vector<440x16xf32>, i32 -> vector<440x16xf32>
    %cst_10 = arith.constant 0.000000e+00 : f32
    %47 = vector.broadcast %cst_10 : f32 to vector<440x16xf32>
    %48 = arith.select %45, %46, %47 : vector<440x16xi1>, vector<440x16xf32>
    %49 = arith.addf %43, %48 : vector<440x16xf32>
    %c8_i32 = arith.constant 8 : i32
    %50 = vector.broadcast %c8_i32 : i32 to vector<440x16xi32>
    %51 = arith.cmpi eq, %3, %50 : vector<440x16xi32>
    %c432_i32 = arith.constant 432 : i32
    %52 = tpu.dynamic_rotate %2 by %c432_i32 dim 0 : vector<440x16xf32>, i32 -> vector<440x16xf32>
    %cst_11 = arith.constant 0.000000e+00 : f32
    %53 = vector.broadcast %cst_11 : f32 to vector<440x16xf32>
    %54 = arith.select %51, %52, %53 : vector<440x16xi1>, vector<440x16xf32>
    %55 = arith.addf %49, %54 : vector<440x16xf32>
    %c9_i32 = arith.constant 9 : i32
    %56 = vector.broadcast %c9_i32 : i32 to vector<440x16xi32>
    %57 = arith.cmpi eq, %3, %56 : vector<440x16xi32>
    %c431_i32 = arith.constant 431 : i32
    %58 = tpu.dynamic_rotate %2 by %c431_i32 dim 0 : vector<440x16xf32>, i32 -> vector<440x16xf32>
    %cst_12 = arith.constant 0.000000e+00 : f32
    %59 = vector.broadcast %cst_12 : f32 to vector<440x16xf32>
    %60 = arith.select %57, %58, %59 : vector<440x16xi1>, vector<440x16xf32>
    %61 = arith.addf %55, %60 : vector<440x16xf32>
    %cst_13 = arith.constant dense<0.000000e+00> : vector<440xf32>
    %62 = vector.multi_reduction <add>, %61, %cst_13 [1] : vector<440x16xf32> to vector<440xf32>
    %63 = vector.shape_cast %62 : vector<440xf32> to vector<440x1xf32>
    %c0_14 = arith.constant 0 : index
    %c0_15 = arith.constant 0 : index
    %64 = memref.load %arg2[%c0_14, %c0_15] : memref<1x1xf32, #tpu.memory_space<smem>>
    %65 = vector.broadcast %64 : f32 to vector<440x1xf32>
    %66 = arith.addf %63, %65 : vector<440x1xf32>
    %67 = math.tanh %66 : vector<440x1xf32>
    %c439_i32_16 = arith.constant 439 : i32
    %68 = tpu.dynamic_rotate %67 by %c439_i32_16 dim 0 : vector<440x1xf32>, i32 -> vector<440x1xf32>
    %69 = arith.maximumf %67, %68 : vector<440x1xf32>
    %70 = tpu.iota {dimensions = array<i32: 0>} : vector<440x128xi32>
    %71 = tpu.iota {dimensions = array<i32: 1>} : vector<440x128xi32>
    %c2_i32_17 = arith.constant 2 : i32
    %72 = vector.broadcast %c2_i32_17 : i32 to vector<440x128xi32>
    %73 = arith.cmpi slt, %71, %72 : vector<440x128xi32>
    %c220_i32 = arith.constant 220 : i32
    %74 = vector.broadcast %c220_i32 : i32 to vector<440x128xi32>
    %75 = arith.muli %71, %74 : vector<440x128xi32>
    %76 = arith.cmpi sge, %70, %75 : vector<440x128xi32>
    %77 = arith.andi %73, %76 : vector<440x128xi1>
    %c220_i32_18 = arith.constant 220 : i32
    %78 = vector.broadcast %c220_i32_18 : i32 to vector<440x128xi32>
    %79 = arith.muli %71, %78 : vector<440x128xi32>
    %c220_i32_19 = arith.constant 220 : i32
    %80 = vector.broadcast %c220_i32_19 : i32 to vector<440x128xi32>
    %81 = arith.addi %79, %80 : vector<440x128xi32>
    %82 = arith.cmpi slt, %70, %81 : vector<440x128xi32>
    %83 = arith.andi %77, %82 : vector<440x128xi1>
    %cst_20 = arith.constant 0.000000e+00 : f32
    %84 = vector.shape_cast %69 : vector<440x1xf32> to vector<440x1xf32>
    %85 = vector.broadcast %84 : vector<440x1xf32> to vector<440x128xf32>
    %86 = vector.broadcast %cst_20 : f32 to vector<440x128xf32>
    %87 = arith.select %83, %85, %86 : vector<440x128xi1>, vector<440x128xf32>
    %88 = arith.truncf %87 : vector<440x128xf32> to vector<440x128xbf16>
    %c0_21 = arith.constant 0 : index
    %c0_22 = arith.constant 0 : index
    %89 = vector.load %arg3[%c0_21, %c0_22] : memref<128x440xbf16, #tpu.memory_space<vmem>>, vector<128x440xbf16>
    %cst_23 = arith.constant dense<0.000000e+00> : vector<128x128xf32>
    %90 = tpu.matmul %89, %88, %cst_23 {dimension_numbers = #tpu.dot_dimension_numbers<[1], [0], [0], [1], [0, 0, 1, 1], [], []>} : vector<128x440xbf16>, vector<440x128xbf16>, vector<128x128xf32> -> vector<128x128xf32>
    %c0_24 = arith.constant 0 : index
    %c0_25 = arith.constant 0 : index
    %91 = vector.load %arg4[%c0_24, %c0_25] : memref<128x1xf32, #tpu.memory_space<vmem>>, vector<128x1xf32>
    %92 = vector.broadcast %91 : vector<128x1xf32> to vector<128x128xf32>
    %93 = arith.addf %90, %92 : vector<128x128xf32>
    %94 = tpu.iota {dimensions = array<i32: 0>} : vector<128x128xi32>
    %c3_i32_26 = arith.constant 3 : i32
    %95 = vector.broadcast %c3_i32_26 : i32 to vector<128x128xi32>
    %96 = arith.cmpi slt, %94, %95 : vector<128x128xi32>
    %cst_27 = arith.constant -1.000000e+30 : f32
    %97 = vector.broadcast %cst_27 : f32 to vector<128x128xf32>
    %98 = arith.select %96, %93, %97 : vector<128x128xi1>, vector<128x128xf32>
    %cst_28 = arith.constant dense<0xFF800000> : vector<128xf32>
    %99 = vector.multi_reduction <maximumf>, %98, %cst_28 [0] : vector<128x128xf32> to vector<128xf32>
    %100 = vector.shape_cast %99 : vector<128xf32> to vector<1x128xf32>
    %101 = vector.broadcast %100 : vector<1x128xf32> to vector<128x128xf32>
    %102 = arith.subf %98, %101 : vector<128x128xf32>
    %103 = math.exp %102 : vector<128x128xf32>
    %cst_29 = arith.constant dense<0.000000e+00> : vector<128xf32>
    %104 = vector.multi_reduction <add>, %103, %cst_29 [0] : vector<128x128xf32> to vector<128xf32>
    %105 = vector.shape_cast %104 : vector<128xf32> to vector<1x128xf32>
    %106 = math.log %105 : vector<1x128xf32>
    %107 = vector.broadcast %106 : vector<1x128xf32> to vector<128x128xf32>
    %108 = arith.subf %102, %107 : vector<128x128xf32>
    %c0_30 = arith.constant 0 : index
    %c0_31 = arith.constant 0 : index
    %109 = vector.load %arg5[%c0_30, %c0_31] : memref<128x128xf32, #tpu.memory_space<vmem>>, vector<128x128xf32>
    tpu.vector_store %arg5[%c0_30, %c0_31], %108 {strides = array<i32>} : memref<128x128xf32, #tpu.memory_space<vmem>>, vector<128x128xf32>,
    return
  }
}

</mosaic_0001>

<llo_original>
// kernel: tile.9
$region0: #{tile.9}
  %s0 = inlined_call_operand.vmem [shape: bf16[128,2,220], index: 0, kind: input, shape index: {}]
  %s1 = inlined_call_operand.vmem [shape: bf16[128,440], index: 1, kind: output, shape index: {}]
  $region1: #{tile.9} parent=0
    #allocation0 [shape = 'u8[225280]{0}', space=vmem, size = 0x37000, scoped, tag = 'scoped mem for output reshape']
    #allocation1 [shape = 'u8[229376]{0}', space=vmem, size = 0x38000, scoped, tag = 'scoped mem for input reshape']
    %s3 = ssub.s32 256, 1
    %s4 = scalar_lea.vmem %s0, 220
    %s5 = sshrl.u32 %s3, 1
    %s6 = sor.u32 %s3, %s5
    %s7 = sand.u32 %s6, 85
    %s8 = sshrl.u32 %s7, 1
    %s9 = sor.u32 %s7, %s8
    %s10 = sand.u32 51, %s9
    %s11 = sshrl.u32 %s10, 2
    %s12 = sor.u32 %s10, %s11
    %s13 = sand.u32 15, %s12
    %v14 = vld [vmem:[%s4] sm:%s13]
    %v15 = vunpack.c.l.bf16 %v14
    %v16 = vunpack.c.h.bf16 %v14
    %s17 = scalar_lea.vmem [#allocation1], 440
    %18 = vst [vmem:[%s17] sm:%s3] %v15
    %s19 = scalar_lea.vmem %s0, 216
    %s20 = sshrl.u32 %s3, 1
    %s21 = sor.u32 %s3, %s20
    %s22 = sand.u32 %s21, 85
    %s23 = sshrl.u32 %s22, 1
    %s24 = sor.u32 %s22, %s23
    %s25 = sand.u32 51, %s24
    %s26 = sshrl.u32 %s25, 2
    %s27 = sor.u32 %s25, %s26
    %s28 = sand.u32 15, %s27
    %v29 = vld [vmem:[%s19] sm:%s28]
    %v30 = vunpack.c.l.bf16 %v29
    %v31 = vunpack.c.h.bf16 %v29
    %s32 = scalar_lea.vmem [#allocation1], 432
    %33 = vst [vmem:[%s32] sm:%s3] %v30
    %s34 = scalar_lea.vmem %s0, 212
    %s35 = sshrl.u32 %s3, 1
    %s36 = sor.u32 %s3, %s35
    %s37 = sand.u32 %s36, 85
    %s38 = sshrl.u32 %s37, 1
    %s39 = sor.u32 %s37, %s38
    %s40 = sand.u32 51, %s39
    %s41 = sshrl.u32 %s40, 2
    %s42 = sor.u32 %s40, %s41
    %s43 = sand.u32 15, %s42
    %v44 = vld [vmem:[%s34] sm:%s43]
    %v45 = vunpack.c.l.bf16 %v44
    %v46 = vunpack.c.h.bf16 %v44
    %s47 = scalar_lea.vmem [#allocation1], 424
    %48 = vst [vmem:[%s47] sm:%s3] %v45
    %s49 = scalar_lea.vmem %s0, 208
    %s50 = sshrl.u32 %s3, 1
    %s51 = sor.u32 %s3, %s50
    %s52 = sand.u32 %s51, 85
    %s53 = sshrl.u32 %s52, 1
    %s54 = sor.u32 %s52, %s53
    %s55 = sand.u32 51, %s54
    %s56 = sshrl.u32 %s55, 2
    %s57 = sor.u32 %s55, %s56
    %s58 = sand.u32 15, %s57
    %v59 = vld [vmem:[%s49] sm:%s58]
    %v60 = vunpack.c.l.bf16 %v59
    %v61 = vunpack.c.h.bf16 %v59
    %s62 = scalar_lea.vmem [#allocation1], 416
    %63 = vst [vmem:[%s62] sm:%s3] %v60
    %s64 = scalar_lea.vmem %s0, 204
    %s65 = sshrl.u32 %s3, 1
    %s66 = sor.u32 %s3, %s65
    %s67 = sand.u32 %s66, 85
    %s68 = sshrl.u32 %s67, 1
    %s69 = sor.u32 %s67, %s68
    %s70 = sand.u32 51, %s69
    %s71 = sshrl.u32 %s70, 2
    %s72 = sor.u32 %s70, %s71
    %s73 = sand.u32 15, %s72
    %v74 = vld [vmem:[%s64] sm:%s73]
    %v75 = vunpack.c.l.bf16 %v74
    %v76 = vunpack.c.h.bf16 %v74
    %s77 = scalar_lea.vmem [#allocation1], 408
    %78 = vst [vmem:[%s77] sm:%s3] %v75
    %s79 = scalar_lea.vmem %s0, 200
    %s80 = sshrl.u32 %s3, 1
    %s81 = sor.u32 %s3, %s80
    %s82 = sand.u32 %s81, 85
    %s83 = sshrl.u32 %s82, 1
    %s84 = sor.u32 %s82, %s83
    %s85 = sand.u32 51, %s84
    %s86 = sshrl.u32 %s85, 2
    %s87 = sor.u32 %s85, %s86
    %s88 = sand.u32 15, %s87
    %v89 = vld [vmem:[%s79] sm:%s88]
    %v90 = vunpack.c.l.bf16 %v89
    %v91 = vunpack.c.h.bf16 %v89
    %s92 = scalar_lea.vmem [#allocation1], 400
    %93 = vst [vmem:[%s92] sm:%s3] %v90
    %s94 = scalar_lea.vmem %s0, 196
    %s95 = sshrl.u32 %s3, 1
    %s96 = sor.u32 %s3, %s95
    %s97 = sand.u32 %s96, 85
    %s98 = sshrl.u32 %s97, 1
    %s99 = sor.u32 %s97, %s98
    %s100 = sand.u32 51, %s99
    %s101 = sshrl.u32 %s100, 2
    %s102 = sor.u32 %s100, %s101
    %s103 = sand.u32 15, %s102
    %v104 = vld [vmem:[%s94] sm:%s103]
    %v105 = vunpack.c.l.bf16 %v104
    %v106 = vunpack.c.h.bf16 %v104
    %s107 = scalar_lea.vmem [#allocation1], 392
    %108 = vst [vmem:[%s107] sm:%s3] %v105
    %s109 = scalar_lea.vmem %s0, 192
    %s110 = sshrl.u32 %s3, 1
    %s111 = sor.u32 %s3, %s110
    %s112 = sand.u32 %s111, 85
    %s113 = sshrl.u32 %s112, 1
    %s114 = sor.u32 %s112, %s113
    %s115 = sand.u32 51, %s114
    %s116 = sshrl.u32 %s115, 2
    %s117 = sor.u32 %s115, %s116
    %s118 = sand.u32 15, %s117
    %v119 = vld [vmem:[%s109] sm:%s118]
    %v120 = vunpack.c.l.bf16 %v119
    %v121 = vunpack.c.h.bf16 %v119
    %s122 = scalar_lea.vmem [#allocation1], 384
    %123 = vst [vmem:[%s122] sm:%s3] %v120
    %s124 = scalar_lea.vmem %s0, 188
    %s125 = sshrl.u32 %s3, 1
    %s126 = sor.u32 %s3, %s125
    %s127 = sand.u32 %s126, 85
    %s128 = sshrl.u32 %s127, 1
    %s129 = sor.u32 %s127, %s128
    %s130 = sand.u32 51, %s129
    %s131 = sshrl.u32 %s130, 2
    %s132 = sor.u32 %s130, %s131
    %s133 = sand.u32 15, %s132
    %v134 = vld [vmem:[%s124] sm:%s133]
    %v135 = vunpack.c.l.bf16 %v134
    %v136 = vunpack.c.h.bf16 %v134
    %s137 = scalar_lea.vmem [#allocation1], 376
    %138 = vst [vmem:[%s137] sm:%s3] %v135
    %s139 = scalar_lea.vmem %s0, 184
    %s140 = sshrl.u32 %s3, 1
    %s141 = sor.u32 %s3, %s140
    %s142 = sand.u32 %s141, 85
    %s143 = sshrl.u32 %s142, 1
    %s144 = sor.u32 %s142, %s143
    %s145 = sand.u32 51, %s144
    %s146 = sshrl.u32 %s145, 2
    %s147 = sor.u32 %s145, %s146
    %s148 = sand.u32 15, %s147
    %v149 = vld [vmem:[%s139] sm:%s148]
    %v150 = vunpack.c.l.bf16 %v149
    %v151 = vunpack.c.h.bf16 %v149
    %s152 = scalar_lea.vmem [#allocation1], 368
    %153 = vst [vmem:[%s152] sm:%s3] %v150
    %s154 = scalar_lea.vmem %s0, 180
    %s155 = sshrl.u32 %s3, 1
    %s156 = sor.u32 %s3, %s155
    %s157 = sand.u32 %s156, 85
    %s158 = sshrl.u32 %s157, 1
    %s159 = sor.u32 %s157, %s158
    %s160 = sand.u32 51, %s159
    %s161 = sshrl.u32 %s160, 2
    %s162 = sor.u32 %s160, %s161
    %s163 = sand.u32 15, %s162
    %v164 = vld [vmem:[%s154] sm:%s163]
    %v165 = vunpack.c.l.bf16 %v164
    %v166 = vunpack.c.h.bf16 %v164
    %s167 = scalar_lea.vmem [#allocation1], 360
    %168 = vst [vmem:[%s167] sm:%s3] %v165
    %s169 = scalar_lea.vmem %s0, 176
    %s170 = sshrl.u32 %s3, 1
    %s171 = sor.u32 %s3, %s170
    %s172 = sand.u32 %s171, 85
    %s173 = sshrl.u32 %s172, 1
    %s174 = sor.u32 %s172, %s173
    %s175 = sand.u32 51, %s174
    %s176 = sshrl.u32 %s175, 2
    %s177 = sor.u32 %s175, %s176
    %s178 = sand.u32 15, %s177
    %v179 = vld [vmem:[%s169] sm:%s178]
    %v180 = vunpack.c.l.bf16 %v179
    %v181 = vunpack.c.h.bf16 %v179
    %s182 = scalar_lea.vmem [#allocation1], 352
    %183 = vst [vmem:[%s182] sm:%s3] %v180
    %s184 = scalar_lea.vmem %s0, 172
    %s185 = sshrl.u32 %s3, 1
    %s186 = sor.u32 %s3, %s185
    %s187 = sand.u32 %s186, 85
    %s188 = sshrl.u32 %s187, 1
    %s189 = sor.u32 %s187, %s188
    %s190 = sand.u32 51, %s189
    %s191 = sshrl.u32 %s190, 2
    %s192 = sor.u32 %s190, %s191
    %s193 = sand.u32 15, %s192
    %v194 = vld [vmem:[%s184] sm:%s193]
    %v195 = vunpack.c.l.bf16 %v194
    %v196 = vunpack.c.h.bf16 %v194
    %s197 = scalar_lea.vmem [#allocation1], 344
    %198 = vst [vmem:[%s197] sm:%s3] %v195
    %s199 = scalar_lea.vmem %s0, 168
    %s200 = sshrl.u32 %s3, 1
    %s201 = sor.u32 %s3, %s200
    %s202 = sand.u32 %s201, 85
    %s203 = sshrl.u32 %s202, 1
    %s204 = sor.u32 %s202, %s203
    %s205 = sand.u32 51, %s204
    %s206 = sshrl.u32 %s205, 2
    %s207 = sor.u32 %s205, %s206
    %s208 = sand.u32 15, %s207
    %v209 = vld [vmem:[%s199] sm:%s208]
    %v210 = vunpack.c.l.bf16 %v209
    %v211 = vunpack.c.h.bf16 %v209
    %s212 = scalar_lea.vmem [#allocation1], 336
    %213 = vst [vmem:[%s212] sm:%s3] %v210
    %s214 = scalar_lea.vmem %s0, 164
    %s215 = sshrl.u32 %s3, 1
    %s216 = sor.u32 %s3, %s215
    %s217 = sand.u32 %s216, 85
    %s218 = sshrl.u32 %s217, 1
    %s219 = sor.u32 %s217, %s218
    %s220 = sand.u32 51, %s219
    %s221 = sshrl.u32 %s220, 2
    %s222 = sor.u32 %s220, %s221
    %s223 = sand.u32 15, %s222
    %v224 = vld [vmem:[%s214] sm:%s223]
    %v225 = vunpack.c.l.bf16 %v224
    %v226 = vunpack.c.h.bf16 %v224
    %s227 = scalar_lea.vmem [#allocation1], 328
    %228 = vst [vmem:[%s227] sm:%s3] %v225
    %s229 = scalar_lea.vmem %s0, 160
    %s230 = sshrl.u32 %s3, 1
    %s231 = sor.u32 %s3, %s230
    %s232 = sand.u32 %s231, 85
    %s233 = sshrl.u32 %s232, 1
    %s234 = sor.u32 %s232, %s233
    %s235 = sand.u32 51, %s234
    %s236 = sshrl.u32 %s235, 2
    %s237 = sor.u32 %s235, %s236
    %s238 = sand.u32 15, %s237
    %v239 = vld [vmem:[%s229] sm:%s238]
    %v240 = vunpack.c.l.bf16 %v239
    %v241 = vunpack.c.h.bf16 %v239
    %s242 = scalar_lea.vmem [#allocation1], 320
    %243 = vst [vmem:[%s242] sm:%s3] %v240
    %s244 = scalar_lea.vmem %s0, 156
    %s245 = sshrl.u32 %s3, 1
    %s246 = sor.u32 %s3, %s245
    %s247 = sand.u32 %s246, 85
    %s248 = sshrl.u32 %s247, 1
    %s249 = sor.u32 %s247, %s248
    %s250 = sand.u32 51, %s249
    %s251 = sshrl.u32 %s250, 2
    %s252 = sor.u32 %s250, %s251
    %s253 = sand.u32 15, %s252
    %v254 = vld [vmem:[%s244] sm:%s253]
    %v255 = vunpack.c.l.bf16 %v254
    %v256 = vunpack.c.h.bf16 %v254
    %s257 = scalar_lea.vmem [#allocation1], 312
    %258 = vst [vmem:[%s257] sm:%s3] %v255
    %s259 = scalar_lea.vmem %s0, 152
    %s260 = sshrl.u32 %s3, 1
    %s261 = sor.u32 %s3, %s260
    %s262 = sand.u32 %s261, 85
    %s263 = sshrl.u32 %s262, 1
    %s264 = sor.u32 %s262, %s263
    %s265 = sand.u32 51, %s264
    %s266 = sshrl.u32 %s265, 2
    %s267 = sor.u32 %s265, %s266
    %s268 = sand.u32 15, %s267
    %v269 = vld [vmem:[%s259] sm:%s268]
    %v270 = vunpack.c.l.bf16 %v269
    %v271 = vunpack.c.h.bf16 %v269
    %s272 = scalar_lea.vmem [#allocation1], 304
    %273 = vst [vmem:[%s272] sm:%s3] %v270
    %s274 = scalar_lea.vmem %s0, 148
    %s275 = sshrl.u32 %s3, 1
    %s276 = sor.u32 %s3, %s275
    %s277 = sand.u32 %s276, 85
    %s278 = sshrl.u32 %s277, 1
    %s279 = sor.u32 %s277, %s278
    %s280 = sand.u32 51, %s279
    %s281 = sshrl.u32 %s280, 2
    %s282 = sor.u32 %s280, %s281
    %s283 = sand.u32 15, %s282
    %v284 = vld [vmem:[%s274] sm:%s283]
    %v285 = vunpack.c.l.bf16 %v284
    %v286 = vunpack.c.h.bf16 %v284
    %s287 = scalar_lea.vmem [#allocation1], 296
    %288 = vst [vmem:[%s287] sm:%s3] %v285
    %s289 = scalar_lea.vmem %s0, 144
    %s290 = sshrl.u32 %s3, 1
    %s291 = sor.u32 %s3, %s290
    %s292 = sand.u32 %s291, 85
    %s293 = sshrl.u32 %s292, 1
    %s294 = sor.u32 %s292, %s293
    %s295 = sand.u32 51, %s294
    %s296 = sshrl.u32 %s295, 2
    %s297 = sor.u32 %s295, %s296
    %s298 = sand.u32 15, %s297
    %v299 = vld [vmem:[%s289] sm:%s298]
    %v300 = vunpack.c.l.bf16 %v299
    %v301 = vunpack.c.h.bf16 %v299
    %s302 = scalar_lea.vmem [#allocation1], 288
    %303 = vst [vmem:[%s302] sm:%s3] %v300
    %s304 = scalar_lea.vmem %s0, 140
    %s305 = sshrl.u32 %s3, 1
    %s306 = sor.u32 %s3, %s305
    %s307 = sand.u32 %s306, 85
    %s308 = sshrl.u32 %s307, 1
    %s309 = sor.u32 %s307, %s308
    %s310 = sand.u32 51, %s309
    %s311 = sshrl.u32 %s310, 2
    %s312 = sor.u32 %s310, %s311
    %s313 = sand.u32 15, %s312
    %v314 = vld [vmem:[%s304] sm:%s313]
    %v315 = vunpack.c.l.bf16 %v314
    %v316 = vunpack.c.h.bf16 %v314
    %s317 = scalar_lea.vmem [#allocation1], 280
    %318 = vst [vmem:[%s317] sm:%s3] %v315
    %s319 = scalar_lea.vmem %s0, 136
    %s320 = sshrl.u32 %s3, 1
    %s321 = sor.u32 %s3, %s320
    %s322 = sand.u32 %s321, 85
    %s323 = sshrl.u32 %s322, 1
    %s324 = sor.u32 %s322, %s323
    %s325 = sand.u32 51, %s324
    %s326 = sshrl.u32 %s325, 2
    %s327 = sor.u32 %s325, %s326
    %s328 = sand.u32 15, %s327
    %v329 = vld [vmem:[%s319] sm:%s328]
    %v330 = vunpack.c.l.bf16 %v329
    %v331 = vunpack.c.h.bf16 %v329
    %s332 = scalar_lea.vmem [#allocation1], 272
    %333 = vst [vmem:[%s332] sm:%s3] %v330
    %s334 = scalar_lea.vmem %s0, 132
    %s335 = sshrl.u32 %s3, 1
    %s336 = sor.u32 %s3, %s335
    %s337 = sand.u32 %s336, 85
    %s338 = sshrl.u32 %s337, 1
    %s339 = sor.u32 %s337, %s338
    %s340 = sand.u32 51, %s339
    %s341 = sshrl.u32 %s340, 2
    %s342 = sor.u32 %s340, %s341
    %s343 = sand.u32 15, %s342
    %v344 = vld [vmem:[%s334] sm:%s343]
    %v345 = vunpack.c.l.bf16 %v344
    %v346 = vunpack.c.h.bf16 %v344
    %s347 = scalar_lea.vmem [#allocation1], 264
    %348 = vst [vmem:[%s347] sm:%s3] %v345
    %s349 = scalar_lea.vmem %s0, 128
    %s350 = sshrl.u32 %s3, 1
    %s351 = sor.u32 %s3, %s350
    %s352 = sand.u32 %s351, 85
    %s353 = sshrl.u32 %s352, 1
    %s354 = sor.u32 %s352, %s353
    %s355 = sand.u32 51, %s354
    %s356 = sshrl.u32 %s355, 2
    %s357 = sor.u32 %s355, %s356
    %s358 = sand.u32 15, %s357
    %v359 = vld [vmem:[%s349] sm:%s358]
    %v360 = vunpack.c.l.bf16 %v359
    %v361 = vunpack.c.h.bf16 %v359
    %s362 = scalar_lea.vmem [#allocation1], 256
    %363 = vst [vmem:[%s362] sm:%s3] %v360
    %s364 = scalar_lea.vmem %s0, 124
    %s365 = sshrl.u32 %s3, 1
    %s366 = sor.u32 %s3, %s365
    %s367 = sand.u32 %s366, 85
    %s368 = sshrl.u32 %s367, 1
    %s369 = sor.u32 %s367, %s368
    %s370 = sand.u32 51, %s369
    %s371 = sshrl.u32 %s370, 2
    %s372 = sor.u32 %s370, %s371
    %s373 = sand.u32 15, %s372
    %v374 = vld [vmem:[%s364] sm:%s373]
    %v375 = vunpack.c.l.bf16 %v374
    %v376 = vunpack.c.h.bf16 %v374
    %s377 = scalar_lea.vmem [#allocation1], 248
    %378 = vst [vmem:[%s377] sm:%s3] %v375
    %s379 = scalar_lea.vmem %s0, 120
    %s380 = sshrl.u32 %s3, 1
    %s381 = sor.u32 %s3, %s380
    %s382 = sand.u32 %s381, 85
    %s383 = sshrl.u32 %s382, 1
    %s384 = sor.u32 %s382, %s383
    %s385 = sand.u32 51, %s384
    %s386 = sshrl.u32 %s385, 2
    %s387 = sor.u32 %s385, %s386
    %s388 = sand.u32 15, %s387
    %v389 = vld [vmem:[%s379] sm:%s388]
    %v390 = vunpack.c.l.bf16 %v389
    %v391 = vunpack.c.h.bf16 %v389
    %s392 = scalar_lea.vmem [#allocation1], 240
    %393 = vst [vmem:[%s392] sm:%s3] %v390
    %s394 = scalar_lea.vmem %s0, 116
    %s395 = sshrl.u32 %s3, 1
    %s396 = sor.u32 %s3, %s395
    %s397 = sand.u32 %s396, 85
    %s398 = sshrl.u32 %s397, 1
    %s399 = sor.u32 %s397, %s398
    %s400 = sand.u32 51, %s399
    %s401 = sshrl.u32 %s400, 2
    %s402 = sor.u32 %s400, %s401
    %s403 = sand.u32 15, %s402
    %v404 = vld [vmem:[%s394] sm:%s403]
    %v405 = vunpack.c.l.bf16 %v404
    %v406 = vunpack.c.h.bf16 %v404
    %s407 = scalar_lea.vmem [#allocation1], 232
    %408 = vst [vmem:[%s407] sm:%s3] %v405
    %s409 = scalar_lea.vmem %s0, 112
    %s410 = sshrl.u32 %s3, 1
    %s411 = sor.u32 %s3, %s410
    %s412 = sand.u32 %s411, 85
    %s413 = sshrl.u32 %s412, 1
    %s414 = sor.u32 %s412, %s413
    %s415 = sand.u32 51, %s414
    %s416 = sshrl.u32 %s415, 2
    %s417 = sor.u32 %s415, %s416
    %s418 = sand.u32 15, %s417
    %v419 = vld [vmem:[%s409] sm:%s418]
    %v420 = vunpack.c.l.bf16 %v419
    %v421 = vunpack.c.h.bf16 %v419
    %s422 = scalar_lea.vmem [#allocation1], 224
    %423 = vst [vmem:[%s422] sm:%s3] %v420
    %s424 = scalar_lea.vmem %s0, 108
    %s425 = sshrl.u32 %s3, 1
    %s426 = sor.u32 %s3, %s425
    %s427 = sand.u32 %s426, 85
    %s428 = sshrl.u32 %s427, 1
    %s429 = sor.u32 %s427, %s428
    %s430 = sand.u32 51, %s429
    %s431 = sshrl.u32 %s430, 2
    %s432 = sor.u32 %s430, %s431
    %s433 = sand.u32 15, %s432
    %v434 = vld [vmem:[%s424] sm:%s433]
    %v435 = vunpack.c.l.bf16 %v434
    %v436 = vunpack.c.h.bf16 %v434
    %s437 = scalar_lea.vmem [#allocation1], 216
    %438 = vst [vmem:[%s437] sm:%s3] %v435
    %s439 = scalar_lea.vmem %s0, 104
    %s440 = sshrl.u32 %s3, 1
    %s441 = sor.u32 %s3, %s440
    %s442 = sand.u32 %s441, 85
    %s443 = sshrl.u32 %s442, 1
    %s444 = sor.u32 %s442, %s443
    %s445 = sand.u32 51, %s444
    %s446 = sshrl.u32 %s445, 2
    %s447 = sor.u32 %s445, %s446
    %s448 = sand.u32 15, %s447
    %v449 = vld [vmem:[%s439] sm:%s448]
    %v450 = vunpack.c.l.bf16 %v449
    %v451 = vunpack.c.h.bf16 %v449
    %s452 = scalar_lea.vmem [#allocation1], 208
    %453 = vst [vmem:[%s452] sm:%s3] %v450
    %s454 = scalar_lea.vmem %s0, 100
    %s455 = sshrl.u32 %s3, 1
    %s456 = sor.u32 %s3, %s455
    %s457 = sand.u32 %s456, 85
    %s458 = sshrl.u32 %s457, 1
    %s459 = sor.u32 %s457, %s458
    %s460 = sand.u32 51, %s459
    %s461 = sshrl.u32 %s460, 2
    %s462 = sor.u32 %s460, %s461
    %s463 = sand.u32 15, %s462
    %v464 = vld [vmem:[%s454] sm:%s463]
    %v465 = vunpack.c.l.bf16 %v464
    %v466 = vunpack.c.h.bf16 %v464
    %s467 = scalar_lea.vmem [#allocation1], 200
    %468 = vst [vmem:[%s467] sm:%s3] %v465
    %s469 = scalar_lea.vmem %s0, 96
    %s470 = sshrl.u32 %s3, 1
    %s471 = sor.u32 %s3, %s470
    %s472 = sand.u32 %s471, 85
    %s473 = sshrl.u32 %s472, 1
    %s474 = sor.u32 %s472, %s473
    %s475 = sand.u32 51, %s474
    %s476 = sshrl.u32 %s475, 2
    %s477 = sor.u32 %s475, %s476
    %s478 = sand.u32 15, %s477
    %v479 = vld [vmem:[%s469] sm:%s478]
    %v480 = vunpack.c.l.bf16 %v479
    %v481 = vunpack.c.h.bf16 %v479
    %s482 = scalar_lea.vmem [#allocation1], 192
    %483 = vst [vmem:[%s482] sm:%s3] %v480
    %s484 = scalar_lea.vmem %s0, 92
    %s485 = sshrl.u32 %s3, 1
    %s486 = sor.u32 %s3, %s485
    %s487 = sand.u32 %s486, 85
    %s488 = sshrl.u32 %s487, 1
    %s489 = sor.u32 %s487, %s488
    %s490 = sand.u32 51, %s489
    %s491 = sshrl.u32 %s490, 2
    %s492 = sor.u32 %s490, %s491
    %s493 = sand.u32 15, %s492
    %v494 = vld [vmem:[%s484] sm:%s493]
    %v495 = vunpack.c.l.bf16 %v494
    %v496 = vunpack.c.h.bf16 %v494
    %s497 = scalar_lea.vmem [#allocation1], 184
    %498 = vst [vmem:[%s497] sm:%s3] %v495
    %s499 = scalar_lea.vmem %s0, 88
    %s500 = sshrl.u32 %s3, 1
    %s501 = sor.u32 %s3, %s500
    %s502 = sand.u32 %s501, 85
    %s503 = sshrl.u32 %s502, 1
    %s504 = sor.u32 %s502, %s503
    %s505 = sand.u32 51, %s504
    %s506 = sshrl.u32 %s505, 2
    %s507 = sor.u32 %s505, %s506
    %s508 = sand.u32 15, %s507
    %v509 = vld [vmem:[%s499] sm:%s508]
    %v510 = vunpack.c.l.bf16 %v509
    %v511 = vunpack.c.h.bf16 %v509
    %s512 = scalar_lea.vmem [#allocation1], 176
    %513 = vst [vmem:[%s512] sm:%s3] %v510
    %s514 = scalar_lea.vmem %s0, 84
    %s515 = sshrl.u32 %s3, 1
    %s516 = sor.u32 %s3, %s515
    %s517 = sand.u32 %s516, 85
    %s518 = sshrl.u32 %s517, 1
    %s519 = sor.u32 %s517, %s518
    %s520 = sand.u32 51, %s519
    %s521 = sshrl.u32 %s520, 2
    %s522 = sor.u32 %s520, %s521
    %s523 = sand.u32 15, %s522
    %v524 = vld [vmem:[%s514] sm:%s523]
    %v525 = vunpack.c.l.bf16 %v524
    %v526 = vunpack.c.h.bf16 %v524
    %s527 = scalar_lea.vmem [#allocation1], 168
    %528 = vst [vmem:[%s527] sm:%s3] %v525
    %s529 = scalar_lea.vmem %s0, 80
    %s530 = sshrl.u32 %s3, 1
    %s531 = sor.u32 %s3, %s530
    %s532 = sand.u32 %s531, 85
    %s533 = sshrl.u32 %s532, 1
    %s534 = sor.u32 %s532, %s533
    %s535 = sand.u32 51, %s534
    %s536 = sshrl.u32 %s535, 2
    %s537 = sor.u32 %s535, %s536
    %s538 = sand.u32 15, %s537
    %v539 = vld [vmem:[%s529] sm:%s538]
    %v540 = vunpack.c.l.bf16 %v539
    %v541 = vunpack.c.h.bf16 %v539
    %s542 = scalar_lea.vmem [#allocation1], 160
    %543 = vst [vmem:[%s542] sm:%s3] %v540
    %s544 = scalar_lea.vmem %s0, 76
    %s545 = sshrl.u32 %s3, 1
    %s546 = sor.u32 %s3, %s545
    %s547 = sand.u32 %s546, 85
    %s548 = sshrl.u32 %s547, 1
    %s549 = sor.u32 %s547, %s548
    %s550 = sand.u32 51, %s549
    %s551 = sshrl.u32 %s550, 2
    %s552 = sor.u32 %s550, %s551
    %s553 = sand.u32 15, %s552
    %v554 = vld [vmem:[%s544] sm:%s553]
    %v555 = vunpack.c.l.bf16 %v554
    %v556 = vunpack.c.h.bf16 %v554
    %s557 = scalar_lea.vmem [#allocation1], 152
    %558 = vst [vmem:[%s557] sm:%s3] %v555
    %s559 = scalar_lea.vmem %s0, 72
    %s560 = sshrl.u32 %s3, 1
    %s561 = sor.u32 %s3, %s560
    %s562 = sand.u32 %s561, 85
    %s563 = sshrl.u32 %s562, 1
    %s564 = sor.u32 %s562, %s563
    %s565 = sand.u32 51, %s564
    %s566 = sshrl.u32 %s565, 2
    %s567 = sor.u32 %s565, %s566
    %s568 = sand.u32 15, %s567
    %v569 = vld [vmem:[%s559] sm:%s568]
    %v570 = vunpack.c.l.bf16 %v569
    %v571 = vunpack.c.h.bf16 %v569
    %s572 = scalar_lea.vmem [#allocation1], 144
    %573 = vst [vmem:[%s572] sm:%s3] %v570
    %s574 = scalar_lea.vmem %s0, 68
    %s575 = sshrl.u32 %s3, 1
    %s576 = sor.u32 %s3, %s575
    %s577 = sand.u32 %s576, 85
    %s578 = sshrl.u32 %s577, 1
    %s579 = sor.u32 %s577, %s578
    %s580 = sand.u32 51, %s579
    %s581 = sshrl.u32 %s580, 2
    %s582 = sor.u32 %s580, %s581
    %s583 = sand.u32 15, %s582
    %v584 = vld [vmem:[%s574] sm:%s583]
    %v585 = vunpack.c.l.bf16 %v584
    %v586 = vunpack.c.h.bf16 %v584
    %s587 = scalar_lea.vmem [#allocation1], 136
    %588 = vst [vmem:[%s587] sm:%s3] %v585
    %s589 = scalar_lea.vmem %s0, 64
    %s590 = sshrl.u32 %s3, 1
    %s591 = sor.u32 %s3, %s590
    %s592 = sand.u32 %s591, 85
    %s593 = sshrl.u32 %s592, 1
    %s594 = sor.u32 %s592, %s593
    %s595 = sand.u32 51, %s594
    %s596 = sshrl.u32 %s595, 2
    %s597 = sor.u32 %s595, %s596
    %s598 = sand.u32 15, %s597
    %v599 = vld [vmem:[%s589] sm:%s598]
    %v600 = vunpack.c.l.bf16 %v599
    %v601 = vunpack.c.h.bf16 %v599
    %s602 = scalar_lea.vmem [#allocation1], 128
    %603 = vst [vmem:[%s602] sm:%s3] %v600
    %s604 = scalar_lea.vmem %s0, 60
    %s605 = sshrl.u32 %s3, 1
    %s606 = sor.u32 %s3, %s605
    %s607 = sand.u32 %s606, 85
    %s608 = sshrl.u32 %s607, 1
    %s609 = sor.u32 %s607, %s608
    %s610 = sand.u32 51, %s609
    %s611 = sshrl.u32 %s610, 2
    %s612 = sor.u32 %s610, %s611
    %s613 = sand.u32 15, %s612
    %v614 = vld [vmem:[%s604] sm:%s613]
    %v615 = vunpack.c.l.bf16 %v614
    %v616 = vunpack.c.h.bf16 %v614
    %s617 = scalar_lea.vmem [#allocation1], 120
    %618 = vst [vmem:[%s617] sm:%s3] %v615
    %s619 = scalar_lea.vmem %s0, 56
    %s620 = sshrl.u32 %s3, 1
    %s621 = sor.u32 %s3, %s620
    %s622 = sand.u32 %s621, 85
    %s623 = sshrl.u32 %s622, 1
    %s624 = sor.u32 %s622, %s623
    %s625 = sand.u32 51, %s624
    %s626 = sshrl.u32 %s625, 2
    %s627 = sor.u32 %s625, %s626
    %s628 = sand.u32 15, %s627
    %v629 = vld [vmem:[%s619] sm:%s628]
    %v630 = vunpack.c.l.bf16 %v629
    %v631 = vunpack.c.h.bf16 %v629
    %s632 = scalar_lea.vmem [#allocation1], 112
    %633 = vst [vmem:[%s632] sm:%s3] %v630
    %s634 = scalar_lea.vmem %s0, 52
    %s635 = sshrl.u32 %s3, 1
    %s636 = sor.u32 %s3, %s635
    %s637 = sand.u32 %s636, 85
    %s638 = sshrl.u32 %s637, 1
    %s639 = sor.u32 %s637, %s638
    %s640 = sand.u32 51, %s639
    %s641 = sshrl.u32 %s640, 2
    %s642 = sor.u32 %s640, %s641
    %s643 = sand.u32 15, %s642
    %v644 = vld [vmem:[%s634] sm:%s643]
    %v645 = vunpack.c.l.bf16 %v644
    %v646 = vunpack.c.h.bf16 %v644
    %s647 = scalar_lea.vmem [#allocation1], 104
    %648 = vst [vmem:[%s647] sm:%s3] %v645
    %s649 = scalar_lea.vmem %s0, 48
    %s650 = sshrl.u32 %s3, 1
    %s651 = sor.u32 %s3, %s650
    %s652 = sand.u32 %s651, 85
    %s653 = sshrl.u32 %s652, 1
    %s654 = sor.u32 %s652, %s653
    %s655 = sand.u32 51, %s654
    %s656 = sshrl.u32 %s655, 2
    %s657 = sor.u32 %s655, %s656
    %s658 = sand.u32 15, %s657
    %v659 = vld [vmem:[%s649] sm:%s658]
    %v660 = vunpack.c.l.bf16 %v659
    %v661 = vunpack.c.h.bf16 %v659
    %s662 = scalar_lea.vmem [#allocation1], 96
    %663 = vst [vmem:[%s662] sm:%s3] %v660
    %s664 = scalar_lea.vmem %s0, 44
    %s665 = sshrl.u32 %s3, 1
    %s666 = sor.u32 %s3, %s665
    %s667 = sand.u32 %s666, 85
    %s668 = sshrl.u32 %s667, 1
    %s669 = sor.u32 %s667, %s668
    %s670 = sand.u32 51, %s669
    %s671 = sshrl.u32 %s670, 2
    %s672 = sor.u32 %s670, %s671
    %s673 = sand.u32 15, %s672
    %v674 = vld [vmem:[%s664] sm:%s673]
    %v675 = vunpack.c.l.bf16 %v674
    %v676 = vunpack.c.h.bf16 %v674
    %s677 = scalar_lea.vmem [#allocation1], 88
    %678 = vst [vmem:[%s677] sm:%s3] %v675
    %s679 = scalar_lea.vmem %s0, 40
    %s680 = sshrl.u32 %s3, 1
    %s681 = sor.u32 %s3, %s680
    %s682 = sand.u32 %s681, 85
    %s683 = sshrl.u32 %s682, 1
    %s684 = sor.u32 %s682, %s683
    %s685 = sand.u32 51, %s684
    %s686 = sshrl.u32 %s685, 2
    %s687 = sor.u32 %s685, %s686
    %s688 = sand.u32 15, %s687
    %v689 = vld [vmem:[%s679] sm:%s688]
    %v690 = vunpack.c.l.bf16 %v689
    %v691 = vunpack.c.h.bf16 %v689
    %s692 = scalar_lea.vmem [#allocation1], 80
    %693 = vst [vmem:[%s692] sm:%s3] %v690
    %s694 = scalar_lea.vmem %s0, 36
    %s695 = sshrl.u32 %s3, 1
    %s696 = sor.u32 %s3, %s695
    %s697 = sand.u32 %s696, 85
    %s698 = sshrl.u32 %s697, 1
    %s699 = sor.u32 %s697, %s698
    %s700 = sand.u32 51, %s699
    %s701 = sshrl.u32 %s700, 2
    %s702 = sor.u32 %s700, %s701
    %s703 = sand.u32 15, %s702
    %v704 = vld [vmem:[%s694] sm:%s703]
    %v705 = vunpack.c.l.bf16 %v704
    %v706 = vunpack.c.h.bf16 %v704
    %s707 = scalar_lea.vmem [#allocation1], 72
    %708 = vst [vmem:[%s707] sm:%s3] %v705
    %s709 = scalar_lea.vmem %s0, 32
    %s710 = sshrl.u32 %s3, 1
    %s711 = sor.u32 %s3, %s710
    %s712 = sand.u32 %s711, 85
    %s713 = sshrl.u32 %s712, 1
    %s714 = sor.u32 %s712, %s713
    %s715 = sand.u32 51, %s714
    %s716 = sshrl.u32 %s715, 2
    %s717 = sor.u32 %s715, %s716
    %s718 = sand.u32 15, %s717
    %v719 = vld [vmem:[%s709] sm:%s718]
    %v720 = vunpack.c.l.bf16 %v719
    %v721 = vunpack.c.h.bf16 %v719
    %s722 = scalar_lea.vmem [#allocation1], 64
    %723 = vst [vmem:[%s722] sm:%s3] %v720
    %s724 = scalar_lea.vmem %s0, 28
    %s725 = sshrl.u32 %s3, 1
    %s726 = sor.u32 %s3, %s725
    %s727 = sand.u32 %s726, 85
    %s728 = sshrl.u32 %s727, 1
    %s729 = sor.u32 %s727, %s728
    %s730 = sand.u32 51, %s729
    %s731 = sshrl.u32 %s730, 2
    %s732 = sor.u32 %s730, %s731
    %s733 = sand.u32 15, %s732
    %v734 = vld [vmem:[%s724] sm:%s733]
    %v735 = vunpack.c.l.bf16 %v734
    %v736 = vunpack.c.h.bf16 %v734
    %s737 = scalar_lea.vmem [#allocation1], 56
    %738 = vst [vmem:[%s737] sm:%s3] %v735
    %s739 = scalar_lea.vmem %s0, 24
    %s740 = sshrl.u32 %s3, 1
    %s741 = sor.u32 %s3, %s740
    %s742 = sand.u32 %s741, 85
    %s743 = sshrl.u32 %s742, 1
    %s744 = sor.u32 %s742, %s743
    %s745 = sand.u32 51, %s744
    %s746 = sshrl.u32 %s745, 2
    %s747 = sor.u32 %s745, %s746
    %s748 = sand.u32 15, %s747
    %v749 = vld [vmem:[%s739] sm:%s748]
    %v750 = vunpack.c.l.bf16 %v749
    %v751 = vunpack.c.h.bf16 %v749
    %s752 = scalar_lea.vmem [#allocation1], 48
    %753 = vst [vmem:[%s752] sm:%s3] %v750
    %s754 = scalar_lea.vmem %s0, 20
    %s755 = sshrl.u32 %s3, 1
    %s756 = sor.u32 %s3, %s755
    %s757 = sand.u32 %s756, 85
    %s758 = sshrl.u32 %s757, 1
    %s759 = sor.u32 %s757, %s758
    %s760 = sand.u32 51, %s759
    %s761 = sshrl.u32 %s760, 2
    %s762 = sor.u32 %s760, %s761
    %s763 = sand.u32 15, %s762
    %v764 = vld [vmem:[%s754] sm:%s763]
    %v765 = vunpack.c.l.bf16 %v764
    %v766 = vunpack.c.h.bf16 %v764
    %s767 = scalar_lea.vmem [#allocation1], 40
    %768 = vst [vmem:[%s767] sm:%s3] %v765
    %s769 = scalar_lea.vmem %s0, 16
    %s770 = sshrl.u32 %s3, 1
    %s771 = sor.u32 %s3, %s770
    %s772 = sand.u32 %s771, 85
    %s773 = sshrl.u32 %s772, 1
    %s774 = sor.u32 %s772, %s773
    %s775 = sand.u32 51, %s774
    %s776 = sshrl.u32 %s775, 2
    %s777 = sor.u32 %s775, %s776
    %s778 = sand.u32 15, %s777
    %v779 = vld [vmem:[%s769] sm:%s778]
    %v780 = vunpack.c.l.bf16 %v779
    %v781 = vunpack.c.h.bf16 %v779
    %s782 = scalar_lea.vmem [#allocation1], 32
    %783 = vst [vmem:[%s782] sm:%s3] %v780
    %s784 = scalar_lea.vmem %s0, 12
    %s785 = sshrl.u32 %s3, 1
    %s786 = sor.u32 %s3, %s785
    %s787 = sand.u32 %s786, 85
    %s788 = sshrl.u32 %s787, 1
    %s789 = sor.u32 %s787, %s788
    %s790 = sand.u32 51, %s789
    %s791 = sshrl.u32 %s790, 2
    %s792 = sor.u32 %s790, %s791
    %s793 = sand.u32 15, %s792
    %v794 = vld [vmem:[%s784] sm:%s793]
    %v795 = vunpack.c.l.bf16 %v794
    %v796 = vunpack.c.h.bf16 %v794
    %s797 = scalar_lea.vmem [#allocation1], 24
    %798 = vst [vmem:[%s797] sm:%s3] %v795
    %s799 = scalar_lea.vmem %s0, 8
    %s800 = sshrl.u32 %s3, 1
    %s801 = sor.u32 %s3, %s800
    %s802 = sand.u32 %s801, 85
    %s803 = sshrl.u32 %s802, 1
    %s804 = sor.u32 %s802, %s803
    %s805 = sand.u32 51, %s804
    %s806 = sshrl.u32 %s805, 2
    %s807 = sor.u32 %s805, %s806
    %s808 = sand.u32 15, %s807
    %v809 = vld [vmem:[%s799] sm:%s808]
    %v810 = vunpack.c.l.bf16 %v809
    %v811 = vunpack.c.h.bf16 %v809
    %s812 = scalar_lea.vmem [#allocation1], 16
    %813 = vst [vmem:[%s812] sm:%s3] %v810
    %s814 = scalar_lea.vmem %s0, 4
    %s815 = sshrl.u32 %s3, 1
    %s816 = sor.u32 %s3, %s815
    %s817 = sand.u32 %s816, 85
    %s818 = sshrl.u32 %s817, 1
    %s819 = sor.u32 %s817, %s818
    %s820 = sand.u32 51, %s819
    %s821 = sshrl.u32 %s820, 2
    %s822 = sor.u32 %s820, %s821
    %s823 = sand.u32 15, %s822
    %v824 = vld [vmem:[%s814] sm:%s823]
    %v825 = vunpack.c.l.bf16 %v824
    %v826 = vunpack.c.h.bf16 %v824
    %s827 = scalar_lea.vmem [#allocation1], 8
    %828 = vst [vmem:[%s827] sm:%s3] %v825
    %s829 = sshrl.u32 %s3, 1
    %s830 = sor.u32 %s3, %s829
    %s831 = sand.u32 %s830, 85
    %s832 = sshrl.u32 %s831, 1
    %s833 = sor.u32 %s831, %s832
    %s834 = sand.u32 51, %s833
    %s835 = sshrl.u32 %s834, 2
    %s836 = sor.u32 %s834, %s835
    %s837 = sand.u32 15, %s836
    %v838 = vld [vmem:[%s0] sm:%s837]
    %v839 = vunpack.c.l.bf16 %v838
    %v840 = vunpack.c.h.bf16 %v838
    %841 = vst [vmem:[#allocation1] sm:%s3] %v839
    %v842 = vld [vmem:[#allocation1] sm:$0xff]
    %843 = vst [vmem:[#allocation0] sm:$0xff] %v842
    %s844 = scalar_lea.vmem [#allocation1], 8
    %v845 = vld [vmem:[%s844] sm:$0xff]
    %s846 = scalar_lea.vmem [#allocation0], 8
    %847 = vst [vmem:[%s846] sm:$0xff] %v845
    %s848 = scalar_lea.vmem [#allocation1], 16
    %v849 = vld [vmem:[%s848] sm:$0xff]
    %s850 = scalar_lea.vmem [#allocation0], 16
    %851 = vst [vmem:[%s850] sm:$0xff] %v849
    %s852 = scalar_lea.vmem [#allocation1], 24
    %v853 = vld [vmem:[%s852] sm:$0xff]
    %s854 = scalar_lea.vmem [#allocation0], 24
    %855 = vst [vmem:[%s854] sm:$0xff] %v853
    %s856 = scalar_lea.vmem [#allocation1], 32
    %v857 = vld [vmem:[%s856] sm:$0xff]
    %s858 = scalar_lea.vmem [#allocation0], 32
    %859 = vst [vmem:[%s858] sm:$0xff] %v857
    %s860 = scalar_lea.vmem [#allocation1], 40
    %v861 = vld [vmem:[%s860] sm:$0xff]
    %s862 = scalar_lea.vmem [#allocation0], 40
    %863 = vst [vmem:[%s862] sm:$0xff] %v861
    %s864 = scalar_lea.vmem [#allocation1], 48
    %v865 = vld [vmem:[%s864] sm:$0xff]
    %s866 = scalar_lea.vmem [#allocation0], 48
    %867 = vst [vmem:[%s866] sm:$0xff] %v865
    %s868 = scalar_lea.vmem [#allocation1], 56
    %v869 = vld [vmem:[%s868] sm:$0xff]
    %s870 = scalar_lea.vmem [#allocation0], 56
    %871 = vst [vmem:[%s870] sm:$0xff] %v869
    %s872 = scalar_lea.vmem [#allocation1], 64
    %v873 = vld [vmem:[%s872] sm:$0xff]
    %s874 = scalar_lea.vmem [#allocation0], 64
    %875 = vst [vmem:[%s874] sm:$0xff] %v873
    %s876 = scalar_lea.vmem [#allocation1], 72
    %v877 = vld [vmem:[%s876] sm:$0xff]
    %s878 = scalar_lea.vmem [#allocation0], 72
    %879 = vst [vmem:[%s878] sm:$0xff] %v877
    %s880 = scalar_lea.vmem [#allocation1], 80
    %v881 = vld [vmem:[%s880] sm:$0xff]
    %s882 = scalar_lea.vmem [#allocation0], 80
    %883 = vst [vmem:[%s882] sm:$0xff] %v881
    %s884 = scalar_lea.vmem [#allocation1], 88
    %v885 = vld [vmem:[%s884] sm:$0xff]
    %s886 = scalar_lea.vmem [#allocation0], 88
    %887 = vst [vmem:[%s886] sm:$0xff] %v885
    %s888 = scalar_lea.vmem [#allocation1], 96
    %v889 = vld [vmem:[%s888] sm:$0xff]
    %s890 = scalar_lea.vmem [#allocation0], 96
    %891 = vst [vmem:[%s890] sm:$0xff] %v889
    %s892 = scalar_lea.vmem [#allocation1], 104
    %v893 = vld [vmem:[%s892] sm:$0xff]
    %s894 = scalar_lea.vmem [#allocation0], 104
    %895 = vst [vmem:[%s894] sm:$0xff] %v893
    %s896 = scalar_lea.vmem [#allocation1], 112
    %v897 = vld [vmem:[%s896] sm:$0xff]
    %s898 = scalar_lea.vmem [#allocation0], 112
    %899 = vst [vmem:[%s898] sm:$0xff] %v897
    %s900 = scalar_lea.vmem [#allocation1], 120
    %v901 = vld [vmem:[%s900] sm:$0xff]
    %s902 = scalar_lea.vmem [#allocation0], 120
    %903 = vst [vmem:[%s902] sm:$0xff] %v901
    %s904 = scalar_lea.vmem [#allocation1], 128
    %v905 = vld [vmem:[%s904] sm:$0xff]
    %s906 = scalar_lea.vmem [#allocation0], 128
    %907 = vst [vmem:[%s906] sm:$0xff] %v905
    %s908 = scalar_lea.vmem [#allocation1], 136
    %v909 = vld [vmem:[%s908] sm:$0xff]
    %s910 = scalar_lea.vmem [#allocation0], 136
    %911 = vst [vmem:[%s910] sm:$0xff] %v909
    %s912 = scalar_lea.vmem [#allocation1], 144
    %v913 = vld [vmem:[%s912] sm:$0xff]
    %s914 = scalar_lea.vmem [#allocation0], 144
    %915 = vst [vmem:[%s914] sm:$0xff] %v913
    %s916 = scalar_lea.vmem [#allocation1], 152
    %v917 = vld [vmem:[%s916] sm:$0xff]
    %s918 = scalar_lea.vmem [#allocation0], 152
    %919 = vst [vmem:[%s918] sm:$0xff] %v917
    %s920 = scalar_lea.vmem [#allocation1], 160
    %v921 = vld [vmem:[%s920] sm:$0xff]
    %s922 = scalar_lea.vmem [#allocation0], 160
    %923 = vst [vmem:[%s922] sm:$0xff] %v921
    %s924 = scalar_lea.vmem [#allocation1], 168
    %v925 = vld [vmem:[%s924] sm:$0xff]
    %s926 = scalar_lea.vmem [#allocation0], 168
    %927 = vst [vmem:[%s926] sm:$0xff] %v925
    %s928 = scalar_lea.vmem [#allocation1], 176
    %v929 = vld [vmem:[%s928] sm:$0xff]
    %s930 = scalar_lea.vmem [#allocation0], 176
    %931 = vst [vmem:[%s930] sm:$0xff] %v929
    %s932 = scalar_lea.vmem [#allocation1], 184
    %v933 = vld [vmem:[%s932] sm:$0xff]
    %s934 = scalar_lea.vmem [#allocation0], 184
    %935 = vst [vmem:[%s934] sm:$0xff] %v933
    %s936 = scalar_lea.vmem [#allocation1], 192
    %v937 = vld [vmem:[%s936] sm:$0xff]
    %s938 = scalar_lea.vmem [#allocation0], 192
    %939 = vst [vmem:[%s938] sm:$0xff] %v937
    %s940 = scalar_lea.vmem [#allocation1], 200
    %v941 = vld [vmem:[%s940] sm:$0xff]
    %s942 = scalar_lea.vmem [#allocation0], 200
    %943 = vst [vmem:[%s942] sm:$0xff] %v941
    %s944 = scalar_lea.vmem [#allocation1], 208
    %v945 = vld [vmem:[%s944] sm:$0xff]
    %s946 = scalar_lea.vmem [#allocation0], 208
    %947 = vst [vmem:[%s946] sm:$0xff] %v945
    %s948 = scalar_lea.vmem [#allocation1], 216
    %v949 = vld [vmem:[%s948] sm:$0xf]
    %s950 = scalar_lea.vmem [#allocation0], 216
    %951 = vst [vmem:[%s950] sm:$0xf] %v949
    %s952 = scalar_lea.vmem [#allocation1], 224
    %v953 = vld [vmem:[%s952] sm:$0xff]
    %s954 = scalar_lea.vmem [#allocation0], 220
    %955 = vst [vmem:[%s954] sm:$0xff] %v953
    %s956 = scalar_lea.vmem [#allocation1], 232
    %v957 = vld [vmem:[%s956] sm:$0xff]
    %s958 = scalar_lea.vmem [#allocation0], 228
    %959 = vst [vmem:[%s958] sm:$0xff] %v957
    %s960 = scalar_lea.vmem [#allocation1], 240
    %v961 = vld [vmem:[%s960] sm:$0xff]
    %s962 = scalar_lea.vmem [#allocation0], 236
    %963 = vst [vmem:[%s962] sm:$0xff] %v961
    %s964 = scalar_lea.vmem [#allocation1], 248
    %v965 = vld [vmem:[%s964] sm:$0xff]
    %s966 = scalar_lea.vmem [#allocation0], 244
    %967 = vst [vmem:[%s966] sm:$0xff] %v965
    %s968 = scalar_lea.vmem [#allocation1], 256
    %v969 = vld [vmem:[%s968] sm:$0xff]
    %s970 = scalar_lea.vmem [#allocation0], 252
    %971 = vst [vmem:[%s970] sm:$0xff] %v969
    %s972 = scalar_lea.vmem [#allocation1], 264
    %v973 = vld [vmem:[%s972] sm:$0xff]
    %s974 = scalar_lea.vmem [#allocation0], 260
    %975 = vst [vmem:[%s974] sm:$0xff] %v973
    %s976 = scalar_lea.vmem [#allocation1], 272
    %v977 = vld [vmem:[%s976] sm:$0xff]
    %s978 = scalar_lea.vmem [#allocation0], 268
    %979 = vst [vmem:[%s978] sm:$0xff] %v977
    %s980 = scalar_lea.vmem [#allocation1], 280
    %v981 = vld [vmem:[%s980] sm:$0xff]
    %s982 = scalar_lea.vmem [#allocation0], 276
    %983 = vst [vmem:[%s982] sm:$0xff] %v981
    %s984 = scalar_lea.vmem [#allocation1], 288
    %v985 = vld [vmem:[%s984] sm:$0xff]
    %s986 = scalar_lea.vmem [#allocation0], 284
    %987 = vst [vmem:[%s986] sm:$0xff] %v985
    %s988 = scalar_lea.vmem [#allocation1], 296
    %v989 = vld [vmem:[%s988] sm:$0xff]
    %s990 = scalar_lea.vmem [#allocation0], 292
    %991 = vst [vmem:[%s990] sm:$0xff] %v989
    %s992 = scalar_lea.vmem [#allocation1], 304
    %v993 = vld [vmem:[%s992] sm:$0xff]
    %s994 = scalar_lea.vmem [#allocation0], 300
    %995 = vst [vmem:[%s994] sm:$0xff] %v993
    %s996 = scalar_lea.vmem [#allocation1], 312
    %v997 = vld [vmem:[%s996] sm:$0xff]
    %s998 = scalar_lea.vmem [#allocation0], 308
    %999 = vst [vmem:[%s998] sm:$0xff] %v997
    %s1000 = scalar_lea.vmem [#allocation1], 320
    %v1001 = vld [vmem:[%s1000] sm:$0xff]
    %s1002 = scalar_lea.vmem [#allocation0], 316
    %1003 = vst [vmem:[%s1002] sm:$0xff] %v1001
    %s1004 = scalar_lea.vmem [#allocation1], 328
    %v1005 = vld [vmem:[%s1004] sm:$0xff]
    %s1006 = scalar_lea.vmem [#allocation0], 324
    %1007 = vst [vmem:[%s1006] sm:$0xff] %v1005
    %s1008 = scalar_lea.vmem [#allocation1], 336
    %v1009 = vld [vmem:[%s1008] sm:$0xff]
    %s1010 = scalar_lea.vmem [#allocation0], 332
    %1011 = vst [vmem:[%s1010] sm:$0xff] %v1009
    %s1012 = scalar_lea.vmem [#allocation1], 344
    %v1013 = vld [vmem:[%s1012] sm:$0xff]
    %s1014 = scalar_lea.vmem [#allocation0], 340
    %1015 = vst [vmem:[%s1014] sm:$0xff] %v1013
    %s1016 = scalar_lea.vmem [#allocation1], 352
    %v1017 = vld [vmem:[%s1016] sm:$0xff]
    %s1018 = scalar_lea.vmem [#allocation0], 348
    %1019 = vst [vmem:[%s1018] sm:$0xff] %v1017
    %s1020 = scalar_lea.vmem [#allocation1], 360
    %v1021 = vld [vmem:[%s1020] sm:$0xff]
    %s1022 = scalar_lea.vmem [#allocation0], 356
    %1023 = vst [vmem:[%s1022] sm:$0xff] %v1021
    %s1024 = scalar_lea.vmem [#allocation1], 368
    %v1025 = vld [vmem:[%s1024] sm:$0xff]
    %s1026 = scalar_lea.vmem [#allocation0], 364
    %1027 = vst [vmem:[%s1026] sm:$0xff] %v1025
    %s1028 = scalar_lea.vmem [#allocation1], 376
    %v1029 = vld [vmem:[%s1028] sm:$0xff]
    %s1030 = scalar_lea.vmem [#allocation0], 372
    %1031 = vst [vmem:[%s1030] sm:$0xff] %v1029
    %s1032 = scalar_lea.vmem [#allocation1], 384
    %v1033 = vld [vmem:[%s1032] sm:$0xff]
    %s1034 = scalar_lea.vmem [#allocation0], 380
    %1035 = vst [vmem:[%s1034] sm:$0xff] %v1033
    %s1036 = scalar_lea.vmem [#allocation1], 392
    %v1037 = vld [vmem:[%s1036] sm:$0xff]
    %s1038 = scalar_lea.vmem [#allocation0], 388
    %1039 = vst [vmem:[%s1038] sm:$0xff] %v1037
    %s1040 = scalar_lea.vmem [#allocation1], 400
    %v1041 = vld [vmem:[%s1040] sm:$0xff]
    %s1042 = scalar_lea.vmem [#allocation0], 396
    %1043 = vst [vmem:[%s1042] sm:$0xff] %v1041
    %s1044 = scalar_lea.vmem [#allocation1], 408
    %v1045 = vld [vmem:[%s1044] sm:$0xff]
    %s1046 = scalar_lea.vmem [#allocation0], 404
    %1047 = vst [vmem:[%s1046] sm:$0xff] %v1045
    %s1048 = scalar_lea.vmem [#allocation1], 416
    %v1049 = vld [vmem:[%s1048] sm:$0xff]
    %s1050 = scalar_lea.vmem [#allocation0], 412
    %1051 = vst [vmem:[%s1050] sm:$0xff] %v1049
    %s1052 = scalar_lea.vmem [#allocation1], 424
    %v1053 = vld [vmem:[%s1052] sm:$0xff]
    %s1054 = scalar_lea.vmem [#allocation0], 420
    %1055 = vst [vmem:[%s1054] sm:$0xff] %v1053
    %s1056 = scalar_lea.vmem [#allocation1], 432
    %v1057 = vld [vmem:[%s1056] sm:$0xff]
    %s1058 = scalar_lea.vmem [#allocation0], 428
    %1059 = vst [vmem:[%s1058] sm:$0xff] %v1057
    %s1060 = scalar_lea.vmem [#allocation1], 440
    %v1061 = vld [vmem:[%s1060] sm:$0xf]
    %s1062 = scalar_lea.vmem [#allocation0], 436
    %1063 = vst [vmem:[%s1062] sm:$0xf] %v1061
    %s1065 = ssub.s32 256, 1
    %v1066 = vld [vmem:[#allocation0] sm:%s1065]
    %v1067 = vpack.c.bf16 0.0, %v1066
    %s1069 = ssub.s32 16, 1
    %1070 = vst [vmem:[%s1] sm:%s1069] %v1067
    %s1071 = scalar_lea.vmem [#allocation0], 8
    %v1072 = vld [vmem:[%s1071] sm:%s1065]
    %v1073 = vpack.c.bf16 0.0, %v1072
    %s1075 = ssub.s32 16, 1
    %s1076 = scalar_lea.vmem %s1, 4
    %1077 = vst [vmem:[%s1076] sm:%s1075] %v1073
    %s1078 = scalar_lea.vmem [#allocation0], 16
    %v1079 = vld [vmem:[%s1078] sm:%s1065]
    %v1080 = vpack.c.bf16 0.0, %v1079
    %s1082 = ssub.s32 16, 1
    %s1083 = scalar_lea.vmem %s1, 8
    %1084 = vst [vmem:[%s1083] sm:%s1082] %v1080
    %s1085 = scalar_lea.vmem [#allocation0], 24
    %v1086 = vld [vmem:[%s1085] sm:%s1065]
    %v1087 = vpack.c.bf16 0.0, %v1086
    %s1089 = ssub.s32 16, 1
    %s1090 = scalar_lea.vmem %s1, 12
    %1091 = vst [vmem:[%s1090] sm:%s1089] %v1087
    %s1092 = scalar_lea.vmem [#allocation0], 32
    %v1093 = vld [vmem:[%s1092] sm:%s1065]
    %v1094 = vpack.c.bf16 0.0, %v1093
    %s1096 = ssub.s32 16, 1
    %s1097 = scalar_lea.vmem %s1, 16
    %1098 = vst [vmem:[%s1097] sm:%s1096] %v1094
    %s1099 = scalar_lea.vmem [#allocation0], 40
    %v1100 = vld [vmem:[%s1099] sm:%s1065]
    %v1101 = vpack.c.bf16 0.0, %v1100
    %s1103 = ssub.s32 16, 1
    %s1104 = scalar_lea.vmem %s1, 20
    %1105 = vst [vmem:[%s1104] sm:%s1103] %v1101
    %s1106 = scalar_lea.vmem [#allocation0], 48
    %v1107 = vld [vmem:[%s1106] sm:%s1065]
    %v1108 = vpack.c.bf16 0.0, %v1107
    %s1110 = ssub.s32 16, 1
    %s1111 = scalar_lea.vmem %s1, 24
    %1112 = vst [vmem:[%s1111] sm:%s1110] %v1108
    %s1113 = scalar_lea.vmem [#allocation0], 56
    %v1114 = vld [vmem:[%s1113] sm:%s1065]
    %v1115 = vpack.c.bf16 0.0, %v1114
    %s1117 = ssub.s32 16, 1
    %s1118 = scalar_lea.vmem %s1, 28
    %1119 = vst [vmem:[%s1118] sm:%s1117] %v1115
    %s1120 = scalar_lea.vmem [#allocation0], 64
    %v1121 = vld [vmem:[%s1120] sm:%s1065]
    %v1122 = vpack.c.bf16 0.0, %v1121
    %s1124 = ssub.s32 16, 1
    %s1125 = scalar_lea.vmem %s1, 32
    %1126 = vst [vmem:[%s1125] sm:%s1124] %v1122
    %s1127 = scalar_lea.vmem [#allocation0], 72
    %v1128 = vld [vmem:[%s1127] sm:%s1065]
    %v1129 = vpack.c.bf16 0.0, %v1128
    %s1131 = ssub.s32 16, 1
    %s1132 = scalar_lea.vmem %s1, 36
    %1133 = vst [vmem:[%s1132] sm:%s1131] %v1129
    %s1134 = scalar_lea.vmem [#allocation0], 80
    %v1135 = vld [vmem:[%s1134] sm:%s1065]
    %v1136 = vpack.c.bf16 0.0, %v1135
    %s1138 = ssub.s32 16, 1
    %s1139 = scalar_lea.vmem %s1, 40
    %1140 = vst [vmem:[%s1139] sm:%s1138] %v1136
    %s1141 = scalar_lea.vmem [#allocation0], 88
    %v1142 = vld [vmem:[%s1141] sm:%s1065]
    %v1143 = vpack.c.bf16 0.0, %v1142
    %s1145 = ssub.s32 16, 1
    %s1146 = scalar_lea.vmem %s1, 44
    %1147 = vst [vmem:[%s1146] sm:%s1145] %v1143
    %s1148 = scalar_lea.vmem [#allocation0], 96
    %v1149 = vld [vmem:[%s1148] sm:%s1065]
    %v1150 = vpack.c.bf16 0.0, %v1149
    %s1152 = ssub.s32 16, 1
    %s1153 = scalar_lea.vmem %s1, 48
    %1154 = vst [vmem:[%s1153] sm:%s1152] %v1150
    %s1155 = scalar_lea.vmem [#allocation0], 104
    %v1156 = vld [vmem:[%s1155] sm:%s1065]
    %v1157 = vpack.c.bf16 0.0, %v1156
    %s1159 = ssub.s32 16, 1
    %s1160 = scalar_lea.vmem %s1, 52
    %1161 = vst [vmem:[%s1160] sm:%s1159] %v1157
    %s1162 = scalar_lea.vmem [#allocation0], 112
    %v1163 = vld [vmem:[%s1162] sm:%s1065]
    %v1164 = vpack.c.bf16 0.0, %v1163
    %s1166 = ssub.s32 16, 1
    %s1167 = scalar_lea.vmem %s1, 56
    %1168 = vst [vmem:[%s1167] sm:%s1166] %v1164
    %s1169 = scalar_lea.vmem [#allocation0], 120
    %v1170 = vld [vmem:[%s1169] sm:%s1065]
    %v1171 = vpack.c.bf16 0.0, %v1170
    %s1173 = ssub.s32 16, 1
    %s1174 = scalar_lea.vmem %s1, 60
    %1175 = vst [vmem:[%s1174] sm:%s1173] %v1171
    %s1176 = scalar_lea.vmem [#allocation0], 128
    %v1177 = vld [vmem:[%s1176] sm:%s1065]
    %v1178 = vpack.c.bf16 0.0, %v1177
    %s1180 = ssub.s32 16, 1
    %s1181 = scalar_lea.vmem %s1, 64
    %1182 = vst [vmem:[%s1181] sm:%s1180] %v1178
    %s1183 = scalar_lea.vmem [#allocation0], 136
    %v1184 = vld [vmem:[%s1183] sm:%s1065]
    %v1185 = vpack.c.bf16 0.0, %v1184
    %s1187 = ssub.s32 16, 1
    %s1188 = scalar_lea.vmem %s1, 68
    %1189 = vst [vmem:[%s1188] sm:%s1187] %v1185
    %s1190 = scalar_lea.vmem [#allocation0], 144
    %v1191 = vld [vmem:[%s1190] sm:%s1065]
    %v1192 = vpack.c.bf16 0.0, %v1191
    %s1194 = ssub.s32 16, 1
    %s1195 = scalar_lea.vmem %s1, 72
    %1196 = vst [vmem:[%s1195] sm:%s1194] %v1192
    %s1197 = scalar_lea.vmem [#allocation0], 152
    %v1198 = vld [vmem:[%s1197] sm:%s1065]
    %v1199 = vpack.c.bf16 0.0, %v1198
    %s1201 = ssub.s32 16, 1
    %s1202 = scalar_lea.vmem %s1, 76
    %1203 = vst [vmem:[%s1202] sm:%s1201] %v1199
    %s1204 = scalar_lea.vmem [#allocation0], 160
    %v1205 = vld [vmem:[%s1204] sm:%s1065]
    %v1206 = vpack.c.bf16 0.0, %v1205
    %s1208 = ssub.s32 16, 1
    %s1209 = scalar_lea.vmem %s1, 80
    %1210 = vst [vmem:[%s1209] sm:%s1208] %v1206
    %s1211 = scalar_lea.vmem [#allocation0], 168
    %v1212 = vld [vmem:[%s1211] sm:%s1065]
    %v1213 = vpack.c.bf16 0.0, %v1212
    %s1215 = ssub.s32 16, 1
    %s1216 = scalar_lea.vmem %s1, 84
    %1217 = vst [vmem:[%s1216] sm:%s1215] %v1213
    %s1218 = scalar_lea.vmem [#allocation0], 176
    %v1219 = vld [vmem:[%s1218] sm:%s1065]
    %v1220 = vpack.c.bf16 0.0, %v1219
    %s1222 = ssub.s32 16, 1
    %s1223 = scalar_lea.vmem %s1, 88
    %1224 = vst [vmem:[%s1223] sm:%s1222] %v1220
    %s1225 = scalar_lea.vmem [#allocation0], 184
    %v1226 = vld [vmem:[%s1225] sm:%s1065]
    %v1227 = vpack.c.bf16 0.0, %v1226
    %s1229 = ssub.s32 16, 1
    %s1230 = scalar_lea.vmem %s1, 92
    %1231 = vst [vmem:[%s1230] sm:%s1229] %v1227
    %s1232 = scalar_lea.vmem [#allocation0], 192
    %v1233 = vld [vmem:[%s1232] sm:%s1065]
    %v1234 = vpack.c.bf16 0.0, %v1233
    %s1236 = ssub.s32 16, 1
    %s1237 = scalar_lea.vmem %s1, 96
    %1238 = vst [vmem:[%s1237] sm:%s1236] %v1234
    %s1239 = scalar_lea.vmem [#allocation0], 200
    %v1240 = vld [vmem:[%s1239] sm:%s1065]
    %v1241 = vpack.c.bf16 0.0, %v1240
    %s1243 = ssub.s32 16, 1
    %s1244 = scalar_lea.vmem %s1, 100
    %1245 = vst [vmem:[%s1244] sm:%s1243] %v1241
    %s1246 = scalar_lea.vmem [#allocation0], 208
    %v1247 = vld [vmem:[%s1246] sm:%s1065]
    %v1248 = vpack.c.bf16 0.0, %v1247
    %s1250 = ssub.s32 16, 1
    %s1251 = scalar_lea.vmem %s1, 104
    %1252 = vst [vmem:[%s1251] sm:%s1250] %v1248
    %s1253 = scalar_lea.vmem [#allocation0], 216
    %v1254 = vld [vmem:[%s1253] sm:%s1065]
    %v1255 = vpack.c.bf16 0.0, %v1254
    %s1257 = ssub.s32 16, 1
    %s1258 = scalar_lea.vmem %s1, 108
    %1259 = vst [vmem:[%s1258] sm:%s1257] %v1255
    %s1260 = scalar_lea.vmem [#allocation0], 224
    %v1261 = vld [vmem:[%s1260] sm:%s1065]
    %v1262 = vpack.c.bf16 0.0, %v1261
    %s1264 = ssub.s32 16, 1
    %s1265 = scalar_lea.vmem %s1, 112
    %1266 = vst [vmem:[%s1265] sm:%s1264] %v1262
    %s1267 = scalar_lea.vmem [#allocation0], 232
    %v1268 = vld [vmem:[%s1267] sm:%s1065]
    %v1269 = vpack.c.bf16 0.0, %v1268
    %s1271 = ssub.s32 16, 1
    %s1272 = scalar_lea.vmem %s1, 116
    %1273 = vst [vmem:[%s1272] sm:%s1271] %v1269
    %s1274 = scalar_lea.vmem [#allocation0], 240
    %v1275 = vld [vmem:[%s1274] sm:%s1065]
    %v1276 = vpack.c.bf16 0.0, %v1275
    %s1278 = ssub.s32 16, 1
    %s1279 = scalar_lea.vmem %s1, 120
    %1280 = vst [vmem:[%s1279] sm:%s1278] %v1276
    %s1281 = scalar_lea.vmem [#allocation0], 248
    %v1282 = vld [vmem:[%s1281] sm:%s1065]
    %v1283 = vpack.c.bf16 0.0, %v1282
    %s1285 = ssub.s32 16, 1
    %s1286 = scalar_lea.vmem %s1, 124
    %1287 = vst [vmem:[%s1286] sm:%s1285] %v1283
    %s1288 = scalar_lea.vmem [#allocation0], 256
    %v1289 = vld [vmem:[%s1288] sm:%s1065]
    %v1290 = vpack.c.bf16 0.0, %v1289
    %s1292 = ssub.s32 16, 1
    %s1293 = scalar_lea.vmem %s1, 128
    %1294 = vst [vmem:[%s1293] sm:%s1292] %v1290
    %s1295 = scalar_lea.vmem [#allocation0], 264
    %v1296 = vld [vmem:[%s1295] sm:%s1065]
    %v1297 = vpack.c.bf16 0.0, %v1296
    %s1299 = ssub.s32 16, 1
    %s1300 = scalar_lea.vmem %s1, 132
    %1301 = vst [vmem:[%s1300] sm:%s1299] %v1297
    %s1302 = scalar_lea.vmem [#allocation0], 272
    %v1303 = vld [vmem:[%s1302] sm:%s1065]
    %v1304 = vpack.c.bf16 0.0, %v1303
    %s1306 = ssub.s32 16, 1
    %s1307 = scalar_lea.vmem %s1, 136
    %1308 = vst [vmem:[%s1307] sm:%s1306] %v1304
    %s1309 = scalar_lea.vmem [#allocation0], 280
    %v1310 = vld [vmem:[%s1309] sm:%s1065]
    %v1311 = vpack.c.bf16 0.0, %v1310
    %s1313 = ssub.s32 16, 1
    %s1314 = scalar_lea.vmem %s1, 140
    %1315 = vst [vmem:[%s1314] sm:%s1313] %v1311
    %s1316 = scalar_lea.vmem [#allocation0], 288
    %v1317 = vld [vmem:[%s1316] sm:%s1065]
    %v1318 = vpack.c.bf16 0.0, %v1317
    %s1320 = ssub.s32 16, 1
    %s1321 = scalar_lea.vmem %s1, 144
    %1322 = vst [vmem:[%s1321] sm:%s1320] %v1318
    %s1323 = scalar_lea.vmem [#allocation0], 296
    %v1324 = vld [vmem:[%s1323] sm:%s1065]
    %v1325 = vpack.c.bf16 0.0, %v1324
    %s1327 = ssub.s32 16, 1
    %s1328 = scalar_lea.vmem %s1, 148
    %1329 = vst [vmem:[%s1328] sm:%s1327] %v1325
    %s1330 = scalar_lea.vmem [#allocation0], 304
    %v1331 = vld [vmem:[%s1330] sm:%s1065]
    %v1332 = vpack.c.bf16 0.0, %v1331
    %s1334 = ssub.s32 16, 1
    %s1335 = scalar_lea.vmem %s1, 152
    %1336 = vst [vmem:[%s1335] sm:%s1334] %v1332
    %s1337 = scalar_lea.vmem [#allocation0], 312
    %v1338 = vld [vmem:[%s1337] sm:%s1065]
    %v1339 = vpack.c.bf16 0.0, %v1338
    %s1341 = ssub.s32 16, 1
    %s1342 = scalar_lea.vmem %s1, 156
    %1343 = vst [vmem:[%s1342] sm:%s1341] %v1339
    %s1344 = scalar_lea.vmem [#allocation0], 320
    %v1345 = vld [vmem:[%s1344] sm:%s1065]
    %v1346 = vpack.c.bf16 0.0, %v1345
    %s1348 = ssub.s32 16, 1
    %s1349 = scalar_lea.vmem %s1, 160
    %1350 = vst [vmem:[%s1349] sm:%s1348] %v1346
    %s1351 = scalar_lea.vmem [#allocation0], 328
    %v1352 = vld [vmem:[%s1351] sm:%s1065]
    %v1353 = vpack.c.bf16 0.0, %v1352
    %s1355 = ssub.s32 16, 1
    %s1356 = scalar_lea.vmem %s1, 164
    %1357 = vst [vmem:[%s1356] sm:%s1355] %v1353
    %s1358 = scalar_lea.vmem [#allocation0], 336
    %v1359 = vld [vmem:[%s1358] sm:%s1065]
    %v1360 = vpack.c.bf16 0.0, %v1359
    %s1362 = ssub.s32 16, 1
    %s1363 = scalar_lea.vmem %s1, 168
    %1364 = vst [vmem:[%s1363] sm:%s1362] %v1360
    %s1365 = scalar_lea.vmem [#allocation0], 344
    %v1366 = vld [vmem:[%s1365] sm:%s1065]
    %v1367 = vpack.c.bf16 0.0, %v1366
    %s1369 = ssub.s32 16, 1
    %s1370 = scalar_lea.vmem %s1, 172
    %1371 = vst [vmem:[%s1370] sm:%s1369] %v1367
    %s1372 = scalar_lea.vmem [#allocation0], 352
    %v1373 = vld [vmem:[%s1372] sm:%s1065]
    %v1374 = vpack.c.bf16 0.0, %v1373
    %s1376 = ssub.s32 16, 1
    %s1377 = scalar_lea.vmem %s1, 176
    %1378 = vst [vmem:[%s1377] sm:%s1376] %v1374
    %s1379 = scalar_lea.vmem [#allocation0], 360
    %v1380 = vld [vmem:[%s1379] sm:%s1065]
    %v1381 = vpack.c.bf16 0.0, %v1380
    %s1383 = ssub.s32 16, 1
    %s1384 = scalar_lea.vmem %s1, 180
    %1385 = vst [vmem:[%s1384] sm:%s1383] %v1381
    %s1386 = scalar_lea.vmem [#allocation0], 368
    %v1387 = vld [vmem:[%s1386] sm:%s1065]
    %v1388 = vpack.c.bf16 0.0, %v1387
    %s1390 = ssub.s32 16, 1
    %s1391 = scalar_lea.vmem %s1, 184
    %1392 = vst [vmem:[%s1391] sm:%s1390] %v1388
    %s1393 = scalar_lea.vmem [#allocation0], 376
    %v1394 = vld [vmem:[%s1393] sm:%s1065]
    %v1395 = vpack.c.bf16 0.0, %v1394
    %s1397 = ssub.s32 16, 1
    %s1398 = scalar_lea.vmem %s1, 188
    %1399 = vst [vmem:[%s1398] sm:%s1397] %v1395
    %s1400 = scalar_lea.vmem [#allocation0], 384
    %v1401 = vld [vmem:[%s1400] sm:%s1065]
    %v1402 = vpack.c.bf16 0.0, %v1401
    %s1404 = ssub.s32 16, 1
    %s1405 = scalar_lea.vmem %s1, 192
    %1406 = vst [vmem:[%s1405] sm:%s1404] %v1402
    %s1407 = scalar_lea.vmem [#allocation0], 392
    %v1408 = vld [vmem:[%s1407] sm:%s1065]
    %v1409 = vpack.c.bf16 0.0, %v1408
    %s1411 = ssub.s32 16, 1
    %s1412 = scalar_lea.vmem %s1, 196
    %1413 = vst [vmem:[%s1412] sm:%s1411] %v1409
    %s1414 = scalar_lea.vmem [#allocation0], 400
    %v1415 = vld [vmem:[%s1414] sm:%s1065]
    %v1416 = vpack.c.bf16 0.0, %v1415
    %s1418 = ssub.s32 16, 1
    %s1419 = scalar_lea.vmem %s1, 200
    %1420 = vst [vmem:[%s1419] sm:%s1418] %v1416
    %s1421 = scalar_lea.vmem [#allocation0], 408
    %v1422 = vld [vmem:[%s1421] sm:%s1065]
    %v1423 = vpack.c.bf16 0.0, %v1422
    %s1425 = ssub.s32 16, 1
    %s1426 = scalar_lea.vmem %s1, 204
    %1427 = vst [vmem:[%s1426] sm:%s1425] %v1423
    %s1428 = scalar_lea.vmem [#allocation0], 416
    %v1429 = vld [vmem:[%s1428] sm:%s1065]
    %v1430 = vpack.c.bf16 0.0, %v1429
    %s1432 = ssub.s32 16, 1
    %s1433 = scalar_lea.vmem %s1, 208
    %1434 = vst [vmem:[%s1433] sm:%s1432] %v1430
    %s1435 = scalar_lea.vmem [#allocation0], 424
    %v1436 = vld [vmem:[%s1435] sm:%s1065]
    %v1437 = vpack.c.bf16 0.0, %v1436
    %s1439 = ssub.s32 16, 1
    %s1440 = scalar_lea.vmem %s1, 212
    %1441 = vst [vmem:[%s1440] sm:%s1439] %v1437
    %s1442 = scalar_lea.vmem [#allocation0], 432
    %v1443 = vld [vmem:[%s1442] sm:%s1065]
    %v1444 = vpack.c.bf16 0.0, %v1443
    %s1446 = ssub.s32 16, 1
    %s1447 = scalar_lea.vmem %s1, 216
    %1448 = vst [vmem:[%s1447] sm:%s1446] %v1444

// kernel: glibert_classifier_cnn.1
$region0: #{glibert_classifier_cnn.1}
  #allocation0 [shape = 'u32[]', space=smem, size = 0x4, offset = 0x4, fixed_abs, tag = 'smem constant byte address 0x4 - core index']
  #allocation1 [shape = 'u32[72,128]{1,0:T(1,128)}', space=vmem, size = 0x9000, scoped, tag = 'internal scratch']
  #allocation2 [shape = 'f32[1,1]{1,0:T(1,128)S(6)}', space=smem, size = 0x200, scoped, tag = 'scoped memory for glibert_classifier_cnn.1']
  %s0 = inlined_call_operand.vmem [shape: bf16[440,768], index: 0, kind: input, shape index: {}]
  %s1 = inlined_call_operand.vmem [shape: bf16[768,16], index: 1, kind: input, shape index: {}]
  %s2 = inlined_call_operand.<no memory space> [shape: f32[1,1], index: 2, kind: input, shape index: {}]
  %s3 = inlined_call_operand.vmem [shape: bf16[128,440], index: 3, kind: input, shape index: {}]
  %s4 = inlined_call_operand.vmem [shape: f32[128,1], index: 4, kind: input, shape index: {}]
  %s5 = inlined_call_operand.vmem [shape: f32[128,128], index: 5, kind: output, shape index: {}]
  %s6 = sld [smem:[#allocation0]]
  $region30: #{glibert_classifier_cnn.1} parent=0
    _
  %s8 = ssub.s32 1, %s6
  %s9 = scalar_select 0, %s8, %s6
  %10 = sst [smem:[#allocation2]] %s2
  // Predicated region
  $region2: #{glibert_classifier_cnn.1} parent=0 // pred_check
    _
  $region3: #{glibert_classifier_cnn.1} parent=0 // pred_check_branch
    %12 = sbr.rel (0) target = $region5
  $region4: #{glibert_classifier_cnn.1} parent=0 // pred_region
    _
  $region5: #{glibert_classifier_cnn.1} parent=0 // pred_fallthru
    _
  // Predicated region
  $region6: #{glibert_classifier_cnn.1} parent=0 // pred_check
    _
  $region7: #{glibert_classifier_cnn.1} parent=0 // pred_check_branch
    %14 = sbr.rel (0) target = $region9
  $region8: #{glibert_classifier_cnn.1} parent=0 // pred_region
    _
  $region9: #{glibert_classifier_cnn.1} parent=0 // pred_fallthru
    _
  // Predicated region
  $region10: #{glibert_classifier_cnn.1} parent=0 // pred_check
    _
  $region11: #{glibert_classifier_cnn.1} parent=0 // pred_check_branch
    %16 = sbr.rel (0) target = $region13
  $region12: #{glibert_classifier_cnn.1} parent=0 // pred_region
    _
  $region13: #{glibert_classifier_cnn.1} parent=0 // pred_fallthru
    _
  // Predicated region
  $region14: #{glibert_classifier_cnn.1} parent=0 // pred_check
    _
  $region15: #{glibert_classifier_cnn.1} parent=0 // pred_check_branch
    %18 = sbr.rel (0) target = $region17
  $region16: #{glibert_classifier_cnn.1} parent=0 // pred_region
    _
  $region17: #{glibert_classifier_cnn.1} parent=0 // pred_fallthru
    _
  // Predicated region
  $region18: #{glibert_classifier_cnn.1} parent=0 // pred_check
    _
  $region19: #{glibert_classifier_cnn.1} parent=0 // pred_check_branch
    %20 = sbr.rel (0) target = $region21
  $region20: #{glibert_classifier_cnn.1} parent=0 // pred_region
    _
  $region21: #{glibert_classifier_cnn.1} parent=0 // pred_fallthru
    _
  %v22 = vld [vmem:[%s0] sm:$0xff]
  %v23 = vld [vmem:[%s0 + $0x8] sm:$0xff]
  %v24 = vld [vmem:[%s0 + $0x10] sm:$0xff]
  %v25 = vld [vmem:[%s0 + $0x18] sm:$0xff]
  %v26 = vld [vmem:[%s0 + $0x20] sm:$0xff]
  %v27 = vld [vmem:[%s0 + $0x28] sm:$0xff]
  %v28 = vld [vmem:[%s0 + $0x30] sm:$0xff]
  %v29 = vld [vmem:[%s0 + $0x38] sm:$0xff]
  %v30 = vld [vmem:[%s0 + $0x40] sm:$0xff]
  %v31 = vld [vmem:[%s0 + $0x48] sm:$0xff]
  %v32 = vld [vmem:[%s0 + $0x50] sm:$0xff]
  %v33 = vld [vmem:[%s0 + $0x58] sm:$0xff]
  %v34 = vld [vmem:[%s0 + $0x60] sm:$0xff]
  %v35 = vld [vmem:[%s0 + $0x68] sm:$0xff]
  %v36 = vld [vmem:[%s0 + $0x70] sm:$0xff]
  %v37 = vld [vmem:[%s0 + $0x78] sm:$0xff]
  %v38 = vld [vmem:[%s0 + $0x80] sm:$0xff]
  %v39 = vld [vmem:[%s0 + $0x88] sm:$0xff]
  %v40 = vld [vmem:[%s0 + $0x90] sm:$0xff]
  %v41 = vld [vmem:[%s0 + $0x98] sm:$0xff]
  %v42 = vld [vmem:[%s0 + $0xa0] sm:$0xff]
  %v43 = vld [vmem:[%s0 + $0xa8] sm:$0xff]
  %v44 = vld [vmem:[%s0 + $0xb0] sm:$0xff]
  %v45 = vld [vmem:[%s0 + $0xb8] sm:$0xff]
  %v46 = vld [vmem:[%s0 + $0xc0] sm:$0xff]
  %v47 = vld [vmem:[%s0 + $0xc8] sm:$0xff]
  %v48 = vld [vmem:[%s0 + $0xd0] sm:$0xff]
  %v49 = vld [vmem:[%s0 + $0xd8] sm:$0xff]
  %v50 = vld [vmem:[%s0 + $0xe0] sm:$0xff]
  %v51 = vld [vmem:[%s0 + $0xe8] sm:$0xff]
  %v52 = vld [vmem:[%s0 + $0xf0] sm:$0xff]
  %v53 = vld [vmem:[%s0 + $0xf8] sm:$0xff]
  %v54 = vld [vmem:[%s0 + $0x100] sm:$0xff]
  %v55 = vld [vmem:[%s0 + $0x108] sm:$0xff]
  %v56 = vld [vmem:[%s0 + $0x110] sm:$0xff]
  %v57 = vld [vmem:[%s0 + $0x118] sm:$0xff]
  %v58 = vld [vmem:[%s0 + $0x120] sm:$0xff]
  %v59 = vld [vmem:[%s0 + $0x128] sm:$0xff]
  %v60 = vld [vmem:[%s0 + $0x130] sm:$0xff]
  %v61 = vld [vmem:[%s0 + $0x138] sm:$0xff]
  %v62 = vld [vmem:[%s0 + $0x140] sm:$0xff]
  %v63 = vld [vmem:[%s0 + $0x148] sm:$0xff]
  %v64 = vld [vmem:[%s0 + $0x150] sm:$0xff]
  %v65 = vld [vmem:[%s0 + $0x158] sm:$0xff]
  %v66 = vld [vmem:[%s0 + $0x160] sm:$0xff]
  %v67 = vld [vmem:[%s0 + $0x168] sm:$0xff]
  %v68 = vld [vmem:[%s0 + $0x170] sm:$0xff]
  %v69 = vld [vmem:[%s0 + $0x178] sm:$0xff]
  %v70 = vld [vmem:[%s0 + $0x180] sm:$0xff]
  %v71 = vld [vmem:[%s0 + $0x188] sm:$0xff]
  %v72 = vld [vmem:[%s0 + $0x190] sm:$0xff]
  %v73 = vld [vmem:[%s0 + $0x198] sm:$0xff]
  %v74 = vld [vmem:[%s0 + $0x1a0] sm:$0xff]
  %v75 = vld [vmem:[%s0 + $0x1a8] sm:$0xff]
  %v76 = vld [vmem:[%s0 + $0x1b0] sm:$0xff]
  %v77 = vld [vmem:[%s0 + $0x1b8] sm:$0xff]
  %v78 = vld [vmem:[%s0 + $0x1c0] sm:$0xff]
  %v79 = vld [vmem:[%s0 + $0x1c8] sm:$0xff]
  %v80 = vld [vmem:[%s0 + $0x1d0] sm:$0xff]
  %v81 = vld [vmem:[%s0 + $0x1d8] sm:$0xff]
  %v82 = vld [vmem:[%s0 + $0x1e0] sm:$0xff]
  %v83 = vld [vmem:[%s0 + $0x1e8] sm:$0xff]
  %v84 = vld [vmem:[%s0 + $0x1f0] sm:$0xff]
  %v85 = vld [vmem:[%s0 + $0x1f8] sm:$0xff]
  %v86 = vld [vmem:[%s0 + $0x200] sm:$0xff]
  %v87 = vld [vmem:[%s0 + $0x208] sm:$0xff]
  %v88 = vld [vmem:[%s0 + $0x210] sm:$0xff]
  %v89 = vld [vmem:[%s0 + $0x218] sm:$0xff]
  %v90 = vld [vmem:[%s0 + $0x220] sm:$0xff]
  %v91 = vld [vmem:[%s0 + $0x228] sm:$0xff]
  %v92 = vld [vmem:[%s0 + $0x230] sm:$0xff]
  %v93 = vld [vmem:[%s0 + $0x238] sm:$0xff]
  %v94 = vld [vmem:[%s0 + $0x240] sm:$0xff]
  %v95 = vld [vmem:[%s0 + $0x248] sm:$0xff]
  %v96 = vld [vmem:[%s0 + $0x250] sm:$0xff]
  %v97 = vld [vmem:[%s0 + $0x258] sm:$0xff]
  %v98 = vld [vmem:[%s0 + $0x260] sm:$0xff]
  %v99 = vld [vmem:[%s0 + $0x268] sm:$0xff]
  %v100 = vld [vmem:[%s0 + $0x270] sm:$0xff]
  %v101 = vld [vmem:[%s0 + $0x278] sm:$0xff]
  %v102 = vld [vmem:[%s0 + $0x280] sm:$0xff]
  %v103 = vld [vmem:[%s0 + $0x288] sm:$0xff]
  %v104 = vld [vmem:[%s0 + $0x290] sm:$0xff]
  %v105 = vld [vmem:[%s0 + $0x298] sm:$0xff]
  %v106 = vld [vmem:[%s0 + $0x2a0] sm:$0xff]
  %v107 = vld [vmem:[%s0 + $0x2a8] sm:$0xff]
  %v108 = vld [vmem:[%s0 + $0x2b0] sm:$0xff]
  %v109 = vld [vmem:[%s0 + $0x2b8] sm:$0xff]
  %v110 = vld [vmem:[%s0 + $0x2c0] sm:$0xff]
  %v111 = vld [vmem:[%s0 + $0x2c8] sm:$0xff]
  %v112 = vld [vmem:[%s0 + $0x2d0] sm:$0xff]
  %v113 = vld [vmem:[%s0 + $0x2d8] sm:$0xff]
  %v114 = vld [vmem:[%s0 + $0x2e0] sm:$0xff]
  %v115 = vld [vmem:[%s0 + $0x2e8] sm:$0xff]
  %v116 = vld [vmem:[%s0 + $0x2f0] sm:$0xff]
  %v117 = vld [vmem:[%s0 + $0x2f8] sm:$0xff]
  %v118 = vld [vmem:[%s0 + $0x300] sm:$0xff]
  %v119 = vld [vmem:[%s0 + $0x308] sm:$0xff]
  %v120 = vld [vmem:[%s0 + $0x310] sm:$0xff]
  %v121 = vld [vmem:[%s0 + $0x318] sm:$0xff]
  %v122 = vld [vmem:[%s0 + $0x320] sm:$0xff]
  %v123 = vld [vmem:[%s0 + $0x328] sm:$0xff]
  %v124 = vld [vmem:[%s0 + $0x330] sm:$0xff]
  %v125 = vld [vmem:[%s0 + $0x338] sm:$0xff]
  %v126 = vld [vmem:[%s0 + $0x340] sm:$0xff]
  %v127 = vld [vmem:[%s0 + $0x348] sm:$0xff]
  %v128 = vld [vmem:[%s0 + $0x350] sm:$0xff]
  %v129 = vld [vmem:[%s0 + $0x358] sm:$0xff]
  %v130 = vld [vmem:[%s0 + $0x360] sm:$0xff]
  %v131 = vld [vmem:[%s0 + $0x368] sm:$0xff]
  %v132 = vld [vmem:[%s0 + $0x370] sm:$0xff]
  %v133 = vld [vmem:[%s0 + $0x378] sm:$0xff]
  %v134 = vld [vmem:[%s0 + $0x380] sm:$0xff]
  %v135 = vld [vmem:[%s0 + $0x388] sm:$0xff]
  %v136 = vld [vmem:[%s0 + $0x390] sm:$0xff]
  %v137 = vld [vmem:[%s0 + $0x398] sm:$0xff]
  %v138 = vld [vmem:[%s0 + $0x3a0] sm:$0xff]
  %v139 = vld [vmem:[%s0 + $0x3a8] sm:$0xff]
  %v140 = vld [vmem:[%s0 + $0x3b0] sm:$0xff]
  %v141 = vld [vmem:[%s0 + $0x3b8] sm:$0xff]
  %v142 = vld [vmem:[%s0 + $0x3c0] sm:$0xff]
  %v143 = vld [vmem:[%s0 + $0x3c8] sm:$0xff]
  %v144 = vld [vmem:[%s0 + $0x3d0] sm:$0xff]
  %v145 = vld [vmem:[%s0 + $0x3d8] sm:$0xff]
  %v146 = vld [vmem:[%s0 + $0x3e0] sm:$0xff]
  %v147 = vld [vmem:[%s0 + $0x3e8] sm:$0xff]
  %v148 = vld [vmem:[%s0 + $0x3f0] sm:$0xff]
  %v149 = vld [vmem:[%s0 + $0x3f8] sm:$0xff]
  %v150 = vld [vmem:[%s0 + $0x400] sm:$0xff]
  %v151 = vld [vmem:[%s0 + $0x408] sm:$0xff]
  %v152 = vld [vmem:[%s0 + $0x410] sm:$0xff]
  %v153 = vld [vmem:[%s0 + $0x418] sm:$0xff]
  %v154 = vld [vmem:[%s0 + $0x420] sm:$0xff]
  %v155 = vld [vmem:[%s0 + $0x428] sm:$0xff]
  %v156 = vld [vmem:[%s0 + $0x430] sm:$0xff]
  %v157 = vld [vmem:[%s0 + $0x438] sm:$0xff]
  %v158 = vld [vmem:[%s0 + $0x440] sm:$0xff]
  %v159 = vld [vmem:[%s0 + $0x448] sm:$0xff]
  %v160 = vld [vmem:[%s0 + $0x450] sm:$0xff]
  %v161 = vld [vmem:[%s0 + $0x458] sm:$0xff]
  %v162 = vld [vmem:[%s0 + $0x460] sm:$0xff]
  %v163 = vld [vmem:[%s0 + $0x468] sm:$0xff]
  %v164 = vld [vmem:[%s0 + $0x470] sm:$0xff]
  %v165 = vld [vmem:[%s0 + $0x478] sm:$0xff]
  %v166 = vld [vmem:[%s0 + $0x480] sm:$0xff]
  %v167 = vld [vmem:[%s0 + $0x488] sm:$0xff]
  %v168 = vld [vmem:[%s0 + $0x490] sm:$0xff]
  %v169 = vld [vmem:[%s0 + $0x498] sm:$0xff]
  %v170 = vld [vmem:[%s0 + $0x4a0] sm:$0xff]
  %v171 = vld [vmem:[%s0 + $0x4a8] sm:$0xff]
  %v172 = vld [vmem:[%s0 + $0x4b0] sm:$0xff]
  %v173 = vld [vmem:[%s0 + $0x4b8] sm:$0xff]
  %v174 = vld [vmem:[%s0 + $0x4c0] sm:$0xff]
  %v175 = vld [vmem:[%s0 + $0x4c8] sm:$0xff]
  %v176 = vld [vmem:[%s0 + $0x4d0] sm:$0xff]
  %v177 = vld [vmem:[%s0 + $0x4d8] sm:$0xff]
  %v178 = vld [vmem:[%s0 + $0x4e0] sm:$0xff]
  %v179 = vld [vmem:[%s0 + $0x4e8] sm:$0xff]
  %v180 = vld [vmem:[%s0 + $0x4f0] sm:$0xff]
  %v181 = vld [vmem:[%s0 + $0x4f8] sm:$0xff]
  %v182 = vld [vmem:[%s0 + $0x500] sm:$0xff]
  %v183 = vld [vmem:[%s0 + $0x508] sm:$0xff]
  %v184 = vld [vmem:[%s0 + $0x510] sm:$0xff]
  %v185 = vld [vmem:[%s0 + $0x518] sm:$0xff]
  %v186 = vld [vmem:[%s0 + $0x520] sm:$0xff]
  %v187 = vld [vmem:[%s1] sm:$0xf]
  %v188 = vld [vmem:[%s1 + $0x4] sm:$0xf]
  %v189 = vld [vmem:[%s1 + $0x8] sm:$0xf]
  %v190 = vld [vmem:[%s1 + $0xc] sm:$0xf]
  %v191 = vld [vmem:[%s1 + $0x10] sm:$0xf]
  %v192 = vld [vmem:[%s1 + $0x14] sm:$0xf]
  %v193 = vld [vmem:[%s1 + $0x18] sm:$0xf]
  %v194 = vld [vmem:[%s1 + $0x1c] sm:$0xf]
  %v195 = vld [vmem:[%s1 + $0x20] sm:$0xf]
  %v196 = vld [vmem:[%s1 + $0x24] sm:$0xf]
  %v197 = vld [vmem:[%s1 + $0x28] sm:$0xf]
  %v198 = vld [vmem:[%s1 + $0x2c] sm:$0xf]
  %v199 = vld [vmem:[%s1 + $0x30] sm:$0xf]
  %v200 = vld [vmem:[%s1 + $0x34] sm:$0xf]
  %v201 = vld [vmem:[%s1 + $0x38] sm:$0xf]
  %v202 = vld [vmem:[%s1 + $0x3c] sm:$0xf]
  %v203 = vld [vmem:[%s1 + $0x40] sm:$0xf]
  %v204 = vld [vmem:[%s1 + $0x44] sm:$0xf]
  %v205 = vld [vmem:[%s1 + $0x48] sm:$0xf]
  %v206 = vld [vmem:[%s1 + $0x4c] sm:$0xf]
  %v207 = vld [vmem:[%s1 + $0x50] sm:$0xf]
  %v208 = vld [vmem:[%s1 + $0x54] sm:$0xf]
  %v209 = vld [vmem:[%s1 + $0x58] sm:$0xf]
  %v210 = vld [vmem:[%s1 + $0x5c] sm:$0xf]
  %v211 = vld [vmem:[%s1 + $0x60] sm:$0xf]
  %v212 = vld [vmem:[%s1 + $0x64] sm:$0xf]
  %v213 = vld [vmem:[%s1 + $0x68] sm:$0xf]
  %v214 = vld [vmem:[%s1 + $0x6c] sm:$0xf]
  %v215 = vld [vmem:[%s1 + $0x70] sm:$0xf]
  %v216 = vld [vmem:[%s1 + $0x74] sm:$0xf]
  %v217 = vld [vmem:[%s1 + $0x78] sm:$0xf]
  %v218 = vld [vmem:[%s1 + $0x7c] sm:$0xf]
  %v219 = vld [vmem:[%s1 + $0x80] sm:$0xf]
  %v220 = vld [vmem:[%s1 + $0x84] sm:$0xf]
  %v221 = vld [vmem:[%s1 + $0x88] sm:$0xf]
  %v222 = vld [vmem:[%s1 + $0x8c] sm:$0xf]
  %v223 = vld [vmem:[%s1 + $0x90] sm:$0xf]
  %v224 = vld [vmem:[%s1 + $0x94] sm:$0xf]
  %v225 = vld [vmem:[%s1 + $0x98] sm:$0xf]
  %v226 = vld [vmem:[%s1 + $0x9c] sm:$0xf]
  %v227 = vld [vmem:[%s1 + $0xa0] sm:$0xf]
  %v228 = vld [vmem:[%s1 + $0xa4] sm:$0xf]
  %v229 = vld [vmem:[%s1 + $0xa8] sm:$0xf]
  %v230 = vld [vmem:[%s1 + $0xac] sm:$0xf]
  %v231 = vld [vmem:[%s1 + $0xb0] sm:$0xf]
  %v232 = vld [vmem:[%s1 + $0xb4] sm:$0xf]
  %v233 = vld [vmem:[%s1 + $0xb8] sm:$0xf]
  %v234 = vld [vmem:[%s1 + $0xbc] sm:$0xf]
  %v235 = vld [vmem:[%s1 + $0xc0] sm:$0xf]
  %v236 = vld [vmem:[%s1 + $0xc4] sm:$0xf]
  %v237 = vld [vmem:[%s1 + $0xc8] sm:$0xf]
  %v238 = vld [vmem:[%s1 + $0xcc] sm:$0xf]
  %v239 = vld [vmem:[%s1 + $0xd0] sm:$0xf]
  %v240 = vld [vmem:[%s1 + $0xd4] sm:$0xf]
  %v241 = vld [vmem:[%s1 + $0xd8] sm:$0xf]
  %v242 = vld [vmem:[%s1 + $0xdc] sm:$0xf]
  %v243 = vld [vmem:[%s1 + $0xe0] sm:$0xf]
  %v244 = vld [vmem:[%s1 + $0xe4] sm:$0xf]
  %v245 = vld [vmem:[%s1 + $0xe8] sm:$0xf]
  %v246 = vld [vmem:[%s1 + $0xec] sm:$0xf]
  %v247 = vld [vmem:[%s1 + $0xf0] sm:$0xf]
  %v248 = vld [vmem:[%s1 + $0xf4] sm:$0xf]
  %v249 = vld [vmem:[%s1 + $0xf8] sm:$0xf]
  %v250 = vld [vmem:[%s1 + $0xfc] sm:$0xf]
  %v251 = vld [vmem:[%s1 + $0x100] sm:$0xf]
  %v252 = vld [vmem:[%s1 + $0x104] sm:$0xf]
  %v253 = vld [vmem:[%s1 + $0x108] sm:$0xf]
  %v254 = vld [vmem:[%s1 + $0x10c] sm:$0xf]
  %v255 = vld [vmem:[%s1 + $0x110] sm:$0xf]
  %v256 = vld [vmem:[%s1 + $0x114] sm:$0xf]
  %v257 = vld [vmem:[%s1 + $0x118] sm:$0xf]
  %v258 = vld [vmem:[%s1 + $0x11c] sm:$0xf]
  %v259 = vld [vmem:[%s1 + $0x120] sm:$0xf]
  %v260 = vld [vmem:[%s1 + $0x124] sm:$0xf]
  %v261 = vld [vmem:[%s1 + $0x128] sm:$0xf]
  %v262 = vld [vmem:[%s1 + $0x12c] sm:$0xf]
  %v263 = vld [vmem:[%s1 + $0x130] sm:$0xf]
  %v264 = vld [vmem:[%s1 + $0x134] sm:$0xf]
  %v265 = vld [vmem:[%s1 + $0x138] sm:$0xf]
  %v266 = vld [vmem:[%s1 + $0x13c] sm:$0xf]
  %v267 = vld [vmem:[%s1 + $0x140] sm:$0xf]
  %v268 = vld [vmem:[%s1 + $0x144] sm:$0xf]
  %v269 = vld [vmem:[%s1 + $0x148] sm:$0xf]
  %v270 = vld [vmem:[%s1 + $0x14c] sm:$0xf]
  %v271 = vld [vmem:[%s1 + $0x150] sm:$0xf]
  %v272 = vld [vmem:[%s1 + $0x154] sm:$0xf]
  %v273 = vld [vmem:[%s1 + $0x158] sm:$0xf]
  %v274 = vld [vmem:[%s1 + $0x15c] sm:$0xf]
  %v275 = vld [vmem:[%s1 + $0x160] sm:$0xf]
  %v276 = vld [vmem:[%s1 + $0x164] sm:$0xf]
  %v277 = vld [vmem:[%s1 + $0x168] sm:$0xf]
  %v278 = vld [vmem:[%s1 + $0x16c] sm:$0xf]
  %v279 = vld [vmem:[%s1 + $0x170] sm:$0xf]
  %v280 = vld [vmem:[%s1 + $0x174] sm:$0xf]
  %v281 = vld [vmem:[%s1 + $0x178] sm:$0xf]
  %v282 = vld [vmem:[%s1 + $0x17c] sm:$0xf]
  %v448 = vunpack.c.l.b16 %v22
  %v449 = vunpack.c.h.b16 %v22
  %v450 = vunpack.c.l.b16 %v23
  %v451 = vunpack.c.h.b16 %v23
  %v452 = vunpack.c.l.b16 %v24
  %v453 = vunpack.c.h.b16 %v24
  %v454 = vunpack.c.l.b16 %v25
  %v455 = vunpack.c.h.b16 %v25
  %v456 = vunpack.c.l.b16 %v26
  %v457 = vunpack.c.h.b16 %v26
  %v458 = vunpack.c.l.b16 %v27
  %v459 = vunpack.c.h.b16 %v27
  %v460 = vunpack.c.l.b16 %v28
  %v461 = vunpack.c.h.b16 %v28
  %v462 = vunpack.c.l.b16 %v29
  %v463 = vunpack.c.h.b16 %v29
  %v464 = vunpack.c.l.b16 %v30
  %v465 = vunpack.c.h.b16 %v30
  %v466 = vunpack.c.l.b16 %v31
  %v467 = vunpack.c.h.b16 %v31
  %v468 = vunpack.c.l.b16 %v32
  %v469 = vunpack.c.h.b16 %v32
  %v470 = vunpack.c.l.b16 %v33
  %v471 = vunpack.c.h.b16 %v33
  %v472 = vunpack.c.l.b16 %v34
  %v473 = vunpack.c.h.b16 %v34
  %v474 = vunpack.c.l.b16 %v35
  %v475 = vunpack.c.h.b16 %v35
  %v476 = vunpack.c.l.b16 %v36
  %v477 = vunpack.c.h.b16 %v36
  %v478 = vunpack.c.l.b16 %v37
  %v479 = vunpack.c.h.b16 %v37
  %v480 = vunpack.c.l.b16 %v38
  %v481 = vunpack.c.h.b16 %v38
  %v482 = vunpack.c.l.b16 %v39
  %v483 = vunpack.c.h.b16 %v39
  %v484 = vunpack.c.l.b16 %v40
  %v485 = vunpack.c.h.b16 %v40
  %v486 = vunpack.c.l.b16 %v41
  %v487 = vunpack.c.h.b16 %v41
  %v488 = vunpack.c.l.b16 %v42
  %v489 = vunpack.c.h.b16 %v42
  %v490 = vunpack.c.l.b16 %v43
  %v491 = vunpack.c.h.b16 %v43
  %v492 = vunpack.c.l.b16 %v44
  %v493 = vunpack.c.h.b16 %v44
  %v494 = vunpack.c.l.b16 %v45
  %v495 = vunpack.c.h.b16 %v45
  %v496 = vunpack.c.l.b16 %v46
  %v497 = vunpack.c.h.b16 %v46
  %v498 = vunpack.c.l.b16 %v47
  %v499 = vunpack.c.h.b16 %v47
  %v500 = vunpack.c.l.b16 %v48
  %v501 = vunpack.c.h.b16 %v48
  %v502 = vunpack.c.l.b16 %v49
  %v503 = vunpack.c.h.b16 %v49
  %v504 = vunpack.c.l.b16 %v50
  %v505 = vunpack.c.h.b16 %v50
  %v506 = vunpack.c.l.b16 %v51
  %v507 = vunpack.c.h.b16 %v51
  %v508 = vunpack.c.l.b16 %v52
  %v509 = vunpack.c.h.b16 %v52
  %v510 = vunpack.c.l.b16 %v53
  %v511 = vunpack.c.h.b16 %v53
  %v512 = vunpack.c.l.b16 %v54
  %v513 = vunpack.c.h.b16 %v54
  %v514 = vunpack.c.l.b16 %v55
  %v515 = vunpack.c.h.b16 %v55
  %v516 = vunpack.c.l.b16 %v56
  %v517 = vunpack.c.h.b16 %v56
  %v518 = vunpack.c.l.b16 %v57
  %v519 = vunpack.c.h.b16 %v57
  %v520 = vunpack.c.l.b16 %v58
  %v521 = vunpack.c.h.b16 %v58
  %v522 = vunpack.c.l.b16 %v59
  %v523 = vunpack.c.h.b16 %v59
  %v524 = vunpack.c.l.b16 %v60
  %v525 = vunpack.c.h.b16 %v60
  %v526 = vunpack.c.l.b16 %v61
  %v527 = vunpack.c.h.b16 %v61
  %v528 = vunpack.c.l.b16 %v62
  %v529 = vunpack.c.h.b16 %v62
  %v530 = vunpack.c.l.b16 %v63
  %v531 = vunpack.c.h.b16 %v63
  %v532 = vunpack.c.l.b16 %v64
  %v533 = vunpack.c.h.b16 %v64
  %v534 = vunpack.c.l.b16 %v65
  %v535 = vunpack.c.h.b16 %v65
  %v536 = vunpack.c.l.b16 %v66
  %v537 = vunpack.c.h.b16 %v66
  %v538 = vunpack.c.l.b16 %v67
  %v539 = vunpack.c.h.b16 %v67
  %v540 = vunpack.c.l.b16 %v68
  %v541 = vunpack.c.h.b16 %v68
  %v542 = vunpack.c.l.b16 %v69
  %v543 = vunpack.c.h.b16 %v69
  %v544 = vunpack.c.l.b16 %v70
  %v545 = vunpack.c.h.b16 %v70
  %v546 = vunpack.c.l.b16 %v71
  %v547 = vunpack.c.h.b16 %v71
  %v548 = vunpack.c.l.b16 %v72
  %v549 = vunpack.c.h.b16 %v72
  %v550 = vunpack.c.l.b16 %v73
  %v551 = vunpack.c.h.b16 %v73
  %v552 = vunpack.c.l.b16 %v74
  %v553 = vunpack.c.h.b16 %v74
  %v554 = vunpack.c.l.b16 %v75
  %v555 = vunpack.c.h.b16 %v75
  %v556 = vunpack.c.l.b16 %v76
  %v557 = vunpack.c.h.b16 %v76
  %v558 = vunpack.c.l.b16 %v77
  %v559 = vunpack.c.h.b16 %v77
  %v560 = vunpack.c.l.b16 %v78
  %v561 = vunpack.c.h.b16 %v78
  %v562 = vunpack.c.l.b16 %v79
  %v563 = vunpack.c.h.b16 %v79
  %v564 = vunpack.c.l.b16 %v80
  %v565 = vunpack.c.h.b16 %v80
  %v566 = vunpack.c.l.b16 %v81
  %v567 = vunpack.c.h.b16 %v81
  %v568 = vunpack.c.l.b16 %v82
  %v569 = vunpack.c.h.b16 %v82
  %v570 = vunpack.c.l.b16 %v83
  %v571 = vunpack.c.h.b16 %v83
  %v572 = vunpack.c.l.b16 %v84
  %v573 = vunpack.c.h.b16 %v84
  %v574 = vunpack.c.l.b16 %v85
  %v575 = vunpack.c.h.b16 %v85
  %v576 = vunpack.c.l.b16 %v86
  %v577 = vunpack.c.h.b16 %v86
  %v578 = vunpack.c.l.b16 %v87
  %v579 = vunpack.c.h.b16 %v87
  %v580 = vunpack.c.l.b16 %v88
  %v581 = vunpack.c.h.b16 %v88
  %v582 = vunpack.c.l.b16 %v89
  %v583 = vunpack.c.h.b16 %v89
  %v584 = vunpack.c.l.b16 %v90
  %v585 = vunpack.c.h.b16 %v90
  %v586 = vunpack.c.l.b16 %v91
  %v587 = vunpack.c.h.b16 %v91
  %v588 = vunpack.c.l.b16 %v92
  %v589 = vunpack.c.h.b16 %v92
  %v590 = vunpack.c.l.b16 %v93
  %v591 = vunpack.c.h.b16 %v93
  %v592 = vunpack.c.l.b16 %v94
  %v593 = vunpack.c.h.b16 %v94
  %v594 = vunpack.c.l.b16 %v95
  %v595 = vunpack.c.h.b16 %v95
  %v596 = vunpack.c.l.b16 %v96
  %v597 = vunpack.c.h.b16 %v96
  %v598 = vunpack.c.l.b16 %v97
  %v599 = vunpack.c.h.b16 %v97
  %v600 = vunpack.c.l.b16 %v98
  %v601 = vunpack.c.h.b16 %v98
  %v602 = vunpack.c.l.b16 %v99
  %v603 = vunpack.c.h.b16 %v99
  %v604 = vunpack.c.l.b16 %v100
  %v605 = vunpack.c.h.b16 %v100
  %v606 = vunpack.c.l.b16 %v101
  %v607 = vunpack.c.h.b16 %v101
  %v608 = vunpack.c.l.b16 %v102
  %v609 = vunpack.c.h.b16 %v102
  %v610 = vunpack.c.l.b16 %v103
  %v611 = vunpack.c.h.b16 %v103
  %v612 = vunpack.c.l.b16 %v104
  %v613 = vunpack.c.h.b16 %v104
  %v614 = vunpack.c.l.b16 %v105
  %v615 = vunpack.c.h.b16 %v105
  %v616 = vunpack.c.l.b16 %v106
  %v617 = vunpack.c.h.b16 %v106
  %v618 = vunpack.c.l.b16 %v107
  %v619 = vunpack.c.h.b16 %v107
  %v620 = vunpack.c.l.b16 %v108
  %v621 = vunpack.c.h.b16 %v108
  %v622 = vunpack.c.l.b16 %v109
  %v623 = vunpack.c.h.b16 %v109
  %v624 = vunpack.c.l.b16 %v110
  %v625 = vunpack.c.h.b16 %v110
  %v626 = vunpack.c.l.b16 %v111
  %v627 = vunpack.c.h.b16 %v111
  %v628 = vunpack.c.l.b16 %v112
  %v629 = vunpack.c.h.b16 %v112
  %v630 = vunpack.c.l.b16 %v113
  %v631 = vunpack.c.h.b16 %v113
  %v632 = vunpack.c.l.b16 %v114
  %v633 = vunpack.c.h.b16 %v114
  %v634 = vunpack.c.l.b16 %v115
  %v635 = vunpack.c.h.b16 %v115
  %v636 = vunpack.c.l.b16 %v116
  %v637 = vunpack.c.h.b16 %v116
  %v638 = vunpack.c.l.b16 %v117
  %v639 = vunpack.c.h.b16 %v117
  %v640 = vunpack.c.l.b16 %v118
  %v641 = vunpack.c.h.b16 %v118
  %v642 = vunpack.c.l.b16 %v119
  %v643 = vunpack.c.h.b16 %v119
  %v644 = vunpack.c.l.b16 %v120
  %v645 = vunpack.c.h.b16 %v120
  %v646 = vunpack.c.l.b16 %v121
  %v647 = vunpack.c.h.b16 %v121
  %v648 = vunpack.c.l.b16 %v122
  %v649 = vunpack.c.h.b16 %v122
  %v650 = vunpack.c.l.b16 %v123
  %v651 = vunpack.c.h.b16 %v123
  %v652 = vunpack.c.l.b16 %v124
  %v653 = vunpack.c.h.b16 %v124
  %v654 = vunpack.c.l.b16 %v125
  %v655 = vunpack.c.h.b16 %v125
  %v656 = vunpack.c.l.b16 %v126
  %v657 = vunpack.c.h.b16 %v126
  %v658 = vunpack.c.l.b16 %v127
  %v659 = vunpack.c.h.b16 %v127
  %v660 = vunpack.c.l.b16 %v128
  %v661 = vunpack.c.h.b16 %v128
  %v662 = vunpack.c.l.b16 %v129
  %v663 = vunpack.c.h.b16 %v129
  %v664 = vunpack.c.l.b16 %v130
  %v665 = vunpack.c.h.b16 %v130
  %v666 = vunpack.c.l.b16 %v131
  %v667 = vunpack.c.h.b16 %v131
  %v668 = vunpack.c.l.b16 %v132
  %v669 = vunpack.c.h.b16 %v132
  %v670 = vunpack.c.l.b16 %v133
  %v671 = vunpack.c.h.b16 %v133
  %v672 = vunpack.c.l.b16 %v134
  %v673 = vunpack.c.h.b16 %v134
  %v674 = vunpack.c.l.b16 %v135
  %v675 = vunpack.c.h.b16 %v135
  %v676 = vunpack.c.l.b16 %v136
  %v677 = vunpack.c.h.b16 %v136
  %v678 = vunpack.c.l.b16 %v137
  %v679 = vunpack.c.h.b16 %v137
  %v680 = vunpack.c.l.b16 %v138
  %v681 = vunpack.c.h.b16 %v138
  %v682 = vunpack.c.l.b16 %v139
  %v683 = vunpack.c.h.b16 %v139
  %v684 = vunpack.c.l.b16 %v140
  %v685 = vunpack.c.h.b16 %v140
  %v686 = vunpack.c.l.b16 %v141
  %v687 = vunpack.c.h.b16 %v141
  %v688 = vunpack.c.l.b16 %v142
  %v689 = vunpack.c.h.b16 %v142
  %v690 = vunpack.c.l.b16 %v143
  %v691 = vunpack.c.h.b16 %v143
  %v692 = vunpack.c.l.b16 %v144
  %v693 = vunpack.c.h.b16 %v144
  %v694 = vunpack.c.l.b16 %v145
  %v695 = vunpack.c.h.b16 %v145
  %v696 = vunpack.c.l.b16 %v146
  %v697 = vunpack.c.h.b16 %v146
  %v698 = vunpack.c.l.b16 %v147
  %v699 = vunpack.c.h.b16 %v147
  %v700 = vunpack.c.l.b16 %v148
  %v701 = vunpack.c.h.b16 %v148
  %v702 = vunpack.c.l.b16 %v149
  %v703 = vunpack.c.h.b16 %v149
  %v704 = vunpack.c.l.b16 %v150
  %v705 = vunpack.c.h.b16 %v150
  %v706 = vunpack.c.l.b16 %v151
  %v707 = vunpack.c.h.b16 %v151
  %v708 = vunpack.c.l.b16 %v152
  %v709 = vunpack.c.h.b16 %v152
  %v710 = vunpack.c.l.b16 %v153
  %v711 = vunpack.c.h.b16 %v153
  %v712 = vunpack.c.l.b16 %v154
  %v713 = vunpack.c.h.b16 %v154
  %v714 = vunpack.c.l.b16 %v155
  %v715 = vunpack.c.h.b16 %v155
  %v716 = vunpack.c.l.b16 %v156
  %v717 = vunpack.c.h.b16 %v156
  %v718 = vunpack.c.l.b16 %v157
  %v719 = vunpack.c.h.b16 %v157
  %v720 = vunpack.c.l.b16 %v158
  %v721 = vunpack.c.h.b16 %v158
  %v722 = vunpack.c.l.b16 %v159
  %v723 = vunpack.c.h.b16 %v159
  %v724 = vunpack.c.l.b16 %v160
  %v725 = vunpack.c.h.b16 %v160
  %v726 = vunpack.c.l.b16 %v161
  %v727 = vunpack.c.h.b16 %v161
  %v728 = vunpack.c.l.b16 %v162
  %v729 = vunpack.c.h.b16 %v162
  %v730 = vunpack.c.l.b16 %v163
  %v731 = vunpack.c.h.b16 %v163
  %v732 = vunpack.c.l.b16 %v164
  %v733 = vunpack.c.h.b16 %v164
  %v734 = vunpack.c.l.b16 %v165
  %v735 = vunpack.c.h.b16 %v165
  %v736 = vunpack.c.l.b16 %v166
  %v737 = vunpack.c.h.b16 %v166
  %v738 = vunpack.c.l.b16 %v167
  %v739 = vunpack.c.h.b16 %v167
  %v740 = vunpack.c.l.b16 %v168
  %v741 = vunpack.c.h.b16 %v168
  %v742 = vunpack.c.l.b16 %v169
  %v743 = vunpack.c.h.b16 %v169
  %v744 = vunpack.c.l.b16 %v170
  %v745 = vunpack.c.h.b16 %v170
  %v746 = vunpack.c.l.b16 %v171
  %v747 = vunpack.c.h.b16 %v171
  %v748 = vunpack.c.l.b16 %v172
  %v749 = vunpack.c.h.b16 %v172
  %v750 = vunpack.c.l.b16 %v173
  %v751 = vunpack.c.h.b16 %v173
  %v752 = vunpack.c.l.b16 %v174
  %v753 = vunpack.c.h.b16 %v174
  %v754 = vunpack.c.l.b16 %v175
  %v755 = vunpack.c.h.b16 %v175
  %v756 = vunpack.c.l.b16 %v176
  %v757 = vunpack.c.h.b16 %v176
  %v758 = vunpack.c.l.b16 %v177
  %v759 = vunpack.c.h.b16 %v177
  %v760 = vunpack.c.l.b16 %v178
  %v761 = vunpack.c.h.b16 %v178
  %v762 = vunpack.c.l.b16 %v179
  %v763 = vunpack.c.h.b16 %v179
  %v764 = vunpack.c.l.b16 %v180
  %v765 = vunpack.c.h.b16 %v180
  %v766 = vunpack.c.l.b16 %v181
  %v767 = vunpack.c.h.b16 %v181
  %v768 = vunpack.c.l.b16 %v182
  %v769 = vunpack.c.h.b16 %v182
  %v770 = vunpack.c.l.b16 %v183
  %v771 = vunpack.c.h.b16 %v183
  %v772 = vunpack.c.l.b16 %v184
  %v773 = vunpack.c.h.b16 %v184
  %v774 = vunpack.c.l.b16 %v185
  %v775 = vunpack.c.h.b16 %v185
  %v776 = vunpack.c.l.b16 %v186
  %v777 = vunpack.c.h.b16 %v186
  %v778 = vpack.c.b16 %v454, %v448
  %v779 = vpack.c.b16 %v455, %v449
  %v780 = vpack.c.b16 %v456, %v450
  %v781 = vpack.c.b16 %v457, %v451
  %v782 = vpack.c.b16 %v458, %v452
  %v783 = vpack.c.b16 %v459, %v453
  %v784 = vpack.c.b16 %v466, %v460
  %v785 = vpack.c.b16 %v467, %v461
  %v786 = vpack.c.b16 %v468, %v462
  %v787 = vpack.c.b16 %v469, %v463
  %v788 = vpack.c.b16 %v470, %v464
  %v789 = vpack.c.b16 %v471, %v465
  %v790 = vpack.c.b16 %v478, %v472
  %v791 = vpack.c.b16 %v479, %v473
  %v792 = vpack.c.b16 %v480, %v474
  %v793 = vpack.c.b16 %v481, %v475
  %v794 = vpack.c.b16 %v482, %v476
  %v795 = vpack.c.b16 %v483, %v477
  %v796 = vpack.c.b16 %v490, %v484
  %v797 = vpack.c.b16 %v491, %v485
  %v798 = vpack.c.b16 %v492, %v486
  %v799 = vpack.c.b16 %v493, %v487
  %v800 = vpack.c.b16 %v494, %v488
  %v801 = vpack.c.b16 %v495, %v489
  %v802 = vpack.c.b16 %v502, %v496
  %v803 = vpack.c.b16 %v503, %v497
  %v804 = vpack.c.b16 %v504, %v498
  %v805 = vpack.c.b16 %v505, %v499
  %v806 = vpack.c.b16 %v506, %v500
  %v807 = vpack.c.b16 %v507, %v501
  %v808 = vpack.c.b16 %v514, %v508
  %v809 = vpack.c.b16 %v515, %v509
  %v810 = vpack.c.b16 %v516, %v510
  %v811 = vpack.c.b16 %v517, %v511
  %v812 = vpack.c.b16 %v518, %v512
  %v813 = vpack.c.b16 %v519, %v513
  %v814 = vpack.c.b16 %v526, %v520
  %v815 = vpack.c.b16 %v527, %v521
  %v816 = vpack.c.b16 %v528, %v522
  %v817 = vpack.c.b16 %v529, %v523
  %v818 = vpack.c.b16 %v530, %v524
  %v819 = vpack.c.b16 %v531, %v525
  %v820 = vpack.c.b16 %v538, %v532
  %v821 = vpack.c.b16 %v539, %v533
  %v822 = vpack.c.b16 %v540, %v534
  %v823 = vpack.c.b16 %v541, %v535
  %v824 = vpack.c.b16 %v542, %v536
  %v825 = vpack.c.b16 %v543, %v537
  %v826 = vpack.c.b16 %v550, %v544
  %v827 = vpack.c.b16 %v551, %v545
  %v828 = vpack.c.b16 %v552, %v546
  %v829 = vpack.c.b16 %v553, %v547
  %v830 = vpack.c.b16 %v554, %v548
  %v831 = vpack.c.b16 %v555, %v549
  %v832 = vpack.c.b16 %v562, %v556
  %v833 = vpack.c.b16 %v563, %v557
  %v834 = vpack.c.b16 %v564, %v558
  %v835 = vpack.c.b16 %v565, %v559
  %v836 = vpack.c.b16 %v566, %v560
  %v837 = vpack.c.b16 %v567, %v561
  %v838 = vpack.c.b16 %v574, %v568
  %v839 = vpack.c.b16 %v575, %v569
  %v840 = vpack.c.b16 %v576, %v570
  %v841 = vpack.c.b16 %v577, %v571
  %v842 = vpack.c.b16 %v578, %v572
  %v843 = vpack.c.b16 %v579, %v573
  %v844 = vpack.c.b16 %v586, %v580
  %v845 = vpack.c.b16 %v587, %v581
  %v846 = vpack.c.b16 %v588, %v582
  %v847 = vpack.c.b16 %v589, %v583
  %v848 = vpack.c.b16 %v590, %v584
  %v849 = vpack.c.b16 %v591, %v585
  %v850 = vpack.c.b16 %v598, %v592
  %v851 = vpack.c.b16 %v599, %v593
  %v852 = vpack.c.b16 %v600, %v594
  %v853 = vpack.c.b16 %v601, %v595
  %v854 = vpack.c.b16 %v602, %v596
  %v855 = vpack.c.b16 %v603, %v597
  %v856 = vpack.c.b16 %v610, %v604
  %v857 = vpack.c.b16 %v611, %v605
  %v858 = vpack.c.b16 %v612, %v606
  %v859 = vpack.c.b16 %v613, %v607
  %v860 = vpack.c.b16 %v614, %v608
  %v861 = vpack.c.b16 %v615, %v609
  %v862 = vpack.c.b16 %v622, %v616
  %v863 = vpack.c.b16 %v623, %v617
  %v864 = vpack.c.b16 %v624, %v618
  %v865 = vpack.c.b16 %v625, %v619
  %v866 = vpack.c.b16 %v626, %v620
  %v867 = vpack.c.b16 %v627, %v621
  %v868 = vpack.c.b16 %v634, %v628
  %v869 = vpack.c.b16 %v635, %v629
  %v870 = vpack.c.b16 %v636, %v630
  %v871 = vpack.c.b16 %v637, %v631
  %v872 = vpack.c.b16 %v638, %v632
  %v873 = vpack.c.b16 %v639, %v633
  %v874 = vpack.c.b16 %v646, %v640
  %v875 = vpack.c.b16 %v647, %v641
  %v876 = vpack.c.b16 %v648, %v642
  %v877 = vpack.c.b16 %v649, %v643
  %v878 = vpack.c.b16 %v650, %v644
  %v879 = vpack.c.b16 %v651, %v645
  %v880 = vpack.c.b16 %v658, %v652
  %v881 = vpack.c.b16 %v659, %v653
  %v882 = vpack.c.b16 %v660, %v654
  %v883 = vpack.c.b16 %v661, %v655
  %v884 = vpack.c.b16 %v662, %v656
  %v885 = vpack.c.b16 %v663, %v657
  %v886 = vpack.c.b16 %v670, %v664
  %v887 = vpack.c.b16 %v671, %v665
  %v888 = vpack.c.b16 %v672, %v666
  %v889 = vpack.c.b16 %v673, %v667
  %v890 = vpack.c.b16 %v674, %v668
  %v891 = vpack.c.b16 %v675, %v669
  %v892 = vpack.c.b16 %v682, %v676
  %v893 = vpack.c.b16 %v683, %v677
  %v894 = vpack.c.b16 %v684, %v678
  %v895 = vpack.c.b16 %v685, %v679
  %v896 = vpack.c.b16 %v686, %v680
  %v897 = vpack.c.b16 %v687, %v681
  %v898 = vpack.c.b16 %v694, %v688
  %v899 = vpack.c.b16 %v695, %v689
  %v900 = vpack.c.b16 %v696, %v690
  %v901 = vpack.c.b16 %v697, %v691
  %v902 = vpack.c.b16 %v698, %v692
  %v903 = vpack.c.b16 %v699, %v693
  %v904 = vpack.c.b16 %v706, %v700
  %v905 = vpack.c.b16 %v707, %v701
  %v906 = vpack.c.b16 %v708, %v702
  %v907 = vpack.c.b16 %v709, %v703
  %v908 = vpack.c.b16 %v710, %v704
  %v909 = vpack.c.b16 %v711, %v705
  %v910 = vpack.c.b16 %v718, %v712
  %v911 = vpack.c.b16 %v719, %v713
  %v912 = vpack.c.b16 %v720, %v714
  %v913 = vpack.c.b16 %v721, %v715
  %v914 = vpack.c.b16 %v722, %v716
  %v915 = vpack.c.b16 %v723, %v717
  %v916 = vpack.c.b16 %v730, %v724
  %v917 = vpack.c.b16 %v731, %v725
  %v918 = vpack.c.b16 %v732, %v726
  %v919 = vpack.c.b16 %v733, %v727
  %v920 = vpack.c.b16 %v734, %v728
  %v921 = vpack.c.b16 %v735, %v729
  %v922 = vpack.c.b16 %v742, %v736
  %v923 = vpack.c.b16 %v743, %v737
  %v924 = vpack.c.b16 %v744, %v738
  %v925 = vpack.c.b16 %v745, %v739
  %v926 = vpack.c.b16 %v746, %v740
  %v927 = vpack.c.b16 %v747, %v741
  %v928 = vpack.c.b16 %v754, %v748
  %v929 = vpack.c.b16 %v755, %v749
  %v930 = vpack.c.b16 %v756, %v750
  %v931 = vpack.c.b16 %v757, %v751
  %v932 = vpack.c.b16 %v758, %v752
  %v933 = vpack.c.b16 %v759, %v753
  %v934 = vpack.c.b16 %v766, %v760
  %v935 = vpack.c.b16 %v767, %v761
  %v936 = vpack.c.b16 %v768, %v762
  %v937 = vpack.c.b16 %v769, %v763
  %v938 = vpack.c.b16 %v770, %v764
  %v939 = vpack.c.b16 %v771, %v765
  %v940 = vpack.c.b16 %v772, %v772
  %v941 = vpack.c.b16 %v773, %v773
  %v942 = vpack.c.b16 %v774, %v774
  %v943 = vpack.c.b16 %v775, %v775
  %v944 = vpack.c.b16 %v776, %v776
  %v945 = vpack.c.b16 %v777, %v777
  %v1210 = vunpack.c.l.b16 %v187
  %v1211 = vunpack.c.l.b16 %v188
  %v1212 = vunpack.c.l.b16 %v189
  %v1213 = vunpack.c.l.b16 %v190
  %v1214 = vunpack.c.l.b16 %v191
  %v1215 = vunpack.c.l.b16 %v192
  %v1216 = vunpack.c.l.b16 %v193
  %v1217 = vunpack.c.l.b16 %v194
  %v1218 = vunpack.c.l.b16 %v195
  %v1219 = vunpack.c.l.b16 %v196
  %v1220 = vunpack.c.l.b16 %v197
  %v1221 = vunpack.c.l.b16 %v198
  %v1222 = vunpack.c.l.b16 %v199
  %v1223 = vunpack.c.l.b16 %v200
  %v1224 = vunpack.c.l.b16 %v201
  %v1225 = vunpack.c.l.b16 %v202
  %v1226 = vunpack.c.l.b16 %v203
  %v1227 = vunpack.c.l.b16 %v204
  %v1228 = vunpack.c.l.b16 %v205
  %v1229 = vunpack.c.l.b16 %v206
  %v1230 = vunpack.c.l.b16 %v207
  %v1231 = vunpack.c.l.b16 %v208
  %v1232 = vunpack.c.l.b16 %v209
  %v1233 = vunpack.c.l.b16 %v210
  %v1234 = vunpack.c.l.b16 %v211
  %v1235 = vunpack.c.l.b16 %v212
  %v1236 = vunpack.c.l.b16 %v213
  %v1237 = vunpack.c.l.b16 %v214
  %v1238 = vunpack.c.l.b16 %v215
  %v1239 = vunpack.c.l.b16 %v216
  %v1240 = vunpack.c.l.b16 %v217
  %v1241 = vunpack.c.l.b16 %v218
  %v1242 = vunpack.c.l.b16 %v219
  %v1243 = vunpack.c.l.b16 %v220
  %v1244 = vunpack.c.l.b16 %v221
  %v1245 = vunpack.c.l.b16 %v222
  %v1246 = vunpack.c.l.b16 %v223
  %v1247 = vunpack.c.l.b16 %v224
  %v1248 = vunpack.c.l.b16 %v225
  %v1249 = vunpack.c.l.b16 %v226
  %v1250 = vunpack.c.l.b16 %v227
  %v1251 = vunpack.c.l.b16 %v228
  %v1252 = vunpack.c.l.b16 %v229
  %v1253 = vunpack.c.l.b16 %v230
  %v1254 = vunpack.c.l.b16 %v231
  %v1255 = vunpack.c.l.b16 %v232
  %v1256 = vunpack.c.l.b16 %v233
  %v1257 = vunpack.c.l.b16 %v234
  %v1258 = vunpack.c.l.b16 %v235
  %v1259 = vunpack.c.l.b16 %v236
  %v1260 = vunpack.c.l.b16 %v237
  %v1261 = vunpack.c.l.b16 %v238
  %v1262 = vunpack.c.l.b16 %v239
  %v1263 = vunpack.c.l.b16 %v240
  %v1264 = vunpack.c.l.b16 %v241
  %v1265 = vunpack.c.l.b16 %v242
  %v1266 = vunpack.c.l.b16 %v243
  %v1267 = vunpack.c.l.b16 %v244
  %v1268 = vunpack.c.l.b16 %v245
  %v1269 = vunpack.c.l.b16 %v246
  %v1270 = vunpack.c.l.b16 %v247
  %v1271 = vunpack.c.l.b16 %v248
  %v1272 = vunpack.c.l.b16 %v249
  %v1273 = vunpack.c.l.b16 %v250
  %v1274 = vunpack.c.l.b16 %v251
  %v1275 = vunpack.c.l.b16 %v252
  %v1276 = vunpack.c.l.b16 %v253
  %v1277 = vunpack.c.l.b16 %v254
  %v1278 = vunpack.c.l.b16 %v255
  %v1279 = vunpack.c.l.b16 %v256
  %v1280 = vunpack.c.l.b16 %v257
  %v1281 = vunpack.c.l.b16 %v258
  %v1282 = vunpack.c.l.b16 %v259
  %v1283 = vunpack.c.l.b16 %v260
  %v1284 = vunpack.c.l.b16 %v261
  %v1285 = vunpack.c.l.b16 %v262
  %v1286 = vunpack.c.l.b16 %v263
  %v1287 = vunpack.c.l.b16 %v264
  %v1288 = vunpack.c.l.b16 %v265
  %v1289 = vunpack.c.l.b16 %v266
  %v1290 = vunpack.c.l.b16 %v267
  %v1291 = vunpack.c.l.b16 %v268
  %v1292 = vunpack.c.l.b16 %v269
  %v1293 = vunpack.c.l.b16 %v270
  %v1294 = vunpack.c.l.b16 %v271
  %v1295 = vunpack.c.l.b16 %v272
  %v1296 = vunpack.c.l.b16 %v273
  %v1297 = vunpack.c.l.b16 %v274
  %v1298 = vunpack.c.l.b16 %v275
  %v1299 = vunpack.c.l.b16 %v276
  %v1300 = vunpack.c.l.b16 %v277
  %v1301 = vunpack.c.l.b16 %v278
  %v1302 = vunpack.c.l.b16 %v279
  %v1303 = vunpack.c.l.b16 %v280
  %v1304 = vunpack.c.l.b16 %v281
  %v1305 = vunpack.c.l.b16 %v282
  %v1306 = vpack.c.b16 %v1211, %v1210
  %v1307 = vpack.c.b16 %v1213, %v1212
  %v1308 = vpack.c.b16 %v1215, %v1214
  %v1309 = vpack.c.b16 %v1217, %v1216
  %v1310 = vpack.c.b16 %v1219, %v1218
  %v1311 = vpack.c.b16 %v1221, %v1220
  %v1312 = vpack.c.b16 %v1223, %v1222
  %v1313 = vpack.c.b16 %v1225, %v1224
  %v1314 = vpack.c.b16 %v1227, %v1226
  %v1315 = vpack.c.b16 %v1229, %v1228
  %v1316 = vpack.c.b16 %v1231, %v1230
  %v1317 = vpack.c.b16 %v1233, %v1232
  %v1318 = vpack.c.b16 %v1235, %v1234
  %v1319 = vpack.c.b16 %v1237, %v1236
  %v1320 = vpack.c.b16 %v1239, %v1238
  %v1321 = vpack.c.b16 %v1241, %v1240
  %v1322 = vpack.c.b16 %v1243, %v1242
  %v1323 = vpack.c.b16 %v1245, %v1244
  %v1324 = vpack.c.b16 %v1247, %v1246
  %v1325 = vpack.c.b16 %v1249, %v1248
  %v1326 = vpack.c.b16 %v1251, %v1250
  %v1327 = vpack.c.b16 %v1253, %v1252
  %v1328 = vpack.c.b16 %v1255, %v1254
  %v1329 = vpack.c.b16 %v1257, %v1256
  %v1330 = vpack.c.b16 %v1259, %v1258
  %v1331 = vpack.c.b16 %v1261, %v1260
  %v1332 = vpack.c.b16 %v1263, %v1262
  %v1333 = vpack.c.b16 %v1265, %v1264
  %v1334 = vpack.c.b16 %v1267, %v1266
  %v1335 = vpack.c.b16 %v1269, %v1268
  %v1336 = vpack.c.b16 %v1271, %v1270
  %v1337 = vpack.c.b16 %v1273, %v1272
  %v1338 = vpack.c.b16 %v1275, %v1274
  %v1339 = vpack.c.b16 %v1277, %v1276
  %v1340 = vpack.c.b16 %v1279, %v1278
  %v1341 = vpack.c.b16 %v1281, %v1280
  %v1342 = vpack.c.b16 %v1283, %v1282
  %v1343 = vpack.c.b16 %v1285, %v1284
  %v1344 = vpack.c.b16 %v1287, %v1286
  %v1345 = vpack.c.b16 %v1289, %v1288
  %v1346 = vpack.c.b16 %v1291, %v1290
  %v1347 = vpack.c.b16 %v1293, %v1292
  %v1348 = vpack.c.b16 %v1295, %v1294
  %v1349 = vpack.c.b16 %v1297, %v1296
  %v1350 = vpack.c.b16 %v1299, %v1298
  %v1351 = vpack.c.b16 %v1301, %v1300
  %v1352 = vpack.c.b16 %v1303, %v1302
  %v1353 = vpack.c.b16 %v1305, %v1304
  %1402 = vmatpush.bf16.msra.mxu0 %v1313
  %1403 = vmatpush.bf16.msra.mxu0 %v1312
  %1404 = vmatpush.bf16.msra.mxu0 %v1311
  %1405 = vmatpush.bf16.msra.mxu0 %v1310
  %1406 = vmatpush.bf16.msra.mxu0 %v1309
  %1407 = vmatpush.bf16.msra.mxu0 %v1308
  %1408 = vmatpush.bf16.msra.mxu0 %v1307
  %1409 = vmatpush.bf16.msra.mxu0 %v1306
  %1410 = vmatmul.bf16.gmra.mxu0 %v778
  %v1411 = vpop.f32.mrf.mxu0
  %v1412 = vadd.f32 0.0, %v1411
  %v1413 = vpop.f32.mrf.mxu0
  %v1414 = vadd.f32 0.0, %v1413
  %1415 = vmatmul.bf16.gmra.mxu0 %v784
  %v1416 = vpop.f32.mrf.mxu0
  %v1417 = vadd.f32 0.0, %v1416
  %v1418 = vpop.f32.mrf.mxu0
  %v1419 = vadd.f32 0.0, %v1418
  %1420 = vmatmul.bf16.gmra.mxu0 %v790
  %v1421 = vpop.f32.mrf.mxu0
  %v1422 = vadd.f32 0.0, %v1421
  %v1423 = vpop.f32.mrf.mxu0
  %v1424 = vadd.f32 0.0, %v1423
  %1425 = vmatmul.bf16.gmra.mxu0 %v796
  %v1426 = vpop.f32.mrf.mxu0
  %v1427 = vadd.f32 0.0, %v1426
  %v1428 = vpop.f32.mrf.mxu0
  %v1429 = vadd.f32 0.0, %v1428
  %1430 = vmatmul.bf16.gmra.mxu0 %v802
  %v1431 = vpop.f32.mrf.mxu0
  %v1432 = vadd.f32 0.0, %v1431
  %v1433 = vpop.f32.mrf.mxu0
  %v1434 = vadd.f32 0.0, %v1433
  %1435 = vmatmul.bf16.gmra.mxu0 %v808
  %v1436 = vpop.f32.mrf.mxu0
  %v1437 = vadd.f32 0.0, %v1436
  %v1438 = vpop.f32.mrf.mxu0
  %v1439 = vadd.f32 0.0, %v1438
  %1440 = vmatmul.bf16.gmra.mxu0 %v814
  %v1441 = vpop.f32.mrf.mxu0
  %v1442 = vadd.f32 0.0, %v1441
  %v1443 = vpop.f32.mrf.mxu0
  %v1444 = vadd.f32 0.0, %v1443
  %1445 = vmatmul.bf16.gmra.mxu0 %v820
  %v1446 = vpop.f32.mrf.mxu0
  %v1447 = vadd.f32 0.0, %v1446
  %v1448 = vpop.f32.mrf.mxu0
  %v1449 = vadd.f32 0.0, %v1448
  %1450 = vmatmul.bf16.gmra.mxu0 %v826
  %v1451 = vpop.f32.mrf.mxu0
  %v1452 = vadd.f32 0.0, %v1451
  %v1453 = vpop.f32.mrf.mxu0
  %v1454 = vadd.f32 0.0, %v1453
  %1455 = vmatmul.bf16.gmra.mxu0 %v832
  %v1456 = vpop.f32.mrf.mxu0
  %v1457 = vadd.f32 0.0, %v1456
  %v1458 = vpop.f32.mrf.mxu0
  %v1459 = vadd.f32 0.0, %v1458
  %1460 = vmatmul.bf16.gmra.mxu0 %v838
  %v1461 = vpop.f32.mrf.mxu0
  %v1462 = vadd.f32 0.0, %v1461
  %v1463 = vpop.f32.mrf.mxu0
  %v1464 = vadd.f32 0.0, %v1463
  %1465 = vmatmul.bf16.gmra.mxu0 %v844
  %v1466 = vpop.f32.mrf.mxu0
  %v1467 = vadd.f32 0.0, %v1466
  %v1468 = vpop.f32.mrf.mxu0
  %v1469 = vadd.f32 0.0, %v1468
  %1470 = vmatmul.bf16.gmra.mxu0 %v850
  %v1471 = vpop.f32.mrf.mxu0
  %v1472 = vadd.f32 0.0, %v1471
  %v1473 = vpop.f32.mrf.mxu0
  %v1474 = vadd.f32 0.0, %v1473
  %1475 = vmatmul.bf16.gmra.mxu0 %v856
  %v1476 = vpop.f32.mrf.mxu0
  %v1477 = vadd.f32 0.0, %v1476
  %v1478 = vpop.f32.mrf.mxu0
  %v1479 = vadd.f32 0.0, %v1478
  %1480 = vmatmul.bf16.gmra.mxu0 %v862
  %v1481 = vpop.f32.mrf.mxu0
  %v1482 = vadd.f32 0.0, %v1481
  %v1483 = vpop.f32.mrf.mxu0
  %v1484 = vadd.f32 0.0, %v1483
  %1485 = vmatmul.bf16.gmra.mxu0 %v868
  %v1486 = vpop.f32.mrf.mxu0
  %v1487 = vadd.f32 0.0, %v1486
  %v1488 = vpop.f32.mrf.mxu0
  %v1489 = vadd.f32 0.0, %v1488
  %1490 = vmatmul.bf16.gmra.mxu0 %v874
  %v1491 = vpop.f32.mrf.mxu0
  %v1492 = vadd.f32 0.0, %v1491
  %v1493 = vpop.f32.mrf.mxu0
  %v1494 = vadd.f32 0.0, %v1493
  %1495 = vmatmul.bf16.gmra.mxu0 %v880
  %v1496 = vpop.f32.mrf.mxu0
  %v1497 = vadd.f32 0.0, %v1496
  %v1498 = vpop.f32.mrf.mxu0
  %v1499 = vadd.f32 0.0, %v1498
  %1500 = vmatmul.bf16.gmra.mxu0 %v886
  %v1501 = vpop.f32.mrf.mxu0
  %v1502 = vadd.f32 0.0, %v1501
  %v1503 = vpop.f32.mrf.mxu0
  %v1504 = vadd.f32 0.0, %v1503
  %1505 = vmatmul.bf16.gmra.mxu0 %v892
  %v1506 = vpop.f32.mrf.mxu0
  %v1507 = vadd.f32 0.0, %v1506
  %v1508 = vpop.f32.mrf.mxu0
  %v1509 = vadd.f32 0.0, %v1508
  %1510 = vmatmul.bf16.gmra.mxu0 %v898
  %v1511 = vpop.f32.mrf.mxu0
  %v1512 = vadd.f32 0.0, %v1511
  %v1513 = vpop.f32.mrf.mxu0
  %v1514 = vadd.f32 0.0, %v1513
  %1515 = vmatmul.bf16.gmra.mxu0 %v904
  %v1516 = vpop.f32.mrf.mxu0
  %v1517 = vadd.f32 0.0, %v1516
  %v1518 = vpop.f32.mrf.mxu0
  %v1519 = vadd.f32 0.0, %v1518
  %1520 = vmatmul.bf16.gmra.mxu0 %v910
  %v1521 = vpop.f32.mrf.mxu0
  %v1522 = vadd.f32 0.0, %v1521
  %v1523 = vpop.f32.mrf.mxu0
  %v1524 = vadd.f32 0.0, %v1523
  %1525 = vmatmul.bf16.gmra.mxu0 %v916
  %v1526 = vpop.f32.mrf.mxu0
  %v1527 = vadd.f32 0.0, %v1526
  %v1528 = vpop.f32.mrf.mxu0
  %v1529 = vadd.f32 0.0, %v1528
  %1530 = vmatmul.bf16.gmra.mxu0 %v922
  %v1531 = vpop.f32.mrf.mxu0
  %v1532 = vadd.f32 0.0, %v1531
  %v1533 = vpop.f32.mrf.mxu0
  %v1534 = vadd.f32 0.0, %v1533
  %1535 = vmatmul.bf16.gmra.mxu0 %v928
  %v1536 = vpop.f32.mrf.mxu0
  %v1537 = vadd.f32 0.0, %v1536
  %v1538 = vpop.f32.mrf.mxu0
  %v1539 = vadd.f32 0.0, %v1538
  %1540 = vmatmul.bf16.gmra.mxu0 %v934
  %v1541 = vpop.f32.mrf.mxu0
  %v1542 = vadd.f32 0.0, %v1541
  %v1543 = vpop.f32.mrf.mxu0
  %v1544 = vadd.f32 0.0, %v1543
  %1545 = vmatmul.bf16.gmra.mxu0 %v940
  %v1546 = vpop.f32.mrf.mxu0
  %v1547 = vadd.f32 0.0, %v1546
  %v1548 = vpop.f32.mrf.mxu0
  %1549 = vdwg.mxu0
  %1550 = vmatpush.bf16.msra.mxu0 %v1321
  %1551 = vmatpush.bf16.msra.mxu0 %v1320
  %1552 = vmatpush.bf16.msra.mxu0 %v1319
  %1553 = vmatpush.bf16.msra.mxu0 %v1318
  %1554 = vmatpush.bf16.msra.mxu0 %v1317
  %1555 = vmatpush.bf16.msra.mxu0 %v1316
  %1556 = vmatpush.bf16.msra.mxu0 %v1315
  %1557 = vmatpush.bf16.msra.mxu0 %v1314
  %1558 = vmatmul.bf16.gmra.mxu0 %v779
  %v1559 = vpop.f32.mrf.mxu0
  %v1560 = vadd.f32 %v1412, %v1559
  %v1561 = vpop.f32.mrf.mxu0
  %v1562 = vadd.f32 %v1414, %v1561
  %1563 = vmatmul.bf16.gmra.mxu0 %v785
  %v1564 = vpop.f32.mrf.mxu0
  %v1565 = vadd.f32 %v1417, %v1564
  %v1566 = vpop.f32.mrf.mxu0
  %v1567 = vadd.f32 %v1419, %v1566
  %1568 = vmatmul.bf16.gmra.mxu0 %v791
  %v1569 = vpop.f32.mrf.mxu0
  %v1570 = vadd.f32 %v1422, %v1569
  %v1571 = vpop.f32.mrf.mxu0
  %v1572 = vadd.f32 %v1424, %v1571
  %1573 = vmatmul.bf16.gmra.mxu0 %v797
  %v1574 = vpop.f32.mrf.mxu0
  %v1575 = vadd.f32 %v1427, %v1574
  %v1576 = vpop.f32.mrf.mxu0
  %v1577 = vadd.f32 %v1429, %v1576
  %1578 = vmatmul.bf16.gmra.mxu0 %v803
  %v1579 = vpop.f32.mrf.mxu0
  %v1580 = vadd.f32 %v1432, %v1579
  %v1581 = vpop.f32.mrf.mxu0
  %v1582 = vadd.f32 %v1434, %v1581
  %1583 = vmatmul.bf16.gmra.mxu0 %v809
  %v1584 = vpop.f32.mrf.mxu0
  %v1585 = vadd.f32 %v1437, %v1584
  %v1586 = vpop.f32.mrf.mxu0
  %v1587 = vadd.f32 %v1439, %v1586
  %1588 = vmatmul.bf16.gmra.mxu0 %v815
  %v1589 = vpop.f32.mrf.mxu0
  %v1590 = vadd.f32 %v1442, %v1589
  %v1591 = vpop.f32.mrf.mxu0
  %v1592 = vadd.f32 %v1444, %v1591
  %1593 = vmatmul.bf16.gmra.mxu0 %v821
  %v1594 = vpop.f32.mrf.mxu0
  %v1595 = vadd.f32 %v1447, %v1594
  %v1596 = vpop.f32.mrf.mxu0
  %v1597 = vadd.f32 %v1449, %v1596
  %1598 = vmatmul.bf16.gmra.mxu0 %v827
  %v1599 = vpop.f32.mrf.mxu0
  %v1600 = vadd.f32 %v1452, %v1599
  %v1601 = vpop.f32.mrf.mxu0
  %v1602 = vadd.f32 %v1454, %v1601
  %1603 = vmatmul.bf16.gmra.mxu0 %v833
  %v1604 = vpop.f32.mrf.mxu0
  %v1605 = vadd.f32 %v1457, %v1604
  %v1606 = vpop.f32.mrf.mxu0
  %v1607 = vadd.f32 %v1459, %v1606
  %1608 = vmatmul.bf16.gmra.mxu0 %v839
  %v1609 = vpop.f32.mrf.mxu0
  %v1610 = vadd.f32 %v1462, %v1609
  %v1611 = vpop.f32.mrf.mxu0
  %v1612 = vadd.f32 %v1464, %v1611
  %1613 = vmatmul.bf16.gmra.mxu0 %v845
  %v1614 = vpop.f32.mrf.mxu0
  %v1615 = vadd.f32 %v1467, %v1614
  %v1616 = vpop.f32.mrf.mxu0
  %v1617 = vadd.f32 %v1469, %v1616
  %1618 = vmatmul.bf16.gmra.mxu0 %v851
  %v1619 = vpop.f32.mrf.mxu0
  %v1620 = vadd.f32 %v1472, %v1619
  %v1621 = vpop.f32.mrf.mxu0
  %v1622 = vadd.f32 %v1474, %v1621
  %1623 = vmatmul.bf16.gmra.mxu0 %v857
  %v1624 = vpop.f32.mrf.mxu0
  %v1625 = vadd.f32 %v1477, %v1624
  %v1626 = vpop.f32.mrf.mxu0
  %v1627 = vadd.f32 %v1479, %v1626
  %1628 = vmatmul.bf16.gmra.mxu0 %v863
  %v1629 = vpop.f32.mrf.mxu0
  %v1630 = vadd.f32 %v1482, %v1629
  %v1631 = vpop.f32.mrf.mxu0
  %v1632 = vadd.f32 %v1484, %v1631
  %1633 = vmatmul.bf16.gmra.mxu0 %v869
  %v1634 = vpop.f32.mrf.mxu0
  %v1635 = vadd.f32 %v1487, %v1634
  %v1636 = vpop.f32.mrf.mxu0
  %v1637 = vadd.f32 %v1489, %v1636
  %1638 = vmatmul.bf16.gmra.mxu0 %v875
  %v1639 = vpop.f32.mrf.mxu0
  %v1640 = vadd.f32 %v1492, %v1639
  %v1641 = vpop.f32.mrf.mxu0
  %v1642 = vadd.f32 %v1494, %v1641
  %1643 = vmatmul.bf16.gmra.mxu0 %v881
  %v1644 = vpop.f32.mrf.mxu0
  %v1645 = vadd.f32 %v1497, %v1644
  %v1646 = vpop.f32.mrf.mxu0
  %v1647 = vadd.f32 %v1499, %v1646
  %1648 = vmatmul.bf16.gmra.mxu0 %v887
  %v1649 = vpop.f32.mrf.mxu0
  %v1650 = vadd.f32 %v1502, %v1649
  %v1651 = vpop.f32.mrf.mxu0
  %v1652 = vadd.f32 %v1504, %v1651
  %1653 = vmatmul.bf16.gmra.mxu0 %v893
  %v1654 = vpop.f32.mrf.mxu0
  %v1655 = vadd.f32 %v1507, %v1654
  %v1656 = vpop.f32.mrf.mxu0
  %v1657 = vadd.f32 %v1509, %v1656
  %1658 = vmatmul.bf16.gmra.mxu0 %v899
  %v1659 = vpop.f32.mrf.mxu0
  %v1660 = vadd.f32 %v1512, %v1659
  %v1661 = vpop.f32.mrf.mxu0
  %v1662 = vadd.f32 %v1514, %v1661
  %1663 = vmatmul.bf16.gmra.mxu0 %v905
  %v1664 = vpop.f32.mrf.mxu0
  %v1665 = vadd.f32 %v1517, %v1664
  %v1666 = vpop.f32.mrf.mxu0
  %v1667 = vadd.f32 %v1519, %v1666
  %1668 = vmatmul.bf16.gmra.mxu0 %v911
  %v1669 = vpop.f32.mrf.mxu0
  %v1670 = vadd.f32 %v1522, %v1669
  %v1671 = vpop.f32.mrf.mxu0
  %v1672 = vadd.f32 %v1524, %v1671
  %1673 = vmatmul.bf16.gmra.mxu0 %v917
  %v1674 = vpop.f32.mrf.mxu0
  %v1675 = vadd.f32 %v1527, %v1674
  %v1676 = vpop.f32.mrf.mxu0
  %v1677 = vadd.f32 %v1529, %v1676
  %1678 = vmatmul.bf16.gmra.mxu0 %v923
  %v1679 = vpop.f32.mrf.mxu0
  %v1680 = vadd.f32 %v1532, %v1679
  %v1681 = vpop.f32.mrf.mxu0
  %v1682 = vadd.f32 %v1534, %v1681
  %1683 = vmatmul.bf16.gmra.mxu0 %v929
  %v1684 = vpop.f32.mrf.mxu0
  %v1685 = vadd.f32 %v1537, %v1684
  %v1686 = vpop.f32.mrf.mxu0
  %v1687 = vadd.f32 %v1539, %v1686
  %1688 = vmatmul.bf16.gmra.mxu0 %v935
  %v1689 = vpop.f32.mrf.mxu0
  %v1690 = vadd.f32 %v1542, %v1689
  %v1691 = vpop.f32.mrf.mxu0
  %v1692 = vadd.f32 %v1544, %v1691
  %1693 = vmatmul.bf16.gmra.mxu0 %v941
  %v1694 = vpop.f32.mrf.mxu0
  %v1695 = vadd.f32 %v1547, %v1694
  %v1696 = vpop.f32.mrf.mxu0
  %1697 = vdwg.mxu0
  %1698 = vmatpush.bf16.msra.mxu0 %v1329
  %1699 = vmatpush.bf16.msra.mxu0 %v1328
  %1700 = vmatpush.bf16.msra.mxu0 %v1327
  %1701 = vmatpush.bf16.msra.mxu0 %v1326
  %1702 = vmatpush.bf16.msra.mxu0 %v1325
  %1703 = vmatpush.bf16.msra.mxu0 %v1324
  %1704 = vmatpush.bf16.msra.mxu0 %v1323
  %1705 = vmatpush.bf16.msra.mxu0 %v1322
  %1706 = vmatmul.bf16.gmra.mxu0 %v780
  %v1707 = vpop.f32.mrf.mxu0
  %v1708 = vadd.f32 %v1560, %v1707
  %v1709 = vpop.f32.mrf.mxu0
  %v1710 = vadd.f32 %v1562, %v1709
  %1711 = vmatmul.bf16.gmra.mxu0 %v786
  %v1712 = vpop.f32.mrf.mxu0
  %v1713 = vadd.f32 %v1565, %v1712
  %v1714 = vpop.f32.mrf.mxu0
  %v1715 = vadd.f32 %v1567, %v1714
  %1716 = vmatmul.bf16.gmra.mxu0 %v792
  %v1717 = vpop.f32.mrf.mxu0
  %v1718 = vadd.f32 %v1570, %v1717
  %v1719 = vpop.f32.mrf.mxu0
  %v1720 = vadd.f32 %v1572, %v1719
  %1721 = vmatmul.bf16.gmra.mxu0 %v798
  %v1722 = vpop.f32.mrf.mxu0
  %v1723 = vadd.f32 %v1575, %v1722
  %v1724 = vpop.f32.mrf.mxu0
  %v1725 = vadd.f32 %v1577, %v1724
  %1726 = vmatmul.bf16.gmra.mxu0 %v804
  %v1727 = vpop.f32.mrf.mxu0
  %v1728 = vadd.f32 %v1580, %v1727
  %v1729 = vpop.f32.mrf.mxu0
  %v1730 = vadd.f32 %v1582, %v1729
  %1731 = vmatmul.bf16.gmra.mxu0 %v810
  %v1732 = vpop.f32.mrf.mxu0
  %v1733 = vadd.f32 %v1585, %v1732
  %v1734 = vpop.f32.mrf.mxu0
  %v1735 = vadd.f32 %v1587, %v1734
  %1736 = vmatmul.bf16.gmra.mxu0 %v816
  %v1737 = vpop.f32.mrf.mxu0
  %v1738 = vadd.f32 %v1590, %v1737
  %v1739 = vpop.f32.mrf.mxu0
  %v1740 = vadd.f32 %v1592, %v1739
  %1741 = vmatmul.bf16.gmra.mxu0 %v822
  %v1742 = vpop.f32.mrf.mxu0
  %v1743 = vadd.f32 %v1595, %v1742
  %v1744 = vpop.f32.mrf.mxu0
  %v1745 = vadd.f32 %v1597, %v1744
  %1746 = vmatmul.bf16.gmra.mxu0 %v828
  %v1747 = vpop.f32.mrf.mxu0
  %v1748 = vadd.f32 %v1600, %v1747
  %v1749 = vpop.f32.mrf.mxu0
  %v1750 = vadd.f32 %v1602, %v1749
  %1751 = vmatmul.bf16.gmra.mxu0 %v834
  %v1752 = vpop.f32.mrf.mxu0
  %v1753 = vadd.f32 %v1605, %v1752
  %v1754 = vpop.f32.mrf.mxu0
  %v1755 = vadd.f32 %v1607, %v1754
  %1756 = vmatmul.bf16.gmra.mxu0 %v840
  %v1757 = vpop.f32.mrf.mxu0
  %v1758 = vadd.f32 %v1610, %v1757
  %v1759 = vpop.f32.mrf.mxu0
  %v1760 = vadd.f32 %v1612, %v1759
  %1761 = vmatmul.bf16.gmra.mxu0 %v846
  %v1762 = vpop.f32.mrf.mxu0
  %v1763 = vadd.f32 %v1615, %v1762
  %v1764 = vpop.f32.mrf.mxu0
  %v1765 = vadd.f32 %v1617, %v1764
  %1766 = vmatmul.bf16.gmra.mxu0 %v852
  %v1767 = vpop.f32.mrf.mxu0
  %v1768 = vadd.f32 %v1620, %v1767
  %v1769 = vpop.f32.mrf.mxu0
  %v1770 = vadd.f32 %v1622, %v1769
  %1771 = vmatmul.bf16.gmra.mxu0 %v858
  %v1772 = vpop.f32.mrf.mxu0
  %v1773 = vadd.f32 %v1625, %v1772
  %v1774 = vpop.f32.mrf.mxu0
  %v1775 = vadd.f32 %v1627, %v1774
  %1776 = vmatmul.bf16.gmra.mxu0 %v864
  %v1777 = vpop.f32.mrf.mxu0
  %v1778 = vadd.f32 %v1630, %v1777
  %v1779 = vpop.f32.mrf.mxu0
  %v1780 = vadd.f32 %v1632, %v1779
  %1781 = vmatmul.bf16.gmra.mxu0 %v870
  %v1782 = vpop.f32.mrf.mxu0
  %v1783 = vadd.f32 %v1635, %v1782
  %v1784 = vpop.f32.mrf.mxu0
  %v1785 = vadd.f32 %v1637, %v1784
  %1786 = vmatmul.bf16.gmra.mxu0 %v876
  %v1787 = vpop.f32.mrf.mxu0
  %v1788 = vadd.f32 %v1640, %v1787
  %v1789 = vpop.f32.mrf.mxu0
  %v1790 = vadd.f32 %v1642, %v1789
  %1791 = vmatmul.bf16.gmra.mxu0 %v882
  %v1792 = vpop.f32.mrf.mxu0
  %v1793 = vadd.f32 %v1645, %v1792
  %v1794 = vpop.f32.mrf.mxu0
  %v1795 = vadd.f32 %v1647, %v1794
  %1796 = vmatmul.bf16.gmra.mxu0 %v888
  %v1797 = vpop.f32.mrf.mxu0
  %v1798 = vadd.f32 %v1650, %v1797
  %v1799 = vpop.f32.mrf.mxu0
  %v1800 = vadd.f32 %v1652, %v1799
  %1801 = vmatmul.bf16.gmra.mxu0 %v894
  %v1802 = vpop.f32.mrf.mxu0
  %v1803 = vadd.f32 %v1655, %v1802
  %v1804 = vpop.f32.mrf.mxu0
  %v1805 = vadd.f32 %v1657, %v1804
  %1806 = vmatmul.bf16.gmra.mxu0 %v900
  %v1807 = vpop.f32.mrf.mxu0
  %v1808 = vadd.f32 %v1660, %v1807
  %v1809 = vpop.f32.mrf.mxu0
  %v1810 = vadd.f32 %v1662, %v1809
  %1811 = vmatmul.bf16.gmra.mxu0 %v906
  %v1812 = vpop.f32.mrf.mxu0
  %v1813 = vadd.f32 %v1665, %v1812
  %v1814 = vpop.f32.mrf.mxu0
  %v1815 = vadd.f32 %v1667, %v1814
  %1816 = vmatmul.bf16.gmra.mxu0 %v912
  %v1817 = vpop.f32.mrf.mxu0
  %v1818 = vadd.f32 %v1670, %v1817
  %v1819 = vpop.f32.mrf.mxu0
  %v1820 = vadd.f32 %v1672, %v1819
  %1821 = vmatmul.bf16.gmra.mxu0 %v918
  %v1822 = vpop.f32.mrf.mxu0
  %v1823 = vadd.f32 %v1675, %v1822
  %v1824 = vpop.f32.mrf.mxu0
  %v1825 = vadd.f32 %v1677, %v1824
  %1826 = vmatmul.bf16.gmra.mxu0 %v924
  %v1827 = vpop.f32.mrf.mxu0
  %v1828 = vadd.f32 %v1680, %v1827
  %v1829 = vpop.f32.mrf.mxu0
  %v1830 = vadd.f32 %v1682, %v1829
  %1831 = vmatmul.bf16.gmra.mxu0 %v930
  %v1832 = vpop.f32.mrf.mxu0
  %v1833 = vadd.f32 %v1685, %v1832
  %v1834 = vpop.f32.mrf.mxu0
  %v1835 = vadd.f32 %v1687, %v1834
  %1836 = vmatmul.bf16.gmra.mxu0 %v936
  %v1837 = vpop.f32.mrf.mxu0
  %v1838 = vadd.f32 %v1690, %v1837
  %v1839 = vpop.f32.mrf.mxu0
  %v1840 = vadd.f32 %v1692, %v1839
  %1841 = vmatmul.bf16.gmra.mxu0 %v942
  %v1842 = vpop.f32.mrf.mxu0
  %v1843 = vadd.f32 %v1695, %v1842
  %v1844 = vpop.f32.mrf.mxu0
  %1845 = vdwg.mxu0
  %1846 = vmatpush.bf16.msra.mxu0 %v1337
  %1847 = vmatpush.bf16.msra.mxu0 %v1336
  %1848 = vmatpush.bf16.msra.mxu0 %v1335
  %1849 = vmatpush.bf16.msra.mxu0 %v1334
  %1850 = vmatpush.bf16.msra.mxu0 %v1333
  %1851 = vmatpush.bf16.msra.mxu0 %v1332
  %1852 = vmatpush.bf16.msra.mxu0 %v1331
  %1853 = vmatpush.bf16.msra.mxu0 %v1330
  %1854 = vmatmul.bf16.gmra.mxu0 %v781
  %v1855 = vpop.f32.mrf.mxu0
  %v1856 = vadd.f32 %v1708, %v1855
  %v1857 = vpop.f32.mrf.mxu0
  %v1858 = vadd.f32 %v1710, %v1857
  %1859 = vmatmul.bf16.gmra.mxu0 %v787
  %v1860 = vpop.f32.mrf.mxu0
  %v1861 = vadd.f32 %v1713, %v1860
  %v1862 = vpop.f32.mrf.mxu0
  %v1863 = vadd.f32 %v1715, %v1862
  %1864 = vmatmul.bf16.gmra.mxu0 %v793
  %v1865 = vpop.f32.mrf.mxu0
  %v1866 = vadd.f32 %v1718, %v1865
  %v1867 = vpop.f32.mrf.mxu0
  %v1868 = vadd.f32 %v1720, %v1867
  %1869 = vmatmul.bf16.gmra.mxu0 %v799
  %v1870 = vpop.f32.mrf.mxu0
  %v1871 = vadd.f32 %v1723, %v1870
  %v1872 = vpop.f32.mrf.mxu0
  %v1873 = vadd.f32 %v1725, %v1872
  %1874 = vmatmul.bf16.gmra.mxu0 %v805
  %v1875 = vpop.f32.mrf.mxu0
  %v1876 = vadd.f32 %v1728, %v1875
  %v1877 = vpop.f32.mrf.mxu0
  %v1878 = vadd.f32 %v1730, %v1877
  %1879 = vmatmul.bf16.gmra.mxu0 %v811
  %v1880 = vpop.f32.mrf.mxu0
  %v1881 = vadd.f32 %v1733, %v1880
  %v1882 = vpop.f32.mrf.mxu0
  %v1883 = vadd.f32 %v1735, %v1882
  %1884 = vmatmul.bf16.gmra.mxu0 %v817
  %v1885 = vpop.f32.mrf.mxu0
  %v1886 = vadd.f32 %v1738, %v1885
  %v1887 = vpop.f32.mrf.mxu0
  %v1888 = vadd.f32 %v1740, %v1887
  %1889 = vmatmul.bf16.gmra.mxu0 %v823
  %v1890 = vpop.f32.mrf.mxu0
  %v1891 = vadd.f32 %v1743, %v1890
  %v1892 = vpop.f32.mrf.mxu0
  %v1893 = vadd.f32 %v1745, %v1892
  %1894 = vmatmul.bf16.gmra.mxu0 %v829
  %v1895 = vpop.f32.mrf.mxu0
  %v1896 = vadd.f32 %v1748, %v1895
  %v1897 = vpop.f32.mrf.mxu0
  %v1898 = vadd.f32 %v1750, %v1897
  %1899 = vmatmul.bf16.gmra.mxu0 %v835
  %v1900 = vpop.f32.mrf.mxu0
  %v1901 = vadd.f32 %v1753, %v1900
  %v1902 = vpop.f32.mrf.mxu0
  %v1903 = vadd.f32 %v1755, %v1902
  %1904 = vmatmul.bf16.gmra.mxu0 %v841
  %v1905 = vpop.f32.mrf.mxu0
  %v1906 = vadd.f32 %v1758, %v1905
  %v1907 = vpop.f32.mrf.mxu0
  %v1908 = vadd.f32 %v1760, %v1907
  %1909 = vmatmul.bf16.gmra.mxu0 %v847
  %v1910 = vpop.f32.mrf.mxu0
  %v1911 = vadd.f32 %v1763, %v1910
  %v1912 = vpop.f32.mrf.mxu0
  %v1913 = vadd.f32 %v1765, %v1912
  %1914 = vmatmul.bf16.gmra.mxu0 %v853
  %v1915 = vpop.f32.mrf.mxu0
  %v1916 = vadd.f32 %v1768, %v1915
  %v1917 = vpop.f32.mrf.mxu0
  %v1918 = vadd.f32 %v1770, %v1917
  %1919 = vmatmul.bf16.gmra.mxu0 %v859
  %v1920 = vpop.f32.mrf.mxu0
  %v1921 = vadd.f32 %v1773, %v1920
  %v1922 = vpop.f32.mrf.mxu0
  %v1923 = vadd.f32 %v1775, %v1922
  %1924 = vmatmul.bf16.gmra.mxu0 %v865
  %v1925 = vpop.f32.mrf.mxu0
  %v1926 = vadd.f32 %v1778, %v1925
  %v1927 = vpop.f32.mrf.mxu0
  %v1928 = vadd.f32 %v1780, %v1927
  %1929 = vmatmul.bf16.gmra.mxu0 %v871
  %v1930 = vpop.f32.mrf.mxu0
  %v1931 = vadd.f32 %v1783, %v1930
  %v1932 = vpop.f32.mrf.mxu0
  %v1933 = vadd.f32 %v1785, %v1932
  %1934 = vmatmul.bf16.gmra.mxu0 %v877
  %v1935 = vpop.f32.mrf.mxu0
  %v1936 = vadd.f32 %v1788, %v1935
  %v1937 = vpop.f32.mrf.mxu0
  %v1938 = vadd.f32 %v1790, %v1937
  %1939 = vmatmul.bf16.gmra.mxu0 %v883
  %v1940 = vpop.f32.mrf.mxu0
  %v1941 = vadd.f32 %v1793, %v1940
  %v1942 = vpop.f32.mrf.mxu0
  %v1943 = vadd.f32 %v1795, %v1942
  %1944 = vmatmul.bf16.gmra.mxu0 %v889
  %v1945 = vpop.f32.mrf.mxu0
  %v1946 = vadd.f32 %v1798, %v1945
  %v1947 = vpop.f32.mrf.mxu0
  %v1948 = vadd.f32 %v1800, %v1947
  %1949 = vmatmul.bf16.gmra.mxu0 %v895
  %v1950 = vpop.f32.mrf.mxu0
  %v1951 = vadd.f32 %v1803, %v1950
  %v1952 = vpop.f32.mrf.mxu0
  %v1953 = vadd.f32 %v1805, %v1952
  %1954 = vmatmul.bf16.gmra.mxu0 %v901
  %v1955 = vpop.f32.mrf.mxu0
  %v1956 = vadd.f32 %v1808, %v1955
  %v1957 = vpop.f32.mrf.mxu0
  %v1958 = vadd.f32 %v1810, %v1957
  %1959 = vmatmul.bf16.gmra.mxu0 %v907
  %v1960 = vpop.f32.mrf.mxu0
  %v1961 = vadd.f32 %v1813, %v1960
  %v1962 = vpop.f32.mrf.mxu0
  %v1963 = vadd.f32 %v1815, %v1962
  %1964 = vmatmul.bf16.gmra.mxu0 %v913
  %v1965 = vpop.f32.mrf.mxu0
  %v1966 = vadd.f32 %v1818, %v1965
  %v1967 = vpop.f32.mrf.mxu0
  %v1968 = vadd.f32 %v1820, %v1967
  %1969 = vmatmul.bf16.gmra.mxu0 %v919
  %v1970 = vpop.f32.mrf.mxu0
  %v1971 = vadd.f32 %v1823, %v1970
  %v1972 = vpop.f32.mrf.mxu0
  %v1973 = vadd.f32 %v1825, %v1972
  %1974 = vmatmul.bf16.gmra.mxu0 %v925
  %v1975 = vpop.f32.mrf.mxu0
  %v1976 = vadd.f32 %v1828, %v1975
  %v1977 = vpop.f32.mrf.mxu0
  %v1978 = vadd.f32 %v1830, %v1977
  %1979 = vmatmul.bf16.gmra.mxu0 %v931
  %v1980 = vpop.f32.mrf.mxu0
  %v1981 = vadd.f32 %v1833, %v1980
  %v1982 = vpop.f32.mrf.mxu0
  %v1983 = vadd.f32 %v1835, %v1982
  %1984 = vmatmul.bf16.gmra.mxu0 %v937
  %v1985 = vpop.f32.mrf.mxu0
  %v1986 = vadd.f32 %v1838, %v1985
  %v1987 = vpop.f32.mrf.mxu0
  %v1988 = vadd.f32 %v1840, %v1987
  %1989 = vmatmul.bf16.gmra.mxu0 %v943
  %v1990 = vpop.f32.mrf.mxu0
  %v1991 = vadd.f32 %v1843, %v1990
  %v1992 = vpop.f32.mrf.mxu0
  %1993 = vdwg.mxu0
  %1994 = vmatpush.bf16.msra.mxu0 %v1345
  %1995 = vmatpush.bf16.msra.mxu0 %v1344
  %1996 = vmatpush.bf16.msra.mxu0 %v1343
  %1997 = vmatpush.bf16.msra.mxu0 %v1342
  %1998 = vmatpush.bf16.msra.mxu0 %v1341
  %1999 = vmatpush.bf16.msra.mxu0 %v1340
  %2000 = vmatpush.bf16.msra.mxu0 %v1339
  %2001 = vmatpush.bf16.msra.mxu0 %v1338
  %2002 = vmatmul.bf16.gmra.mxu0 %v782
  %v2003 = vpop.f32.mrf.mxu0
  %v2004 = vadd.f32 %v1856, %v2003
  %v2005 = vpop.f32.mrf.mxu0
  %v2006 = vadd.f32 %v1858, %v2005
  %2007 = vmatmul.bf16.gmra.mxu0 %v788
  %v2008 = vpop.f32.mrf.mxu0
  %v2009 = vadd.f32 %v1861, %v2008
  %v2010 = vpop.f32.mrf.mxu0
  %v2011 = vadd.f32 %v1863, %v2010
  %2012 = vmatmul.bf16.gmra.mxu0 %v794
  %v2013 = vpop.f32.mrf.mxu0
  %v2014 = vadd.f32 %v1866, %v2013
  %v2015 = vpop.f32.mrf.mxu0
  %v2016 = vadd.f32 %v1868, %v2015
  %2017 = vmatmul.bf16.gmra.mxu0 %v800
  %v2018 = vpop.f32.mrf.mxu0
  %v2019 = vadd.f32 %v1871, %v2018
  %v2020 = vpop.f32.mrf.mxu0
  %v2021 = vadd.f32 %v1873, %v2020
  %2022 = vmatmul.bf16.gmra.mxu0 %v806
  %v2023 = vpop.f32.mrf.mxu0
  %v2024 = vadd.f32 %v1876, %v2023
  %v2025 = vpop.f32.mrf.mxu0
  %v2026 = vadd.f32 %v1878, %v2025
  %2027 = vmatmul.bf16.gmra.mxu0 %v812
  %v2028 = vpop.f32.mrf.mxu0
  %v2029 = vadd.f32 %v1881, %v2028
  %v2030 = vpop.f32.mrf.mxu0
  %v2031 = vadd.f32 %v1883, %v2030
  %2032 = vmatmul.bf16.gmra.mxu0 %v818
  %v2033 = vpop.f32.mrf.mxu0
  %v2034 = vadd.f32 %v1886, %v2033
  %v2035 = vpop.f32.mrf.mxu0
  %v2036 = vadd.f32 %v1888, %v2035
  %2037 = vmatmul.bf16.gmra.mxu0 %v824
  %v2038 = vpop.f32.mrf.mxu0
  %v2039 = vadd.f32 %v1891, %v2038
  %v2040 = vpop.f32.mrf.mxu0
  %v2041 = vadd.f32 %v1893, %v2040
  %2042 = vmatmul.bf16.gmra.mxu0 %v830
  %v2043 = vpop.f32.mrf.mxu0
  %v2044 = vadd.f32 %v1896, %v2043
  %v2045 = vpop.f32.mrf.mxu0
  %v2046 = vadd.f32 %v1898, %v2045
  %2047 = vmatmul.bf16.gmra.mxu0 %v836
  %v2048 = vpop.f32.mrf.mxu0
  %v2049 = vadd.f32 %v1901, %v2048
  %v2050 = vpop.f32.mrf.mxu0
  %v2051 = vadd.f32 %v1903, %v2050
  %2052 = vmatmul.bf16.gmra.mxu0 %v842
  %v2053 = vpop.f32.mrf.mxu0
  %v2054 = vadd.f32 %v1906, %v2053
  %v2055 = vpop.f32.mrf.mxu0
  %v2056 = vadd.f32 %v1908, %v2055
  %2057 = vmatmul.bf16.gmra.mxu0 %v848
  %v2058 = vpop.f32.mrf.mxu0
  %v2059 = vadd.f32 %v1911, %v2058
  %v2060 = vpop.f32.mrf.mxu0
  %v2061 = vadd.f32 %v1913, %v2060
  %2062 = vmatmul.bf16.gmra.mxu0 %v854
  %v2063 = vpop.f32.mrf.mxu0
  %v2064 = vadd.f32 %v1916, %v2063
  %v2065 = vpop.f32.mrf.mxu0
  %v2066 = vadd.f32 %v1918, %v2065
  %2067 = vmatmul.bf16.gmra.mxu0 %v860
  %v2068 = vpop.f32.mrf.mxu0
  %v2069 = vadd.f32 %v1921, %v2068
  %v2070 = vpop.f32.mrf.mxu0
  %v2071 = vadd.f32 %v1923, %v2070
  %2072 = vmatmul.bf16.gmra.mxu0 %v866
  %v2073 = vpop.f32.mrf.mxu0
  %v2074 = vadd.f32 %v1926, %v2073
  %v2075 = vpop.f32.mrf.mxu0
  %v2076 = vadd.f32 %v1928, %v2075
  %2077 = vmatmul.bf16.gmra.mxu0 %v872
  %v2078 = vpop.f32.mrf.mxu0
  %v2079 = vadd.f32 %v1931, %v2078
  %v2080 = vpop.f32.mrf.mxu0
  %v2081 = vadd.f32 %v1933, %v2080
  %2082 = vmatmul.bf16.gmra.mxu0 %v878
  %v2083 = vpop.f32.mrf.mxu0
  %v2084 = vadd.f32 %v1936, %v2083
  %v2085 = vpop.f32.mrf.mxu0
  %v2086 = vadd.f32 %v1938, %v2085
  %2087 = vmatmul.bf16.gmra.mxu0 %v884
  %v2088 = vpop.f32.mrf.mxu0
  %v2089 = vadd.f32 %v1941, %v2088
  %v2090 = vpop.f32.mrf.mxu0
  %v2091 = vadd.f32 %v1943, %v2090
  %2092 = vmatmul.bf16.gmra.mxu0 %v890
  %v2093 = vpop.f32.mrf.mxu0
  %v2094 = vadd.f32 %v1946, %v2093
  %v2095 = vpop.f32.mrf.mxu0
  %v2096 = vadd.f32 %v1948, %v2095
  %2097 = vmatmul.bf16.gmra.mxu0 %v896
  %v2098 = vpop.f32.mrf.mxu0
  %v2099 = vadd.f32 %v1951, %v2098
  %v2100 = vpop.f32.mrf.mxu0
  %v2101 = vadd.f32 %v1953, %v2100
  %2102 = vmatmul.bf16.gmra.mxu0 %v902
  %v2103 = vpop.f32.mrf.mxu0
  %v2104 = vadd.f32 %v1956, %v2103
  %v2105 = vpop.f32.mrf.mxu0
  %v2106 = vadd.f32 %v1958, %v2105
  %2107 = vmatmul.bf16.gmra.mxu0 %v908
  %v2108 = vpop.f32.mrf.mxu0
  %v2109 = vadd.f32 %v1961, %v2108
  %v2110 = vpop.f32.mrf.mxu0
  %v2111 = vadd.f32 %v1963, %v2110
  %2112 = vmatmul.bf16.gmra.mxu0 %v914
  %v2113 = vpop.f32.mrf.mxu0
  %v2114 = vadd.f32 %v1966, %v2113
  %v2115 = vpop.f32.mrf.mxu0
  %v2116 = vadd.f32 %v1968, %v2115
  %2117 = vmatmul.bf16.gmra.mxu0 %v920
  %v2118 = vpop.f32.mrf.mxu0
  %v2119 = vadd.f32 %v1971, %v2118
  %v2120 = vpop.f32.mrf.mxu0
  %v2121 = vadd.f32 %v1973, %v2120
  %2122 = vmatmul.bf16.gmra.mxu0 %v926
  %v2123 = vpop.f32.mrf.mxu0
  %v2124 = vadd.f32 %v1976, %v2123
  %v2125 = vpop.f32.mrf.mxu0
  %v2126 = vadd.f32 %v1978, %v2125
  %2127 = vmatmul.bf16.gmra.mxu0 %v932
  %v2128 = vpop.f32.mrf.mxu0
  %v2129 = vadd.f32 %v1981, %v2128
  %v2130 = vpop.f32.mrf.mxu0
  %v2131 = vadd.f32 %v1983, %v2130
  %2132 = vmatmul.bf16.gmra.mxu0 %v938
  %v2133 = vpop.f32.mrf.mxu0
  %v2134 = vadd.f32 %v1986, %v2133
  %v2135 = vpop.f32.mrf.mxu0
  %v2136 = vadd.f32 %v1988, %v2135
  %2137 = vmatmul.bf16.gmra.mxu0 %v944
  %v2138 = vpop.f32.mrf.mxu0
  %v2139 = vadd.f32 %v1991, %v2138
  %v2140 = vpop.f32.mrf.mxu0
  %2141 = vdwg.mxu0
  %2142 = vmatpush.bf16.msra.mxu0 %v1353
  %2143 = vmatpush.bf16.msra.mxu0 %v1352
  %2144 = vmatpush.bf16.msra.mxu0 %v1351
  %2145 = vmatpush.bf16.msra.mxu0 %v1350
  %2146 = vmatpush.bf16.msra.mxu0 %v1349
  %2147 = vmatpush.bf16.msra.mxu0 %v1348
  %2148 = vmatpush.bf16.msra.mxu0 %v1347
  %2149 = vmatpush.bf16.msra.mxu0 %v1346
  %2150 = vmatmul.bf16.gmra.mxu0 %v783
  %v2151 = vpop.f32.mrf.mxu0
  %v2152 = vadd.f32 %v2004, %v2151
  %v2153 = vpop.f32.mrf.mxu0
  %v2154 = vadd.f32 %v2006, %v2153
  %2155 = vmatmul.bf16.gmra.mxu0 %v789
  %v2156 = vpop.f32.mrf.mxu0
  %v2157 = vadd.f32 %v2009, %v2156
  %v2158 = vpop.f32.mrf.mxu0
  %v2159 = vadd.f32 %v2011, %v2158
  %2160 = vmatmul.bf16.gmra.mxu0 %v795
  %v2161 = vpop.f32.mrf.mxu0
  %v2162 = vadd.f32 %v2014, %v2161
  %v2163 = vpop.f32.mrf.mxu0
  %v2164 = vadd.f32 %v2016, %v2163
  %2165 = vmatmul.bf16.gmra.mxu0 %v801
  %v2166 = vpop.f32.mrf.mxu0
  %v2167 = vadd.f32 %v2019, %v2166
  %v2168 = vpop.f32.mrf.mxu0
  %v2169 = vadd.f32 %v2021, %v2168
  %2170 = vmatmul.bf16.gmra.mxu0 %v807
  %v2171 = vpop.f32.mrf.mxu0
  %v2172 = vadd.f32 %v2024, %v2171
  %v2173 = vpop.f32.mrf.mxu0
  %v2174 = vadd.f32 %v2026, %v2173
  %2175 = vmatmul.bf16.gmra.mxu0 %v813
  %v2176 = vpop.f32.mrf.mxu0
  %v2177 = vadd.f32 %v2029, %v2176
  %v2178 = vpop.f32.mrf.mxu0
  %v2179 = vadd.f32 %v2031, %v2178
  %2180 = vmatmul.bf16.gmra.mxu0 %v819
  %v2181 = vpop.f32.mrf.mxu0
  %v2182 = vadd.f32 %v2034, %v2181
  %v2183 = vpop.f32.mrf.mxu0
  %v2184 = vadd.f32 %v2036, %v2183
  %2185 = vmatmul.bf16.gmra.mxu0 %v825
  %v2186 = vpop.f32.mrf.mxu0
  %v2187 = vadd.f32 %v2039, %v2186
  %v2188 = vpop.f32.mrf.mxu0
  %v2189 = vadd.f32 %v2041, %v2188
  %2190 = vmatmul.bf16.gmra.mxu0 %v831
  %v2191 = vpop.f32.mrf.mxu0
  %v2192 = vadd.f32 %v2044, %v2191
  %v2193 = vpop.f32.mrf.mxu0
  %v2194 = vadd.f32 %v2046, %v2193
  %2195 = vmatmul.bf16.gmra.mxu0 %v837
  %v2196 = vpop.f32.mrf.mxu0
  %v2197 = vadd.f32 %v2049, %v2196
  %v2198 = vpop.f32.mrf.mxu0
  %v2199 = vadd.f32 %v2051, %v2198
  %2200 = vmatmul.bf16.gmra.mxu0 %v843
  %v2201 = vpop.f32.mrf.mxu0
  %v2202 = vadd.f32 %v2054, %v2201
  %v2203 = vpop.f32.mrf.mxu0
  %v2204 = vadd.f32 %v2056, %v2203
  %2205 = vmatmul.bf16.gmra.mxu0 %v849
  %v2206 = vpop.f32.mrf.mxu0
  %v2207 = vadd.f32 %v2059, %v2206
  %v2208 = vpop.f32.mrf.mxu0
  %v2209 = vadd.f32 %v2061, %v2208
  %2210 = vmatmul.bf16.gmra.mxu0 %v855
  %v2211 = vpop.f32.mrf.mxu0
  %v2212 = vadd.f32 %v2064, %v2211
  %v2213 = vpop.f32.mrf.mxu0
  %v2214 = vadd.f32 %v2066, %v2213
  %2215 = vmatmul.bf16.gmra.mxu0 %v861
  %v2216 = vpop.f32.mrf.mxu0
  %v2217 = vadd.f32 %v2069, %v2216
  %v2218 = vpop.f32.mrf.mxu0
  %v2219 = vadd.f32 %v2071, %v2218
  %2220 = vmatmul.bf16.gmra.mxu0 %v867
  %v2221 = vpop.f32.mrf.mxu0
  %v2222 = vadd.f32 %v2074, %v2221
  %v2223 = vpop.f32.mrf.mxu0
  %v2224 = vadd.f32 %v2076, %v2223
  %2225 = vmatmul.bf16.gmra.mxu0 %v873
  %v2226 = vpop.f32.mrf.mxu0
  %v2227 = vadd.f32 %v2079, %v2226
  %v2228 = vpop.f32.mrf.mxu0
  %v2229 = vadd.f32 %v2081, %v2228
  %2230 = vmatmul.bf16.gmra.mxu0 %v879
  %v2231 = vpop.f32.mrf.mxu0
  %v2232 = vadd.f32 %v2084, %v2231
  %v2233 = vpop.f32.mrf.mxu0
  %v2234 = vadd.f32 %v2086, %v2233
  %2235 = vmatmul.bf16.gmra.mxu0 %v885
  %v2236 = vpop.f32.mrf.mxu0
  %v2237 = vadd.f32 %v2089, %v2236
  %v2238 = vpop.f32.mrf.mxu0
  %v2239 = vadd.f32 %v2091, %v2238
  %2240 = vmatmul.bf16.gmra.mxu0 %v891
  %v2241 = vpop.f32.mrf.mxu0
  %v2242 = vadd.f32 %v2094, %v2241
  %v2243 = vpop.f32.mrf.mxu0
  %v2244 = vadd.f32 %v2096, %v2243
  %2245 = vmatmul.bf16.gmra.mxu0 %v897
  %v2246 = vpop.f32.mrf.mxu0
  %v2247 = vadd.f32 %v2099, %v2246
  %v2248 = vpop.f32.mrf.mxu0
  %v2249 = vadd.f32 %v2101, %v2248
  %2250 = vmatmul.bf16.gmra.mxu0 %v903
  %v2251 = vpop.f32.mrf.mxu0
  %v2252 = vadd.f32 %v2104, %v2251
  %v2253 = vpop.f32.mrf.mxu0
  %v2254 = vadd.f32 %v2106, %v2253
  %2255 = vmatmul.bf16.gmra.mxu0 %v909
  %v2256 = vpop.f32.mrf.mxu0
  %v2257 = vadd.f32 %v2109, %v2256
  %v2258 = vpop.f32.mrf.mxu0
  %v2259 = vadd.f32 %v2111, %v2258
  %2260 = vmatmul.bf16.gmra.mxu0 %v915
  %v2261 = vpop.f32.mrf.mxu0
  %v2262 = vadd.f32 %v2114, %v2261
  %v2263 = vpop.f32.mrf.mxu0
  %v2264 = vadd.f32 %v2116, %v2263
  %2265 = vmatmul.bf16.gmra.mxu0 %v921
  %v2266 = vpop.f32.mrf.mxu0
  %v2267 = vadd.f32 %v2119, %v2266
  %v2268 = vpop.f32.mrf.mxu0
  %v2269 = vadd.f32 %v2121, %v2268
  %2270 = vmatmul.bf16.gmra.mxu0 %v927
  %v2271 = vpop.f32.mrf.mxu0
  %v2272 = vadd.f32 %v2124, %v2271
  %v2273 = vpop.f32.mrf.mxu0
  %v2274 = vadd.f32 %v2126, %v2273
  %2275 = vmatmul.bf16.gmra.mxu0 %v933
  %v2276 = vpop.f32.mrf.mxu0
  %v2277 = vadd.f32 %v2129, %v2276
  %v2278 = vpop.f32.mrf.mxu0
  %v2279 = vadd.f32 %v2131, %v2278
  %2280 = vmatmul.bf16.gmra.mxu0 %v939
  %v2281 = vpop.f32.mrf.mxu0
  %v2282 = vadd.f32 %v2134, %v2281
  %v2283 = vpop.f32.mrf.mxu0
  %v2284 = vadd.f32 %v2136, %v2283
  %2285 = vmatmul.bf16.gmra.mxu0 %v945
  %v2286 = vpop.f32.mrf.mxu0
  %v2287 = vadd.f32 %v2139, %v2286
  %v2288 = vpop.f32.mrf.mxu0
  %2289 = vdwg.mxu0
  %v2290 = vlaneseq
  %v2291 = vand.u32 %v2290, 127
  %vm2292 = vcmp.eq.s32.totalorder %v2291, 0
  %v2293 = vsel %vm2292, %v2152, 0.0
  %v2294 = vsel %vm2292, %v2154, 0.0
  %v2295 = vsel %vm2292, %v2157, 0.0
  %v2296 = vsel %vm2292, %v2159, 0.0
  %v2297 = vsel %vm2292, %v2162, 0.0
  %v2298 = vsel %vm2292, %v2164, 0.0
  %v2299 = vsel %vm2292, %v2167, 0.0
  %v2300 = vsel %vm2292, %v2169, 0.0
  %v2301 = vsel %vm2292, %v2172, 0.0
  %v2302 = vsel %vm2292, %v2174, 0.0
  %v2303 = vsel %vm2292, %v2177, 0.0
  %v2304 = vsel %vm2292, %v2179, 0.0
  %v2305 = vsel %vm2292, %v2182, 0.0
  %v2306 = vsel %vm2292, %v2184, 0.0
  %v2307 = vsel %vm2292, %v2187, 0.0
  %v2308 = vsel %vm2292, %v2189, 0.0
  %v2309 = vsel %vm2292, %v2192, 0.0
  %v2310 = vsel %vm2292, %v2194, 0.0
  %v2311 = vsel %vm2292, %v2197, 0.0
  %v2312 = vsel %vm2292, %v2199, 0.0
  %v2313 = vsel %vm2292, %v2202, 0.0
  %v2314 = vsel %vm2292, %v2204, 0.0
  %v2315 = vsel %vm2292, %v2207, 0.0
  %v2316 = vsel %vm2292, %v2209, 0.0
  %v2317 = vsel %vm2292, %v2212, 0.0
  %v2318 = vsel %vm2292, %v2214, 0.0
  %v2319 = vsel %vm2292, %v2217, 0.0
  %v2320 = vsel %vm2292, %v2219, 0.0
  %v2321 = vsel %vm2292, %v2222, 0.0
  %v2322 = vsel %vm2292, %v2224, 0.0
  %v2323 = vsel %vm2292, %v2227, 0.0
  %v2324 = vsel %vm2292, %v2229, 0.0
  %v2325 = vsel %vm2292, %v2232, 0.0
  %v2326 = vsel %vm2292, %v2234, 0.0
  %v2327 = vsel %vm2292, %v2237, 0.0
  %v2328 = vsel %vm2292, %v2239, 0.0
  %v2329 = vsel %vm2292, %v2242, 0.0
  %v2330 = vsel %vm2292, %v2244, 0.0
  %v2331 = vsel %vm2292, %v2247, 0.0
  %v2332 = vsel %vm2292, %v2249, 0.0
  %v2333 = vsel %vm2292, %v2252, 0.0
  %v2334 = vsel %vm2292, %v2254, 0.0
  %v2335 = vsel %vm2292, %v2257, 0.0
  %v2336 = vsel %vm2292, %v2259, 0.0
  %v2337 = vsel %vm2292, %v2262, 0.0
  %v2338 = vsel %vm2292, %v2264, 0.0
  %v2339 = vsel %vm2292, %v2267, 0.0
  %v2340 = vsel %vm2292, %v2269, 0.0
  %v2341 = vsel %vm2292, %v2272, 0.0
  %v2342 = vsel %vm2292, %v2274, 0.0
  %v2343 = vsel %vm2292, %v2277, 0.0
  %v2344 = vsel %vm2292, %v2279, 0.0
  %v2345 = vsel %vm2292, %v2282, 0.0
  %v2346 = vsel %vm2292, %v2284, 0.0
  %v2347 = vsel %vm2292, %v2287, 0.0
  %vm2348 = vcmp.eq.s32.totalorder %v2291, 1
  %v2349 = vrot.slane %v2152, 1
  %v2350 = vrot.slane %v2154, 1
  %v2351 = vrot.slane %v2157, 1
  %v2352 = vrot.slane %v2159, 1
  %v2353 = vrot.slane %v2162, 1
  %v2354 = vrot.slane %v2164, 1
  %v2355 = vrot.slane %v2167, 1
  %v2356 = vrot.slane %v2169, 1
  %v2357 = vrot.slane %v2172, 1
  %v2358 = vrot.slane %v2174, 1
  %v2359 = vrot.slane %v2177, 1
  %v2360 = vrot.slane %v2179, 1
  %v2361 = vrot.slane %v2182, 1
  %v2362 = vrot.slane %v2184, 1
  %v2363 = vrot.slane %v2187, 1
  %v2364 = vrot.slane %v2189, 1
  %v2365 = vrot.slane %v2192, 1
  %v2366 = vrot.slane %v2194, 1
  %v2367 = vrot.slane %v2197, 1
  %v2368 = vrot.slane %v2199, 1
  %v2369 = vrot.slane %v2202, 1
  %v2370 = vrot.slane %v2204, 1
  %v2371 = vrot.slane %v2207, 1
  %v2372 = vrot.slane %v2209, 1
  %v2373 = vrot.slane %v2212, 1
  %v2374 = vrot.slane %v2214, 1
  %v2375 = vrot.slane %v2217, 1
  %v2376 = vrot.slane %v2219, 1
  %v2377 = vrot.slane %v2222, 1
  %v2378 = vrot.slane %v2224, 1
  %v2379 = vrot.slane %v2227, 1
  %v2380 = vrot.slane %v2229, 1
  %v2381 = vrot.slane %v2232, 1
  %v2382 = vrot.slane %v2234, 1
  %v2383 = vrot.slane %v2237, 1
  %v2384 = vrot.slane %v2239, 1
  %v2385 = vrot.slane %v2242, 1
  %v2386 = vrot.slane %v2244, 1
  %v2387 = vrot.slane %v2247, 1
  %v2388 = vrot.slane %v2249, 1
  %v2389 = vrot.slane %v2252, 1
  %v2390 = vrot.slane %v2254, 1
  %v2391 = vrot.slane %v2257, 1
  %v2392 = vrot.slane %v2259, 1
  %v2393 = vrot.slane %v2262, 1
  %v2394 = vrot.slane %v2264, 1
  %v2395 = vrot.slane %v2267, 1
  %v2396 = vrot.slane %v2269, 1
  %v2397 = vrot.slane %v2272, 1
  %v2398 = vrot.slane %v2274, 1
  %v2399 = vrot.slane %v2277, 1
  %v2400 = vrot.slane %v2279, 1
  %v2401 = vrot.slane %v2282, 1
  %v2402 = vrot.slane %v2284, 1
  %v2403 = vrot.slane %v2287, 1
  %v2404 = vlaneseq
  %v2405 = vshrl.u32 %v2404, 7
  %vm2406 = vcmp.lt.s32.totalorder %v2405, 7
  %v2407 = vsel %vm2406, %v2402, %v2403
  %v2408 = vsel %vm2406, %v2401, %v2402
  %v2409 = vsel %vm2406, %v2400, %v2401
  %v2410 = vsel %vm2406, %v2399, %v2400
  %v2411 = vsel %vm2406, %v2398, %v2399
  %v2412 = vsel %vm2406, %v2397, %v2398
  %v2413 = vsel %vm2406, %v2396, %v2397
  %v2414 = vsel %vm2406, %v2395, %v2396
  %v2415 = vsel %vm2406, %v2394, %v2395
  %v2416 = vsel %vm2406, %v2393, %v2394
  %v2417 = vsel %vm2406, %v2392, %v2393
  %v2418 = vsel %vm2406, %v2391, %v2392
  %v2419 = vsel %vm2406, %v2390, %v2391
  %v2420 = vsel %vm2406, %v2389, %v2390
  %v2421 = vsel %vm2406, %v2388, %v2389
  %v2422 = vsel %vm2406, %v2387, %v2388
  %v2423 = vsel %vm2406, %v2386, %v2387
  %v2424 = vsel %vm2406, %v2385, %v2386
  %v2425 = vsel %vm2406, %v2384, %v2385
  %v2426 = vsel %vm2406, %v2383, %v2384
  %v2427 = vsel %vm2406, %v2382, %v2383
  %v2428 = vsel %vm2406, %v2381, %v2382
  %v2429 = vsel %vm2406, %v2380, %v2381
  %v2430 = vsel %vm2406, %v2379, %v2380
  %v2431 = vsel %vm2406, %v2378, %v2379
  %v2432 = vsel %vm2406, %v2377, %v2378
  %v2433 = vsel %vm2406, %v2376, %v2377
  %v2434 = vsel %vm2406, %v2375, %v2376
  %v2435 = vsel %vm2406, %v2374, %v2375
  %v2436 = vsel %vm2406, %v2373, %v2374
  %v2437 = vsel %vm2406, %v2372, %v2373
  %v2438 = vsel %vm2406, %v2371, %v2372
  %v2439 = vsel %vm2406, %v2370, %v2371
  %v2440 = vsel %vm2406, %v2369, %v2370
  %v2441 = vsel %vm2406, %v2368, %v2369
  %v2442 = vsel %vm2406, %v2367, %v2368
  %v2443 = vsel %vm2406, %v2366, %v2367
  %v2444 = vsel %vm2406, %v2365, %v2366
  %v2445 = vsel %vm2406, %v2364, %v2365
  %v2446 = vsel %vm2406, %v2363, %v2364
  %v2447 = vsel %vm2406, %v2362, %v2363
  %v2448 = vsel %vm2406, %v2361, %v2362
  %v2449 = vsel %vm2406, %v2360, %v2361
  %v2450 = vsel %vm2406, %v2359, %v2360
  %v2451 = vsel %vm2406, %v2358, %v2359
  %v2452 = vsel %vm2406, %v2357, %v2358
  %v2453 = vsel %vm2406, %v2356, %v2357
  %v2454 = vsel %vm2406, %v2355, %v2356
  %v2455 = vsel %vm2406, %v2354, %v2355
  %v2456 = vsel %vm2406, %v2353, %v2354
  %v2457 = vsel %vm2406, %v2352, %v2353
  %v2458 = vsel %vm2406, %v2351, %v2352
  %v2459 = vsel %vm2406, %v2350, %v2351
  %v2460 = vsel %vm2406, %v2349, %v2350
  %v2461 = vsel %vm2406, %v2403, %v2349
  %v2462 = vsel %vm2348, %v2460, 0.0
  %v2463 = vsel %vm2348, %v2459, 0.0
  %v2464 = vsel %vm2348, %v2458, 0.0
  %v2465 = vsel %vm2348, %v2457, 0.0
  %v2466 = vsel %vm2348, %v2456, 0.0
  %v2467 = vsel %vm2348, %v2455, 0.0
  %v2468 = vsel %vm2348, %v2454, 0.0
  %v2469 = vsel %vm2348, %v2453, 0.0
  %v2470 = vsel %vm2348, %v2452, 0.0
  %v2471 = vsel %vm2348, %v2451, 0.0
  %v2472 = vsel %vm2348, %v2450, 0.0
  %v2473 = vsel %vm2348, %v2449, 0.0
  %v2474 = vsel %vm2348, %v2448, 0.0
  %v2475 = vsel %vm2348, %v2447, 0.0
  %v2476 = vsel %vm2348, %v2446, 0.0
  %v2477 = vsel %vm2348, %v2445, 0.0
  %v2478 = vsel %vm2348, %v2444, 0.0
  %v2479 = vsel %vm2348, %v2443, 0.0
  %v2480 = vsel %vm2348, %v2442, 0.0
  %v2481 = vsel %vm2348, %v2441, 0.0
  %v2482 = vsel %vm2348, %v2440, 0.0
  %v2483 = vsel %vm2348, %v2439, 0.0
  %v2484 = vsel %vm2348, %v2438, 0.0
  %v2485 = vsel %vm2348, %v2437, 0.0
  %v2486 = vsel %vm2348, %v2436, 0.0
  %v2487 = vsel %vm2348, %v2435, 0.0
  %v2488 = vsel %vm2348, %v2434, 0.0
  %v2489 = vsel %vm2348, %v2433, 0.0
  %v2490 = vsel %vm2348, %v2432, 0.0
  %v2491 = vsel %vm2348, %v2431, 0.0
  %v2492 = vsel %vm2348, %v2430, 0.0
  %v2493 = vsel %vm2348, %v2429, 0.0
  %v2494 = vsel %vm2348, %v2428, 0.0
  %v2495 = vsel %vm2348, %v2427, 0.0
  %v2496 = vsel %vm2348, %v2426, 0.0
  %v2497 = vsel %vm2348, %v2425, 0.0
  %v2498 = vsel %vm2348, %v2424, 0.0
  %v2499 = vsel %vm2348, %v2423, 0.0
  %v2500 = vsel %vm2348, %v2422, 0.0
  %v2501 = vsel %vm2348, %v2421, 0.0
  %v2502 = vsel %vm2348, %v2420, 0.0
  %v2503 = vsel %vm2348, %v2419, 0.0
  %v2504 = vsel %vm2348, %v2418, 0.0
  %v2505 = vsel %vm2348, %v2417, 0.0
  %v2506 = vsel %vm2348, %v2416, 0.0
  %v2507 = vsel %vm2348, %v2415, 0.0
  %v2508 = vsel %vm2348, %v2414, 0.0
  %v2509 = vsel %vm2348, %v2413, 0.0
  %v2510 = vsel %vm2348, %v2412, 0.0
  %v2511 = vsel %vm2348, %v2411, 0.0
  %v2512 = vsel %vm2348, %v2410, 0.0
  %v2513 = vsel %vm2348, %v2409, 0.0
  %v2514 = vsel %vm2348, %v2408, 0.0
  %v2515 = vsel %vm2348, %v2407, 0.0
  %v2516 = vsel %vm2348, %v2461, 0.0
  %v2517 = vadd.f32 %v2293, %v2462
  %v2518 = vadd.f32 %v2294, %v2463
  %v2519 = vadd.f32 %v2295, %v2464
  %v2520 = vadd.f32 %v2296, %v2465
  %v2521 = vadd.f32 %v2297, %v2466
  %v2522 = vadd.f32 %v2298, %v2467
  %v2523 = vadd.f32 %v2299, %v2468
  %v2524 = vadd.f32 %v2300, %v2469
  %v2525 = vadd.f32 %v2301, %v2470
  %v2526 = vadd.f32 %v2302, %v2471
  %v2527 = vadd.f32 %v2303, %v2472
  %v2528 = vadd.f32 %v2304, %v2473
  %v2529 = vadd.f32 %v2305, %v2474
  %v2530 = vadd.f32 %v2306, %v2475
  %v2531 = vadd.f32 %v2307, %v2476
  %v2532 = vadd.f32 %v2308, %v2477
  %v2533 = vadd.f32 %v2309, %v2478
  %v2534 = vadd.f32 %v2310, %v2479
  %v2535 = vadd.f32 %v2311, %v2480
  %v2536 = vadd.f32 %v2312, %v2481
  %v2537 = vadd.f32 %v2313, %v2482
  %v2538 = vadd.f32 %v2314, %v2483
  %v2539 = vadd.f32 %v2315, %v2484
  %v2540 = vadd.f32 %v2316, %v2485
  %v2541 = vadd.f32 %v2317, %v2486
  %v2542 = vadd.f32 %v2318, %v2487
  %v2543 = vadd.f32 %v2319, %v2488
  %v2544 = vadd.f32 %v2320, %v2489
  %v2545 = vadd.f32 %v2321, %v2490
  %v2546 = vadd.f32 %v2322, %v2491
  %v2547 = vadd.f32 %v2323, %v2492
  %v2548 = vadd.f32 %v2324, %v2493
  %v2549 = vadd.f32 %v2325, %v2494
  %v2550 = vadd.f32 %v2326, %v2495
  %v2551 = vadd.f32 %v2327, %v2496
  %v2552 = vadd.f32 %v2328, %v2497
  %v2553 = vadd.f32 %v2329, %v2498
  %v2554 = vadd.f32 %v2330, %v2499
  %v2555 = vadd.f32 %v2331, %v2500
  %v2556 = vadd.f32 %v2332, %v2501
  %v2557 = vadd.f32 %v2333, %v2502
  %v2558 = vadd.f32 %v2334, %v2503
  %v2559 = vadd.f32 %v2335, %v2504
  %v2560 = vadd.f32 %v2336, %v2505
  %v2561 = vadd.f32 %v2337, %v2506
  %v2562 = vadd.f32 %v2338, %v2507
  %v2563 = vadd.f32 %v2339, %v2508
  %v2564 = vadd.f32 %v2340, %v2509
  %v2565 = vadd.f32 %v2341, %v2510
  %v2566 = vadd.f32 %v2342, %v2511
  %v2567 = vadd.f32 %v2343, %v2512
  %v2568 = vadd.f32 %v2344, %v2513
  %v2569 = vadd.f32 %v2345, %v2514
  %v2570 = vadd.f32 %v2346, %v2515
  %v2571 = vadd.f32 %v2347, %v2516
  %vm2572 = vcmp.eq.s32.totalorder %v2291, 2
  %v2573 = vrot.slane %v2152, 2
  %v2574 = vrot.slane %v2154, 2
  %v2575 = vrot.slane %v2157, 2
  %v2576 = vrot.slane %v2159, 2
  %v2577 = vrot.slane %v2162, 2
  %v2578 = vrot.slane %v2164, 2
  %v2579 = vrot.slane %v2167, 2
  %v2580 = vrot.slane %v2169, 2
  %v2581 = vrot.slane %v2172, 2
  %v2582 = vrot.slane %v2174, 2
  %v2583 = vrot.slane %v2177, 2
  %v2584 = vrot.slane %v2179, 2
  %v2585 = vrot.slane %v2182, 2
  %v2586 = vrot.slane %v2184, 2
  %v2587 = vrot.slane %v2187, 2
  %v2588 = vrot.slane %v2189, 2
  %v2589 = vrot.slane %v2192, 2
  %v2590 = vrot.slane %v2194, 2
  %v2591 = vrot.slane %v2197, 2
  %v2592 = vrot.slane %v2199, 2
  %v2593 = vrot.slane %v2202, 2
  %v2594 = vrot.slane %v2204, 2
  %v2595 = vrot.slane %v2207, 2
  %v2596 = vrot.slane %v2209, 2
  %v2597 = vrot.slane %v2212, 2
  %v2598 = vrot.slane %v2214, 2
  %v2599 = vrot.slane %v2217, 2
  %v2600 = vrot.slane %v2219, 2
  %v2601 = vrot.slane %v2222, 2
  %v2602 = vrot.slane %v2224, 2
  %v2603 = vrot.slane %v2227, 2
  %v2604 = vrot.slane %v2229, 2
  %v2605 = vrot.slane %v2232, 2
  %v2606 = vrot.slane %v2234, 2
  %v2607 = vrot.slane %v2237, 2
  %v2608 = vrot.slane %v2239, 2
  %v2609 = vrot.slane %v2242, 2
  %v2610 = vrot.slane %v2244, 2
  %v2611 = vrot.slane %v2247, 2
  %v2612 = vrot.slane %v2249, 2
  %v2613 = vrot.slane %v2252, 2
  %v2614 = vrot.slane %v2254, 2
  %v2615 = vrot.slane %v2257, 2
  %v2616 = vrot.slane %v2259, 2
  %v2617 = vrot.slane %v2262, 2
  %v2618 = vrot.slane %v2264, 2
  %v2619 = vrot.slane %v2267, 2
  %v2620 = vrot.slane %v2269, 2
  %v2621 = vrot.slane %v2272, 2
  %v2622 = vrot.slane %v2274, 2
  %v2623 = vrot.slane %v2277, 2
  %v2624 = vrot.slane %v2279, 2
  %v2625 = vrot.slane %v2282, 2
  %v2626 = vrot.slane %v2284, 2
  %v2627 = vrot.slane %v2287, 2
  %vm2628 = vcmp.lt.s32.totalorder %v2405, 6
  %v2629 = vsel %vm2628, %v2626, %v2627
  %v2630 = vsel %vm2628, %v2625, %v2626
  %v2631 = vsel %vm2628, %v2624, %v2625
  %v2632 = vsel %vm2628, %v2623, %v2624
  %v2633 = vsel %vm2628, %v2622, %v2623
  %v2634 = vsel %vm2628, %v2621, %v2622
  %v2635 = vsel %vm2628, %v2620, %v2621
  %v2636 = vsel %vm2628, %v2619, %v2620
  %v2637 = vsel %vm2628, %v2618, %v2619
  %v2638 = vsel %vm2628, %v2617, %v2618
  %v2639 = vsel %vm2628, %v2616, %v2617
  %v2640 = vsel %vm2628, %v2615, %v2616
  %v2641 = vsel %vm2628, %v2614, %v2615
  %v2642 = vsel %vm2628, %v2613, %v2614
  %v2643 = vsel %vm2628, %v2612, %v2613
  %v2644 = vsel %vm2628, %v2611, %v2612
  %v2645 = vsel %vm2628, %v2610, %v2611
  %v2646 = vsel %vm2628, %v2609, %v2610
  %v2647 = vsel %vm2628, %v2608, %v2609
  %v2648 = vsel %vm2628, %v2607, %v2608
  %v2649 = vsel %vm2628, %v2606, %v2607
  %v2650 = vsel %vm2628, %v2605, %v2606
  %v2651 = vsel %vm2628, %v2604, %v2605
  %v2652 = vsel %vm2628, %v2603, %v2604
  %v2653 = vsel %vm2628, %v2602, %v2603
  %v2654 = vsel %vm2628, %v2601, %v2602
  %v2655 = vsel %vm2628, %v2600, %v2601
  %v2656 = vsel %vm2628, %v2599, %v2600
  %v2657 = vsel %vm2628, %v2598, %v2599
  %v2658 = vsel %vm2628, %v2597, %v2598
  %v2659 = vsel %vm2628, %v2596, %v2597
  %v2660 = vsel %vm2628, %v2595, %v2596
  %v2661 = vsel %vm2628, %v2594, %v2595
  %v2662 = vsel %vm2628, %v2593, %v2594
  %v2663 = vsel %vm2628, %v2592, %v2593
  %v2664 = vsel %vm2628, %v2591, %v2592
  %v2665 = vsel %vm2628, %v2590, %v2591
  %v2666 = vsel %vm2628, %v2589, %v2590
  %v2667 = vsel %vm2628, %v2588, %v2589
  %v2668 = vsel %vm2628, %v2587, %v2588
  %v2669 = vsel %vm2628, %v2586, %v2587
  %v2670 = vsel %vm2628, %v2585, %v2586
  %v2671 = vsel %vm2628, %v2584, %v2585
  %v2672 = vsel %vm2628, %v2583, %v2584
  %v2673 = vsel %vm2628, %v2582, %v2583
  %v2674 = vsel %vm2628, %v2581, %v2582
  %v2675 = vsel %vm2628, %v2580, %v2581
  %v2676 = vsel %vm2628, %v2579, %v2580
  %v2677 = vsel %vm2628, %v2578, %v2579
  %v2678 = vsel %vm2628, %v2577, %v2578
  %v2679 = vsel %vm2628, %v2576, %v2577
  %v2680 = vsel %vm2628, %v2575, %v2576
  %v2681 = vsel %vm2628, %v2574, %v2575
  %v2682 = vsel %vm2628, %v2573, %v2574
  %v2683 = vsel %vm2628, %v2627, %v2573
  %v2684 = vsel %vm2572, %v2682, 0.0
  %v2685 = vsel %vm2572, %v2681, 0.0
  %v2686 = vsel %vm2572, %v2680, 0.0
  %v2687 = vsel %vm2572, %v2679, 0.0
  %v2688 = vsel %vm2572, %v2678, 0.0
  %v2689 = vsel %vm2572, %v2677, 0.0
  %v2690 = vsel %vm2572, %v2676, 0.0
  %v2691 = vsel %vm2572, %v2675, 0.0
  %v2692 = vsel %vm2572, %v2674, 0.0
  %v2693 = vsel %vm2572, %v2673, 0.0
  %v2694 = vsel %vm2572, %v2672, 0.0
  %v2695 = vsel %vm2572, %v2671, 0.0
  %v2696 = vsel %vm2572, %v2670, 0.0
  %v2697 = vsel %vm2572, %v2669, 0.0
  %v2698 = vsel %vm2572, %v2668, 0.0
  %v2699 = vsel %vm2572, %v2667, 0.0
  %v2700 = vsel %vm2572, %v2666, 0.0
  %v2701 = vsel %vm2572, %v2665, 0.0
  %v2702 = vsel %vm2572, %v2664, 0.0
  %v2703 = vsel %vm2572, %v2663, 0.0
  %v2704 = vsel %vm2572, %v2662, 0.0
  %v2705 = vsel %vm2572, %v2661, 0.0
  %v2706 = vsel %vm2572, %v2660, 0.0
  %v2707 = vsel %vm2572, %v2659, 0.0
  %v2708 = vsel %vm2572, %v2658, 0.0
  %v2709 = vsel %vm2572, %v2657, 0.0
  %v2710 = vsel %vm2572, %v2656, 0.0
  %v2711 = vsel %vm2572, %v2655, 0.0
  %v2712 = vsel %vm2572, %v2654, 0.0
  %v2713 = vsel %vm2572, %v2653, 0.0
  %v2714 = vsel %vm2572, %v2652, 0.0
  %v2715 = vsel %vm2572, %v2651, 0.0
  %v2716 = vsel %vm2572, %v2650, 0.0
  %v2717 = vsel %vm2572, %v2649, 0.0
  %v2718 = vsel %vm2572, %v2648, 0.0
  %v2719 = vsel %vm2572, %v2647, 0.0
  %v2720 = vsel %vm2572, %v2646, 0.0
  %v2721 = vsel %vm2572, %v2645, 0.0
  %v2722 = vsel %vm2572, %v2644, 0.0
  %v2723 = vsel %vm2572, %v2643, 0.0
  %v2724 = vsel %vm2572, %v2642, 0.0
  %v2725 = vsel %vm2572, %v2641, 0.0
  %v2726 = vsel %vm2572, %v2640, 0.0
  %v2727 = vsel %vm2572, %v2639, 0.0
  %v2728 = vsel %vm2572, %v2638, 0.0
  %v2729 = vsel %vm2572, %v2637, 0.0
  %v2730 = vsel %vm2572, %v2636, 0.0
  %v2731 = vsel %vm2572, %v2635, 0.0
  %v2732 = vsel %vm2572, %v2634, 0.0
  %v2733 = vsel %vm2572, %v2633, 0.0
  %v2734 = vsel %vm2572, %v2632, 0.0
  %v2735 = vsel %vm2572, %v2631, 0.0
  %v2736 = vsel %vm2572, %v2630, 0.0
  %v2737 = vsel %vm2572, %v2629, 0.0
  %v2738 = vsel %vm2572, %v2683, 0.0
  %v2739 = vadd.f32 %v2517, %v2684
  %v2740 = vadd.f32 %v2518, %v2685
  %v2741 = vadd.f32 %v2519, %v2686
  %v2742 = vadd.f32 %v2520, %v2687
  %v2743 = vadd.f32 %v2521, %v2688
  %v2744 = vadd.f32 %v2522, %v2689
  %v2745 = vadd.f32 %v2523, %v2690
  %v2746 = vadd.f32 %v2524, %v2691
  %v2747 = vadd.f32 %v2525, %v2692
  %v2748 = vadd.f32 %v2526, %v2693
  %v2749 = vadd.f32 %v2527, %v2694
  %v2750 = vadd.f32 %v2528, %v2695
  %v2751 = vadd.f32 %v2529, %v2696
  %v2752 = vadd.f32 %v2530, %v2697
  %v2753 = vadd.f32 %v2531, %v2698
  %v2754 = vadd.f32 %v2532, %v2699
  %v2755 = vadd.f32 %v2533, %v2700
  %v2756 = vadd.f32 %v2534, %v2701
  %v2757 = vadd.f32 %v2535, %v2702
  %v2758 = vadd.f32 %v2536, %v2703
  %v2759 = vadd.f32 %v2537, %v2704
  %v2760 = vadd.f32 %v2538, %v2705
  %v2761 = vadd.f32 %v2539, %v2706
  %v2762 = vadd.f32 %v2540, %v2707
  %v2763 = vadd.f32 %v2541, %v2708
  %v2764 = vadd.f32 %v2542, %v2709
  %v2765 = vadd.f32 %v2543, %v2710
  %v2766 = vadd.f32 %v2544, %v2711
  %v2767 = vadd.f32 %v2545, %v2712
  %v2768 = vadd.f32 %v2546, %v2713
  %v2769 = vadd.f32 %v2547, %v2714
  %v2770 = vadd.f32 %v2548, %v2715
  %v2771 = vadd.f32 %v2549, %v2716
  %v2772 = vadd.f32 %v2550, %v2717
  %v2773 = vadd.f32 %v2551, %v2718
  %v2774 = vadd.f32 %v2552, %v2719
  %v2775 = vadd.f32 %v2553, %v2720
  %v2776 = vadd.f32 %v2554, %v2721
  %v2777 = vadd.f32 %v2555, %v2722
  %v2778 = vadd.f32 %v2556, %v2723
  %v2779 = vadd.f32 %v2557, %v2724
  %v2780 = vadd.f32 %v2558, %v2725
  %v2781 = vadd.f32 %v2559, %v2726
  %v2782 = vadd.f32 %v2560, %v2727
  %v2783 = vadd.f32 %v2561, %v2728
  %v2784 = vadd.f32 %v2562, %v2729
  %v2785 = vadd.f32 %v2563, %v2730
  %v2786 = vadd.f32 %v2564, %v2731
  %v2787 = vadd.f32 %v2565, %v2732
  %v2788 = vadd.f32 %v2566, %v2733
  %v2789 = vadd.f32 %v2567, %v2734
  %v2790 = vadd.f32 %v2568, %v2735
  %v2791 = vadd.f32 %v2569, %v2736
  %v2792 = vadd.f32 %v2570, %v2737
  %v2793 = vadd.f32 %v2571, %v2738
  %vm2794 = vcmp.eq.s32.totalorder %v2291, 3
  %v2795 = vrot.slane %v2152, 3
  %v2796 = vrot.slane %v2154, 3
  %v2797 = vrot.slane %v2157, 3
  %v2798 = vrot.slane %v2159, 3
  %v2799 = vrot.slane %v2162, 3
  %v2800 = vrot.slane %v2164, 3
  %v2801 = vrot.slane %v2167, 3
  %v2802 = vrot.slane %v2169, 3
  %v2803 = vrot.slane %v2172, 3
  %v2804 = vrot.slane %v2174, 3
  %v2805 = vrot.slane %v2177, 3
  %v2806 = vrot.slane %v2179, 3
  %v2807 = vrot.slane %v2182, 3
  %v2808 = vrot.slane %v2184, 3
  %v2809 = vrot.slane %v2187, 3
  %v2810 = vrot.slane %v2189, 3
  %v2811 = vrot.slane %v2192, 3
  %v2812 = vrot.slane %v2194, 3
  %v2813 = vrot.slane %v2197, 3
  %v2814 = vrot.slane %v2199, 3
  %v2815 = vrot.slane %v2202, 3
  %v2816 = vrot.slane %v2204, 3
  %v2817 = vrot.slane %v2207, 3
  %v2818 = vrot.slane %v2209, 3
  %v2819 = vrot.slane %v2212, 3
  %v2820 = vrot.slane %v2214, 3
  %v2821 = vrot.slane %v2217, 3
  %v2822 = vrot.slane %v2219, 3
  %v2823 = vrot.slane %v2222, 3
  %v2824 = vrot.slane %v2224, 3
  %v2825 = vrot.slane %v2227, 3
  %v2826 = vrot.slane %v2229, 3
  %v2827 = vrot.slane %v2232, 3
  %v2828 = vrot.slane %v2234, 3
  %v2829 = vrot.slane %v2237, 3
  %v2830 = vrot.slane %v2239, 3
  %v2831 = vrot.slane %v2242, 3
  %v2832 = vrot.slane %v2244, 3
  %v2833 = vrot.slane %v2247, 3
  %v2834 = vrot.slane %v2249, 3
  %v2835 = vrot.slane %v2252, 3
  %v2836 = vrot.slane %v2254, 3
  %v2837 = vrot.slane %v2257, 3
  %v2838 = vrot.slane %v2259, 3
  %v2839 = vrot.slane %v2262, 3
  %v2840 = vrot.slane %v2264, 3
  %v2841 = vrot.slane %v2267, 3
  %v2842 = vrot.slane %v2269, 3
  %v2843 = vrot.slane %v2272, 3
  %v2844 = vrot.slane %v2274, 3
  %v2845 = vrot.slane %v2277, 3
  %v2846 = vrot.slane %v2279, 3
  %v2847 = vrot.slane %v2282, 3
  %v2848 = vrot.slane %v2284, 3
  %v2849 = vrot.slane %v2287, 3
  %vm2850 = vcmp.lt.s32.totalorder %v2405, 5
  %v2851 = vsel %vm2850, %v2848, %v2849
  %v2852 = vsel %vm2850, %v2847, %v2848
  %v2853 = vsel %vm2850, %v2846, %v2847
  %v2854 = vsel %vm2850, %v2845, %v2846
  %v2855 = vsel %vm2850, %v2844, %v2845
  %v2856 = vsel %vm2850, %v2843, %v2844
  %v2857 = vsel %vm2850, %v2842, %v2843
  %v2858 = vsel %vm2850, %v2841, %v2842
  %v2859 = vsel %vm2850, %v2840, %v2841
  %v2860 = vsel %vm2850, %v2839, %v2840
  %v2861 = vsel %vm2850, %v2838, %v2839
  %v2862 = vsel %vm2850, %v2837, %v2838
  %v2863 = vsel %vm2850, %v2836, %v2837
  %v2864 = vsel %vm2850, %v2835, %v2836
  %v2865 = vsel %vm2850, %v2834, %v2835
  %v2866 = vsel %vm2850, %v2833, %v2834
  %v2867 = vsel %vm2850, %v2832, %v2833
  %v2868 = vsel %vm2850, %v2831, %v2832
  %v2869 = vsel %vm2850, %v2830, %v2831
  %v2870 = vsel %vm2850, %v2829, %v2830
  %v2871 = vsel %vm2850, %v2828, %v2829
  %v2872 = vsel %vm2850, %v2827, %v2828
  %v2873 = vsel %vm2850, %v2826, %v2827
  %v2874 = vsel %vm2850, %v2825, %v2826
  %v2875 = vsel %vm2850, %v2824, %v2825
  %v2876 = vsel %vm2850, %v2823, %v2824
  %v2877 = vsel %vm2850, %v2822, %v2823
  %v2878 = vsel %vm2850, %v2821, %v2822
  %v2879 = vsel %vm2850, %v2820, %v2821
  %v2880 = vsel %vm2850, %v2819, %v2820
  %v2881 = vsel %vm2850, %v2818, %v2819
  %v2882 = vsel %vm2850, %v2817, %v2818
  %v2883 = vsel %vm2850, %v2816, %v2817
  %v2884 = vsel %vm2850, %v2815, %v2816
  %v2885 = vsel %vm2850, %v2814, %v2815
  %v2886 = vsel %vm2850, %v2813, %v2814
  %v2887 = vsel %vm2850, %v2812, %v2813
  %v2888 = vsel %vm2850, %v2811, %v2812
  %v2889 = vsel %vm2850, %v2810, %v2811
  %v2890 = vsel %vm2850, %v2809, %v2810
  %v2891 = vsel %vm2850, %v2808, %v2809
  %v2892 = vsel %vm2850, %v2807, %v2808
  %v2893 = vsel %vm2850, %v2806, %v2807
  %v2894 = vsel %vm2850, %v2805, %v2806
  %v2895 = vsel %vm2850, %v2804, %v2805
  %v2896 = vsel %vm2850, %v2803, %v2804
  %v2897 = vsel %vm2850, %v2802, %v2803
  %v2898 = vsel %vm2850, %v2801, %v2802
  %v2899 = vsel %vm2850, %v2800, %v2801
  %v2900 = vsel %vm2850, %v2799, %v2800
  %v2901 = vsel %vm2850, %v2798, %v2799
  %v2902 = vsel %vm2850, %v2797, %v2798
  %v2903 = vsel %vm2850, %v2796, %v2797
  %v2904 = vsel %vm2850, %v2795, %v2796
  %v2905 = vsel %vm2850, %v2849, %v2795
  %v2906 = vsel %vm2794, %v2904, 0.0
  %v2907 = vsel %vm2794, %v2903, 0.0
  %v2908 = vsel %vm2794, %v2902, 0.0
  %v2909 = vsel %vm2794, %v2901, 0.0
  %v2910 = vsel %vm2794, %v2900, 0.0
  %v2911 = vsel %vm2794, %v2899, 0.0
  %v2912 = vsel %vm2794, %v2898, 0.0
  %v2913 = vsel %vm2794, %v2897, 0.0
  %v2914 = vsel %vm2794, %v2896, 0.0
  %v2915 = vsel %vm2794, %v2895, 0.0
  %v2916 = vsel %vm2794, %v2894, 0.0
  %v2917 = vsel %vm2794, %v2893, 0.0
  %v2918 = vsel %vm2794, %v2892, 0.0
  %v2919 = vsel %vm2794, %v2891, 0.0
  %v2920 = vsel %vm2794, %v2890, 0.0
  %v2921 = vsel %vm2794, %v2889, 0.0
  %v2922 = vsel %vm2794, %v2888, 0.0
  %v2923 = vsel %vm2794, %v2887, 0.0
  %v2924 = vsel %vm2794, %v2886, 0.0
  %v2925 = vsel %vm2794, %v2885, 0.0
  %v2926 = vsel %vm2794, %v2884, 0.0
  %v2927 = vsel %vm2794, %v2883, 0.0
  %v2928 = vsel %vm2794, %v2882, 0.0
  %v2929 = vsel %vm2794, %v2881, 0.0
  %v2930 = vsel %vm2794, %v2880, 0.0
  %v2931 = vsel %vm2794, %v2879, 0.0
  %v2932 = vsel %vm2794, %v2878, 0.0
  %v2933 = vsel %vm2794, %v2877, 0.0
  %v2934 = vsel %vm2794, %v2876, 0.0
  %v2935 = vsel %vm2794, %v2875, 0.0
  %v2936 = vsel %vm2794, %v2874, 0.0
  %v2937 = vsel %vm2794, %v2873, 0.0
  %v2938 = vsel %vm2794, %v2872, 0.0
  %v2939 = vsel %vm2794, %v2871, 0.0
  %v2940 = vsel %vm2794, %v2870, 0.0
  %v2941 = vsel %vm2794, %v2869, 0.0
  %v2942 = vsel %vm2794, %v2868, 0.0
  %v2943 = vsel %vm2794, %v2867, 0.0
  %v2944 = vsel %vm2794, %v2866, 0.0
  %v2945 = vsel %vm2794, %v2865, 0.0
  %v2946 = vsel %vm2794, %v2864, 0.0
  %v2947 = vsel %vm2794, %v2863, 0.0
  %v2948 = vsel %vm2794, %v2862, 0.0
  %v2949 = vsel %vm2794, %v2861, 0.0
  %v2950 = vsel %vm2794, %v2860, 0.0
  %v2951 = vsel %vm2794, %v2859, 0.0
  %v2952 = vsel %vm2794, %v2858, 0.0
  %v2953 = vsel %vm2794, %v2857, 0.0
  %v2954 = vsel %vm2794, %v2856, 0.0
  %v2955 = vsel %vm2794, %v2855, 0.0
  %v2956 = vsel %vm2794, %v2854, 0.0
  %v2957 = vsel %vm2794, %v2853, 0.0
  %v2958 = vsel %vm2794, %v2852, 0.0
  %v2959 = vsel %vm2794, %v2851, 0.0
  %v2960 = vsel %vm2794, %v2905, 0.0
  %v2961 = vadd.f32 %v2739, %v2906
  %v2962 = vadd.f32 %v2740, %v2907
  %v2963 = vadd.f32 %v2741, %v2908
  %v2964 = vadd.f32 %v2742, %v2909
  %v2965 = vadd.f32 %v2743, %v2910
  %v2966 = vadd.f32 %v2744, %v2911
  %v2967 = vadd.f32 %v2745, %v2912
  %v2968 = vadd.f32 %v2746, %v2913
  %v2969 = vadd.f32 %v2747, %v2914
  %v2970 = vadd.f32 %v2748, %v2915
  %v2971 = vadd.f32 %v2749, %v2916
  %v2972 = vadd.f32 %v2750, %v2917
  %v2973 = vadd.f32 %v2751, %v2918
  %v2974 = vadd.f32 %v2752, %v2919
  %v2975 = vadd.f32 %v2753, %v2920
  %v2976 = vadd.f32 %v2754, %v2921
  %v2977 = vadd.f32 %v2755, %v2922
  %v2978 = vadd.f32 %v2756, %v2923
  %v2979 = vadd.f32 %v2757, %v2924
  %v2980 = vadd.f32 %v2758, %v2925
  %v2981 = vadd.f32 %v2759, %v2926
  %v2982 = vadd.f32 %v2760, %v2927
  %v2983 = vadd.f32 %v2761, %v2928
  %v2984 = vadd.f32 %v2762, %v2929
  %v2985 = vadd.f32 %v2763, %v2930
  %v2986 = vadd.f32 %v2764, %v2931
  %v2987 = vadd.f32 %v2765, %v2932
  %v2988 = vadd.f32 %v2766, %v2933
  %v2989 = vadd.f32 %v2767, %v2934
  %v2990 = vadd.f32 %v2768, %v2935
  %v2991 = vadd.f32 %v2769, %v2936
  %v2992 = vadd.f32 %v2770, %v2937
  %v2993 = vadd.f32 %v2771, %v2938
  %v2994 = vadd.f32 %v2772, %v2939
  %v2995 = vadd.f32 %v2773, %v2940
  %v2996 = vadd.f32 %v2774, %v2941
  %v2997 = vadd.f32 %v2775, %v2942
  %v2998 = vadd.f32 %v2776, %v2943
  %v2999 = vadd.f32 %v2777, %v2944
  %v3000 = vadd.f32 %v2778, %v2945
  %v3001 = vadd.f32 %v2779, %v2946
  %v3002 = vadd.f32 %v2780, %v2947
  %v3003 = vadd.f32 %v2781, %v2948
  %v3004 = vadd.f32 %v2782, %v2949
  %v3005 = vadd.f32 %v2783, %v2950
  %v3006 = vadd.f32 %v2784, %v2951
  %v3007 = vadd.f32 %v2785, %v2952
  %v3008 = vadd.f32 %v2786, %v2953
  %v3009 = vadd.f32 %v2787, %v2954
  %v3010 = vadd.f32 %v2788, %v2955
  %v3011 = vadd.f32 %v2789, %v2956
  %v3012 = vadd.f32 %v2790, %v2957
  %v3013 = vadd.f32 %v2791, %v2958
  %v3014 = vadd.f32 %v2792, %v2959
  %v3015 = vadd.f32 %v2793, %v2960
  %vm3016 = vcmp.eq.s32.totalorder %v2291, 4
  %v3017 = vrot.slane %v2152, 4
  %v3018 = vrot.slane %v2154, 4
  %v3019 = vrot.slane %v2157, 4
  %v3020 = vrot.slane %v2159, 4
  %v3021 = vrot.slane %v2162, 4
  %v3022 = vrot.slane %v2164, 4
  %v3023 = vrot.slane %v2167, 4
  %v3024 = vrot.slane %v2169, 4
  %v3025 = vrot.slane %v2172, 4
  %v3026 = vrot.slane %v2174, 4
  %v3027 = vrot.slane %v2177, 4
  %v3028 = vrot.slane %v2179, 4
  %v3029 = vrot.slane %v2182, 4
  %v3030 = vrot.slane %v2184, 4
  %v3031 = vrot.slane %v2187, 4
  %v3032 = vrot.slane %v2189, 4
  %v3033 = vrot.slane %v2192, 4
  %v3034 = vrot.slane %v2194, 4
  %v3035 = vrot.slane %v2197, 4
  %v3036 = vrot.slane %v2199, 4
  %v3037 = vrot.slane %v2202, 4
  %v3038 = vrot.slane %v2204, 4
  %v3039 = vrot.slane %v2207, 4
  %v3040 = vrot.slane %v2209, 4
  %v3041 = vrot.slane %v2212, 4
  %v3042 = vrot.slane %v2214, 4
  %v3043 = vrot.slane %v2217, 4
  %v3044 = vrot.slane %v2219, 4
  %v3045 = vrot.slane %v2222, 4
  %v3046 = vrot.slane %v2224, 4
  %v3047 = vrot.slane %v2227, 4
  %v3048 = vrot.slane %v2229, 4
  %v3049 = vrot.slane %v2232, 4
  %v3050 = vrot.slane %v2234, 4
  %v3051 = vrot.slane %v2237, 4
  %v3052 = vrot.slane %v2239, 4
  %v3053 = vrot.slane %v2242, 4
  %v3054 = vrot.slane %v2244, 4
  %v3055 = vrot.slane %v2247, 4
  %v3056 = vrot.slane %v2249, 4
  %v3057 = vrot.slane %v2252, 4
  %v3058 = vrot.slane %v2254, 4
  %v3059 = vrot.slane %v2257, 4
  %v3060 = vrot.slane %v2259, 4
  %v3061 = vrot.slane %v2262, 4
  %v3062 = vrot.slane %v2264, 4
  %v3063 = vrot.slane %v2267, 4
  %v3064 = vrot.slane %v2269, 4
  %v3065 = vrot.slane %v2272, 4
  %v3066 = vrot.slane %v2274, 4
  %v3067 = vrot.slane %v2277, 4
  %v3068 = vrot.slane %v2279, 4
  %v3069 = vrot.slane %v2282, 4
  %v3070 = vrot.slane %v2284, 4
  %v3071 = vrot.slane %v2287, 4
  %vm3072 = vcmp.lt.s32.totalorder %v2405, 4
  %v3073 = vsel %vm3072, %v3070, %v3071
  %v3074 = vsel %vm3072, %v3069, %v3070
  %v3075 = vsel %vm3072, %v3068, %v3069
  %v3076 = vsel %vm3072, %v3067, %v3068
  %v3077 = vsel %vm3072, %v3066, %v3067
  %v3078 = vsel %vm3072, %v3065, %v3066
  %v3079 = vsel %vm3072, %v3064, %v3065
  %v3080 = vsel %vm3072, %v3063, %v3064
  %v3081 = vsel %vm3072, %v3062, %v3063
  %v3082 = vsel %vm3072, %v3061, %v3062
  %v3083 = vsel %vm3072, %v3060, %v3061
  %v3084 = vsel %vm3072, %v3059, %v3060
  %v3085 = vsel %vm3072, %v3058, %v3059
  %v3086 = vsel %vm3072, %v3057, %v3058
  %v3087 = vsel %vm3072, %v3056, %v3057
  %v3088 = vsel %vm3072, %v3055, %v3056
  %v3089 = vsel %vm3072, %v3054, %v3055
  %v3090 = vsel %vm3072, %v3053, %v3054
  %v3091 = vsel %vm3072, %v3052, %v3053
  %v3092 = vsel %vm3072, %v3051, %v3052
  %v3093 = vsel %vm3072, %v3050, %v3051
  %v3094 = vsel %vm3072, %v3049, %v3050
  %v3095 = vsel %vm3072, %v3048, %v3049
  %v3096 = vsel %vm3072, %v3047, %v3048
  %v3097 = vsel %vm3072, %v3046, %v3047
  %v3098 = vsel %vm3072, %v3045, %v3046
  %v3099 = vsel %vm3072, %v3044, %v3045
  %v3100 = vsel %vm3072, %v3043, %v3044
  %v3101 = vsel %vm3072, %v3042, %v3043
  %v3102 = vsel %vm3072, %v3041, %v3042
  %v3103 = vsel %vm3072, %v3040, %v3041
  %v3104 = vsel %vm3072, %v3039, %v3040
  %v3105 = vsel %vm3072, %v3038, %v3039
  %v3106 = vsel %vm3072, %v3037, %v3038
  %v3107 = vsel %vm3072, %v3036, %v3037
  %v3108 = vsel %vm3072, %v3035, %v3036
  %v3109 = vsel %vm3072, %v3034, %v3035
  %v3110 = vsel %vm3072, %v3033, %v3034
  %v3111 = vsel %vm3072, %v3032, %v3033
  %v3112 = vsel %vm3072, %v3031, %v3032
  %v3113 = vsel %vm3072, %v3030, %v3031
  %v3114 = vsel %vm3072, %v3029, %v3030
  %v3115 = vsel %vm3072, %v3028, %v3029
  %v3116 = vsel %vm3072, %v3027, %v3028
  %v3117 = vsel %vm3072, %v3026, %v3027
  %v3118 = vsel %vm3072, %v3025, %v3026
  %v3119 = vsel %vm3072, %v3024, %v3025
  %v3120 = vsel %vm3072, %v3023, %v3024
  %v3121 = vsel %vm3072, %v3022, %v3023
  %v3122 = vsel %vm3072, %v3021, %v3022
  %v3123 = vsel %vm3072, %v3020, %v3021
  %v3124 = vsel %vm3072, %v3019, %v3020
  %v3125 = vsel %vm3072, %v3018, %v3019
  %v3126 = vsel %vm3072, %v3017, %v3018
  %v3127 = vsel %vm3072, %v3071, %v3017
  %v3128 = vsel %vm3016, %v3126, 0.0
  %v3129 = vsel %vm3016, %v3125, 0.0
  %v3130 = vsel %vm3016, %v3124, 0.0
  %v3131 = vsel %vm3016, %v3123, 0.0
  %v3132 = vsel %vm3016, %v3122, 0.0
  %v3133 = vsel %vm3016, %v3121, 0.0
  %v3134 = vsel %vm3016, %v3120, 0.0
  %v3135 = vsel %vm3016, %v3119, 0.0
  %v3136 = vsel %vm3016, %v3118, 0.0
  %v3137 = vsel %vm3016, %v3117, 0.0
  %v3138 = vsel %vm3016, %v3116, 0.0
  %v3139 = vsel %vm3016, %v3115, 0.0
  %v3140 = vsel %vm3016, %v3114, 0.0
  %v3141 = vsel %vm3016, %v3113, 0.0
  %v3142 = vsel %vm3016, %v3112, 0.0
  %v3143 = vsel %vm3016, %v3111, 0.0
  %v3144 = vsel %vm3016, %v3110, 0.0
  %v3145 = vsel %vm3016, %v3109, 0.0
  %v3146 = vsel %vm3016, %v3108, 0.0
  %v3147 = vsel %vm3016, %v3107, 0.0
  %v3148 = vsel %vm3016, %v3106, 0.0
  %v3149 = vsel %vm3016, %v3105, 0.0
  %v3150 = vsel %vm3016, %v3104, 0.0
  %v3151 = vsel %vm3016, %v3103, 0.0
  %v3152 = vsel %vm3016, %v3102, 0.0
  %v3153 = vsel %vm3016, %v3101, 0.0
  %v3154 = vsel %vm3016, %v3100, 0.0
  %v3155 = vsel %vm3016, %v3099, 0.0
  %v3156 = vsel %vm3016, %v3098, 0.0
  %v3157 = vsel %vm3016, %v3097, 0.0
  %v3158 = vsel %vm3016, %v3096, 0.0
  %v3159 = vsel %vm3016, %v3095, 0.0
  %v3160 = vsel %vm3016, %v3094, 0.0
  %v3161 = vsel %vm3016, %v3093, 0.0
  %v3162 = vsel %vm3016, %v3092, 0.0
  %v3163 = vsel %vm3016, %v3091, 0.0
  %v3164 = vsel %vm3016, %v3090, 0.0
  %v3165 = vsel %vm3016, %v3089, 0.0
  %v3166 = vsel %vm3016, %v3088, 0.0
  %v3167 = vsel %vm3016, %v3087, 0.0
  %v3168 = vsel %vm3016, %v3086, 0.0
  %v3169 = vsel %vm3016, %v3085, 0.0
  %v3170 = vsel %vm3016, %v3084, 0.0
  %v3171 = vsel %vm3016, %v3083, 0.0
  %v3172 = vsel %vm3016, %v3082, 0.0
  %v3173 = vsel %vm3016, %v3081, 0.0
  %v3174 = vsel %vm3016, %v3080, 0.0
  %v3175 = vsel %vm3016, %v3079, 0.0
  %v3176 = vsel %vm3016, %v3078, 0.0
  %v3177 = vsel %vm3016, %v3077, 0.0
  %v3178 = vsel %vm3016, %v3076, 0.0
  %v3179 = vsel %vm3016, %v3075, 0.0
  %v3180 = vsel %vm3016, %v3074, 0.0
  %v3181 = vsel %vm3016, %v3073, 0.0
  %v3182 = vsel %vm3016, %v3127, 0.0
  %v3183 = vadd.f32 %v2961, %v3128
  %v3184 = vadd.f32 %v2962, %v3129
  %v3185 = vadd.f32 %v2963, %v3130
  %v3186 = vadd.f32 %v2964, %v3131
  %v3187 = vadd.f32 %v2965, %v3132
  %v3188 = vadd.f32 %v2966, %v3133
  %v3189 = vadd.f32 %v2967, %v3134
  %v3190 = vadd.f32 %v2968, %v3135
  %v3191 = vadd.f32 %v2969, %v3136
  %v3192 = vadd.f32 %v2970, %v3137
  %v3193 = vadd.f32 %v2971, %v3138
  %v3194 = vadd.f32 %v2972, %v3139
  %v3195 = vadd.f32 %v2973, %v3140
  %v3196 = vadd.f32 %v2974, %v3141
  %v3197 = vadd.f32 %v2975, %v3142
  %v3198 = vadd.f32 %v2976, %v3143
  %v3199 = vadd.f32 %v2977, %v3144
  %v3200 = vadd.f32 %v2978, %v3145
  %v3201 = vadd.f32 %v2979, %v3146
  %v3202 = vadd.f32 %v2980, %v3147
  %v3203 = vadd.f32 %v2981, %v3148
  %v3204 = vadd.f32 %v2982, %v3149
  %v3205 = vadd.f32 %v2983, %v3150
  %v3206 = vadd.f32 %v2984, %v3151
  %v3207 = vadd.f32 %v2985, %v3152
  %v3208 = vadd.f32 %v2986, %v3153
  %v3209 = vadd.f32 %v2987, %v3154
  %v3210 = vadd.f32 %v2988, %v3155
  %v3211 = vadd.f32 %v2989, %v3156
  %v3212 = vadd.f32 %v2990, %v3157
  %v3213 = vadd.f32 %v2991, %v3158
  %v3214 = vadd.f32 %v2992, %v3159
  %v3215 = vadd.f32 %v2993, %v3160
  %v3216 = vadd.f32 %v2994, %v3161
  %v3217 = vadd.f32 %v2995, %v3162
  %v3218 = vadd.f32 %v2996, %v3163
  %v3219 = vadd.f32 %v2997, %v3164
  %v3220 = vadd.f32 %v2998, %v3165
  %v3221 = vadd.f32 %v2999, %v3166
  %v3222 = vadd.f32 %v3000, %v3167
  %v3223 = vadd.f32 %v3001, %v3168
  %v3224 = vadd.f32 %v3002, %v3169
  %v3225 = vadd.f32 %v3003, %v3170
  %v3226 = vadd.f32 %v3004, %v3171
  %v3227 = vadd.f32 %v3005, %v3172
  %v3228 = vadd.f32 %v3006, %v3173
  %v3229 = vadd.f32 %v3007, %v3174
  %v3230 = vadd.f32 %v3008, %v3175
  %v3231 = vadd.f32 %v3009, %v3176
  %v3232 = vadd.f32 %v3010, %v3177
  %v3233 = vadd.f32 %v3011, %v3178
  %v3234 = vadd.f32 %v3012, %v3179
  %v3235 = vadd.f32 %v3013, %v3180
  %v3236 = vadd.f32 %v3014, %v3181
  %v3237 = vadd.f32 %v3015, %v3182
  %vm3238 = vcmp.eq.s32.totalorder %v2291, 5
  %v3239 = vrot.slane %v2152, 5
  %v3240 = vrot.slane %v2154, 5
  %v3241 = vrot.slane %v2157, 5
  %v3242 = vrot.slane %v2159, 5
  %v3243 = vrot.slane %v2162, 5
  %v3244 = vrot.slane %v2164, 5
  %v3245 = vrot.slane %v2167, 5
  %v3246 = vrot.slane %v2169, 5
  %v3247 = vrot.slane %v2172, 5
  %v3248 = vrot.slane %v2174, 5
  %v3249 = vrot.slane %v2177, 5
  %v3250 = vrot.slane %v2179, 5
  %v3251 = vrot.slane %v2182, 5
  %v3252 = vrot.slane %v2184, 5
  %v3253 = vrot.slane %v2187, 5
  %v3254 = vrot.slane %v2189, 5
  %v3255 = vrot.slane %v2192, 5
  %v3256 = vrot.slane %v2194, 5
  %v3257 = vrot.slane %v2197, 5
  %v3258 = vrot.slane %v2199, 5
  %v3259 = vrot.slane %v2202, 5
  %v3260 = vrot.slane %v2204, 5
  %v3261 = vrot.slane %v2207, 5
  %v3262 = vrot.slane %v2209, 5
  %v3263 = vrot.slane %v2212, 5
  %v3264 = vrot.slane %v2214, 5
  %v3265 = vrot.slane %v2217, 5
  %v3266 = vrot.slane %v2219, 5
  %v3267 = vrot.slane %v2222, 5
  %v3268 = vrot.slane %v2224, 5
  %v3269 = vrot.slane %v2227, 5
  %v3270 = vrot.slane %v2229, 5
  %v3271 = vrot.slane %v2232, 5
  %v3272 = vrot.slane %v2234, 5
  %v3273 = vrot.slane %v2237, 5
  %v3274 = vrot.slane %v2239, 5
  %v3275 = vrot.slane %v2242, 5
  %v3276 = vrot.slane %v2244, 5
  %v3277 = vrot.slane %v2247, 5
  %v3278 = vrot.slane %v2249, 5
  %v3279 = vrot.slane %v2252, 5
  %v3280 = vrot.slane %v2254, 5
  %v3281 = vrot.slane %v2257, 5
  %v3282 = vrot.slane %v2259, 5
  %v3283 = vrot.slane %v2262, 5
  %v3284 = vrot.slane %v2264, 5
  %v3285 = vrot.slane %v2267, 5
  %v3286 = vrot.slane %v2269, 5
  %v3287 = vrot.slane %v2272, 5
  %v3288 = vrot.slane %v2274, 5
  %v3289 = vrot.slane %v2277, 5
  %v3290 = vrot.slane %v2279, 5
  %v3291 = vrot.slane %v2282, 5
  %v3292 = vrot.slane %v2284, 5
  %v3293 = vrot.slane %v2287, 5
  %vm3294 = vcmp.lt.s32.totalorder %v2405, 3
  %v3295 = vsel %vm3294, %v3292, %v3293
  %v3296 = vsel %vm3294, %v3291, %v3292
  %v3297 = vsel %vm3294, %v3290, %v3291
  %v3298 = vsel %vm3294, %v3289, %v3290
  %v3299 = vsel %vm3294, %v3288, %v3289
  %v3300 = vsel %vm3294, %v3287, %v3288
  %v3301 = vsel %vm3294, %v3286, %v3287
  %v3302 = vsel %vm3294, %v3285, %v3286
  %v3303 = vsel %vm3294, %v3284, %v3285
  %v3304 = vsel %vm3294, %v3283, %v3284
  %v3305 = vsel %vm3294, %v3282, %v3283
  %v3306 = vsel %vm3294, %v3281, %v3282
  %v3307 = vsel %vm3294, %v3280, %v3281
  %v3308 = vsel %vm3294, %v3279, %v3280
  %v3309 = vsel %vm3294, %v3278, %v3279
  %v3310 = vsel %vm3294, %v3277, %v3278
  %v3311 = vsel %vm3294, %v3276, %v3277
  %v3312 = vsel %vm3294, %v3275, %v3276
  %v3313 = vsel %vm3294, %v3274, %v3275
  %v3314 = vsel %vm3294, %v3273, %v3274
  %v3315 = vsel %vm3294, %v3272, %v3273
  %v3316 = vsel %vm3294, %v3271, %v3272
  %v3317 = vsel %vm3294, %v3270, %v3271
  %v3318 = vsel %vm3294, %v3269, %v3270
  %v3319 = vsel %vm3294, %v3268, %v3269
  %v3320 = vsel %vm3294, %v3267, %v3268
  %v3321 = vsel %vm3294, %v3266, %v3267
  %v3322 = vsel %vm3294, %v3265, %v3266
  %v3323 = vsel %vm3294, %v3264, %v3265
  %v3324 = vsel %vm3294, %v3263, %v3264
  %v3325 = vsel %vm3294, %v3262, %v3263
  %v3326 = vsel %vm3294, %v3261, %v3262
  %v3327 = vsel %vm3294, %v3260, %v3261
  %v3328 = vsel %vm3294, %v3259, %v3260
  %v3329 = vsel %vm3294, %v3258, %v3259
  %v3330 = vsel %vm3294, %v3257, %v3258
  %v3331 = vsel %vm3294, %v3256, %v3257
  %v3332 = vsel %vm3294, %v3255, %v3256
  %v3333 = vsel %vm3294, %v3254, %v3255
  %v3334 = vsel %vm3294, %v3253, %v3254
  %v3335 = vsel %vm3294, %v3252, %v3253
  %v3336 = vsel %vm3294, %v3251, %v3252
  %v3337 = vsel %vm3294, %v3250, %v3251
  %v3338 = vsel %vm3294, %v3249, %v3250
  %v3339 = vsel %vm3294, %v3248, %v3249
  %v3340 = vsel %vm3294, %v3247, %v3248
  %v3341 = vsel %vm3294, %v3246, %v3247
  %v3342 = vsel %vm3294, %v3245, %v3246
  %v3343 = vsel %vm3294, %v3244, %v3245
  %v3344 = vsel %vm3294, %v3243, %v3244
  %v3345 = vsel %vm3294, %v3242, %v3243
  %v3346 = vsel %vm3294, %v3241, %v3242
  %v3347 = vsel %vm3294, %v3240, %v3241
  %v3348 = vsel %vm3294, %v3239, %v3240
  %v3349 = vsel %vm3294, %v3293, %v3239
  %v3350 = vsel %vm3238, %v3348, 0.0
  %v3351 = vsel %vm3238, %v3347, 0.0
  %v3352 = vsel %vm3238, %v3346, 0.0
  %v3353 = vsel %vm3238, %v3345, 0.0
  %v3354 = vsel %vm3238, %v3344, 0.0
  %v3355 = vsel %vm3238, %v3343, 0.0
  %v3356 = vsel %vm3238, %v3342, 0.0
  %v3357 = vsel %vm3238, %v3341, 0.0
  %v3358 = vsel %vm3238, %v3340, 0.0
  %v3359 = vsel %vm3238, %v3339, 0.0
  %v3360 = vsel %vm3238, %v3338, 0.0
  %v3361 = vsel %vm3238, %v3337, 0.0
  %v3362 = vsel %vm3238, %v3336, 0.0
  %v3363 = vsel %vm3238, %v3335, 0.0
  %v3364 = vsel %vm3238, %v3334, 0.0
  %v3365 = vsel %vm3238, %v3333, 0.0
  %v3366 = vsel %vm3238, %v3332, 0.0
  %v3367 = vsel %vm3238, %v3331, 0.0
  %v3368 = vsel %vm3238, %v3330, 0.0
  %v3369 = vsel %vm3238, %v3329, 0.0
  %v3370 = vsel %vm3238, %v3328, 0.0
  %v3371 = vsel %vm3238, %v3327, 0.0
  %v3372 = vsel %vm3238, %v3326, 0.0
  %v3373 = vsel %vm3238, %v3325, 0.0
  %v3374 = vsel %vm3238, %v3324, 0.0
  %v3375 = vsel %vm3238, %v3323, 0.0
  %v3376 = vsel %vm3238, %v3322, 0.0
  %v3377 = vsel %vm3238, %v3321, 0.0
  %v3378 = vsel %vm3238, %v3320, 0.0
  %v3379 = vsel %vm3238, %v3319, 0.0
  %v3380 = vsel %vm3238, %v3318, 0.0
  %v3381 = vsel %vm3238, %v3317, 0.0
  %v3382 = vsel %vm3238, %v3316, 0.0
  %v3383 = vsel %vm3238, %v3315, 0.0
  %v3384 = vsel %vm3238, %v3314, 0.0
  %v3385 = vsel %vm3238, %v3313, 0.0
  %v3386 = vsel %vm3238, %v3312, 0.0
  %v3387 = vsel %vm3238, %v3311, 0.0
  %v3388 = vsel %vm3238, %v3310, 0.0
  %v3389 = vsel %vm3238, %v3309, 0.0
  %v3390 = vsel %vm3238, %v3308, 0.0
  %v3391 = vsel %vm3238, %v3307, 0.0
  %v3392 = vsel %vm3238, %v3306, 0.0
  %v3393 = vsel %vm3238, %v3305, 0.0
  %v3394 = vsel %vm3238, %v3304, 0.0
  %v3395 = vsel %vm3238, %v3303, 0.0
  %v3396 = vsel %vm3238, %v3302, 0.0
  %v3397 = vsel %vm3238, %v3301, 0.0
  %v3398 = vsel %vm3238, %v3300, 0.0
  %v3399 = vsel %vm3238, %v3299, 0.0
  %v3400 = vsel %vm3238, %v3298, 0.0
  %v3401 = vsel %vm3238, %v3297, 0.0
  %v3402 = vsel %vm3238, %v3296, 0.0
  %v3403 = vsel %vm3238, %v3295, 0.0
  %v3404 = vsel %vm3238, %v3349, 0.0
  %v3405 = vadd.f32 %v3183, %v3350
  %v3406 = vadd.f32 %v3184, %v3351
  %v3407 = vadd.f32 %v3185, %v3352
  %v3408 = vadd.f32 %v3186, %v3353
  %v3409 = vadd.f32 %v3187, %v3354
  %v3410 = vadd.f32 %v3188, %v3355
  %v3411 = vadd.f32 %v3189, %v3356
  %v3412 = vadd.f32 %v3190, %v3357
  %v3413 = vadd.f32 %v3191, %v3358
  %v3414 = vadd.f32 %v3192, %v3359
  %v3415 = vadd.f32 %v3193, %v3360
  %v3416 = vadd.f32 %v3194, %v3361
  %v3417 = vadd.f32 %v3195, %v3362
  %v3418 = vadd.f32 %v3196, %v3363
  %v3419 = vadd.f32 %v3197, %v3364
  %v3420 = vadd.f32 %v3198, %v3365
  %v3421 = vadd.f32 %v3199, %v3366
  %v3422 = vadd.f32 %v3200, %v3367
  %v3423 = vadd.f32 %v3201, %v3368
  %v3424 = vadd.f32 %v3202, %v3369
  %v3425 = vadd.f32 %v3203, %v3370
  %v3426 = vadd.f32 %v3204, %v3371
  %v3427 = vadd.f32 %v3205, %v3372
  %v3428 = vadd.f32 %v3206, %v3373
  %v3429 = vadd.f32 %v3207, %v3374
  %v3430 = vadd.f32 %v3208, %v3375
  %v3431 = vadd.f32 %v3209, %v3376
  %v3432 = vadd.f32 %v3210, %v3377
  %v3433 = vadd.f32 %v3211, %v3378
  %v3434 = vadd.f32 %v3212, %v3379
  %v3435 = vadd.f32 %v3213, %v3380
  %v3436 = vadd.f32 %v3214, %v3381
  %v3437 = vadd.f32 %v3215, %v3382
  %v3438 = vadd.f32 %v3216, %v3383
  %v3439 = vadd.f32 %v3217, %v3384
  %v3440 = vadd.f32 %v3218, %v3385
  %v3441 = vadd.f32 %v3219, %v3386
  %v3442 = vadd.f32 %v3220, %v3387
  %v3443 = vadd.f32 %v3221, %v3388
  %v3444 = vadd.f32 %v3222, %v3389
  %v3445 = vadd.f32 %v3223, %v3390
  %v3446 = vadd.f32 %v3224, %v3391
  %v3447 = vadd.f32 %v3225, %v3392
  %v3448 = vadd.f32 %v3226, %v3393
  %v3449 = vadd.f32 %v3227, %v3394
  %v3450 = vadd.f32 %v3228, %v3395
  %v3451 = vadd.f32 %v3229, %v3396
  %v3452 = vadd.f32 %v3230, %v3397
  %v3453 = vadd.f32 %v3231, %v3398
  %v3454 = vadd.f32 %v3232, %v3399
  %v3455 = vadd.f32 %v3233, %v3400
  %v3456 = vadd.f32 %v3234, %v3401
  %v3457 = vadd.f32 %v3235, %v3402
  %v3458 = vadd.f32 %v3236, %v3403
  %v3459 = vadd.f32 %v3237, %v3404
  %vm3460 = vcmp.eq.s32.totalorder %v2291, 6
  %v3461 = vrot.slane %v2152, 6
  %v3462 = vrot.slane %v2154, 6
  %v3463 = vrot.slane %v2157, 6
  %v3464 = vrot.slane %v2159, 6
  %v3465 = vrot.slane %v2162, 6
  %v3466 = vrot.slane %v2164, 6
  %v3467 = vrot.slane %v2167, 6
  %v3468 = vrot.slane %v2169, 6
  %v3469 = vrot.slane %v2172, 6
  %v3470 = vrot.slane %v2174, 6
  %v3471 = vrot.slane %v2177, 6
  %v3472 = vrot.slane %v2179, 6
  %v3473 = vrot.slane %v2182, 6
  %v3474 = vrot.slane %v2184, 6
  %v3475 = vrot.slane %v2187, 6
  %v3476 = vrot.slane %v2189, 6
  %v3477 = vrot.slane %v2192, 6
  %v3478 = vrot.slane %v2194, 6
  %v3479 = vrot.slane %v2197, 6
  %v3480 = vrot.slane %v2199, 6
  %v3481 = vrot.slane %v2202, 6
  %v3482 = vrot.slane %v2204, 6
  %v3483 = vrot.slane %v2207, 6
  %v3484 = vrot.slane %v2209, 6
  %v3485 = vrot.slane %v2212, 6
  %v3486 = vrot.slane %v2214, 6
  %v3487 = vrot.slane %v2217, 6
  %v3488 = vrot.slane %v2219, 6
  %v3489 = vrot.slane %v2222, 6
  %v3490 = vrot.slane %v2224, 6
  %v3491 = vrot.slane %v2227, 6
  %v3492 = vrot.slane %v2229, 6
  %v3493 = vrot.slane %v2232, 6
  %v3494 = vrot.slane %v2234, 6
  %v3495 = vrot.slane %v2237, 6
  %v3496 = vrot.slane %v2239, 6
  %v3497 = vrot.slane %v2242, 6
  %v3498 = vrot.slane %v2244, 6
  %v3499 = vrot.slane %v2247, 6
  %v3500 = vrot.slane %v2249, 6
  %v3501 = vrot.slane %v2252, 6
  %v3502 = vrot.slane %v2254, 6
  %v3503 = vrot.slane %v2257, 6
  %v3504 = vrot.slane %v2259, 6
  %v3505 = vrot.slane %v2262, 6
  %v3506 = vrot.slane %v2264, 6
  %v3507 = vrot.slane %v2267, 6
  %v3508 = vrot.slane %v2269, 6
  %v3509 = vrot.slane %v2272, 6
  %v3510 = vrot.slane %v2274, 6
  %v3511 = vrot.slane %v2277, 6
  %v3512 = vrot.slane %v2279, 6
  %v3513 = vrot.slane %v2282, 6
  %v3514 = vrot.slane %v2284, 6
  %v3515 = vrot.slane %v2287, 6
  %vm3516 = vcmp.lt.s32.totalorder %v2405, 2
  %v3517 = vsel %vm3516, %v3514, %v3515
  %v3518 = vsel %vm3516, %v3513, %v3514
  %v3519 = vsel %vm3516, %v3512, %v3513
  %v3520 = vsel %vm3516, %v3511, %v3512
  %v3521 = vsel %vm3516, %v3510, %v3511
  %v3522 = vsel %vm3516, %v3509, %v3510
  %v3523 = vsel %vm3516, %v3508, %v3509
  %v3524 = vsel %vm3516, %v3507, %v3508
  %v3525 = vsel %vm3516, %v3506, %v3507
  %v3526 = vsel %vm3516, %v3505, %v3506
  %v3527 = vsel %vm3516, %v3504, %v3505
  %v3528 = vsel %vm3516, %v3503, %v3504
  %v3529 = vsel %vm3516, %v3502, %v3503
  %v3530 = vsel %vm3516, %v3501, %v3502
  %v3531 = vsel %vm3516, %v3500, %v3501
  %v3532 = vsel %vm3516, %v3499, %v3500
  %v3533 = vsel %vm3516, %v3498, %v3499
  %v3534 = vsel %vm3516, %v3497, %v3498
  %v3535 = vsel %vm3516, %v3496, %v3497
  %v3536 = vsel %vm3516, %v3495, %v3496
  %v3537 = vsel %vm3516, %v3494, %v3495
  %v3538 = vsel %vm3516, %v3493, %v3494
  %v3539 = vsel %vm3516, %v3492, %v3493
  %v3540 = vsel %vm3516, %v3491, %v3492
  %v3541 = vsel %vm3516, %v3490, %v3491
  %v3542 = vsel %vm3516, %v3489, %v3490
  %v3543 = vsel %vm3516, %v3488, %v3489
  %v3544 = vsel %vm3516, %v3487, %v3488
  %v3545 = vsel %vm3516, %v3486, %v3487
  %v3546 = vsel %vm3516, %v3485, %v3486
  %v3547 = vsel %vm3516, %v3484, %v3485
  %v3548 = vsel %vm3516, %v3483, %v3484
  %v3549 = vsel %vm3516, %v3482, %v3483
  %v3550 = vsel %vm3516, %v3481, %v3482
  %v3551 = vsel %vm3516, %v3480, %v3481
  %v3552 = vsel %vm3516, %v3479, %v3480
  %v3553 = vsel %vm3516, %v3478, %v3479
  %v3554 = vsel %vm3516, %v3477, %v3478
  %v3555 = vsel %vm3516, %v3476, %v3477
  %v3556 = vsel %vm3516, %v3475, %v3476
  %v3557 = vsel %vm3516, %v3474, %v3475
  %v3558 = vsel %vm3516, %v3473, %v3474
  %v3559 = vsel %vm3516, %v3472, %v3473
  %v3560 = vsel %vm3516, %v3471, %v3472
  %v3561 = vsel %vm3516, %v3470, %v3471
  %v3562 = vsel %vm3516, %v3469, %v3470
  %v3563 = vsel %vm3516, %v3468, %v3469
  %v3564 = vsel %vm3516, %v3467, %v3468
  %v3565 = vsel %vm3516, %v3466, %v3467
  %v3566 = vsel %vm3516, %v3465, %v3466
  %v3567 = vsel %vm3516, %v3464, %v3465
  %v3568 = vsel %vm3516, %v3463, %v3464
  %v3569 = vsel %vm3516, %v3462, %v3463
  %v3570 = vsel %vm3516, %v3461, %v3462
  %v3571 = vsel %vm3516, %v3515, %v3461
  %v3572 = vsel %vm3460, %v3570, 0.0
  %v3573 = vsel %vm3460, %v3569, 0.0
  %v3574 = vsel %vm3460, %v3568, 0.0
  %v3575 = vsel %vm3460, %v3567, 0.0
  %v3576 = vsel %vm3460, %v3566, 0.0
  %v3577 = vsel %vm3460, %v3565, 0.0
  %v3578 = vsel %vm3460, %v3564, 0.0
  %v3579 = vsel %vm3460, %v3563, 0.0
  %v3580 = vsel %vm3460, %v3562, 0.0
  %v3581 = vsel %vm3460, %v3561, 0.0
  %v3582 = vsel %vm3460, %v3560, 0.0
  %v3583 = vsel %vm3460, %v3559, 0.0
  %v3584 = vsel %vm3460, %v3558, 0.0
  %v3585 = vsel %vm3460, %v3557, 0.0
  %v3586 = vsel %vm3460, %v3556, 0.0
  %v3587 = vsel %vm3460, %v3555, 0.0
  %v3588 = vsel %vm3460, %v3554, 0.0
  %v3589 = vsel %vm3460, %v3553, 0.0
  %v3590 = vsel %vm3460, %v3552, 0.0
  %v3591 = vsel %vm3460, %v3551, 0.0
  %v3592 = vsel %vm3460, %v3550, 0.0
  %v3593 = vsel %vm3460, %v3549, 0.0
  %v3594 = vsel %vm3460, %v3548, 0.0
  %v3595 = vsel %vm3460, %v3547, 0.0
  %v3596 = vsel %vm3460, %v3546, 0.0
  %v3597 = vsel %vm3460, %v3545, 0.0
  %v3598 = vsel %vm3460, %v3544, 0.0
  %v3599 = vsel %vm3460, %v3543, 0.0
  %v3600 = vsel %vm3460, %v3542, 0.0
  %v3601 = vsel %vm3460, %v3541, 0.0
  %v3602 = vsel %vm3460, %v3540, 0.0
  %v3603 = vsel %vm3460, %v3539, 0.0
  %v3604 = vsel %vm3460, %v3538, 0.0
  %v3605 = vsel %vm3460, %v3537, 0.0
  %v3606 = vsel %vm3460, %v3536, 0.0
  %v3607 = vsel %vm3460, %v3535, 0.0
  %v3608 = vsel %vm3460, %v3534, 0.0
  %v3609 = vsel %vm3460, %v3533, 0.0
  %v3610 = vsel %vm3460, %v3532, 0.0
  %v3611 = vsel %vm3460, %v3531, 0.0
  %v3612 = vsel %vm3460, %v3530, 0.0
  %v3613 = vsel %vm3460, %v3529, 0.0
  %v3614 = vsel %vm3460, %v3528, 0.0
  %v3615 = vsel %vm3460, %v3527, 0.0
  %v3616 = vsel %vm3460, %v3526, 0.0
  %v3617 = vsel %vm3460, %v3525, 0.0
  %v3618 = vsel %vm3460, %v3524, 0.0
  %v3619 = vsel %vm3460, %v3523, 0.0
  %v3620 = vsel %vm3460, %v3522, 0.0
  %v3621 = vsel %vm3460, %v3521, 0.0
  %v3622 = vsel %vm3460, %v3520, 0.0
  %v3623 = vsel %vm3460, %v3519, 0.0
  %v3624 = vsel %vm3460, %v3518, 0.0
  %v3625 = vsel %vm3460, %v3517, 0.0
  %v3626 = vsel %vm3460, %v3571, 0.0
  %v3627 = vadd.f32 %v3405, %v3572
  %v3628 = vadd.f32 %v3406, %v3573
  %v3629 = vadd.f32 %v3407, %v3574
  %v3630 = vadd.f32 %v3408, %v3575
  %v3631 = vadd.f32 %v3409, %v3576
  %v3632 = vadd.f32 %v3410, %v3577
  %v3633 = vadd.f32 %v3411, %v3578
  %v3634 = vadd.f32 %v3412, %v3579
  %v3635 = vadd.f32 %v3413, %v3580
  %v3636 = vadd.f32 %v3414, %v3581
  %v3637 = vadd.f32 %v3415, %v3582
  %v3638 = vadd.f32 %v3416, %v3583
  %v3639 = vadd.f32 %v3417, %v3584
  %v3640 = vadd.f32 %v3418, %v3585
  %v3641 = vadd.f32 %v3419, %v3586
  %v3642 = vadd.f32 %v3420, %v3587
  %v3643 = vadd.f32 %v3421, %v3588
  %v3644 = vadd.f32 %v3422, %v3589
  %v3645 = vadd.f32 %v3423, %v3590
  %v3646 = vadd.f32 %v3424, %v3591
  %v3647 = vadd.f32 %v3425, %v3592
  %v3648 = vadd.f32 %v3426, %v3593
  %v3649 = vadd.f32 %v3427, %v3594
  %v3650 = vadd.f32 %v3428, %v3595
  %v3651 = vadd.f32 %v3429, %v3596
  %v3652 = vadd.f32 %v3430, %v3597
  %v3653 = vadd.f32 %v3431, %v3598
  %v3654 = vadd.f32 %v3432, %v3599
  %v3655 = vadd.f32 %v3433, %v3600
  %v3656 = vadd.f32 %v3434, %v3601
  %v3657 = vadd.f32 %v3435, %v3602
  %v3658 = vadd.f32 %v3436, %v3603
  %v3659 = vadd.f32 %v3437, %v3604
  %v3660 = vadd.f32 %v3438, %v3605
  %v3661 = vadd.f32 %v3439, %v3606
  %v3662 = vadd.f32 %v3440, %v3607
  %v3663 = vadd.f32 %v3441, %v3608
  %v3664 = vadd.f32 %v3442, %v3609
  %v3665 = vadd.f32 %v3443, %v3610
  %v3666 = vadd.f32 %v3444, %v3611
  %v3667 = vadd.f32 %v3445, %v3612
  %v3668 = vadd.f32 %v3446, %v3613
  %v3669 = vadd.f32 %v3447, %v3614
  %v3670 = vadd.f32 %v3448, %v3615
  %v3671 = vadd.f32 %v3449, %v3616
  %v3672 = vadd.f32 %v3450, %v3617
  %v3673 = vadd.f32 %v3451, %v3618
  %v3674 = vadd.f32 %v3452, %v3619
  %v3675 = vadd.f32 %v3453, %v3620
  %v3676 = vadd.f32 %v3454, %v3621
  %v3677 = vadd.f32 %v3455, %v3622
  %v3678 = vadd.f32 %v3456, %v3623
  %v3679 = vadd.f32 %v3457, %v3624
  %v3680 = vadd.f32 %v3458, %v3625
  %v3681 = vadd.f32 %v3459, %v3626
  %vm3682 = vcmp.eq.s32.totalorder %v2291, 7
  %v3683 = vrot.slane %v2152, 7
  %v3684 = vrot.slane %v2154, 7
  %v3685 = vrot.slane %v2157, 7
  %v3686 = vrot.slane %v2159, 7
  %v3687 = vrot.slane %v2162, 7
  %v3688 = vrot.slane %v2164, 7
  %v3689 = vrot.slane %v2167, 7
  %v3690 = vrot.slane %v2169, 7
  %v3691 = vrot.slane %v2172, 7
  %v3692 = vrot.slane %v2174, 7
  %v3693 = vrot.slane %v2177, 7
  %v3694 = vrot.slane %v2179, 7
  %v3695 = vrot.slane %v2182, 7
  %v3696 = vrot.slane %v2184, 7
  %v3697 = vrot.slane %v2187, 7
  %v3698 = vrot.slane %v2189, 7
  %v3699 = vrot.slane %v2192, 7
  %v3700 = vrot.slane %v2194, 7
  %v3701 = vrot.slane %v2197, 7
  %v3702 = vrot.slane %v2199, 7
  %v3703 = vrot.slane %v2202, 7
  %v3704 = vrot.slane %v2204, 7
  %v3705 = vrot.slane %v2207, 7
  %v3706 = vrot.slane %v2209, 7
  %v3707 = vrot.slane %v2212, 7
  %v3708 = vrot.slane %v2214, 7
  %v3709 = vrot.slane %v2217, 7
  %v3710 = vrot.slane %v2219, 7
  %v3711 = vrot.slane %v2222, 7
  %v3712 = vrot.slane %v2224, 7
  %v3713 = vrot.slane %v2227, 7
  %v3714 = vrot.slane %v2229, 7
  %v3715 = vrot.slane %v2232, 7
  %v3716 = vrot.slane %v2234, 7
  %v3717 = vrot.slane %v2237, 7
  %v3718 = vrot.slane %v2239, 7
  %v3719 = vrot.slane %v2242, 7
  %v3720 = vrot.slane %v2244, 7
  %v3721 = vrot.slane %v2247, 7
  %v3722 = vrot.slane %v2249, 7
  %v3723 = vrot.slane %v2252, 7
  %v3724 = vrot.slane %v2254, 7
  %v3725 = vrot.slane %v2257, 7
  %v3726 = vrot.slane %v2259, 7
  %v3727 = vrot.slane %v2262, 7
  %v3728 = vrot.slane %v2264, 7
  %v3729 = vrot.slane %v2267, 7
  %v3730 = vrot.slane %v2269, 7
  %v3731 = vrot.slane %v2272, 7
  %v3732 = vrot.slane %v2274, 7
  %v3733 = vrot.slane %v2277, 7
  %v3734 = vrot.slane %v2279, 7
  %v3735 = vrot.slane %v2282, 7
  %v3736 = vrot.slane %v2284, 7
  %v3737 = vrot.slane %v2287, 7
  %vm3738 = vcmp.lt.s32.totalorder %v2405, 1
  %v3739 = vsel %vm3738, %v3736, %v3737
  %v3740 = vsel %vm3738, %v3735, %v3736
  %v3741 = vsel %vm3738, %v3734, %v3735
  %v3742 = vsel %vm3738, %v3733, %v3734
  %v3743 = vsel %vm3738, %v3732, %v3733
  %v3744 = vsel %vm3738, %v3731, %v3732
  %v3745 = vsel %vm3738, %v3730, %v3731
  %v3746 = vsel %vm3738, %v3729, %v3730
  %v3747 = vsel %vm3738, %v3728, %v3729
  %v3748 = vsel %vm3738, %v3727, %v3728
  %v3749 = vsel %vm3738, %v3726, %v3727
  %v3750 = vsel %vm3738, %v3725, %v3726
  %v3751 = vsel %vm3738, %v3724, %v3725
  %v3752 = vsel %vm3738, %v3723, %v3724
  %v3753 = vsel %vm3738, %v3722, %v3723
  %v3754 = vsel %vm3738, %v3721, %v3722
  %v3755 = vsel %vm3738, %v3720, %v3721
  %v3756 = vsel %vm3738, %v3719, %v3720
  %v3757 = vsel %vm3738, %v3718, %v3719
  %v3758 = vsel %vm3738, %v3717, %v3718
  %v3759 = vsel %vm3738, %v3716, %v3717
  %v3760 = vsel %vm3738, %v3715, %v3716
  %v3761 = vsel %vm3738, %v3714, %v3715
  %v3762 = vsel %vm3738, %v3713, %v3714
  %v3763 = vsel %vm3738, %v3712, %v3713
  %v3764 = vsel %vm3738, %v3711, %v3712
  %v3765 = vsel %vm3738, %v3710, %v3711
  %v3766 = vsel %vm3738, %v3709, %v3710
  %v3767 = vsel %vm3738, %v3708, %v3709
  %v3768 = vsel %vm3738, %v3707, %v3708
  %v3769 = vsel %vm3738, %v3706, %v3707
  %v3770 = vsel %vm3738, %v3705, %v3706
  %v3771 = vsel %vm3738, %v3704, %v3705
  %v3772 = vsel %vm3738, %v3703, %v3704
  %v3773 = vsel %vm3738, %v3702, %v3703
  %v3774 = vsel %vm3738, %v3701, %v3702
  %v3775 = vsel %vm3738, %v3700, %v3701
  %v3776 = vsel %vm3738, %v3699, %v3700
  %v3777 = vsel %vm3738, %v3698, %v3699
  %v3778 = vsel %vm3738, %v3697, %v3698
  %v3779 = vsel %vm3738, %v3696, %v3697
  %v3780 = vsel %vm3738, %v3695, %v3696
  %v3781 = vsel %vm3738, %v3694, %v3695
  %v3782 = vsel %vm3738, %v3693, %v3694
  %v3783 = vsel %vm3738, %v3692, %v3693
  %v3784 = vsel %vm3738, %v3691, %v3692
  %v3785 = vsel %vm3738, %v3690, %v3691
  %v3786 = vsel %vm3738, %v3689, %v3690
  %v3787 = vsel %vm3738, %v3688, %v3689
  %v3788 = vsel %vm3738, %v3687, %v3688
  %v3789 = vsel %vm3738, %v3686, %v3687
  %v3790 = vsel %vm3738, %v3685, %v3686
  %v3791 = vsel %vm3738, %v3684, %v3685
  %v3792 = vsel %vm3738, %v3683, %v3684
  %v3793 = vsel %vm3738, %v3737, %v3683
  %v3794 = vsel %vm3682, %v3792, 0.0
  %v3795 = vsel %vm3682, %v3791, 0.0
  %v3796 = vsel %vm3682, %v3790, 0.0
  %v3797 = vsel %vm3682, %v3789, 0.0
  %v3798 = vsel %vm3682, %v3788, 0.0
  %v3799 = vsel %vm3682, %v3787, 0.0
  %v3800 = vsel %vm3682, %v3786, 0.0
  %v3801 = vsel %vm3682, %v3785, 0.0
  %v3802 = vsel %vm3682, %v3784, 0.0
  %v3803 = vsel %vm3682, %v3783, 0.0
  %v3804 = vsel %vm3682, %v3782, 0.0
  %v3805 = vsel %vm3682, %v3781, 0.0
  %v3806 = vsel %vm3682, %v3780, 0.0
  %v3807 = vsel %vm3682, %v3779, 0.0
  %v3808 = vsel %vm3682, %v3778, 0.0
  %v3809 = vsel %vm3682, %v3777, 0.0
  %v3810 = vsel %vm3682, %v3776, 0.0
  %v3811 = vsel %vm3682, %v3775, 0.0
  %v3812 = vsel %vm3682, %v3774, 0.0
  %v3813 = vsel %vm3682, %v3773, 0.0
  %v3814 = vsel %vm3682, %v3772, 0.0
  %v3815 = vsel %vm3682, %v3771, 0.0
  %v3816 = vsel %vm3682, %v3770, 0.0
  %v3817 = vsel %vm3682, %v3769, 0.0
  %v3818 = vsel %vm3682, %v3768, 0.0
  %v3819 = vsel %vm3682, %v3767, 0.0
  %v3820 = vsel %vm3682, %v3766, 0.0
  %v3821 = vsel %vm3682, %v3765, 0.0
  %v3822 = vsel %vm3682, %v3764, 0.0
  %v3823 = vsel %vm3682, %v3763, 0.0
  %v3824 = vsel %vm3682, %v3762, 0.0
  %v3825 = vsel %vm3682, %v3761, 0.0
  %v3826 = vsel %vm3682, %v3760, 0.0
  %v3827 = vsel %vm3682, %v3759, 0.0
  %v3828 = vsel %vm3682, %v3758, 0.0
  %v3829 = vsel %vm3682, %v3757, 0.0
  %v3830 = vsel %vm3682, %v3756, 0.0
  %v3831 = vsel %vm3682, %v3755, 0.0
  %v3832 = vsel %vm3682, %v3754, 0.0
  %v3833 = vsel %vm3682, %v3753, 0.0
  %v3834 = vsel %vm3682, %v3752, 0.0
  %v3835 = vsel %vm3682, %v3751, 0.0
  %v3836 = vsel %vm3682, %v3750, 0.0
  %v3837 = vsel %vm3682, %v3749, 0.0
  %v3838 = vsel %vm3682, %v3748, 0.0
  %v3839 = vsel %vm3682, %v3747, 0.0
  %v3840 = vsel %vm3682, %v3746, 0.0
  %v3841 = vsel %vm3682, %v3745, 0.0
  %v3842 = vsel %vm3682, %v3744, 0.0
  %v3843 = vsel %vm3682, %v3743, 0.0
  %v3844 = vsel %vm3682, %v3742, 0.0
  %v3845 = vsel %vm3682, %v3741, 0.0
  %v3846 = vsel %vm3682, %v3740, 0.0
  %v3847 = vsel %vm3682, %v3739, 0.0
  %v3848 = vsel %vm3682, %v3793, 0.0
  %v3849 = vadd.f32 %v3627, %v3794
  %v3850 = vadd.f32 %v3628, %v3795
  %v3851 = vadd.f32 %v3629, %v3796
  %v3852 = vadd.f32 %v3630, %v3797
  %v3853 = vadd.f32 %v3631, %v3798
  %v3854 = vadd.f32 %v3632, %v3799
  %v3855 = vadd.f32 %v3633, %v3800
  %v3856 = vadd.f32 %v3634, %v3801
  %v3857 = vadd.f32 %v3635, %v3802
  %v3858 = vadd.f32 %v3636, %v3803
  %v3859 = vadd.f32 %v3637, %v3804
  %v3860 = vadd.f32 %v3638, %v3805
  %v3861 = vadd.f32 %v3639, %v3806
  %v3862 = vadd.f32 %v3640, %v3807
  %v3863 = vadd.f32 %v3641, %v3808
  %v3864 = vadd.f32 %v3642, %v3809
  %v3865 = vadd.f32 %v3643, %v3810
  %v3866 = vadd.f32 %v3644, %v3811
  %v3867 = vadd.f32 %v3645, %v3812
  %v3868 = vadd.f32 %v3646, %v3813
  %v3869 = vadd.f32 %v3647, %v3814
  %v3870 = vadd.f32 %v3648, %v3815
  %v3871 = vadd.f32 %v3649, %v3816
  %v3872 = vadd.f32 %v3650, %v3817
  %v3873 = vadd.f32 %v3651, %v3818
  %v3874 = vadd.f32 %v3652, %v3819
  %v3875 = vadd.f32 %v3653, %v3820
  %v3876 = vadd.f32 %v3654, %v3821
  %v3877 = vadd.f32 %v3655, %v3822
  %v3878 = vadd.f32 %v3656, %v3823
  %v3879 = vadd.f32 %v3657, %v3824
  %v3880 = vadd.f32 %v3658, %v3825
  %v3881 = vadd.f32 %v3659, %v3826
  %v3882 = vadd.f32 %v3660, %v3827
  %v3883 = vadd.f32 %v3661, %v3828
  %v3884 = vadd.f32 %v3662, %v3829
  %v3885 = vadd.f32 %v3663, %v3830
  %v3886 = vadd.f32 %v3664, %v3831
  %v3887 = vadd.f32 %v3665, %v3832
  %v3888 = vadd.f32 %v3666, %v3833
  %v3889 = vadd.f32 %v3667, %v3834
  %v3890 = vadd.f32 %v3668, %v3835
  %v3891 = vadd.f32 %v3669, %v3836
  %v3892 = vadd.f32 %v3670, %v3837
  %v3893 = vadd.f32 %v3671, %v3838
  %v3894 = vadd.f32 %v3672, %v3839
  %v3895 = vadd.f32 %v3673, %v3840
  %v3896 = vadd.f32 %v3674, %v3841
  %v3897 = vadd.f32 %v3675, %v3842
  %v3898 = vadd.f32 %v3676, %v3843
  %v3899 = vadd.f32 %v3677, %v3844
  %v3900 = vadd.f32 %v3678, %v3845
  %v3901 = vadd.f32 %v3679, %v3846
  %v3902 = vadd.f32 %v3680, %v3847
  %v3903 = vadd.f32 %v3681, %v3848
  %vm3904 = vcmp.eq.s32.totalorder %v2291, 8
  %v3905 = vsel %vm3904, %v2154, 0.0
  %v3906 = vsel %vm3904, %v2157, 0.0
  %v3907 = vsel %vm3904, %v2159, 0.0
  %v3908 = vsel %vm3904, %v2162, 0.0
  %v3909 = vsel %vm3904, %v2164, 0.0
  %v3910 = vsel %vm3904, %v2167, 0.0
  %v3911 = vsel %vm3904, %v2169, 0.0
  %v3912 = vsel %vm3904, %v2172, 0.0
  %v3913 = vsel %vm3904, %v2174, 0.0
  %v3914 = vsel %vm3904, %v2177, 0.0
  %v3915 = vsel %vm3904, %v2179, 0.0
  %v3916 = vsel %vm3904, %v2182, 0.0
  %v3917 = vsel %vm3904, %v2184, 0.0
  %v3918 = vsel %vm3904, %v2187, 0.0
  %v3919 = vsel %vm3904, %v2189, 0.0
  %v3920 = vsel %vm3904, %v2192, 0.0
  %v3921 = vsel %vm3904, %v2194, 0.0
  %v3922 = vsel %vm3904, %v2197, 0.0
  %v3923 = vsel %vm3904, %v2199, 0.0
  %v3924 = vsel %vm3904, %v2202, 0.0
  %v3925 = vsel %vm3904, %v2204, 0.0
  %v3926 = vsel %vm3904, %v2207, 0.0
  %v3927 = vsel %vm3904, %v2209, 0.0
  %v3928 = vsel %vm3904, %v2212, 0.0
  %v3929 = vsel %vm3904, %v2214, 0.0
  %v3930 = vsel %vm3904, %v2217, 0.0
  %v3931 = vsel %vm3904, %v2219, 0.0
  %v3932 = vsel %vm3904, %v2222, 0.0
  %v3933 = vsel %vm3904, %v2224, 0.0
  %v3934 = vsel %vm3904, %v2227, 0.0
  %v3935 = vsel %vm3904, %v2229, 0.0
  %v3936 = vsel %vm3904, %v2232, 0.0
  %v3937 = vsel %vm3904, %v2234, 0.0
  %v3938 = vsel %vm3904, %v2237, 0.0
  %v3939 = vsel %vm3904, %v2239, 0.0
  %v3940 = vsel %vm3904, %v2242, 0.0
  %v3941 = vsel %vm3904, %v2244, 0.0
  %v3942 = vsel %vm3904, %v2247, 0.0
  %v3943 = vsel %vm3904, %v2249, 0.0
  %v3944 = vsel %vm3904, %v2252, 0.0
  %v3945 = vsel %vm3904, %v2254, 0.0
  %v3946 = vsel %vm3904, %v2257, 0.0
  %v3947 = vsel %vm3904, %v2259, 0.0
  %v3948 = vsel %vm3904, %v2262, 0.0
  %v3949 = vsel %vm3904, %v2264, 0.0
  %v3950 = vsel %vm3904, %v2267, 0.0
  %v3951 = vsel %vm3904, %v2269, 0.0
  %v3952 = vsel %vm3904, %v2272, 0.0
  %v3953 = vsel %vm3904, %v2274, 0.0
  %v3954 = vsel %vm3904, %v2277, 0.0
  %v3955 = vsel %vm3904, %v2279, 0.0
  %v3956 = vsel %vm3904, %v2282, 0.0
  %v3957 = vsel %vm3904, %v2284, 0.0
  %v3958 = vsel %vm3904, %v2287, 0.0
  %v3959 = vsel %vm3904, %v2152, 0.0
  %v3960 = vadd.f32 %v3849, %v3905
  %v3961 = vadd.f32 %v3850, %v3906
  %v3962 = vadd.f32 %v3851, %v3907
  %v3963 = vadd.f32 %v3852, %v3908
  %v3964 = vadd.f32 %v3853, %v3909
  %v3965 = vadd.f32 %v3854, %v3910
  %v3966 = vadd.f32 %v3855, %v3911
  %v3967 = vadd.f32 %v3856, %v3912
  %v3968 = vadd.f32 %v3857, %v3913
  %v3969 = vadd.f32 %v3858, %v3914
  %v3970 = vadd.f32 %v3859, %v3915
  %v3971 = vadd.f32 %v3860, %v3916
  %v3972 = vadd.f32 %v3861, %v3917
  %v3973 = vadd.f32 %v3862, %v3918
  %v3974 = vadd.f32 %v3863, %v3919
  %v3975 = vadd.f32 %v3864, %v3920
  %v3976 = vadd.f32 %v3865, %v3921
  %v3977 = vadd.f32 %v3866, %v3922
  %v3978 = vadd.f32 %v3867, %v3923
  %v3979 = vadd.f32 %v3868, %v3924
  %v3980 = vadd.f32 %v3869, %v3925
  %v3981 = vadd.f32 %v3870, %v3926
  %v3982 = vadd.f32 %v3871, %v3927
  %v3983 = vadd.f32 %v3872, %v3928
  %v3984 = vadd.f32 %v3873, %v3929
  %v3985 = vadd.f32 %v3874, %v3930
  %v3986 = vadd.f32 %v3875, %v3931
  %v3987 = vadd.f32 %v3876, %v3932
  %v3988 = vadd.f32 %v3877, %v3933
  %v3989 = vadd.f32 %v3878, %v3934
  %v3990 = vadd.f32 %v3879, %v3935
  %v3991 = vadd.f32 %v3880, %v3936
  %v3992 = vadd.f32 %v3881, %v3937
  %v3993 = vadd.f32 %v3882, %v3938
  %v3994 = vadd.f32 %v3883, %v3939
  %v3995 = vadd.f32 %v3884, %v3940
  %v3996 = vadd.f32 %v3885, %v3941
  %v3997 = vadd.f32 %v3886, %v3942
  %v3998 = vadd.f32 %v3887, %v3943
  %v3999 = vadd.f32 %v3888, %v3944
  %v4000 = vadd.f32 %v3889, %v3945
  %v4001 = vadd.f32 %v3890, %v3946
  %v4002 = vadd.f32 %v3891, %v3947
  %v4003 = vadd.f32 %v3892, %v3948
  %v4004 = vadd.f32 %v3893, %v3949
  %v4005 = vadd.f32 %v3894, %v3950
  %v4006 = vadd.f32 %v3895, %v3951
  %v4007 = vadd.f32 %v3896, %v3952
  %v4008 = vadd.f32 %v3897, %v3953
  %v4009 = vadd.f32 %v3898, %v3954
  %v4010 = vadd.f32 %v3899, %v3955
  %v4011 = vadd.f32 %v3900, %v3956
  %v4012 = vadd.f32 %v3901, %v3957
  %v4013 = vadd.f32 %v3902, %v3958
  %v4014 = vadd.f32 %v3903, %v3959
  %vm4015 = vcmp.eq.s32.totalorder %v2291, 9
  %v4016 = vsel %vm4015, %v2459, 0.0
  %v4017 = vsel %vm4015, %v2458, 0.0
  %v4018 = vsel %vm4015, %v2457, 0.0
  %v4019 = vsel %vm4015, %v2456, 0.0
  %v4020 = vsel %vm4015, %v2455, 0.0
  %v4021 = vsel %vm4015, %v2454, 0.0
  %v4022 = vsel %vm4015, %v2453, 0.0
  %v4023 = vsel %vm4015, %v2452, 0.0
  %v4024 = vsel %vm4015, %v2451, 0.0
  %v4025 = vsel %vm4015, %v2450, 0.0
  %v4026 = vsel %vm4015, %v2449, 0.0
  %v4027 = vsel %vm4015, %v2448, 0.0
  %v4028 = vsel %vm4015, %v2447, 0.0
  %v4029 = vsel %vm4015, %v2446, 0.0
  %v4030 = vsel %vm4015, %v2445, 0.0
  %v4031 = vsel %vm4015, %v2444, 0.0
  %v4032 = vsel %vm4015, %v2443, 0.0
  %v4033 = vsel %vm4015, %v2442, 0.0
  %v4034 = vsel %vm4015, %v2441, 0.0
  %v4035 = vsel %vm4015, %v2440, 0.0
  %v4036 = vsel %vm4015, %v2439, 0.0
  %v4037 = vsel %vm4015, %v2438, 0.0
  %v4038 = vsel %vm4015, %v2437, 0.0
  %v4039 = vsel %vm4015, %v2436, 0.0
  %v4040 = vsel %vm4015, %v2435, 0.0
  %v4041 = vsel %vm4015, %v2434, 0.0
  %v4042 = vsel %vm4015, %v2433, 0.0
  %v4043 = vsel %vm4015, %v2432, 0.0
  %v4044 = vsel %vm4015, %v2431, 0.0
  %v4045 = vsel %vm4015, %v2430, 0.0
  %v4046 = vsel %vm4015, %v2429, 0.0
  %v4047 = vsel %vm4015, %v2428, 0.0
  %v4048 = vsel %vm4015, %v2427, 0.0
  %v4049 = vsel %vm4015, %v2426, 0.0
  %v4050 = vsel %vm4015, %v2425, 0.0
  %v4051 = vsel %vm4015, %v2424, 0.0
  %v4052 = vsel %vm4015, %v2423, 0.0
  %v4053 = vsel %vm4015, %v2422, 0.0
  %v4054 = vsel %vm4015, %v2421, 0.0
  %v4055 = vsel %vm4015, %v2420, 0.0
  %v4056 = vsel %vm4015, %v2419, 0.0
  %v4057 = vsel %vm4015, %v2418, 0.0
  %v4058 = vsel %vm4015, %v2417, 0.0
  %v4059 = vsel %vm4015, %v2416, 0.0
  %v4060 = vsel %vm4015, %v2415, 0.0
  %v4061 = vsel %vm4015, %v2414, 0.0
  %v4062 = vsel %vm4015, %v2413, 0.0
  %v4063 = vsel %vm4015, %v2412, 0.0
  %v4064 = vsel %vm4015, %v2411, 0.0
  %v4065 = vsel %vm4015, %v2410, 0.0
  %v4066 = vsel %vm4015, %v2409, 0.0
  %v4067 = vsel %vm4015, %v2408, 0.0
  %v4068 = vsel %vm4015, %v2407, 0.0
  %v4069 = vsel %vm4015, %v2461, 0.0
  %v4070 = vsel %vm4015, %v2460, 0.0
  %v4071 = vadd.f32 %v3960, %v4016
  %v4072 = vadd.f32 %v3961, %v4017
  %v4073 = vadd.f32 %v3962, %v4018
  %v4074 = vadd.f32 %v3963, %v4019
  %v4075 = vadd.f32 %v3964, %v4020
  %v4076 = vadd.f32 %v3965, %v4021
  %v4077 = vadd.f32 %v3966, %v4022
  %v4078 = vadd.f32 %v3967, %v4023
  %v4079 = vadd.f32 %v3968, %v4024
  %v4080 = vadd.f32 %v3969, %v4025
  %v4081 = vadd.f32 %v3970, %v4026
  %v4082 = vadd.f32 %v3971, %v4027
  %v4083 = vadd.f32 %v3972, %v4028
  %v4084 = vadd.f32 %v3973, %v4029
  %v4085 = vadd.f32 %v3974, %v4030
  %v4086 = vadd.f32 %v3975, %v4031
  %v4087 = vadd.f32 %v3976, %v4032
  %v4088 = vadd.f32 %v3977, %v4033
  %v4089 = vadd.f32 %v3978, %v4034
  %v4090 = vadd.f32 %v3979, %v4035
  %v4091 = vadd.f32 %v3980, %v4036
  %v4092 = vadd.f32 %v3981, %v4037
  %v4093 = vadd.f32 %v3982, %v4038
  %v4094 = vadd.f32 %v3983, %v4039
  %v4095 = vadd.f32 %v3984, %v4040
  %v4096 = vadd.f32 %v3985, %v4041
  %v4097 = vadd.f32 %v3986, %v4042
  %v4098 = vadd.f32 %v3987, %v4043
  %v4099 = vadd.f32 %v3988, %v4044
  %v4100 = vadd.f32 %v3989, %v4045
  %v4101 = vadd.f32 %v3990, %v4046
  %v4102 = vadd.f32 %v3991, %v4047
  %v4103 = vadd.f32 %v3992, %v4048
  %v4104 = vadd.f32 %v3993, %v4049
  %v4105 = vadd.f32 %v3994, %v4050
  %v4106 = vadd.f32 %v3995, %v4051
  %v4107 = vadd.f32 %v3996, %v4052
  %v4108 = vadd.f32 %v3997, %v4053
  %v4109 = vadd.f32 %v3998, %v4054
  %v4110 = vadd.f32 %v3999, %v4055
  %v4111 = vadd.f32 %v4000, %v4056
  %v4112 = vadd.f32 %v4001, %v4057
  %v4113 = vadd.f32 %v4002, %v4058
  %v4114 = vadd.f32 %v4003, %v4059
  %v4115 = vadd.f32 %v4004, %v4060
  %v4116 = vadd.f32 %v4005, %v4061
  %v4117 = vadd.f32 %v4006, %v4062
  %v4118 = vadd.f32 %v4007, %v4063
  %v4119 = vadd.f32 %v4008, %v4064
  %v4120 = vadd.f32 %v4009, %v4065
  %v4121 = vadd.f32 %v4010, %v4066
  %v4122 = vadd.f32 %v4011, %v4067
  %v4123 = vadd.f32 %v4012, %v4068
  %v4124 = vadd.f32 %v4013, %v4069
  %v4125 = vadd.f32 %v4014, %v4070
  %vm4126 = vcmask 130048
  %v4127 = vsel %vm4126, %v4071, 0.0
  %4128 = vadd.xlane.f32.xlu0 %v4127
  %v4129 = vpop.xlane.xlu0 %4128
  %v4130 = vsel %vm4126, %v4072, 0.0
  %4131 = vadd.xlane.f32.xlu0 %v4130
  %v4132 = vpop.xlane.xlu0 %4131
  %v4133 = vsel %vm4126, %v4073, 0.0
  %4134 = vadd.xlane.f32.xlu0 %v4133
  %v4135 = vpop.xlane.xlu0 %4134
  %v4136 = vsel %vm4126, %v4074, 0.0
  %4137 = vadd.xlane.f32.xlu0 %v4136
  %v4138 = vpop.xlane.xlu0 %4137
  %v4139 = vsel %vm4126, %v4075, 0.0
  %4140 = vadd.xlane.f32.xlu0 %v4139
  %v4141 = vpop.xlane.xlu0 %4140
  %v4142 = vsel %vm4126, %v4076, 0.0
  %4143 = vadd.xlane.f32.xlu0 %v4142
  %v4144 = vpop.xlane.xlu0 %4143
  %v4145 = vsel %vm4126, %v4077, 0.0
  %4146 = vadd.xlane.f32.xlu0 %v4145
  %v4147 = vpop.xlane.xlu0 %4146
  %v4148 = vsel %vm4126, %v4078, 0.0
  %4149 = vadd.xlane.f32.xlu0 %v4148
  %v4150 = vpop.xlane.xlu0 %4149
  %v4151 = vsel %vm4126, %v4079, 0.0
  %4152 = vadd.xlane.f32.xlu0 %v4151
  %v4153 = vpop.xlane.xlu0 %4152
  %v4154 = vsel %vm4126, %v4080, 0.0
  %4155 = vadd.xlane.f32.xlu0 %v4154
  %v4156 = vpop.xlane.xlu0 %4155
  %v4157 = vsel %vm4126, %v4081, 0.0
  %4158 = vadd.xlane.f32.xlu0 %v4157
  %v4159 = vpop.xlane.xlu0 %4158
  %v4160 = vsel %vm4126, %v4082, 0.0
  %4161 = vadd.xlane.f32.xlu0 %v4160
  %v4162 = vpop.xlane.xlu0 %4161
  %v4163 = vsel %vm4126, %v4083, 0.0
  %4164 = vadd.xlane.f32.xlu0 %v4163
  %v4165 = vpop.xlane.xlu0 %4164
  %v4166 = vsel %vm4126, %v4084, 0.0
  %4167 = vadd.xlane.f32.xlu0 %v4166
  %v4168 = vpop.xlane.xlu0 %4167
  %v4169 = vsel %vm4126, %v4085, 0.0
  %4170 = vadd.xlane.f32.xlu0 %v4169
  %v4171 = vpop.xlane.xlu0 %4170
  %v4172 = vsel %vm4126, %v4086, 0.0
  %4173 = vadd.xlane.f32.xlu0 %v4172
  %v4174 = vpop.xlane.xlu0 %4173
  %v4175 = vsel %vm4126, %v4087, 0.0
  %4176 = vadd.xlane.f32.xlu0 %v4175
  %v4177 = vpop.xlane.xlu0 %4176
  %v4178 = vsel %vm4126, %v4088, 0.0
  %4179 = vadd.xlane.f32.xlu0 %v4178
  %v4180 = vpop.xlane.xlu0 %4179
  %v4181 = vsel %vm4126, %v4089, 0.0
  %4182 = vadd.xlane.f32.xlu0 %v4181
  %v4183 = vpop.xlane.xlu0 %4182
  %v4184 = vsel %vm4126, %v4090, 0.0
  %4185 = vadd.xlane.f32.xlu0 %v4184
  %v4186 = vpop.xlane.xlu0 %4185
  %v4187 = vsel %vm4126, %v4091, 0.0
  %4188 = vadd.xlane.f32.xlu0 %v4187
  %v4189 = vpop.xlane.xlu0 %4188
  %v4190 = vsel %vm4126, %v4092, 0.0
  %4191 = vadd.xlane.f32.xlu0 %v4190
  %v4192 = vpop.xlane.xlu0 %4191
  %v4193 = vsel %vm4126, %v4093, 0.0
  %4194 = vadd.xlane.f32.xlu0 %v4193
  %v4195 = vpop.xlane.xlu0 %4194
  %v4196 = vsel %vm4126, %v4094, 0.0
  %4197 = vadd.xlane.f32.xlu0 %v4196
  %v4198 = vpop.xlane.xlu0 %4197
  %v4199 = vsel %vm4126, %v4095, 0.0
  %4200 = vadd.xlane.f32.xlu0 %v4199
  %v4201 = vpop.xlane.xlu0 %4200
  %v4202 = vsel %vm4126, %v4096, 0.0
  %4203 = vadd.xlane.f32.xlu0 %v4202
  %v4204 = vpop.xlane.xlu0 %4203
  %v4205 = vsel %vm4126, %v4097, 0.0
  %4206 = vadd.xlane.f32.xlu0 %v4205
  %v4207 = vpop.xlane.xlu0 %4206
  %v4208 = vsel %vm4126, %v4098, 0.0
  %4209 = vadd.xlane.f32.xlu0 %v4208
  %v4210 = vpop.xlane.xlu0 %4209
  %v4211 = vsel %vm4126, %v4099, 0.0
  %4212 = vadd.xlane.f32.xlu0 %v4211
  %v4213 = vpop.xlane.xlu0 %4212
  %v4214 = vsel %vm4126, %v4100, 0.0
  %4215 = vadd.xlane.f32.xlu0 %v4214
  %v4216 = vpop.xlane.xlu0 %4215
  %v4217 = vsel %vm4126, %v4101, 0.0
  %4218 = vadd.xlane.f32.xlu0 %v4217
  %v4219 = vpop.xlane.xlu0 %4218
  %v4220 = vsel %vm4126, %v4102, 0.0
  %4221 = vadd.xlane.f32.xlu0 %v4220
  %v4222 = vpop.xlane.xlu0 %4221
  %v4223 = vsel %vm4126, %v4103, 0.0
  %4224 = vadd.xlane.f32.xlu0 %v4223
  %v4225 = vpop.xlane.xlu0 %4224
  %v4226 = vsel %vm4126, %v4104, 0.0
  %4227 = vadd.xlane.f32.xlu0 %v4226
  %v4228 = vpop.xlane.xlu0 %4227
  %v4229 = vsel %vm4126, %v4105, 0.0
  %4230 = vadd.xlane.f32.xlu0 %v4229
  %v4231 = vpop.xlane.xlu0 %4230
  %v4232 = vsel %vm4126, %v4106, 0.0
  %4233 = vadd.xlane.f32.xlu0 %v4232
  %v4234 = vpop.xlane.xlu0 %4233
  %v4235 = vsel %vm4126, %v4107, 0.0
  %4236 = vadd.xlane.f32.xlu0 %v4235
  %v4237 = vpop.xlane.xlu0 %4236
  %v4238 = vsel %vm4126, %v4108, 0.0
  %4239 = vadd.xlane.f32.xlu0 %v4238
  %v4240 = vpop.xlane.xlu0 %4239
  %v4241 = vsel %vm4126, %v4109, 0.0
  %4242 = vadd.xlane.f32.xlu0 %v4241
  %v4243 = vpop.xlane.xlu0 %4242
  %v4244 = vsel %vm4126, %v4110, 0.0
  %4245 = vadd.xlane.f32.xlu0 %v4244
  %v4246 = vpop.xlane.xlu0 %4245
  %v4247 = vsel %vm4126, %v4111, 0.0
  %4248 = vadd.xlane.f32.xlu0 %v4247
  %v4249 = vpop.xlane.xlu0 %4248
  %v4250 = vsel %vm4126, %v4112, 0.0
  %4251 = vadd.xlane.f32.xlu0 %v4250
  %v4252 = vpop.xlane.xlu0 %4251
  %v4253 = vsel %vm4126, %v4113, 0.0
  %4254 = vadd.xlane.f32.xlu0 %v4253
  %v4255 = vpop.xlane.xlu0 %4254
  %v4256 = vsel %vm4126, %v4114, 0.0
  %4257 = vadd.xlane.f32.xlu0 %v4256
  %v4258 = vpop.xlane.xlu0 %4257
  %v4259 = vsel %vm4126, %v4115, 0.0
  %4260 = vadd.xlane.f32.xlu0 %v4259
  %v4261 = vpop.xlane.xlu0 %4260
  %v4262 = vsel %vm4126, %v4116, 0.0
  %4263 = vadd.xlane.f32.xlu0 %v4262
  %v4264 = vpop.xlane.xlu0 %4263
  %v4265 = vsel %vm4126, %v4117, 0.0
  %4266 = vadd.xlane.f32.xlu0 %v4265
  %v4267 = vpop.xlane.xlu0 %4266
  %v4268 = vsel %vm4126, %v4118, 0.0
  %4269 = vadd.xlane.f32.xlu0 %v4268
  %v4270 = vpop.xlane.xlu0 %4269
  %v4271 = vsel %vm4126, %v4119, 0.0
  %4272 = vadd.xlane.f32.xlu0 %v4271
  %v4273 = vpop.xlane.xlu0 %4272
  %v4274 = vsel %vm4126, %v4120, 0.0
  %4275 = vadd.xlane.f32.xlu0 %v4274
  %v4276 = vpop.xlane.xlu0 %4275
  %v4277 = vsel %vm4126, %v4121, 0.0
  %4278 = vadd.xlane.f32.xlu0 %v4277
  %v4279 = vpop.xlane.xlu0 %4278
  %v4280 = vsel %vm4126, %v4122, 0.0
  %4281 = vadd.xlane.f32.xlu0 %v4280
  %v4282 = vpop.xlane.xlu0 %4281
  %v4283 = vsel %vm4126, %v4123, 0.0
  %4284 = vadd.xlane.f32.xlu0 %v4283
  %v4285 = vpop.xlane.xlu0 %4284
  %v4286 = vsel %vm4126, %v4124, 0.0
  %4287 = vadd.xlane.f32.xlu0 %v4286
  %v4288 = vpop.xlane.xlu0 %4287
  %v4289 = vsel %vm4126, %v4125, 0.0
  %4290 = vadd.xlane.f32.xlu0 %v4289
  %v4291 = vpop.xlane.xlu0 %4290
  %s4292 = sld [smem:[#allocation2]]
  %v4293 = vstv %s4292
  %v4294 = vadd.f32 %v4129, %v4293
  %v4295 = vadd.f32 %v4132, %v4293
  %v4296 = vadd.f32 %v4135, %v4293
  %v4297 = vadd.f32 %v4138, %v4293
  %v4298 = vadd.f32 %v4141, %v4293
  %v4299 = vadd.f32 %v4144, %v4293
  %v4300 = vadd.f32 %v4147, %v4293
  %v4301 = vadd.f32 %v4150, %v4293
  %v4302 = vadd.f32 %v4153, %v4293
  %v4303 = vadd.f32 %v4156, %v4293
  %v4304 = vadd.f32 %v4159, %v4293
  %v4305 = vadd.f32 %v4162, %v4293
  %v4306 = vadd.f32 %v4165, %v4293
  %v4307 = vadd.f32 %v4168, %v4293
  %v4308 = vadd.f32 %v4171, %v4293
  %v4309 = vadd.f32 %v4174, %v4293
  %v4310 = vadd.f32 %v4177, %v4293
  %v4311 = vadd.f32 %v4180, %v4293
  %v4312 = vadd.f32 %v4183, %v4293
  %v4313 = vadd.f32 %v4186, %v4293
  %v4314 = vadd.f32 %v4189, %v4293
  %v4315 = vadd.f32 %v4192, %v4293
  %v4316 = vadd.f32 %v4195, %v4293
  %v4317 = vadd.f32 %v4198, %v4293
  %v4318 = vadd.f32 %v4201, %v4293
  %v4319 = vadd.f32 %v4204, %v4293
  %v4320 = vadd.f32 %v4207, %v4293
  %v4321 = vadd.f32 %v4210, %v4293
  %v4322 = vadd.f32 %v4213, %v4293
  %v4323 = vadd.f32 %v4216, %v4293
  %v4324 = vadd.f32 %v4219, %v4293
  %v4325 = vadd.f32 %v4222, %v4293
  %v4326 = vadd.f32 %v4225, %v4293
  %v4327 = vadd.f32 %v4228, %v4293
  %v4328 = vadd.f32 %v4231, %v4293
  %v4329 = vadd.f32 %v4234, %v4293
  %v4330 = vadd.f32 %v4237, %v4293
  %v4331 = vadd.f32 %v4240, %v4293
  %v4332 = vadd.f32 %v4243, %v4293
  %v4333 = vadd.f32 %v4246, %v4293
  %v4334 = vadd.f32 %v4249, %v4293
  %v4335 = vadd.f32 %v4252, %v4293
  %v4336 = vadd.f32 %v4255, %v4293
  %v4337 = vadd.f32 %v4258, %v4293
  %v4338 = vadd.f32 %v4261, %v4293
  %v4339 = vadd.f32 %v4264, %v4293
  %v4340 = vadd.f32 %v4267, %v4293
  %v4341 = vadd.f32 %v4270, %v4293
  %v4342 = vadd.f32 %v4273, %v4293
  %v4343 = vadd.f32 %v4276, %v4293
  %v4344 = vadd.f32 %v4279, %v4293
  %v4345 = vadd.f32 %v4282, %v4293
  %v4346 = vadd.f32 %v4285, %v4293
  %v4347 = vadd.f32 %v4288, %v4293
  %v4348 = vadd.f32 %v4291, %v4293
  %v4349 = vtanh.pop %v4294
  %v4350 = vtanh.pop %v4295
  %v4351 = vtanh.pop %v4296
  %v4352 = vtanh.pop %v4297
  %v4353 = vtanh.pop %v4298
  %v4354 = vtanh.pop %v4299
  %v4355 = vtanh.pop %v4300
  %v4356 = vtanh.pop %v4301
  %v4357 = vtanh.pop %v4302
  %v4358 = vtanh.pop %v4303
  %v4359 = vtanh.pop %v4304
  %v4360 = vtanh.pop %v4305
  %v4361 = vtanh.pop %v4306
  %v4362 = vtanh.pop %v4307
  %v4363 = vtanh.pop %v4308
  %v4364 = vtanh.pop %v4309
  %v4365 = vtanh.pop %v4310
  %v4366 = vtanh.pop %v4311
  %v4367 = vtanh.pop %v4312
  %v4368 = vtanh.pop %v4313
  %v4369 = vtanh.pop %v4314
  %v4370 = vtanh.pop %v4315
  %v4371 = vtanh.pop %v4316
  %v4372 = vtanh.pop %v4317
  %v4373 = vtanh.pop %v4318
  %v4374 = vtanh.pop %v4319
  %v4375 = vtanh.pop %v4320
  %v4376 = vtanh.pop %v4321
  %v4377 = vtanh.pop %v4322
  %v4378 = vtanh.pop %v4323
  %v4379 = vtanh.pop %v4324
  %v4380 = vtanh.pop %v4325
  %v4381 = vtanh.pop %v4326
  %v4382 = vtanh.pop %v4327
  %v4383 = vtanh.pop %v4328
  %v4384 = vtanh.pop %v4329
  %v4385 = vtanh.pop %v4330
  %v4386 = vtanh.pop %v4331
  %v4387 = vtanh.pop %v4332
  %v4388 = vtanh.pop %v4333
  %v4389 = vtanh.pop %v4334
  %v4390 = vtanh.pop %v4335
  %v4391 = vtanh.pop %v4336
  %v4392 = vtanh.pop %v4337
  %v4393 = vtanh.pop %v4338
  %v4394 = vtanh.pop %v4339
  %v4395 = vtanh.pop %v4340
  %v4396 = vtanh.pop %v4341
  %v4397 = vtanh.pop %v4342
  %v4398 = vtanh.pop %v4343
  %v4399 = vtanh.pop %v4344
  %v4400 = vtanh.pop %v4345
  %v4401 = vtanh.pop %v4346
  %v4402 = vtanh.pop %v4347
  %v4403 = vtanh.pop %v4348
  %v4404 = vrot.slane %v4349, 1
  %v4405 = vrot.slane %v4350, 1
  %v4406 = vrot.slane %v4351, 1
  %v4407 = vrot.slane %v4352, 1
  %v4408 = vrot.slane %v4353, 1
  %v4409 = vrot.slane %v4354, 1
  %v4410 = vrot.slane %v4355, 1
  %v4411 = vrot.slane %v4356, 1
  %v4412 = vrot.slane %v4357, 1
  %v4413 = vrot.slane %v4358, 1
  %v4414 = vrot.slane %v4359, 1
  %v4415 = vrot.slane %v4360, 1
  %v4416 = vrot.slane %v4361, 1
  %v4417 = vrot.slane %v4362, 1
  %v4418 = vrot.slane %v4363, 1
  %v4419 = vrot.slane %v4364, 1
  %v4420 = vrot.slane %v4365, 1
  %v4421 = vrot.slane %v4366, 1
  %v4422 = vrot.slane %v4367, 1
  %v4423 = vrot.slane %v4368, 1
  %v4424 = vrot.slane %v4369, 1
  %v4425 = vrot.slane %v4370, 1
  %v4426 = vrot.slane %v4371, 1
  %v4427 = vrot.slane %v4372, 1
  %v4428 = vrot.slane %v4373, 1
  %v4429 = vrot.slane %v4374, 1
  %v4430 = vrot.slane %v4375, 1
  %v4431 = vrot.slane %v4376, 1
  %v4432 = vrot.slane %v4377, 1
  %v4433 = vrot.slane %v4378, 1
  %v4434 = vrot.slane %v4379, 1
  %v4435 = vrot.slane %v4380, 1
  %v4436 = vrot.slane %v4381, 1
  %v4437 = vrot.slane %v4382, 1
  %v4438 = vrot.slane %v4383, 1
  %v4439 = vrot.slane %v4384, 1
  %v4440 = vrot.slane %v4385, 1
  %v4441 = vrot.slane %v4386, 1
  %v4442 = vrot.slane %v4387, 1
  %v4443 = vrot.slane %v4388, 1
  %v4444 = vrot.slane %v4389, 1
  %v4445 = vrot.slane %v4390, 1
  %v4446 = vrot.slane %v4391, 1
  %v4447 = vrot.slane %v4392, 1
  %v4448 = vrot.slane %v4393, 1
  %v4449 = vrot.slane %v4394, 1
  %v4450 = vrot.slane %v4395, 1
  %v4451 = vrot.slane %v4396, 1
  %v4452 = vrot.slane %v4397, 1
  %v4453 = vrot.slane %v4398, 1
  %v4454 = vrot.slane %v4399, 1
  %v4455 = vrot.slane %v4400, 1
  %v4456 = vrot.slane %v4401, 1
  %v4457 = vrot.slane %v4402, 1
  %v4458 = vrot.slane %v4403, 1
  %v4459 = vsel %vm2406, %v4457, %v4458
  %v4460 = vsel %vm2406, %v4456, %v4457
  %v4461 = vsel %vm2406, %v4455, %v4456
  %v4462 = vsel %vm2406, %v4454, %v4455
  %v4463 = vsel %vm2406, %v4453, %v4454
  %v4464 = vsel %vm2406, %v4452, %v4453
  %v4465 = vsel %vm2406, %v4451, %v4452
  %v4466 = vsel %vm2406, %v4450, %v4451
  %v4467 = vsel %vm2406, %v4449, %v4450
  %v4468 = vsel %vm2406, %v4448, %v4449
  %v4469 = vsel %vm2406, %v4447, %v4448
  %v4470 = vsel %vm2406, %v4446, %v4447
  %v4471 = vsel %vm2406, %v4445, %v4446
  %v4472 = vsel %vm2406, %v4444, %v4445
  %v4473 = vsel %vm2406, %v4443, %v4444
  %v4474 = vsel %vm2406, %v4442, %v4443
  %v4475 = vsel %vm2406, %v4441, %v4442
  %v4476 = vsel %vm2406, %v4440, %v4441
  %v4477 = vsel %vm2406, %v4439, %v4440
  %v4478 = vsel %vm2406, %v4438, %v4439
  %v4479 = vsel %vm2406, %v4437, %v4438
  %v4480 = vsel %vm2406, %v4436, %v4437
  %v4481 = vsel %vm2406, %v4435, %v4436
  %v4482 = vsel %vm2406, %v4434, %v4435
  %v4483 = vsel %vm2406, %v4433, %v4434
  %v4484 = vsel %vm2406, %v4432, %v4433
  %v4485 = vsel %vm2406, %v4431, %v4432
  %v4486 = vsel %vm2406, %v4430, %v4431
  %v4487 = vsel %vm2406, %v4429, %v4430
  %v4488 = vsel %vm2406, %v4428, %v4429
  %v4489 = vsel %vm2406, %v4427, %v4428
  %v4490 = vsel %vm2406, %v4426, %v4427
  %v4491 = vsel %vm2406, %v4425, %v4426
  %v4492 = vsel %vm2406, %v4424, %v4425
  %v4493 = vsel %vm2406, %v4423, %v4424
  %v4494 = vsel %vm2406, %v4422, %v4423
  %v4495 = vsel %vm2406, %v4421, %v4422
  %v4496 = vsel %vm2406, %v4420, %v4421
  %v4497 = vsel %vm2406, %v4419, %v4420
  %v4498 = vsel %vm2406, %v4418, %v4419
  %v4499 = vsel %vm2406, %v4417, %v4418
  %v4500 = vsel %vm2406, %v4416, %v4417
  %v4501 = vsel %vm2406, %v4415, %v4416
  %v4502 = vsel %vm2406, %v4414, %v4415
  %v4503 = vsel %vm2406, %v4413, %v4414
  %v4504 = vsel %vm2406, %v4412, %v4413
  %v4505 = vsel %vm2406, %v4411, %v4412
  %v4506 = vsel %vm2406, %v4410, %v4411
  %v4507 = vsel %vm2406, %v4409, %v4410
  %v4508 = vsel %vm2406, %v4408, %v4409
  %v4509 = vsel %vm2406, %v4407, %v4408
  %v4510 = vsel %vm2406, %v4406, %v4407
  %v4511 = vsel %vm2406, %v4405, %v4406
  %v4512 = vsel %vm2406, %v4404, %v4405
  %v4513 = vsel %vm2406, %v4458, %v4404
  %v4514 = vmax.f32 %v4349, %v4512
  %v4515 = vmax.f32 %v4350, %v4511
  %v4516 = vmax.f32 %v4351, %v4510
  %v4517 = vmax.f32 %v4352, %v4509
  %v4518 = vmax.f32 %v4353, %v4508
  %v4519 = vmax.f32 %v4354, %v4507
  %v4520 = vmax.f32 %v4355, %v4506
  %v4521 = vmax.f32 %v4356, %v4505
  %v4522 = vmax.f32 %v4357, %v4504
  %v4523 = vmax.f32 %v4358, %v4503
  %v4524 = vmax.f32 %v4359, %v4502
  %v4525 = vmax.f32 %v4360, %v4501
  %v4526 = vmax.f32 %v4361, %v4500
  %v4527 = vmax.f32 %v4362, %v4499
  %v4528 = vmax.f32 %v4363, %v4498
  %v4529 = vmax.f32 %v4364, %v4497
  %v4530 = vmax.f32 %v4365, %v4496
  %v4531 = vmax.f32 %v4366, %v4495
  %v4532 = vmax.f32 %v4367, %v4494
  %v4533 = vmax.f32 %v4368, %v4493
  %v4534 = vmax.f32 %v4369, %v4492
  %v4535 = vmax.f32 %v4370, %v4491
  %v4536 = vmax.f32 %v4371, %v4490
  %v4537 = vmax.f32 %v4372, %v4489
  %v4538 = vmax.f32 %v4373, %v4488
  %v4539 = vmax.f32 %v4374, %v4487
  %v4540 = vmax.f32 %v4375, %v4486
  %v4541 = vmax.f32 %v4376, %v4485
  %v4542 = vmax.f32 %v4377, %v4484
  %v4543 = vmax.f32 %v4378, %v4483
  %v4544 = vmax.f32 %v4379, %v4482
  %v4545 = vmax.f32 %v4380, %v4481
  %v4546 = vmax.f32 %v4381, %v4480
  %v4547 = vmax.f32 %v4382, %v4479
  %v4548 = vmax.f32 %v4383, %v4478
  %v4549 = vmax.f32 %v4384, %v4477
  %v4550 = vmax.f32 %v4385, %v4476
  %v4551 = vmax.f32 %v4386, %v4475
  %v4552 = vmax.f32 %v4387, %v4474
  %v4553 = vmax.f32 %v4388, %v4473
  %v4554 = vmax.f32 %v4389, %v4472
  %v4555 = vmax.f32 %v4390, %v4471
  %v4556 = vmax.f32 %v4391, %v4470
  %v4557 = vmax.f32 %v4392, %v4469
  %v4558 = vmax.f32 %v4393, %v4468
  %v4559 = vmax.f32 %v4394, %v4467
  %v4560 = vmax.f32 %v4395, %v4466
  %v4561 = vmax.f32 %v4396, %v4465
  %v4562 = vmax.f32 %v4397, %v4464
  %v4563 = vmax.f32 %v4398, %v4463
  %v4564 = vmax.f32 %v4399, %v4462
  %v4565 = vmax.f32 %v4400, %v4461
  %v4566 = vmax.f32 %v4401, %v4460
  %v4567 = vmax.f32 %v4402, %v4459
  %v4568 = vmax.f32 %v4403, %v4513
  %v4569 = vadd.s32 %v2405, 8
  %v4570 = vadd.s32 %v2405, 16
  %v4571 = vadd.s32 %v2405, 24
  %v4572 = vadd.s32 %v2405, 32
  %v4573 = vadd.s32 %v2405, 40
  %v4574 = vadd.s32 %v2405, 48
  %v4575 = vadd.s32 %v2405, 56
  %v4576 = vadd.s32 %v2405, 64
  %v4577 = vadd.s32 %v2405, 72
  %v4578 = vadd.s32 %v2405, 80
  %v4579 = vadd.s32 %v2405, 88
  %v4580 = vadd.s32 %v2405, 96
  %v4581 = vadd.s32 %v2405, 104
  %v4582 = vadd.s32 %v2405, 112
  %v4583 = vadd.s32 %v2405, 120
  %v4584 = vadd.s32 %v2405, 128
  %v4585 = vadd.s32 %v2405, 136
  %v4586 = vadd.s32 %v2405, 144
  %v4587 = vadd.s32 %v2405, 152
  %v4588 = vadd.s32 %v2405, 160
  %v4589 = vadd.s32 %v2405, 168
  %v4590 = vadd.s32 %v2405, 176
  %v4591 = vadd.s32 %v2405, 184
  %v4592 = vadd.s32 %v2405, 192
  %v4593 = vadd.s32 %v2405, 200
  %v4594 = vadd.s32 %v2405, 208
  %v4595 = vadd.s32 %v2405, 216
  %v4596 = vadd.s32 %v2405, 224
  %v4597 = vadd.s32 %v2405, 232
  %v4598 = vadd.s32 %v2405, 240
  %v4599 = vadd.s32 %v2405, 248
  %v4600 = vadd.s32 %v2405, 256
  %v4601 = vadd.s32 %v2405, 264
  %v4602 = vadd.s32 %v2405, 272
  %v4603 = vadd.s32 %v2405, 280
  %v4604 = vadd.s32 %v2405, 288
  %v4605 = vadd.s32 %v2405, 296
  %v4606 = vadd.s32 %v2405, 304
  %v4607 = vadd.s32 %v2405, 312
  %v4608 = vadd.s32 %v2405, 320
  %v4609 = vadd.s32 %v2405, 328
  %v4610 = vadd.s32 %v2405, 336
  %v4611 = vadd.s32 %v2405, 344
  %v4612 = vadd.s32 %v2405, 352
  %v4613 = vadd.s32 %v2405, 360
  %v4614 = vadd.s32 %v2405, 368
  %v4615 = vadd.s32 %v2405, 376
  %v4616 = vadd.s32 %v2405, 384
  %v4617 = vadd.s32 %v2405, 392
  %v4618 = vadd.s32 %v2405, 400
  %v4619 = vadd.s32 %v2405, 408
  %v4620 = vadd.s32 %v2405, 416
  %v4621 = vadd.s32 %v2405, 424
  %v4622 = vadd.s32 %v2405, 432
  %vm4623 = vcmp.lt.s32.totalorder %v2291, 2
  %v4624 = vmul.u32 %v2291, 220
  %vm4625 = vcmp.ge.s32.totalorder %v2405, %v4624
  %vm4626 = vcmp.ge.s32.totalorder %v4569, %v4624
  %vm4627 = vcmp.ge.s32.totalorder %v4570, %v4624
  %vm4628 = vcmp.ge.s32.totalorder %v4571, %v4624
  %vm4629 = vcmp.ge.s32.totalorder %v4572, %v4624
  %vm4630 = vcmp.ge.s32.totalorder %v4573, %v4624
  %vm4631 = vcmp.ge.s32.totalorder %v4574, %v4624
  %vm4632 = vcmp.ge.s32.totalorder %v4575, %v4624
  %vm4633 = vcmp.ge.s32.totalorder %v4576, %v4624
  %vm4634 = vcmp.ge.s32.totalorder %v4577, %v4624
  %vm4635 = vcmp.ge.s32.totalorder %v4578, %v4624
  %vm4636 = vcmp.ge.s32.totalorder %v4579, %v4624
  %vm4637 = vcmp.ge.s32.totalorder %v4580, %v4624
  %vm4638 = vcmp.ge.s32.totalorder %v4581, %v4624
  %vm4639 = vcmp.ge.s32.totalorder %v4582, %v4624
  %vm4640 = vcmp.ge.s32.totalorder %v4583, %v4624
  %vm4641 = vcmp.ge.s32.totalorder %v4584, %v4624
  %vm4642 = vcmp.ge.s32.totalorder %v4585, %v4624
  %vm4643 = vcmp.ge.s32.totalorder %v4586, %v4624
  %vm4644 = vcmp.ge.s32.totalorder %v4587, %v4624
  %vm4645 = vcmp.ge.s32.totalorder %v4588, %v4624
  %vm4646 = vcmp.ge.s32.totalorder %v4589, %v4624
  %vm4647 = vcmp.ge.s32.totalorder %v4590, %v4624
  %vm4648 = vcmp.ge.s32.totalorder %v4591, %v4624
  %vm4649 = vcmp.ge.s32.totalorder %v4592, %v4624
  %vm4650 = vcmp.ge.s32.totalorder %v4593, %v4624
  %vm4651 = vcmp.ge.s32.totalorder %v4594, %v4624
  %vm4652 = vcmp.ge.s32.totalorder %v4595, %v4624
  %vm4653 = vcmp.ge.s32.totalorder %v4596, %v4624
  %vm4654 = vcmp.ge.s32.totalorder %v4597, %v4624
  %vm4655 = vcmp.ge.s32.totalorder %v4598, %v4624
  %vm4656 = vcmp.ge.s32.totalorder %v4599, %v4624
  %vm4657 = vcmp.ge.s32.totalorder %v4600, %v4624
  %vm4658 = vcmp.ge.s32.totalorder %v4601, %v4624
  %vm4659 = vcmp.ge.s32.totalorder %v4602, %v4624
  %vm4660 = vcmp.ge.s32.totalorder %v4603, %v4624
  %vm4661 = vcmp.ge.s32.totalorder %v4604, %v4624
  %vm4662 = vcmp.ge.s32.totalorder %v4605, %v4624
  %vm4663 = vcmp.ge.s32.totalorder %v4606, %v4624
  %vm4664 = vcmp.ge.s32.totalorder %v4607, %v4624
  %vm4665 = vcmp.ge.s32.totalorder %v4608, %v4624
  %vm4666 = vcmp.ge.s32.totalorder %v4609, %v4624
  %vm4667 = vcmp.ge.s32.totalorder %v4610, %v4624
  %vm4668 = vcmp.ge.s32.totalorder %v4611, %v4624
  %vm4669 = vcmp.ge.s32.totalorder %v4612, %v4624
  %vm4670 = vcmp.ge.s32.totalorder %v4613, %v4624
  %vm4671 = vcmp.ge.s32.totalorder %v4614, %v4624
  %vm4672 = vcmp.ge.s32.totalorder %v4615, %v4624
  %vm4673 = vcmp.ge.s32.totalorder %v4616, %v4624
  %vm4674 = vcmp.ge.s32.totalorder %v4617, %v4624
  %vm4675 = vcmp.ge.s32.totalorder %v4618, %v4624
  %vm4676 = vcmp.ge.s32.totalorder %v4619, %v4624
  %vm4677 = vcmp.ge.s32.totalorder %v4620, %v4624
  %vm4678 = vcmp.ge.s32.totalorder %v4621, %v4624
  %vm4679 = vcmp.ge.s32.totalorder %v4622, %v4624
  %vm4680 = vmand %vm4623, %vm4625
  %vm4681 = vmand %vm4623, %vm4626
  %vm4682 = vmand %vm4623, %vm4627
  %vm4683 = vmand %vm4623, %vm4628
  %vm4684 = vmand %vm4623, %vm4629
  %vm4685 = vmand %vm4623, %vm4630
  %vm4686 = vmand %vm4623, %vm4631
  %vm4687 = vmand %vm4623, %vm4632
  %vm4688 = vmand %vm4623, %vm4633
  %vm4689 = vmand %vm4623, %vm4634
  %vm4690 = vmand %vm4623, %vm4635
  %vm4691 = vmand %vm4623, %vm4636
  %vm4692 = vmand %vm4623, %vm4637
  %vm4693 = vmand %vm4623, %vm4638
  %vm4694 = vmand %vm4623, %vm4639
  %vm4695 = vmand %vm4623, %vm4640
  %vm4696 = vmand %vm4623, %vm4641
  %vm4697 = vmand %vm4623, %vm4642
  %vm4698 = vmand %vm4623, %vm4643
  %vm4699 = vmand %vm4623, %vm4644
  %vm4700 = vmand %vm4623, %vm4645
  %vm4701 = vmand %vm4623, %vm4646
  %vm4702 = vmand %vm4623, %vm4647
  %vm4703 = vmand %vm4623, %vm4648
  %vm4704 = vmand %vm4623, %vm4649
  %vm4705 = vmand %vm4623, %vm4650
  %vm4706 = vmand %vm4623, %vm4651
  %vm4707 = vmand %vm4623, %vm4652
  %vm4708 = vmand %vm4623, %vm4653
  %vm4709 = vmand %vm4623, %vm4654
  %vm4710 = vmand %vm4623, %vm4655
  %vm4711 = vmand %vm4623, %vm4656
  %vm4712 = vmand %vm4623, %vm4657
  %vm4713 = vmand %vm4623, %vm4658
  %vm4714 = vmand %vm4623, %vm4659
  %vm4715 = vmand %vm4623, %vm4660
  %vm4716 = vmand %vm4623, %vm4661
  %vm4717 = vmand %vm4623, %vm4662
  %vm4718 = vmand %vm4623, %vm4663
  %vm4719 = vmand %vm4623, %vm4664
  %vm4720 = vmand %vm4623, %vm4665
  %vm4721 = vmand %vm4623, %vm4666
  %vm4722 = vmand %vm4623, %vm4667
  %vm4723 = vmand %vm4623, %vm4668
  %vm4724 = vmand %vm4623, %vm4669
  %vm4725 = vmand %vm4623, %vm4670
  %vm4726 = vmand %vm4623, %vm4671
  %vm4727 = vmand %vm4623, %vm4672
  %vm4728 = vmand %vm4623, %vm4673
  %vm4729 = vmand %vm4623, %vm4674
  %vm4730 = vmand %vm4623, %vm4675
  %vm4731 = vmand %vm4623, %vm4676
  %vm4732 = vmand %vm4623, %vm4677
  %vm4733 = vmand %vm4623, %vm4678
  %vm4734 = vmand %vm4623, %vm4679
  %v4735 = vadd.s32 %v4624, 220
  %vm4736 = vcmp.lt.s32.totalorder %v2405, %v4735
  %vm4737 = vcmp.lt.s32.totalorder %v4569, %v4735
  %vm4738 = vcmp.lt.s32.totalorder %v4570, %v4735
  %vm4739 = vcmp.lt.s32.totalorder %v4571, %v4735
  %vm4740 = vcmp.lt.s32.totalorder %v4572, %v4735
  %vm4741 = vcmp.lt.s32.totalorder %v4573, %v4735
  %vm4742 = vcmp.lt.s32.totalorder %v4574, %v4735
  %vm4743 = vcmp.lt.s32.totalorder %v4575, %v4735
  %vm4744 = vcmp.lt.s32.totalorder %v4576, %v4735
  %vm4745 = vcmp.lt.s32.totalorder %v4577, %v4735
  %vm4746 = vcmp.lt.s32.totalorder %v4578, %v4735
  %vm4747 = vcmp.lt.s32.totalorder %v4579, %v4735
  %vm4748 = vcmp.lt.s32.totalorder %v4580, %v4735
  %vm4749 = vcmp.lt.s32.totalorder %v4581, %v4735
  %vm4750 = vcmp.lt.s32.totalorder %v4582, %v4735
  %vm4751 = vcmp.lt.s32.totalorder %v4583, %v4735
  %vm4752 = vcmp.lt.s32.totalorder %v4584, %v4735
  %vm4753 = vcmp.lt.s32.totalorder %v4585, %v4735
  %vm4754 = vcmp.lt.s32.totalorder %v4586, %v4735
  %vm4755 = vcmp.lt.s32.totalorder %v4587, %v4735
  %vm4756 = vcmp.lt.s32.totalorder %v4588, %v4735
  %vm4757 = vcmp.lt.s32.totalorder %v4589, %v4735
  %vm4758 = vcmp.lt.s32.totalorder %v4590, %v4735
  %vm4759 = vcmp.lt.s32.totalorder %v4591, %v4735
  %vm4760 = vcmp.lt.s32.totalorder %v4592, %v4735
  %vm4761 = vcmp.lt.s32.totalorder %v4593, %v4735
  %vm4762 = vcmp.lt.s32.totalorder %v4594, %v4735
  %vm4763 = vcmp.lt.s32.totalorder %v4595, %v4735
  %vm4764 = vcmp.lt.s32.totalorder %v4596, %v4735
  %vm4765 = vcmp.lt.s32.totalorder %v4597, %v4735
  %vm4766 = vcmp.lt.s32.totalorder %v4598, %v4735
  %vm4767 = vcmp.lt.s32.totalorder %v4599, %v4735
  %vm4768 = vcmp.lt.s32.totalorder %v4600, %v4735
  %vm4769 = vcmp.lt.s32.totalorder %v4601, %v4735
  %vm4770 = vcmp.lt.s32.totalorder %v4602, %v4735
  %vm4771 = vcmp.lt.s32.totalorder %v4603, %v4735
  %vm4772 = vcmp.lt.s32.totalorder %v4604, %v4735
  %vm4773 = vcmp.lt.s32.totalorder %v4605, %v4735
  %vm4774 = vcmp.lt.s32.totalorder %v4606, %v4735
  %vm4775 = vcmp.lt.s32.totalorder %v4607, %v4735
  %vm4776 = vcmp.lt.s32.totalorder %v4608, %v4735
  %vm4777 = vcmp.lt.s32.totalorder %v4609, %v4735
  %vm4778 = vcmp.lt.s32.totalorder %v4610, %v4735
  %vm4779 = vcmp.lt.s32.totalorder %v4611, %v4735
  %vm4780 = vcmp.lt.s32.totalorder %v4612, %v4735
  %vm4781 = vcmp.lt.s32.totalorder %v4613, %v4735
  %vm4782 = vcmp.lt.s32.totalorder %v4614, %v4735
  %vm4783 = vcmp.lt.s32.totalorder %v4615, %v4735
  %vm4784 = vcmp.lt.s32.totalorder %v4616, %v4735
  %vm4785 = vcmp.lt.s32.totalorder %v4617, %v4735
  %vm4786 = vcmp.lt.s32.totalorder %v4618, %v4735
  %vm4787 = vcmp.lt.s32.totalorder %v4619, %v4735
  %vm4788 = vcmp.lt.s32.totalorder %v4620, %v4735
  %vm4789 = vcmp.lt.s32.totalorder %v4621, %v4735
  %vm4790 = vcmp.lt.s32.totalorder %v4622, %v4735
  %vm4791 = vmand %vm4680, %vm4736
  %vm4792 = vmand %vm4681, %vm4737
  %vm4793 = vmand %vm4682, %vm4738
  %vm4794 = vmand %vm4683, %vm4739
  %vm4795 = vmand %vm4684, %vm4740
  %vm4796 = vmand %vm4685, %vm4741
  %vm4797 = vmand %vm4686, %vm4742
  %vm4798 = vmand %vm4687, %vm4743
  %vm4799 = vmand %vm4688, %vm4744
  %vm4800 = vmand %vm4689, %vm4745
  %vm4801 = vmand %vm4690, %vm4746
  %vm4802 = vmand %vm4691, %vm4747
  %vm4803 = vmand %vm4692, %vm4748
  %vm4804 = vmand %vm4693, %vm4749
  %vm4805 = vmand %vm4694, %vm4750
  %vm4806 = vmand %vm4695, %vm4751
  %vm4807 = vmand %vm4696, %vm4752
  %vm4808 = vmand %vm4697, %vm4753
  %vm4809 = vmand %vm4698, %vm4754
  %vm4810 = vmand %vm4699, %vm4755
  %vm4811 = vmand %vm4700, %vm4756
  %vm4812 = vmand %vm4701, %vm4757
  %vm4813 = vmand %vm4702, %vm4758
  %vm4814 = vmand %vm4703, %vm4759
  %vm4815 = vmand %vm4704, %vm4760
  %vm4816 = vmand %vm4705, %vm4761
  %vm4817 = vmand %vm4706, %vm4762
  %vm4818 = vmand %vm4707, %vm4763
  %vm4819 = vmand %vm4708, %vm4764
  %vm4820 = vmand %vm4709, %vm4765
  %vm4821 = vmand %vm4710, %vm4766
  %vm4822 = vmand %vm4711, %vm4767
  %vm4823 = vmand %vm4712, %vm4768
  %vm4824 = vmand %vm4713, %vm4769
  %vm4825 = vmand %vm4714, %vm4770
  %vm4826 = vmand %vm4715, %vm4771
  %vm4827 = vmand %vm4716, %vm4772
  %vm4828 = vmand %vm4717, %vm4773
  %vm4829 = vmand %vm4718, %vm4774
  %vm4830 = vmand %vm4719, %vm4775
  %vm4831 = vmand %vm4720, %vm4776
  %vm4832 = vmand %vm4721, %vm4777
  %vm4833 = vmand %vm4722, %vm4778
  %vm4834 = vmand %vm4723, %vm4779
  %vm4835 = vmand %vm4724, %vm4780
  %vm4836 = vmand %vm4725, %vm4781
  %vm4837 = vmand %vm4726, %vm4782
  %vm4838 = vmand %vm4727, %vm4783
  %vm4839 = vmand %vm4728, %vm4784
  %vm4840 = vmand %vm4729, %vm4785
  %vm4841 = vmand %vm4730, %vm4786
  %vm4842 = vmand %vm4731, %vm4787
  %vm4843 = vmand %vm4732, %vm4788
  %vm4844 = vmand %vm4733, %vm4789
  %vm4845 = vmand %vm4734, %vm4790
  %4847 = vset.pattern.permute.xlu0 0
  %4848 = vperm.xlu0 %4847, %v4514
  %v4849 = vpop.permute.xlu0 %4848
  %4852 = vset.pattern.permute.xlu0 0
  %4853 = vperm.xlu0 %4852, %v4515
  %v4854 = vpop.permute.xlu0 %4853
  %4857 = vset.pattern.permute.xlu0 0
  %4858 = vperm.xlu0 %4857, %v4516
  %v4859 = vpop.permute.xlu0 %4858
  %4862 = vset.pattern.permute.xlu0 0
  %4863 = vperm.xlu0 %4862, %v4517
  %v4864 = vpop.permute.xlu0 %4863
  %4867 = vset.pattern.permute.xlu0 0
  %4868 = vperm.xlu0 %4867, %v4518
  %v4869 = vpop.permute.xlu0 %4868
  %4872 = vset.pattern.permute.xlu0 0
  %4873 = vperm.xlu0 %4872, %v4519
  %v4874 = vpop.permute.xlu0 %4873
  %4877 = vset.pattern.permute.xlu0 0
  %4878 = vperm.xlu0 %4877, %v4520
  %v4879 = vpop.permute.xlu0 %4878
  %4882 = vset.pattern.permute.xlu0 0
  %4883 = vperm.xlu0 %4882, %v4521
  %v4884 = vpop.permute.xlu0 %4883
  %4887 = vset.pattern.permute.xlu0 0
  %4888 = vperm.xlu0 %4887, %v4522
  %v4889 = vpop.permute.xlu0 %4888
  %4892 = vset.pattern.permute.xlu0 0
  %4893 = vperm.xlu0 %4892, %v4523
  %v4894 = vpop.permute.xlu0 %4893
  %4897 = vset.pattern.permute.xlu0 0
  %4898 = vperm.xlu0 %4897, %v4524
  %v4899 = vpop.permute.xlu0 %4898
  %4902 = vset.pattern.permute.xlu0 0
  %4903 = vperm.xlu0 %4902, %v4525
  %v4904 = vpop.permute.xlu0 %4903
  %4907 = vset.pattern.permute.xlu0 0
  %4908 = vperm.xlu0 %4907, %v4526
  %v4909 = vpop.permute.xlu0 %4908
  %4912 = vset.pattern.permute.xlu0 0
  %4913 = vperm.xlu0 %4912, %v4527
  %v4914 = vpop.permute.xlu0 %4913
  %4917 = vset.pattern.permute.xlu0 0
  %4918 = vperm.xlu0 %4917, %v4528
  %v4919 = vpop.permute.xlu0 %4918
  %4922 = vset.pattern.permute.xlu0 0
  %4923 = vperm.xlu0 %4922, %v4529
  %v4924 = vpop.permute.xlu0 %4923
  %4927 = vset.pattern.permute.xlu0 0
  %4928 = vperm.xlu0 %4927, %v4530
  %v4929 = vpop.permute.xlu0 %4928
  %4932 = vset.pattern.permute.xlu0 0
  %4933 = vperm.xlu0 %4932, %v4531
  %v4934 = vpop.permute.xlu0 %4933
  %4937 = vset.pattern.permute.xlu0 0
  %4938 = vperm.xlu0 %4937, %v4532
  %v4939 = vpop.permute.xlu0 %4938
  %4942 = vset.pattern.permute.xlu0 0
  %4943 = vperm.xlu0 %4942, %v4533
  %v4944 = vpop.permute.xlu0 %4943
  %4947 = vset.pattern.permute.xlu0 0
  %4948 = vperm.xlu0 %4947, %v4534
  %v4949 = vpop.permute.xlu0 %4948
  %4952 = vset.pattern.permute.xlu0 0
  %4953 = vperm.xlu0 %4952, %v4535
  %v4954 = vpop.permute.xlu0 %4953
  %4957 = vset.pattern.permute.xlu0 0
  %4958 = vperm.xlu0 %4957, %v4536
  %v4959 = vpop.permute.xlu0 %4958
  %4962 = vset.pattern.permute.xlu0 0
  %4963 = vperm.xlu0 %4962, %v4537
  %v4964 = vpop.permute.xlu0 %4963
  %4967 = vset.pattern.permute.xlu0 0
  %4968 = vperm.xlu0 %4967, %v4538
  %v4969 = vpop.permute.xlu0 %4968
  %4972 = vset.pattern.permute.xlu0 0
  %4973 = vperm.xlu0 %4972, %v4539
  %v4974 = vpop.permute.xlu0 %4973
  %4977 = vset.pattern.permute.xlu0 0
  %4978 = vperm.xlu0 %4977, %v4540
  %v4979 = vpop.permute.xlu0 %4978
  %4982 = vset.pattern.permute.xlu0 0
  %4983 = vperm.xlu0 %4982, %v4541
  %v4984 = vpop.permute.xlu0 %4983
  %4987 = vset.pattern.permute.xlu0 0
  %4988 = vperm.xlu0 %4987, %v4542
  %v4989 = vpop.permute.xlu0 %4988
  %4992 = vset.pattern.permute.xlu0 0
  %4993 = vperm.xlu0 %4992, %v4543
  %v4994 = vpop.permute.xlu0 %4993
  %4997 = vset.pattern.permute.xlu0 0
  %4998 = vperm.xlu0 %4997, %v4544
  %v4999 = vpop.permute.xlu0 %4998
  %5002 = vset.pattern.permute.xlu0 0
  %5003 = vperm.xlu0 %5002, %v4545
  %v5004 = vpop.permute.xlu0 %5003
  %5007 = vset.pattern.permute.xlu0 0
  %5008 = vperm.xlu0 %5007, %v4546
  %v5009 = vpop.permute.xlu0 %5008
  %5012 = vset.pattern.permute.xlu0 0
  %5013 = vperm.xlu0 %5012, %v4547
  %v5014 = vpop.permute.xlu0 %5013
  %5017 = vset.pattern.permute.xlu0 0
  %5018 = vperm.xlu0 %5017, %v4548
  %v5019 = vpop.permute.xlu0 %5018
  %5022 = vset.pattern.permute.xlu0 0
  %5023 = vperm.xlu0 %5022, %v4549
  %v5024 = vpop.permute.xlu0 %5023
  %5027 = vset.pattern.permute.xlu0 0
  %5028 = vperm.xlu0 %5027, %v4550
  %v5029 = vpop.permute.xlu0 %5028
  %5032 = vset.pattern.permute.xlu0 0
  %5033 = vperm.xlu0 %5032, %v4551
  %v5034 = vpop.permute.xlu0 %5033
  %5037 = vset.pattern.permute.xlu0 0
  %5038 = vperm.xlu0 %5037, %v4552
  %v5039 = vpop.permute.xlu0 %5038
  %5042 = vset.pattern.permute.xlu0 0
  %5043 = vperm.xlu0 %5042, %v4553
  %v5044 = vpop.permute.xlu0 %5043
  %5047 = vset.pattern.permute.xlu0 0
  %5048 = vperm.xlu0 %5047, %v4554
  %v5049 = vpop.permute.xlu0 %5048
  %5052 = vset.pattern.permute.xlu0 0
  %5053 = vperm.xlu0 %5052, %v4555
  %v5054 = vpop.permute.xlu0 %5053
  %5057 = vset.pattern.permute.xlu0 0
  %5058 = vperm.xlu0 %5057, %v4556
  %v5059 = vpop.permute.xlu0 %5058
  %5062 = vset.pattern.permute.xlu0 0
  %5063 = vperm.xlu0 %5062, %v4557
  %v5064 = vpop.permute.xlu0 %5063
  %5067 = vset.pattern.permute.xlu0 0
  %5068 = vperm.xlu0 %5067, %v4558
  %v5069 = vpop.permute.xlu0 %5068
  %5072 = vset.pattern.permute.xlu0 0
  %5073 = vperm.xlu0 %5072, %v4559
  %v5074 = vpop.permute.xlu0 %5073
  %5077 = vset.pattern.permute.xlu0 0
  %5078 = vperm.xlu0 %5077, %v4560
  %v5079 = vpop.permute.xlu0 %5078
  %5082 = vset.pattern.permute.xlu0 0
  %5083 = vperm.xlu0 %5082, %v4561
  %v5084 = vpop.permute.xlu0 %5083
  %5087 = vset.pattern.permute.xlu0 0
  %5088 = vperm.xlu0 %5087, %v4562
  %v5089 = vpop.permute.xlu0 %5088
  %5092 = vset.pattern.permute.xlu0 0
  %5093 = vperm.xlu0 %5092, %v4563
  %v5094 = vpop.permute.xlu0 %5093
  %5097 = vset.pattern.permute.xlu0 0
  %5098 = vperm.xlu0 %5097, %v4564
  %v5099 = vpop.permute.xlu0 %5098
  %5102 = vset.pattern.permute.xlu0 0
  %5103 = vperm.xlu0 %5102, %v4565
  %v5104 = vpop.permute.xlu0 %5103
  %5107 = vset.pattern.permute.xlu0 0
  %5108 = vperm.xlu0 %5107, %v4566
  %v5109 = vpop.permute.xlu0 %5108
  %5112 = vset.pattern.permute.xlu0 0
  %5113 = vperm.xlu0 %5112, %v4567
  %v5114 = vpop.permute.xlu0 %5113
  %5117 = vset.pattern.permute.xlu0 0
  %5118 = vperm.xlu0 %5117, %v4568
  %v5119 = vpop.permute.xlu0 %5118
  %v5121 = vsel %vm4791, %v4849, 0.0
  %v5122 = vsel %vm4792, %v4854, 0.0
  %v5123 = vsel %vm4793, %v4859, 0.0
  %v5124 = vsel %vm4794, %v4864, 0.0
  %v5125 = vsel %vm4795, %v4869, 0.0
  %v5126 = vsel %vm4796, %v4874, 0.0
  %v5127 = vsel %vm4797, %v4879, 0.0
  %v5128 = vsel %vm4798, %v4884, 0.0
  %v5129 = vsel %vm4799, %v4889, 0.0
  %v5130 = vsel %vm4800, %v4894, 0.0
  %v5131 = vsel %vm4801, %v4899, 0.0
  %v5132 = vsel %vm4802, %v4904, 0.0
  %v5133 = vsel %vm4803, %v4909, 0.0
  %v5134 = vsel %vm4804, %v4914, 0.0
  %v5135 = vsel %vm4805, %v4919, 0.0
  %v5136 = vsel %vm4806, %v4924, 0.0
  %v5137 = vsel %vm4807, %v4929, 0.0
  %v5138 = vsel %vm4808, %v4934, 0.0
  %v5139 = vsel %vm4809, %v4939, 0.0
  %v5140 = vsel %vm4810, %v4944, 0.0
  %v5141 = vsel %vm4811, %v4949, 0.0
  %v5142 = vsel %vm4812, %v4954, 0.0
  %v5143 = vsel %vm4813, %v4959, 0.0
  %v5144 = vsel %vm4814, %v4964, 0.0
  %v5145 = vsel %vm4815, %v4969, 0.0
  %v5146 = vsel %vm4816, %v4974, 0.0
  %v5147 = vsel %vm4817, %v4979, 0.0
  %v5148 = vsel %vm4818, %v4984, 0.0
  %v5149 = vsel %vm4819, %v4989, 0.0
  %v5150 = vsel %vm4820, %v4994, 0.0
  %v5151 = vsel %vm4821, %v4999, 0.0
  %v5152 = vsel %vm4822, %v5004, 0.0
  %v5153 = vsel %vm4823, %v5009, 0.0
  %v5154 = vsel %vm4824, %v5014, 0.0
  %v5155 = vsel %vm4825, %v5019, 0.0
  %v5156 = vsel %vm4826, %v5024, 0.0
  %v5157 = vsel %vm4827, %v5029, 0.0
  %v5158 = vsel %vm4828, %v5034, 0.0
  %v5159 = vsel %vm4829, %v5039, 0.0
  %v5160 = vsel %vm4830, %v5044, 0.0
  %v5161 = vsel %vm4831, %v5049, 0.0
  %v5162 = vsel %vm4832, %v5054, 0.0
  %v5163 = vsel %vm4833, %v5059, 0.0
  %v5164 = vsel %vm4834, %v5064, 0.0
  %v5165 = vsel %vm4835, %v5069, 0.0
  %v5166 = vsel %vm4836, %v5074, 0.0
  %v5167 = vsel %vm4837, %v5079, 0.0
  %v5168 = vsel %vm4838, %v5084, 0.0
  %v5169 = vsel %vm4839, %v5089, 0.0
  %v5170 = vsel %vm4840, %v5094, 0.0
  %v5171 = vsel %vm4841, %v5099, 0.0
  %v5172 = vsel %vm4842, %v5104, 0.0
  %v5173 = vsel %vm4843, %v5109, 0.0
  %v5174 = vsel %vm4844, %v5114, 0.0
  %v5175 = vsel %vm4845, %v5119, 0.0
  %v5176 = vpack.c.bf16 %v5122, %v5121
  %v5177 = vpack.c.bf16 %v5124, %v5123
  %v5178 = vpack.c.bf16 %v5126, %v5125
  %v5179 = vpack.c.bf16 %v5128, %v5127
  %v5180 = vpack.c.bf16 %v5130, %v5129
  %v5181 = vpack.c.bf16 %v5132, %v5131
  %v5182 = vpack.c.bf16 %v5134, %v5133
  %v5183 = vpack.c.bf16 %v5136, %v5135
  %v5184 = vpack.c.bf16 %v5138, %v5137
  %v5185 = vpack.c.bf16 %v5140, %v5139
  %v5186 = vpack.c.bf16 %v5142, %v5141
  %v5187 = vpack.c.bf16 %v5144, %v5143
  %v5188 = vpack.c.bf16 %v5146, %v5145
  %v5189 = vpack.c.bf16 %v5148, %v5147
  %v5190 = vpack.c.bf16 %v5150, %v5149
  %v5191 = vpack.c.bf16 %v5152, %v5151
  %v5192 = vpack.c.bf16 %v5154, %v5153
  %v5193 = vpack.c.bf16 %v5156, %v5155
  %v5194 = vpack.c.bf16 %v5158, %v5157
  %v5195 = vpack.c.bf16 %v5160, %v5159
  %v5196 = vpack.c.bf16 %v5162, %v5161
  %v5197 = vpack.c.bf16 %v5164, %v5163
  %v5198 = vpack.c.bf16 %v5166, %v5165
  %v5199 = vpack.c.bf16 %v5168, %v5167
  %v5200 = vpack.c.bf16 %v5170, %v5169
  %v5201 = vpack.c.bf16 %v5172, %v5171
  %v5202 = vpack.c.bf16 %v5174, %v5173
  %v5203 = vpack.c.bf16 %v5175, %v5175
  %v5204 = vld [vmem:[%s3] sm:$0xff]
  %v5205 = vld [vmem:[%s3 + $0x8] sm:$0xff]
  %v5206 = vld [vmem:[%s3 + $0x10] sm:$0xff]
  %v5207 = vld [vmem:[%s3 + $0x18] sm:$0xff]
  %v5208 = vld [vmem:[%s3 + $0x20] sm:$0xff]
  %v5209 = vld [vmem:[%s3 + $0x28] sm:$0xff]
  %v5210 = vld [vmem:[%s3 + $0x30] sm:$0xff]
  %v5211 = vld [vmem:[%s3 + $0x38] sm:$0xff]
  %v5212 = vld [vmem:[%s3 + $0x40] sm:$0xff]
  %v5213 = vld [vmem:[%s3 + $0x48] sm:$0xff]
  %v5214 = vld [vmem:[%s3 + $0x50] sm:$0xff]
  %v5215 = vld [vmem:[%s3 + $0x58] sm:$0xff]
  %v5216 = vld [vmem:[%s3 + $0x60] sm:$0xff]
  %v5217 = vld [vmem:[%s3 + $0x68] sm:$0xff]
  %v5218 = vld [vmem:[%s3 + $0x70] sm:$0xff]
  %v5219 = vld [vmem:[%s3 + $0x78] sm:$0xff]
  %v5220 = vld [vmem:[%s3 + $0x80] sm:$0xff]
  %v5221 = vld [vmem:[%s3 + $0x88] sm:$0xff]
  %v5222 = vld [vmem:[%s3 + $0x90] sm:$0xff]
  %v5223 = vld [vmem:[%s3 + $0x98] sm:$0xff]
  %v5224 = vld [vmem:[%s3 + $0xa0] sm:$0xff]
  %v5225 = vld [vmem:[%s3 + $0xa8] sm:$0xff]
  %v5226 = vld [vmem:[%s3 + $0xb0] sm:$0xff]
  %v5227 = vld [vmem:[%s3 + $0xb8] sm:$0xff]
  %v5228 = vld [vmem:[%s3 + $0xc0] sm:$0xff]
  %v5229 = vld [vmem:[%s3 + $0xc8] sm:$0xff]
  %v5230 = vld [vmem:[%s3 + $0xd0] sm:$0xff]
  %v5231 = vld [vmem:[%s3 + $0xd8] sm:$0xff]
  %v5232 = vld [vmem:[%s3 + $0xe0] sm:$0xff]
  %v5233 = vld [vmem:[%s3 + $0xe8] sm:$0xff]
  %v5234 = vld [vmem:[%s3 + $0xf0] sm:$0xff]
  %v5235 = vld [vmem:[%s3 + $0xf8] sm:$0xff]
  %v5236 = vld [vmem:[%s4] sm:$0xff]
  %v5237 = vld [vmem:[%s4 + $0x8] sm:$0xff]
  %v5238 = vld [vmem:[%s4 + $0x10] sm:$0xff]
  %v5239 = vld [vmem:[%s4 + $0x18] sm:$0xff]
  %v5240 = vld [vmem:[%s4 + $0x20] sm:$0xff]
  %v5241 = vld [vmem:[%s4 + $0x28] sm:$0xff]
  %v5242 = vld [vmem:[%s4 + $0x30] sm:$0xff]
  %v5243 = vld [vmem:[%s4 + $0x38] sm:$0xff]
  %v5244 = vld [vmem:[%s4 + $0x40] sm:$0xff]
  %v5245 = vld [vmem:[%s4 + $0x48] sm:$0xff]
  %v5246 = vld [vmem:[%s4 + $0x50] sm:$0xff]
  %v5247 = vld [vmem:[%s4 + $0x58] sm:$0xff]
  %v5248 = vld [vmem:[%s4 + $0x60] sm:$0xff]
  %v5249 = vld [vmem:[%s4 + $0x68] sm:$0xff]
  %v5250 = vld [vmem:[%s4 + $0x70] sm:$0xff]
  %v5251 = vld [vmem:[%s4 + $0x78] sm:$0xff]
  %5253 = vset.pattern.permute.xlu0 0
  %5254 = vperm.xlu0 %5253, %v5236
  %v5255 = vpop.permute.xlu0 %5254
  %5258 = vset.pattern.permute.xlu0 0
  %5259 = vperm.xlu0 %5258, %v5237
  %v5260 = vpop.permute.xlu0 %5259
  %5263 = vset.pattern.permute.xlu0 0
  %5264 = vperm.xlu0 %5263, %v5238
  %v5265 = vpop.permute.xlu0 %5264
  %5268 = vset.pattern.permute.xlu0 0
  %5269 = vperm.xlu0 %5268, %v5239
  %v5270 = vpop.permute.xlu0 %5269
  %5273 = vset.pattern.permute.xlu0 0
  %5274 = vperm.xlu0 %5273, %v5240
  %v5275 = vpop.permute.xlu0 %5274
  %5278 = vset.pattern.permute.xlu0 0
  %5279 = vperm.xlu0 %5278, %v5241
  %v5280 = vpop.permute.xlu0 %5279
  %5283 = vset.pattern.permute.xlu0 0
  %5284 = vperm.xlu0 %5283, %v5242
  %v5285 = vpop.permute.xlu0 %5284
  %5288 = vset.pattern.permute.xlu0 0
  %5289 = vperm.xlu0 %5288, %v5243
  %v5290 = vpop.permute.xlu0 %5289
  %5293 = vset.pattern.permute.xlu0 0
  %5294 = vperm.xlu0 %5293, %v5244
  %v5295 = vpop.permute.xlu0 %5294
  %5298 = vset.pattern.permute.xlu0 0
  %5299 = vperm.xlu0 %5298, %v5245
  %v5300 = vpop.permute.xlu0 %5299
  %5303 = vset.pattern.permute.xlu0 0
  %5304 = vperm.xlu0 %5303, %v5246
  %v5305 = vpop.permute.xlu0 %5304
  %5308 = vset.pattern.permute.xlu0 0
  %5309 = vperm.xlu0 %5308, %v5247
  %v5310 = vpop.permute.xlu0 %5309
  %5313 = vset.pattern.permute.xlu0 0
  %5314 = vperm.xlu0 %5313, %v5248
  %v5315 = vpop.permute.xlu0 %5314
  %5318 = vset.pattern.permute.xlu0 0
  %5319 = vperm.xlu0 %5318, %v5249
  %v5320 = vpop.permute.xlu0 %5319
  %5323 = vset.pattern.permute.xlu0 0
  %5324 = vperm.xlu0 %5323, %v5250
  %v5325 = vpop.permute.xlu0 %5324
  %5328 = vset.pattern.permute.xlu0 0
  %5329 = vperm.xlu0 %5328, %v5251
  %v5330 = vpop.permute.xlu0 %5329
  %v5364 = vunpack.c.l.b16 %v5204
  %v5365 = vunpack.c.h.b16 %v5204
  %v5366 = vunpack.c.l.b16 %v5205
  %v5367 = vunpack.c.h.b16 %v5205
  %v5368 = vunpack.c.l.b16 %v5206
  %v5369 = vunpack.c.h.b16 %v5206
  %v5370 = vunpack.c.l.b16 %v5207
  %v5371 = vunpack.c.h.b16 %v5207
  %v5372 = vunpack.c.l.b16 %v5208
  %v5373 = vunpack.c.h.b16 %v5208
  %v5374 = vunpack.c.l.b16 %v5209
  %v5375 = vunpack.c.h.b16 %v5209
  %v5376 = vunpack.c.l.b16 %v5210
  %v5377 = vunpack.c.h.b16 %v5210
  %v5378 = vunpack.c.l.b16 %v5211
  %v5379 = vunpack.c.h.b16 %v5211
  %v5380 = vunpack.c.l.b16 %v5212
  %v5381 = vunpack.c.h.b16 %v5212
  %v5382 = vunpack.c.l.b16 %v5213
  %v5383 = vunpack.c.h.b16 %v5213
  %v5384 = vunpack.c.l.b16 %v5214
  %v5385 = vunpack.c.h.b16 %v5214
  %v5386 = vunpack.c.l.b16 %v5215
  %v5387 = vunpack.c.h.b16 %v5215
  %v5388 = vunpack.c.l.b16 %v5216
  %v5389 = vunpack.c.h.b16 %v5216
  %v5390 = vunpack.c.l.b16 %v5217
  %v5391 = vunpack.c.h.b16 %v5217
  %v5392 = vunpack.c.l.b16 %v5218
  %v5393 = vunpack.c.h.b16 %v5218
  %v5394 = vunpack.c.l.b16 %v5219
  %v5395 = vunpack.c.h.b16 %v5219
  %v5396 = vunpack.c.l.b16 %v5220
  %v5397 = vunpack.c.h.b16 %v5220
  %v5398 = vunpack.c.l.b16 %v5221
  %v5399 = vunpack.c.h.b16 %v5221
  %v5400 = vunpack.c.l.b16 %v5222
  %v5401 = vunpack.c.h.b16 %v5222
  %v5402 = vunpack.c.l.b16 %v5223
  %v5403 = vunpack.c.h.b16 %v5223
  %v5404 = vunpack.c.l.b16 %v5224
  %v5405 = vunpack.c.h.b16 %v5224
  %v5406 = vunpack.c.l.b16 %v5225
  %v5407 = vunpack.c.h.b16 %v5225
  %v5408 = vunpack.c.l.b16 %v5226
  %v5409 = vunpack.c.h.b16 %v5226
  %v5410 = vunpack.c.l.b16 %v5227
  %v5411 = vunpack.c.h.b16 %v5227
  %v5412 = vunpack.c.l.b16 %v5228
  %v5413 = vunpack.c.h.b16 %v5228
  %v5414 = vunpack.c.l.b16 %v5229
  %v5415 = vunpack.c.h.b16 %v5229
  %v5416 = vunpack.c.l.b16 %v5230
  %v5417 = vunpack.c.h.b16 %v5230
  %v5418 = vunpack.c.l.b16 %v5231
  %v5419 = vunpack.c.h.b16 %v5231
  %v5420 = vunpack.c.l.b16 %v5232
  %v5421 = vunpack.c.h.b16 %v5232
  %v5422 = vunpack.c.l.b16 %v5233
  %v5423 = vunpack.c.h.b16 %v5233
  %v5424 = vunpack.c.l.b16 %v5234
  %v5425 = vunpack.c.h.b16 %v5234
  %v5426 = vunpack.c.l.b16 %v5235
  %v5427 = vunpack.c.h.b16 %v5235
  %v5428 = vpack.c.b16 %v5368, %v5364
  %v5429 = vpack.c.b16 %v5369, %v5365
  %v5430 = vpack.c.b16 %v5370, %v5366
  %v5431 = vpack.c.b16 %v5371, %v5367
  %v5432 = vpack.c.b16 %v5376, %v5372
  %v5433 = vpack.c.b16 %v5377, %v5373
  %v5434 = vpack.c.b16 %v5378, %v5374
  %v5435 = vpack.c.b16 %v5379, %v5375
  %v5436 = vpack.c.b16 %v5384, %v5380
  %v5437 = vpack.c.b16 %v5385, %v5381
  %v5438 = vpack.c.b16 %v5386, %v5382
  %v5439 = vpack.c.b16 %v5387, %v5383
  %v5440 = vpack.c.b16 %v5392, %v5388
  %v5441 = vpack.c.b16 %v5393, %v5389
  %v5442 = vpack.c.b16 %v5394, %v5390
  %v5443 = vpack.c.b16 %v5395, %v5391
  %v5444 = vpack.c.b16 %v5400, %v5396
  %v5445 = vpack.c.b16 %v5401, %v5397
  %v5446 = vpack.c.b16 %v5402, %v5398
  %v5447 = vpack.c.b16 %v5403, %v5399
  %v5448 = vpack.c.b16 %v5408, %v5404
  %v5449 = vpack.c.b16 %v5409, %v5405
  %v5450 = vpack.c.b16 %v5410, %v5406
  %v5451 = vpack.c.b16 %v5411, %v5407
  %v5452 = vpack.c.b16 %v5416, %v5412
  %v5453 = vpack.c.b16 %v5417, %v5413
  %v5454 = vpack.c.b16 %v5418, %v5414
  %v5455 = vpack.c.b16 %v5419, %v5415
  %v5456 = vpack.c.b16 %v5424, %v5420
  %v5457 = vpack.c.b16 %v5425, %v5421
  %v5458 = vpack.c.b16 %v5426, %v5422
  %v5459 = vpack.c.b16 %v5427, %v5423
  %vm5484 = vcmask 457728
  %v5486 = vsel %vm5484, %v5431, 0
  %v5489 = vsel %vm5484, %v5435, 0
  %v5492 = vsel %vm5484, %v5439, 0
  %v5495 = vsel %vm5484, %v5443, 0
  %v5498 = vsel %vm5484, %v5447, 0
  %v5501 = vsel %vm5484, %v5451, 0
  %v5504 = vsel %vm5484, %v5455, 0
  %v5507 = vsel %vm5484, %v5459, 0
  %vm5509 = vcmask 1043456
  %v5511 = vsel %vm5509, %v5203, 0
  %5513 = vmatpush.bf16.msra.mxu0 %v5183
  %5514 = vmatpush.bf16.msra.mxu0 %v5182
  %5515 = vmatpush.bf16.msra.mxu0 %v5181
  %5516 = vmatpush.bf16.msra.mxu0 %v5180
  %5517 = vmatpush.bf16.msra.mxu0 %v5179
  %5518 = vmatpush.bf16.msra.mxu0 %v5178
  %5519 = vmatpush.bf16.msra.mxu0 %v5177
  %5520 = vmatpush.bf16.msra.mxu0 %v5176
  %5521 = vmatmul.bf16.gmra.mxu0 %v5428
  %v5522 = vpop.f32.mrf.mxu0
  %v5523 = vadd.f32 %v5255, %v5522
  %v5524 = vpop.f32.mrf.mxu0
  %v5525 = vadd.f32 %v5260, %v5524
  %5526 = vmatmul.bf16.gmra.mxu0 %v5432
  %v5527 = vpop.f32.mrf.mxu0
  %v5528 = vadd.f32 %v5265, %v5527
  %v5529 = vpop.f32.mrf.mxu0
  %v5530 = vadd.f32 %v5270, %v5529
  %5531 = vmatmul.bf16.gmra.mxu0 %v5436
  %v5532 = vpop.f32.mrf.mxu0
  %v5533 = vadd.f32 %v5275, %v5532
  %v5534 = vpop.f32.mrf.mxu0
  %v5535 = vadd.f32 %v5280, %v5534
  %5536 = vmatmul.bf16.gmra.mxu0 %v5440
  %v5537 = vpop.f32.mrf.mxu0
  %v5538 = vadd.f32 %v5285, %v5537
  %v5539 = vpop.f32.mrf.mxu0
  %v5540 = vadd.f32 %v5290, %v5539
  %5541 = vmatmul.bf16.gmra.mxu0 %v5444
  %v5542 = vpop.f32.mrf.mxu0
  %v5543 = vadd.f32 %v5295, %v5542
  %v5544 = vpop.f32.mrf.mxu0
  %v5545 = vadd.f32 %v5300, %v5544
  %5546 = vmatmul.bf16.gmra.mxu0 %v5448
  %v5547 = vpop.f32.mrf.mxu0
  %v5548 = vadd.f32 %v5305, %v5547
  %v5549 = vpop.f32.mrf.mxu0
  %v5550 = vadd.f32 %v5310, %v5549
  %5551 = vmatmul.bf16.gmra.mxu0 %v5452
  %v5552 = vpop.f32.mrf.mxu0
  %v5553 = vadd.f32 %v5315, %v5552
  %v5554 = vpop.f32.mrf.mxu0
  %v5555 = vadd.f32 %v5320, %v5554
  %5556 = vmatmul.bf16.gmra.mxu0 %v5456
  %v5557 = vpop.f32.mrf.mxu0
  %v5558 = vadd.f32 %v5325, %v5557
  %v5559 = vpop.f32.mrf.mxu0
  %v5560 = vadd.f32 %v5330, %v5559
  %5561 = vdwg.mxu0
  %5562 = vmatpush.bf16.msra.mxu0 %v5191
  %5563 = vmatpush.bf16.msra.mxu0 %v5190
  %5564 = vmatpush.bf16.msra.mxu0 %v5189
  %5565 = vmatpush.bf16.msra.mxu0 %v5188
  %5566 = vmatpush.bf16.msra.mxu0 %v5187
  %5567 = vmatpush.bf16.msra.mxu0 %v5186
  %5568 = vmatpush.bf16.msra.mxu0 %v5185
  %5569 = vmatpush.bf16.msra.mxu0 %v5184
  %5570 = vmatmul.bf16.gmra.mxu0 %v5429
  %v5571 = vpop.f32.mrf.mxu0
  %v5572 = vadd.f32 %v5523, %v5571
  %v5573 = vpop.f32.mrf.mxu0
  %v5574 = vadd.f32 %v5525, %v5573
  %5575 = vmatmul.bf16.gmra.mxu0 %v5433
  %v5576 = vpop.f32.mrf.mxu0
  %v5577 = vadd.f32 %v5528, %v5576
  %v5578 = vpop.f32.mrf.mxu0
  %v5579 = vadd.f32 %v5530, %v5578
  %5580 = vmatmul.bf16.gmra.mxu0 %v5437
  %v5581 = vpop.f32.mrf.mxu0
  %v5582 = vadd.f32 %v5533, %v5581
  %v5583 = vpop.f32.mrf.mxu0
  %v5584 = vadd.f32 %v5535, %v5583
  %5585 = vmatmul.bf16.gmra.mxu0 %v5441
  %v5586 = vpop.f32.mrf.mxu0
  %v5587 = vadd.f32 %v5538, %v5586
  %v5588 = vpop.f32.mrf.mxu0
  %v5589 = vadd.f32 %v5540, %v5588
  %5590 = vmatmul.bf16.gmra.mxu0 %v5445
  %v5591 = vpop.f32.mrf.mxu0
  %v5592 = vadd.f32 %v5543, %v5591
  %v5593 = vpop.f32.mrf.mxu0
  %v5594 = vadd.f32 %v5545, %v5593
  %5595 = vmatmul.bf16.gmra.mxu0 %v5449
  %v5596 = vpop.f32.mrf.mxu0
  %v5597 = vadd.f32 %v5548, %v5596
  %v5598 = vpop.f32.mrf.mxu0
  %v5599 = vadd.f32 %v5550, %v5598
  %5600 = vmatmul.bf16.gmra.mxu0 %v5453
  %v5601 = vpop.f32.mrf.mxu0
  %v5602 = vadd.f32 %v5553, %v5601
  %v5603 = vpop.f32.mrf.mxu0
  %v5604 = vadd.f32 %v5555, %v5603
  %5605 = vmatmul.bf16.gmra.mxu0 %v5457
  %v5606 = vpop.f32.mrf.mxu0
  %v5607 = vadd.f32 %v5558, %v5606
  %v5608 = vpop.f32.mrf.mxu0
  %v5609 = vadd.f32 %v5560, %v5608
  %5610 = vdwg.mxu0
  %5611 = vmatpush.bf16.msra.mxu0 %v5199
  %5612 = vmatpush.bf16.msra.mxu0 %v5198
  %5613 = vmatpush.bf16.msra.mxu0 %v5197
  %5614 = vmatpush.bf16.msra.mxu0 %v5196
  %5615 = vmatpush.bf16.msra.mxu0 %v5195
  %5616 = vmatpush.bf16.msra.mxu0 %v5194
  %5617 = vmatpush.bf16.msra.mxu0 %v5193
  %5618 = vmatpush.bf16.msra.mxu0 %v5192
  %5619 = vmatmul.bf16.gmra.mxu0 %v5430
  %v5620 = vpop.f32.mrf.mxu0
  %v5621 = vadd.f32 %v5572, %v5620
  %v5622 = vpop.f32.mrf.mxu0
  %v5623 = vadd.f32 %v5574, %v5622
  %5624 = vmatmul.bf16.gmra.mxu0 %v5434
  %v5625 = vpop.f32.mrf.mxu0
  %v5626 = vadd.f32 %v5577, %v5625
  %v5627 = vpop.f32.mrf.mxu0
  %v5628 = vadd.f32 %v5579, %v5627
  %5629 = vmatmul.bf16.gmra.mxu0 %v5438
  %v5630 = vpop.f32.mrf.mxu0
  %v5631 = vadd.f32 %v5582, %v5630
  %v5632 = vpop.f32.mrf.mxu0
  %v5633 = vadd.f32 %v5584, %v5632
  %5634 = vmatmul.bf16.gmra.mxu0 %v5442
  %v5635 = vpop.f32.mrf.mxu0
  %v5636 = vadd.f32 %v5587, %v5635
  %v5637 = vpop.f32.mrf.mxu0
  %v5638 = vadd.f32 %v5589, %v5637
  %5639 = vmatmul.bf16.gmra.mxu0 %v5446
  %v5640 = vpop.f32.mrf.mxu0
  %v5641 = vadd.f32 %v5592, %v5640
  %v5642 = vpop.f32.mrf.mxu0
  %v5643 = vadd.f32 %v5594, %v5642
  %5644 = vmatmul.bf16.gmra.mxu0 %v5450
  %v5645 = vpop.f32.mrf.mxu0
  %v5646 = vadd.f32 %v5597, %v5645
  %v5647 = vpop.f32.mrf.mxu0
  %v5648 = vadd.f32 %v5599, %v5647
  %5649 = vmatmul.bf16.gmra.mxu0 %v5454
  %v5650 = vpop.f32.mrf.mxu0
  %v5651 = vadd.f32 %v5602, %v5650
  %v5652 = vpop.f32.mrf.mxu0
  %v5653 = vadd.f32 %v5604, %v5652
  %5654 = vmatmul.bf16.gmra.mxu0 %v5458
  %v5655 = vpop.f32.mrf.mxu0
  %v5656 = vadd.f32 %v5607, %v5655
  %v5657 = vpop.f32.mrf.mxu0
  %v5658 = vadd.f32 %v5609, %v5657
  %5659 = vdwg.mxu0
  %5660 = vmatpush.bf16.msra.mxu0 0
  %5661 = vmatpush.bf16.msra.mxu0 0
  %5662 = vmatpush.bf16.msra.mxu0 0
  %5663 = vmatpush.bf16.msra.mxu0 0
  %5664 = vmatpush.bf16.msra.mxu0 %v5511
  %5665 = vmatpush.bf16.msra.mxu0 %v5202
  %5666 = vmatpush.bf16.msra.mxu0 %v5201
  %5667 = vmatpush.bf16.msra.mxu0 %v5200
  %5668 = vmatmul.bf16.gmra.mxu0 %v5486
  %v5669 = vpop.f32.mrf.mxu0
  %v5670 = vadd.f32 %v5621, %v5669
  %v5671 = vpop.f32.mrf.mxu0
  %v5672 = vadd.f32 %v5623, %v5671
  %5673 = vmatmul.bf16.gmra.mxu0 %v5489
  %v5674 = vpop.f32.mrf.mxu0
  %v5675 = vadd.f32 %v5626, %v5674
  %v5676 = vpop.f32.mrf.mxu0
  %v5677 = vadd.f32 %v5628, %v5676
  %5678 = vmatmul.bf16.gmra.mxu0 %v5492
  %v5679 = vpop.f32.mrf.mxu0
  %v5680 = vadd.f32 %v5631, %v5679
  %v5681 = vpop.f32.mrf.mxu0
  %v5682 = vadd.f32 %v5633, %v5681
  %5683 = vmatmul.bf16.gmra.mxu0 %v5495
  %v5684 = vpop.f32.mrf.mxu0
  %v5685 = vadd.f32 %v5636, %v5684
  %v5686 = vpop.f32.mrf.mxu0
  %v5687 = vadd.f32 %v5638, %v5686
  %5688 = vmatmul.bf16.gmra.mxu0 %v5498
  %v5689 = vpop.f32.mrf.mxu0
  %v5690 = vadd.f32 %v5641, %v5689
  %v5691 = vpop.f32.mrf.mxu0
  %v5692 = vadd.f32 %v5643, %v5691
  %5693 = vmatmul.bf16.gmra.mxu0 %v5501
  %v5694 = vpop.f32.mrf.mxu0
  %v5695 = vadd.f32 %v5646, %v5694
  %v5696 = vpop.f32.mrf.mxu0
  %v5697 = vadd.f32 %v5648, %v5696
  %5698 = vmatmul.bf16.gmra.mxu0 %v5504
  %v5699 = vpop.f32.mrf.mxu0
  %v5700 = vadd.f32 %v5651, %v5699
  %v5701 = vpop.f32.mrf.mxu0
  %v5702 = vadd.f32 %v5653, %v5701
  %5703 = vmatmul.bf16.gmra.mxu0 %v5507
  %v5704 = vpop.f32.mrf.mxu0
  %v5705 = vadd.f32 %v5656, %v5704
  %v5706 = vpop.f32.mrf.mxu0
  %v5707 = vadd.f32 %v5658, %v5706
  %5708 = vdwg.mxu0
  %vm5709 = vcmp.lt.s32.totalorder %v4569, 3
  %vm5710 = vcmp.lt.s32.totalorder %v4570, 3
  %vm5711 = vcmp.lt.s32.totalorder %v4571, 3
  %vm5712 = vcmp.lt.s32.totalorder %v4572, 3
  %vm5713 = vcmp.lt.s32.totalorder %v4573, 3
  %vm5714 = vcmp.lt.s32.totalorder %v4574, 3
  %vm5715 = vcmp.lt.s32.totalorder %v4575, 3
  %vm5716 = vcmp.lt.s32.totalorder %v4576, 3
  %vm5717 = vcmp.lt.s32.totalorder %v4577, 3
  %vm5718 = vcmp.lt.s32.totalorder %v4578, 3
  %vm5719 = vcmp.lt.s32.totalorder %v4579, 3
  %vm5720 = vcmp.lt.s32.totalorder %v4580, 3
  %vm5721 = vcmp.lt.s32.totalorder %v4581, 3
  %vm5722 = vcmp.lt.s32.totalorder %v4582, 3
  %vm5723 = vcmp.lt.s32.totalorder %v4583, 3
  %v5724 = vsel %vm3294, %v5670, -1e+30
  %v5725 = vsel %vm5709, %v5672, -1e+30
  %v5726 = vsel %vm5710, %v5675, -1e+30
  %v5727 = vsel %vm5711, %v5677, -1e+30
  %v5728 = vsel %vm5712, %v5680, -1e+30
  %v5729 = vsel %vm5713, %v5682, -1e+30
  %v5730 = vsel %vm5714, %v5685, -1e+30
  %v5731 = vsel %vm5715, %v5687, -1e+30
  %v5732 = vsel %vm5716, %v5690, -1e+30
  %v5733 = vsel %vm5717, %v5692, -1e+30
  %v5734 = vsel %vm5718, %v5695, -1e+30
  %v5735 = vsel %vm5719, %v5697, -1e+30
  %v5736 = vsel %vm5720, %v5700, -1e+30
  %v5737 = vsel %vm5721, %v5702, -1e+30
  %v5738 = vsel %vm5722, %v5705, -1e+30
  %v5739 = vsel %vm5723, %v5707, -1e+30
  %v5740 = vmax.f32 %v5724, %v5728
  %v5741 = vmax.f32 %v5725, %v5729
  %v5742 = vmax.f32 %v5726, %v5730
  %v5743 = vmax.f32 %v5727, %v5731
  %v5744 = vmax.f32 %v5740, %v5732
  %v5745 = vmax.f32 %v5741, %v5733
  %v5746 = vmax.f32 %v5742, %v5734
  %v5747 = vmax.f32 %v5743, %v5735
  %v5748 = vmax.f32 %v5744, %v5736
  %v5749 = vmax.f32 %v5745, %v5737
  %v5750 = vmax.f32 %v5746, %v5738
  %v5751 = vmax.f32 %v5747, %v5739
  %v5752 = vmax.f32 %v5748, %v5749
  %v5753 = vmax.f32 %v5750, %v5751
  %v5754 = vmax.f32 %v5752, %v5753
  %v5755 = vrot.slane %v5754, 4
  %v5756 = vmax.f32 %v5754, %v5755
  %v5757 = vrot.slane %v5756, 2
  %v5758 = vmax.f32 %v5756, %v5757
  %v5759 = vrot.slane %v5758, 1
  %v5760 = vmax.f32 %v5758, %v5759
  %v5761 = vsub.f32 %v5724, %v5760
  %v5762 = vsub.f32 %v5725, %v5760
  %v5763 = vsub.f32 %v5726, %v5760
  %v5764 = vsub.f32 %v5727, %v5760
  %v5765 = vsub.f32 %v5728, %v5760
  %v5766 = vsub.f32 %v5729, %v5760
  %v5767 = vsub.f32 %v5730, %v5760
  %v5768 = vsub.f32 %v5731, %v5760
  %v5769 = vsub.f32 %v5732, %v5760
  %v5770 = vsub.f32 %v5733, %v5760
  %v5771 = vsub.f32 %v5734, %v5760
  %v5772 = vsub.f32 %v5735, %v5760
  %v5773 = vsub.f32 %v5736, %v5760
  %v5774 = vsub.f32 %v5737, %v5760
  %v5775 = vsub.f32 %v5738, %v5760
  %v5776 = vsub.f32 %v5739, %v5760
  %v5777 = vmul.f32 %v5761, 1.442695
  %v5778 = vpow.pop %v5777
  %v5779 = vmul.f32 %v5762, 1.442695
  %v5780 = vpow.pop %v5779
  %v5781 = vmul.f32 %v5763, 1.442695
  %v5782 = vpow.pop %v5781
  %v5783 = vmul.f32 %v5764, 1.442695
  %v5784 = vpow.pop %v5783
  %v5785 = vmul.f32 %v5765, 1.442695
  %v5786 = vpow.pop %v5785
  %v5787 = vmul.f32 %v5766, 1.442695
  %v5788 = vpow.pop %v5787
  %v5789 = vmul.f32 %v5767, 1.442695
  %v5790 = vpow.pop %v5789
  %v5791 = vmul.f32 %v5768, 1.442695
  %v5792 = vpow.pop %v5791
  %v5793 = vmul.f32 %v5769, 1.442695
  %v5794 = vpow.pop %v5793
  %v5795 = vmul.f32 %v5770, 1.442695
  %v5796 = vpow.pop %v5795
  %v5797 = vmul.f32 %v5771, 1.442695
  %v5798 = vpow.pop %v5797
  %v5799 = vmul.f32 %v5772, 1.442695
  %v5800 = vpow.pop %v5799
  %v5801 = vmul.f32 %v5773, 1.442695
  %v5802 = vpow.pop %v5801
  %v5803 = vmul.f32 %v5774, 1.442695
  %v5804 = vpow.pop %v5803
  %v5805 = vmul.f32 %v5775, 1.442695
  %v5806 = vpow.pop %v5805
  %v5807 = vmul.f32 %v5776, 1.442695
  %v5808 = vpow.pop %v5807
  %v5809 = vadd.f32 %v5778, %v5780
  %v5810 = vadd.f32 %v5809, %v5782
  %v5811 = vadd.f32 %v5810, %v5784
  %v5812 = vadd.f32 %v5811, %v5786
  %v5813 = vadd.f32 %v5812, %v5788
  %v5814 = vadd.f32 %v5813, %v5790
  %v5815 = vadd.f32 %v5814, %v5792
  %v5816 = vadd.f32 %v5815, %v5794
  %v5817 = vadd.f32 %v5816, %v5796
  %v5818 = vadd.f32 %v5817, %v5798
  %v5819 = vadd.f32 %v5818, %v5800
  %v5820 = vadd.f32 %v5819, %v5802
  %v5821 = vadd.f32 %v5820, %v5804
  %v5822 = vadd.f32 %v5821, %v5806
  %v5823 = vadd.f32 %v5822, %v5808
  %v5824 = vrot.slane %v5823, 4
  %v5825 = vadd.f32 %v5823, %v5824
  %v5826 = vrot.slane %v5825, 2
  %v5827 = vadd.f32 %v5825, %v5826
  %v5828 = vrot.slane %v5827, 1
  %v5829 = vadd.f32 %v5827, %v5828
  %v5830 = vlog2.pop %v5829
  %v5831 = vmul.f32 %v5830, 0.6931472
  %v5832 = vsub.f32 %v5761, %v5831
  %v5833 = vsub.f32 %v5762, %v5831
  %v5834 = vsub.f32 %v5763, %v5831
  %v5835 = vsub.f32 %v5764, %v5831
  %v5836 = vsub.f32 %v5765, %v5831
  %v5837 = vsub.f32 %v5766, %v5831
  %v5838 = vsub.f32 %v5767, %v5831
  %v5839 = vsub.f32 %v5768, %v5831
  %v5840 = vsub.f32 %v5769, %v5831
  %v5841 = vsub.f32 %v5770, %v5831
  %v5842 = vsub.f32 %v5771, %v5831
  %v5843 = vsub.f32 %v5772, %v5831
  %v5844 = vsub.f32 %v5773, %v5831
  %v5845 = vsub.f32 %v5774, %v5831
  %v5846 = vsub.f32 %v5775, %v5831
  %v5847 = vsub.f32 %v5776, %v5831
  %5848 = vst [vmem:[%s5] sm:$0xff] %v5832
  %5849 = vst [vmem:[%s5 + $0x8] sm:$0xff] %v5833
  %5850 = vst [vmem:[%s5 + $0x10] sm:$0xff] %v5834
  %5851 = vst [vmem:[%s5 + $0x18] sm:$0xff] %v5835
  %5852 = vst [vmem:[%s5 + $0x20] sm:$0xff] %v5836
  %5853 = vst [vmem:[%s5 + $0x28] sm:$0xff] %v5837
  %5854 = vst [vmem:[%s5 + $0x30] sm:$0xff] %v5838
  %5855 = vst [vmem:[%s5 + $0x38] sm:$0xff] %v5839
  %5856 = vst [vmem:[%s5 + $0x40] sm:$0xff] %v5840
  %5857 = vst [vmem:[%s5 + $0x48] sm:$0xff] %v5841
  %5858 = vst [vmem:[%s5 + $0x50] sm:$0xff] %v5842
  %5859 = vst [vmem:[%s5 + $0x58] sm:$0xff] %v5843
  %5860 = vst [vmem:[%s5 + $0x60] sm:$0xff] %v5844
  %5861 = vst [vmem:[%s5 + $0x68] sm:$0xff] %v5845
  %5862 = vst [vmem:[%s5 + $0x70] sm:$0xff] %v5846
  %5863 = vst [vmem:[%s5 + $0x78] sm:$0xff] %v5847
  // Predicated region
  $region22: #{glibert_classifier_cnn.1} parent=0 // pred_check
    _
  $region23: #{glibert_classifier_cnn.1} parent=0 // pred_check_branch
    %5865 = sbr.rel (0) target = $region25
  $region24: #{glibert_classifier_cnn.1} parent=0 // pred_region
    _
  $region25: #{glibert_classifier_cnn.1} parent=0 // pred_fallthru
    _
  // Predicated region
  $region26: #{glibert_classifier_cnn.1} parent=0 // pred_check
    _
  $region27: #{glibert_classifier_cnn.1} parent=0 // pred_check_branch
    %5867 = sbr.rel (0) target = $region29
  $region28: #{glibert_classifier_cnn.1} parent=0 // pred_region
    _
  $region29: #{glibert_classifier_cnn.1} parent=0 // pred_fallthru
    _

</llo_original>
